<compile_context>
chip_gen: v7x
topology: tpu7x:2x2x1
jax: 0.10.0
libtpu: 0.0.40
codegen_flags: <defaults>
</compile_context>

<pallas_src>
import functools

import jax
import jax.numpy as jnp
from jax.experimental import pallas as pl
from jax.experimental.pallas import tpu as pltpu


# ------------------------------------------------------------------------------------ kernel
def _cnn_tiny_kernel(xg_ref, w1lo_ref, w1hi_ref, b1_ref,
                     w2_ref, b2_ref, w3_ref, b3_ref,
                     fcw_ref, fcb_ref,
                     act3_ref, out_ref,
                     pad2_ref, pad3_ref):
    f32 = jnp.float32
    B, Hq1, Wo1, _ = xg_ref.shape
    C1 = w1lo_ref.shape[1]
    C2 = w2_ref.shape[2]
    C3 = w3_ref.shape[2]

    # ---- layer 1: conv(6,2)/(3,2)/pad(1,0) + folded BN + ReLU ------------------------------
    # xg is the H-padded, (3,2)-space-to-depth input: xg[b, q, wo, (s*2+j)*Cin+c].
    Ho1 = Hq1 - 1
    lo = xg_ref[:, 0:Ho1, :, :].reshape(B * Ho1 * Wo1, xg_ref.shape[3])
    hi = xg_ref[:, 1:Ho1 + 1, :, :].reshape(B * Ho1 * Wo1, xg_ref.shape[3])
    acc1 = jnp.dot(lo, w1lo_ref[...], preferred_element_type=f32)
    acc1 = acc1 + jnp.dot(hi, w1hi_ref[...], preferred_element_type=f32)
    act1 = jnp.maximum(acc1 + b1_ref[...], 0.0)                 # (B*Ho1*Wo1, C1)

    # stash layer-1 output into an H-zero-padded VMEM scratch; rows = (b, h, w)
    Hp2 = Ho1 + 2
    pad2_ref[...] = jnp.zeros(pad2_ref.shape, f32)
    for b in range(B):
        dst = (b * Hp2 + 1) * Wo1
        src = b * Ho1 * Wo1
        pad2_ref[dst:dst + Ho1 * Wo1, :] = act1[src:src + Ho1 * Wo1, :]

    # ---- layer 2 ---------------------------------------------------------------------------
    Wo2, Hq2 = Wo1 // 2, Hp2 // 3
    Ho2 = Hq2 - 1
    half = (B * Hp2 * Wo1) // 2
    ev = pad2_ref[pl.ds(0, half, stride=2), :]                  # even input columns (j=0)
    od = pad2_ref[pl.ds(1, half, stride=2), :]                  # odd  input columns (j=1)
    x2 = jnp.concatenate([ev, od], axis=-1)                     # lanes = (j, c)
    x2 = x2.reshape(B, Hq2, 3, Wo2, 2 * C1)                     # H grouped as (q, s)
    acc2 = jnp.zeros((B * Ho2 * Wo2, C2), f32)
    for i in range(6):                                          # kernel-row offsets
        qi, si = divmod(i, 3)
        p = x2[:, qi:qi + Ho2, si, :, :].reshape(B * Ho2 * Wo2, 2 * C1)
        acc2 = acc2 + jnp.dot(p, w2_ref[i], preferred_element_type=f32)
    act2 = jnp.maximum(acc2 + b2_ref[...], 0.0)                 # (B*Ho2*Wo2, C2)

    Hp3 = Ho2 + 2
    pad3_ref[...] = jnp.zeros(pad3_ref.shape, f32)
    for b in range(B):
        dst = (b * Hp3 + 1) * Wo2
        src = b * Ho2 * Wo2
        pad3_ref[dst:dst + Ho2 * Wo2, :] = act2[src:src + Ho2 * Wo2, :]

    # ---- layer 3 ---------------------------------------------------------------------------
    Wo3, Hq3 = Wo2 // 2, Hp3 // 3
    Ho3 = Hq3 - 1
    half = (B * Hp3 * Wo2) // 2
    ev = pad3_ref[pl.ds(0, half, stride=2), :]
    od = pad3_ref[pl.ds(1, half, stride=2), :]
    x3 = jnp.concatenate([ev, od], axis=-1).reshape(B, Hq3, 3, Wo3, 2 * C2)
    acc3 = jnp.zeros((B * Ho3 * Wo3, C3), f32)
    for i in range(6):
        qi, si = divmod(i, 3)
        p = x3[:, qi:qi + Ho3, si, :, :].reshape(B * Ho3 * Wo3, 2 * C2)
        acc3 = acc3 + jnp.dot(p, w3_ref[i], preferred_element_type=f32)
    act3 = jnp.maximum(acc3 + b3_ref[...], 0.0)                 # (B*S3, C3), rows = (b, h, w)
    act3_ref[...] = act3

    # ---- fused Linear (consumes the VMEM-resident layer-3 activation) -----------------------
    S3 = Ho3 * Wo3
    N = out_ref.shape[1]
    acc = jnp.zeros((B, N), f32)
    for s in range(S3):
        rows = act3_ref[pl.ds(s, B, stride=S3), :]              # (B, C3): spatial pos s, all b
        acc = acc + jnp.dot(rows, fcw_ref[s], preferred_element_type=f32)
    out_ref[...] = acc + fcb_ref[...]


# --------------------------------------------------------------------------------- wrappers
def _full_block(shape):
    return pl.BlockSpec(shape, lambda i: (0,) * len(shape))


def _fold_bn(bn, conv_b, eps=1e-5):
    gamma, beta, mean, var = bn
    scale = gamma / jnp.sqrt(var + eps)
    bias = beta + scale * (conv_b - mean)
    return scale, bias


def cnn_tiny_forward(params, x):
    """x: (B, Cin, H, W) NCHW. Returns (x_flat, logits), matching the PyTorch module."""
    B, Cin, H, W = x.shape
    C1 = params["c1_w"].shape[0]
    C2 = params["c2_w"].shape[0]
    C3 = params["c3_w"].shape[0]
    N = params["fc_w"].shape[0]

    Hp1 = H + 2
    assert Hp1 % 3 == 0 and W % 2 == 0
    Hq1, Wo1 = Hp1 // 3, W // 2
    Ho1 = Hq1 - 1
    assert (Ho1 + 2) % 3 == 0
    Hq2, Wo2 = (Ho1 + 2) // 3, Wo1 // 2
    Ho2 = Hq2 - 1
    assert (Ho2 + 2) % 3 == 0
    Hq3, Wo3 = (Ho2 + 2) // 3, Wo2 // 2
    Ho3 = Hq3 - 1
    S3 = Ho3 * Wo3
    for wo in (Wo1, Wo2, Wo3):
        assert wo % 8 == 0, "W extents must keep sublane tiles aligned"
    assert params["fc_w"].shape[1] == C3 * S3

    # boundary-only input glue: NCHW -> NHWC, zero-pad H, space-to-depth (3, 2)
    xn = jnp.transpose(x, (0, 2, 3, 1)).astype(jnp.float32)
    xn = jnp.pad(xn, ((0, 0), (1, 1), (0, 0), (0, 0)))
    xg = xn.reshape(B, Hq1, 3, Wo1, 2, Cin)
    xg = jnp.transpose(xg, (0, 1, 3, 2, 4, 5)).reshape(B, Hq1, Wo1, 6 * Cin)

    # fold eval-mode BN + conv bias into weights / biases; rearrange for the in-kernel layout
    s1, bb1 = _fold_bn(params["bn1"], params["c1_b"])
    s2, bb2 = _fold_bn(params["bn2"], params["c2_b"])
    s3, bb3 = _fold_bn(params["bn3"], params["c3_b"])
    w1 = (params["c1_w"] * s1[:, None, None, None]).astype(jnp.float32)
    w1lo = w1[:, :, 0:3, :].transpose(2, 3, 1, 0).reshape(6 * Cin, C1)
    w1hi = w1[:, :, 3:6, :].transpose(2, 3, 1, 0).reshape(6 * Cin, C1)
    w2 = (params["c2_w"] * s2[:, None, None, None]).astype(jnp.float32)
    w2k = w2.transpose(2, 3, 1, 0).reshape(6, 2 * C1, C2)
    w3 = (params["c3_w"] * s3[:, None, None, None]).astype(jnp.float32)
    w3k = w3.transpose(2, 3, 1, 0).reshape(6, 2 * C2, C3)
    fcw = params["fc_w"].reshape(N, C3, S3).transpose(2, 1, 0).astype(jnp.float32)
    fcb = params["fc_b"].reshape(1, N).astype(jnp.float32)
    b1 = bb1.reshape(1, C1).astype(jnp.float32)
    b2 = bb2.reshape(1, C2).astype(jnp.float32)
    b3 = bb3.reshape(1, C3).astype(jnp.float32)

    ins = (xg, w1lo, w1hi, b1, w2k, b2, w3k, b3, fcw, fcb)
    act3, logits = pl.pallas_call(
        _cnn_tiny_kernel,
        out_shape=(jax.ShapeDtypeStruct((B * S3, C3), jnp.float32),
                   jax.ShapeDtypeStruct((B, N), jnp.float32)),
        grid=(1,),
        in_specs=[_full_block(a.shape) for a in ins],
        out_specs=[_full_block((B * S3, C3)), _full_block((B, N))],
        scratch_shapes=[
            pltpu.VMEM((B * (Ho1 + 2) * Wo1, C1), jnp.float32),   # padded layer-1 activation
            pltpu.VMEM((B * (Ho2 + 2) * Wo2, C2), jnp.float32),   # padded layer-2 activation
        ],
        compiler_params=pltpu.CompilerParams(
            dimension_semantics=("arbitrary",),
            vmem_limit_bytes=32 * 1024 * 1024,
        ),
    )(*ins)

    # x.view(B, -1) in the NCHW convention (8 KB boundary-only reshape/transpose)
    x_flat = act3.reshape(B, Ho3, Wo3, C3).transpose(0, 3, 1, 2).reshape(B, C3 * S3)
    return x_flat, logits


# ------------------------------------------------------------------------------- parameters
def _conv_params(key, cout, cin, kh, kw):
    fan_in = cin * kh * kw
    bound = 1.0 / jnp.sqrt(float(fan_in))
    kw_, kb_ = jax.random.split(key)
    w = jax.random.uniform(kw_, (cout, cin, kh, kw), jnp.float32, -bound, bound)
    b = jax.random.uniform(kb_, (cout,), jnp.float32, -bound, bound)
    return w, b


def _bn_params(cout):
    return (jnp.ones((cout,), jnp.float32),   # gamma
            jnp.zeros((cout,), jnp.float32),  # beta
            jnp.zeros((cout,), jnp.float32),  # running_mean
            jnp.ones((cout,), jnp.float32))   # running_var


def init_params(key, input_channel, num_classes):
    k1, k2, k3, k4 = jax.random.split(key, 4)
    p = {}
    p["c1_w"], p["c1_b"] = _conv_params(k1, 16, input_channel, 6, 2)
    p["bn1"] = _bn_params(16)
    p["c2_w"], p["c2_b"] = _conv_params(k2, 32, 16, 6, 2)
    p["bn2"] = _bn_params(32)
    p["c3_w"], p["c3_b"] = _conv_params(k3, 64, 32, 6, 2)
    p["bn3"] = _bn_params(64)
    bound = 1.0 / jnp.sqrt(1024.0)
    kfw, kfb = jax.random.split(k4)
    p["fc_w"] = jax.random.uniform(kfw, (num_classes, 1024), jnp.float32, -bound, bound)
    p["fc_b"] = jax.random.uniform(kfb, (num_classes,), jnp.float32, -bound, bound)
    return p


# ------------------------------------------------------------------------------------- main
if __name__ == "__main__":
    key = jax.random.PRNGKey(0)
    kx, kp = jax.random.split(key)

    input_channel = 1      # PAMAP2-style single-channel (time x sensor) input
    num_classes = 12
    # (B, C, H, W) chosen so the flatten after 3 conv layers is exactly 1024
    # (64 channels * 2 * 8 spatial), matching nn.Linear(1024, num_classes).
    x = jax.random.normal(kx, (2, input_channel, 67, 64), jnp.float32)

    params = init_params(kp, input_channel, num_classes)

    fwd = jax.jit(functools.partial(cnn_tiny_forward, params))
    x_flat, out = fwd(x)
    jax.block_until_ready((x_flat, out))

    assert x_flat.shape == (2, 1024), x_flat.shape
    assert out.shape == (2, num_classes), out.shape
    print("KERNEL_OK")
</pallas_src>

<mosaic_0001>
module attributes {stable_mosaic.version = 11 : i64} {
  func.func @_cnn_tiny_kernel(%arg0: i32, %arg1: memref<2x23x32x6xf32, #tpu.memory_space<vmem>>, %arg2: memref<6x16xf32, #tpu.memory_space<vmem>>, %arg3: memref<6x16xf32, #tpu.memory_space<vmem>>, %arg4: memref<1x16xf32, #tpu.memory_space<vmem>>, %arg5: memref<6x32x32xf32, #tpu.memory_space<vmem>>, %arg6: memref<1x32xf32, #tpu.memory_space<vmem>>, %arg7: memref<6x64x64xf32, #tpu.memory_space<vmem>>, %arg8: memref<1x64xf32, #tpu.memory_space<vmem>>, %arg9: memref<16x64x12xf32, #tpu.memory_space<vmem>>, %arg10: memref<1x12xf32, #tpu.memory_space<vmem>>, %arg11: memref<32x64xf32, #tpu.memory_space<vmem>>, %arg12: memref<2x12xf32, #tpu.memory_space<vmem>>, %arg13: memref<1536x16xf32, #tpu.memory_space<vmem>>, %arg14: memref<288x32xf32, #tpu.memory_space<vmem>>) attributes {dimension_semantics = [#tpu.dimension_semantics<arbitrary>], iteration_bounds = array<i64: 1>, scalar_prefetch = 0 : i64, scratch_operands = 2 : i64, tpu.core_type = #tpu.core_type<tc>, window_params = [{pipeline_mode = #tpu.pipeline_mode<synchronous>, transform_indices = @transform_0, window_bounds = array<i64: 2, 23, 32, 6>}, {pipeline_mode = #tpu.pipeline_mode<synchronous>, transform_indices = @transform_1, window_bounds = array<i64: 6, 16>}, {pipeline_mode = #tpu.pipeline_mode<synchronous>, transform_indices = @transform_2, window_bounds = array<i64: 6, 16>}, {pipeline_mode = #tpu.pipeline_mode<synchronous>, transform_indices = @transform_3, window_bounds = array<i64: 1, 16>}, {pipeline_mode = #tpu.pipeline_mode<synchronous>, transform_indices = @transform_4, window_bounds = array<i64: 6, 32, 32>}, {pipeline_mode = #tpu.pipeline_mode<synchronous>, transform_indices = @transform_5, window_bounds = array<i64: 1, 32>}, {pipeline_mode = #tpu.pipeline_mode<synchronous>, transform_indices = @transform_6, window_bounds = array<i64: 6, 64, 64>}, {pipeline_mode = #tpu.pipeline_mode<synchronous>, transform_indices = @transform_7, window_bounds = array<i64: 1, 64>}, {pipeline_mode = #tpu.pipeline_mode<synchronous>, transform_indices = @transform_8, window_bounds = array<i64: 16, 64, 12>}, {pipeline_mode = #tpu.pipeline_mode<synchronous>, transform_indices = @transform_9, window_bounds = array<i64: 1, 12>}, {pipeline_mode = #tpu.pipeline_mode<synchronous>, transform_indices = @transform_10, window_bounds = array<i64: 32, 64>}, {pipeline_mode = #tpu.pipeline_mode<synchronous>, transform_indices = @transform_11, window_bounds = array<i64: 2, 12>}]} {
    %c0 = arith.constant 0 : index
    %c0_0 = arith.constant 0 : index
    %c0_1 = arith.constant 0 : index
    %c0_2 = arith.constant 0 : index
    %0 = vector.load %arg1[%c0, %c0_0, %c0_1, %c0_2] : memref<2x23x32x6xf32, #tpu.memory_space<vmem>>, vector<2x22x32x6xf32>
    %1 = vector.shape_cast %0 : vector<2x22x32x6xf32> to vector<1408x6xf32>
    %c0_3 = arith.constant 0 : index
    %c1 = arith.constant 1 : index
    %c0_4 = arith.constant 0 : index
    %c0_5 = arith.constant 0 : index
    %2 = vector.load %arg1[%c0_3, %c1, %c0_4, %c0_5] : memref<2x23x32x6xf32, #tpu.memory_space<vmem>>, vector<2x22x32x6xf32>
    %3 = vector.shape_cast %2 : vector<2x22x32x6xf32> to vector<1408x6xf32>
    %c0_6 = arith.constant 0 : index
    %c0_7 = arith.constant 0 : index
    %4 = vector.load %arg2[%c0_6, %c0_7] : memref<6x16xf32, #tpu.memory_space<vmem>>, vector<6x16xf32>
    %cst = arith.constant dense<0.000000e+00> : vector<1408x16xf32>
    %5 = tpu.matmul %1, %4, %cst {dimension_numbers = #tpu.dot_dimension_numbers<[1], [0], [0], [1], [0, 0, 1, 1], [], []>} : vector<1408x6xf32>, vector<6x16xf32>, vector<1408x16xf32> -> vector<1408x16xf32>
    %c0_8 = arith.constant 0 : index
    %c0_9 = arith.constant 0 : index
    %6 = vector.load %arg3[%c0_8, %c0_9] : memref<6x16xf32, #tpu.memory_space<vmem>>, vector<6x16xf32>
    %cst_10 = arith.constant dense<0.000000e+00> : vector<1408x16xf32>
    %7 = tpu.matmul %3, %6, %cst_10 {dimension_numbers = #tpu.dot_dimension_numbers<[1], [0], [0], [1], [0, 0, 1, 1], [], []>} : vector<1408x6xf32>, vector<6x16xf32>, vector<1408x16xf32> -> vector<1408x16xf32>
    %8 = arith.addf %5, %7 : vector<1408x16xf32>
    %c0_11 = arith.constant 0 : index
    %c0_12 = arith.constant 0 : index
    %9 = vector.load %arg4[%c0_11, %c0_12] : memref<1x16xf32, #tpu.memory_space<vmem>>, vector<1x16xf32>
    %10 = vector.broadcast %9 : vector<1x16xf32> to vector<1408x16xf32>
    %11 = arith.addf %8, %10 : vector<1408x16xf32>
    %cst_13 = arith.constant 0.000000e+00 : f32
    %12 = vector.broadcast %cst_13 : f32 to vector<1408x16xf32>
    %13 = arith.maximumf %11, %12 : vector<1408x16xf32>
    %cst_14 = arith.constant 0.000000e+00 : f32
    %14 = vector.broadcast %cst_14 : f32 to vector<1536x16xf32>
    %c0_15 = arith.constant 0 : index
    %c0_16 = arith.constant 0 : index
    %15 = vector.load %arg13[%c0_15, %c0_16] : memref<1536x16xf32, #tpu.memory_space<vmem>>, vector<1536x16xf32>
    tpu.vector_store %arg13[%c0_15, %c0_16], %14 {strides = array<i32>} : memref<1536x16xf32, #tpu.memory_space<vmem>>, vector<1536x16xf32>,
    %16 = vector.extract_strided_slice %13 {offsets = [0, 0], sizes = [704, 16], strides = [1, 1]} : vector<1408x16xf32> to vector<704x16xf32>
    %c32 = arith.constant 32 : index
    %c0_17 = arith.constant 0 : index
    %17 = vector.load %arg13[%c32, %c0_17] : memref<1536x16xf32, #tpu.memory_space<vmem>>, vector<704x16xf32>
    tpu.vector_store %arg13[%c32, %c0_17], %16 {strides = array<i32>} : memref<1536x16xf32, #tpu.memory_space<vmem>>, vector<704x16xf32>,
    %18 = vector.extract_strided_slice %13 {offsets = [704, 0], sizes = [704, 16], strides = [1, 1]} : vector<1408x16xf32> to vector<704x16xf32>
    %c800 = arith.constant 800 : index
    %c0_18 = arith.constant 0 : index
    %19 = vector.load %arg13[%c800, %c0_18] : memref<1536x16xf32, #tpu.memory_space<vmem>>, vector<704x16xf32>
    tpu.vector_store %arg13[%c800, %c0_18], %18 {strides = array<i32>} : memref<1536x16xf32, #tpu.memory_space<vmem>>, vector<704x16xf32>,
    %c0_19 = arith.constant 0 : index
    %c0_20 = arith.constant 0 : index
    %20 = tpu.strided_load %arg13[%c0_19, %c0_20] {strides = array<i32: 2, 1>} : memref<1536x16xf32, #tpu.memory_space<vmem>>, vector<768x16xf32>
    %c1_21 = arith.constant 1 : index
    %c0_22 = arith.constant 0 : index
    %21 = tpu.strided_load %arg13[%c1_21, %c0_22] {strides = array<i32: 2, 1>} : memref<1536x16xf32, #tpu.memory_space<vmem>>, vector<768x16xf32>
    %22 = tpu.concatenate %20, %21 in 1 : vector<768x16xf32>, vector<768x16xf32> -> vector<768x32xf32>
    %23 = vector.shape_cast %22 : vector<768x32xf32> to vector<2x8x3x16x32xf32>
    %cst_23 = arith.constant 0.000000e+00 : f32
    %24 = vector.broadcast %cst_23 : f32 to vector<224x32xf32>
    %25 = vector.extract_strided_slice %23 {offsets = [0, 0, 0, 0, 0], sizes = [2, 7, 1, 16, 32], strides = [1, 1, 1, 1, 1]} : vector<2x8x3x16x32xf32> to vector<2x7x1x16x32xf32>
    %26 = vector.shape_cast %25 : vector<2x7x1x16x32xf32> to vector<2x7x16x32xf32>
    %27 = vector.shape_cast %26 : vector<2x7x16x32xf32> to vector<224x32xf32>
    %c0_24 = arith.constant 0 : index
    %c0_25 = arith.constant 0 : index
    %c0_26 = arith.constant 0 : index
    %28 = vector.load %arg5[%c0_24, %c0_25, %c0_26] : memref<6x32x32xf32, #tpu.memory_space<vmem>>, vector<1x32x32xf32>
    %29 = vector.shape_cast %28 : vector<1x32x32xf32> to vector<32x32xf32>
    %cst_27 = arith.constant dense<0.000000e+00> : vector<224x32xf32>
    %30 = tpu.matmul %27, %29, %cst_27 {dimension_numbers = #tpu.dot_dimension_numbers<[1], [0], [0], [1], [0, 0, 1, 1], [], []>} : vector<224x32xf32>, vector<32x32xf32>, vector<224x32xf32> -> vector<224x32xf32>
    %31 = arith.addf %24, %30 : vector<224x32xf32>
    %32 = vector.extract_strided_slice %23 {offsets = [0, 0, 1, 0, 0], sizes = [2, 7, 1, 16, 32], strides = [1, 1, 1, 1, 1]} : vector<2x8x3x16x32xf32> to vector<2x7x1x16x32xf32>
    %33 = vector.shape_cast %32 : vector<2x7x1x16x32xf32> to vector<2x7x16x32xf32>
    %34 = vector.shape_cast %33 : vector<2x7x16x32xf32> to vector<224x32xf32>
    %c1_28 = arith.constant 1 : index
    %c0_29 = arith.constant 0 : index
    %c0_30 = arith.constant 0 : index
    %35 = vector.load %arg5[%c1_28, %c0_29, %c0_30] : memref<6x32x32xf32, #tpu.memory_space<vmem>>, vector<1x32x32xf32>
    %36 = vector.shape_cast %35 : vector<1x32x32xf32> to vector<32x32xf32>
    %cst_31 = arith.constant dense<0.000000e+00> : vector<224x32xf32>
    %37 = tpu.matmul %34, %36, %cst_31 {dimension_numbers = #tpu.dot_dimension_numbers<[1], [0], [0], [1], [0, 0, 1, 1], [], []>} : vector<224x32xf32>, vector<32x32xf32>, vector<224x32xf32> -> vector<224x32xf32>
    %38 = arith.addf %31, %37 : vector<224x32xf32>
    %39 = vector.extract_strided_slice %23 {offsets = [0, 0, 2, 0, 0], sizes = [2, 7, 1, 16, 32], strides = [1, 1, 1, 1, 1]} : vector<2x8x3x16x32xf32> to vector<2x7x1x16x32xf32>
    %40 = vector.shape_cast %39 : vector<2x7x1x16x32xf32> to vector<2x7x16x32xf32>
    %41 = vector.shape_cast %40 : vector<2x7x16x32xf32> to vector<224x32xf32>
    %c2 = arith.constant 2 : index
    %c0_32 = arith.constant 0 : index
    %c0_33 = arith.constant 0 : index
    %42 = vector.load %arg5[%c2, %c0_32, %c0_33] : memref<6x32x32xf32, #tpu.memory_space<vmem>>, vector<1x32x32xf32>
    %43 = vector.shape_cast %42 : vector<1x32x32xf32> to vector<32x32xf32>
    %cst_34 = arith.constant dense<0.000000e+00> : vector<224x32xf32>
    %44 = tpu.matmul %41, %43, %cst_34 {dimension_numbers = #tpu.dot_dimension_numbers<[1], [0], [0], [1], [0, 0, 1, 1], [], []>} : vector<224x32xf32>, vector<32x32xf32>, vector<224x32xf32> -> vector<224x32xf32>
    %45 = arith.addf %38, %44 : vector<224x32xf32>
    %46 = vector.extract_strided_slice %23 {offsets = [0, 1, 0, 0, 0], sizes = [2, 7, 1, 16, 32], strides = [1, 1, 1, 1, 1]} : vector<2x8x3x16x32xf32> to vector<2x7x1x16x32xf32>
    %47 = vector.shape_cast %46 : vector<2x7x1x16x32xf32> to vector<2x7x16x32xf32>
    %48 = vector.shape_cast %47 : vector<2x7x16x32xf32> to vector<224x32xf32>
    %c3 = arith.constant 3 : index
    %c0_35 = arith.constant 0 : index
    %c0_36 = arith.constant 0 : index
    %49 = vector.load %arg5[%c3, %c0_35, %c0_36] : memref<6x32x32xf32, #tpu.memory_space<vmem>>, vector<1x32x32xf32>
    %50 = vector.shape_cast %49 : vector<1x32x32xf32> to vector<32x32xf32>
    %cst_37 = arith.constant dense<0.000000e+00> : vector<224x32xf32>
    %51 = tpu.matmul %48, %50, %cst_37 {dimension_numbers = #tpu.dot_dimension_numbers<[1], [0], [0], [1], [0, 0, 1, 1], [], []>} : vector<224x32xf32>, vector<32x32xf32>, vector<224x32xf32> -> vector<224x32xf32>
    %52 = arith.addf %45, %51 : vector<224x32xf32>
    %53 = vector.extract_strided_slice %23 {offsets = [0, 1, 1, 0, 0], sizes = [2, 7, 1, 16, 32], strides = [1, 1, 1, 1, 1]} : vector<2x8x3x16x32xf32> to vector<2x7x1x16x32xf32>
    %54 = vector.shape_cast %53 : vector<2x7x1x16x32xf32> to vector<2x7x16x32xf32>
    %55 = vector.shape_cast %54 : vector<2x7x16x32xf32> to vector<224x32xf32>
    %c4 = arith.constant 4 : index
    %c0_38 = arith.constant 0 : index
    %c0_39 = arith.constant 0 : index
    %56 = vector.load %arg5[%c4, %c0_38, %c0_39] : memref<6x32x32xf32, #tpu.memory_space<vmem>>, vector<1x32x32xf32>
    %57 = vector.shape_cast %56 : vector<1x32x32xf32> to vector<32x32xf32>
    %cst_40 = arith.constant dense<0.000000e+00> : vector<224x32xf32>
    %58 = tpu.matmul %55, %57, %cst_40 {dimension_numbers = #tpu.dot_dimension_numbers<[1], [0], [0], [1], [0, 0, 1, 1], [], []>} : vector<224x32xf32>, vector<32x32xf32>, vector<224x32xf32> -> vector<224x32xf32>
    %59 = arith.addf %52, %58 : vector<224x32xf32>
    %60 = vector.extract_strided_slice %23 {offsets = [0, 1, 2, 0, 0], sizes = [2, 7, 1, 16, 32], strides = [1, 1, 1, 1, 1]} : vector<2x8x3x16x32xf32> to vector<2x7x1x16x32xf32>
    %61 = vector.shape_cast %60 : vector<2x7x1x16x32xf32> to vector<2x7x16x32xf32>
    %62 = vector.shape_cast %61 : vector<2x7x16x32xf32> to vector<224x32xf32>
    %c5 = arith.constant 5 : index
    %c0_41 = arith.constant 0 : index
    %c0_42 = arith.constant 0 : index
    %63 = vector.load %arg5[%c5, %c0_41, %c0_42] : memref<6x32x32xf32, #tpu.memory_space<vmem>>, vector<1x32x32xf32>
    %64 = vector.shape_cast %63 : vector<1x32x32xf32> to vector<32x32xf32>
    %cst_43 = arith.constant dense<0.000000e+00> : vector<224x32xf32>
    %65 = tpu.matmul %62, %64, %cst_43 {dimension_numbers = #tpu.dot_dimension_numbers<[1], [0], [0], [1], [0, 0, 1, 1], [], []>} : vector<224x32xf32>, vector<32x32xf32>, vector<224x32xf32> -> vector<224x32xf32>
    %66 = arith.addf %59, %65 : vector<224x32xf32>
    %c0_44 = arith.constant 0 : index
    %c0_45 = arith.constant 0 : index
    %67 = vector.load %arg6[%c0_44, %c0_45] : memref<1x32xf32, #tpu.memory_space<vmem>>, vector<1x32xf32>
    %68 = vector.broadcast %67 : vector<1x32xf32> to vector<224x32xf32>
    %69 = arith.addf %66, %68 : vector<224x32xf32>
    %cst_46 = arith.constant 0.000000e+00 : f32
    %70 = vector.broadcast %cst_46 : f32 to vector<224x32xf32>
    %71 = arith.maximumf %69, %70 : vector<224x32xf32>
    %cst_47 = arith.constant 0.000000e+00 : f32
    %72 = vector.broadcast %cst_47 : f32 to vector<288x32xf32>
    %c0_48 = arith.constant 0 : index
    %c0_49 = arith.constant 0 : index
    %73 = vector.load %arg14[%c0_48, %c0_49] : memref<288x32xf32, #tpu.memory_space<vmem>>, vector<288x32xf32>
    tpu.vector_store %arg14[%c0_48, %c0_49], %72 {strides = array<i32>} : memref<288x32xf32, #tpu.memory_space<vmem>>, vector<288x32xf32>,
    %74 = vector.extract_strided_slice %71 {offsets = [0, 0], sizes = [112, 32], strides = [1, 1]} : vector<224x32xf32> to vector<112x32xf32>
    %c16 = arith.constant 16 : index
    %c0_50 = arith.constant 0 : index
    %75 = vector.load %arg14[%c16, %c0_50] : memref<288x32xf32, #tpu.memory_space<vmem>>, vector<112x32xf32>
    tpu.vector_store %arg14[%c16, %c0_50], %74 {strides = array<i32>} : memref<288x32xf32, #tpu.memory_space<vmem>>, vector<112x32xf32>,
    %76 = vector.extract_strided_slice %71 {offsets = [112, 0], sizes = [112, 32], strides = [1, 1]} : vector<224x32xf32> to vector<112x32xf32>
    %c160 = arith.constant 160 : index
    %c0_51 = arith.constant 0 : index
    %77 = vector.load %arg14[%c160, %c0_51] : memref<288x32xf32, #tpu.memory_space<vmem>>, vector<112x32xf32>
    tpu.vector_store %arg14[%c160, %c0_51], %76 {strides = array<i32>} : memref<288x32xf32, #tpu.memory_space<vmem>>, vector<112x32xf32>,
    %c0_52 = arith.constant 0 : index
    %c0_53 = arith.constant 0 : index
    %78 = tpu.strided_load %arg14[%c0_52, %c0_53] {strides = array<i32: 2, 1>} : memref<288x32xf32, #tpu.memory_space<vmem>>, vector<144x32xf32>
    %c1_54 = arith.constant 1 : index
    %c0_55 = arith.constant 0 : index
    %79 = tpu.strided_load %arg14[%c1_54, %c0_55] {strides = array<i32: 2, 1>} : memref<288x32xf32, #tpu.memory_space<vmem>>, vector<144x32xf32>
    %80 = tpu.concatenate %78, %79 in 1 : vector<144x32xf32>, vector<144x32xf32> -> vector<144x64xf32>
    %81 = vector.shape_cast %80 : vector<144x64xf32> to vector<2x3x3x8x64xf32>
    %cst_56 = arith.constant 0.000000e+00 : f32
    %82 = vector.broadcast %cst_56 : f32 to vector<32x64xf32>
    %83 = vector.extract_strided_slice %81 {offsets = [0, 0, 0, 0, 0], sizes = [2, 2, 1, 8, 64], strides = [1, 1, 1, 1, 1]} : vector<2x3x3x8x64xf32> to vector<2x2x1x8x64xf32>
    %84 = vector.shape_cast %83 : vector<2x2x1x8x64xf32> to vector<2x2x8x64xf32>
    %85 = vector.shape_cast %84 : vector<2x2x8x64xf32> to vector<32x64xf32>
    %c0_57 = arith.constant 0 : index
    %c0_58 = arith.constant 0 : index
    %c0_59 = arith.constant 0 : index
    %86 = vector.load %arg7[%c0_57, %c0_58, %c0_59] : memref<6x64x64xf32, #tpu.memory_space<vmem>>, vector<1x64x64xf32>
    %87 = vector.shape_cast %86 : vector<1x64x64xf32> to vector<64x64xf32>
    %cst_60 = arith.constant dense<0.000000e+00> : vector<32x64xf32>
    %88 = tpu.matmul %85, %87, %cst_60 {dimension_numbers = #tpu.dot_dimension_numbers<[1], [0], [0], [1], [0, 0, 1, 1], [], []>} : vector<32x64xf32>, vector<64x64xf32>, vector<32x64xf32> -> vector<32x64xf32>
    %89 = arith.addf %82, %88 : vector<32x64xf32>
    %90 = vector.extract_strided_slice %81 {offsets = [0, 0, 1, 0, 0], sizes = [2, 2, 1, 8, 64], strides = [1, 1, 1, 1, 1]} : vector<2x3x3x8x64xf32> to vector<2x2x1x8x64xf32>
    %91 = vector.shape_cast %90 : vector<2x2x1x8x64xf32> to vector<2x2x8x64xf32>
    %92 = vector.shape_cast %91 : vector<2x2x8x64xf32> to vector<32x64xf32>
    %c1_61 = arith.constant 1 : index
    %c0_62 = arith.constant 0 : index
    %c0_63 = arith.constant 0 : index
    %93 = vector.load %arg7[%c1_61, %c0_62, %c0_63] : memref<6x64x64xf32, #tpu.memory_space<vmem>>, vector<1x64x64xf32>
    %94 = vector.shape_cast %93 : vector<1x64x64xf32> to vector<64x64xf32>
    %cst_64 = arith.constant dense<0.000000e+00> : vector<32x64xf32>
    %95 = tpu.matmul %92, %94, %cst_64 {dimension_numbers = #tpu.dot_dimension_numbers<[1], [0], [0], [1], [0, 0, 1, 1], [], []>} : vector<32x64xf32>, vector<64x64xf32>, vector<32x64xf32> -> vector<32x64xf32>
    %96 = arith.addf %89, %95 : vector<32x64xf32>
    %97 = vector.extract_strided_slice %81 {offsets = [0, 0, 2, 0, 0], sizes = [2, 2, 1, 8, 64], strides = [1, 1, 1, 1, 1]} : vector<2x3x3x8x64xf32> to vector<2x2x1x8x64xf32>
    %98 = vector.shape_cast %97 : vector<2x2x1x8x64xf32> to vector<2x2x8x64xf32>
    %99 = vector.shape_cast %98 : vector<2x2x8x64xf32> to vector<32x64xf32>
    %c2_65 = arith.constant 2 : index
    %c0_66 = arith.constant 0 : index
    %c0_67 = arith.constant 0 : index
    %100 = vector.load %arg7[%c2_65, %c0_66, %c0_67] : memref<6x64x64xf32, #tpu.memory_space<vmem>>, vector<1x64x64xf32>
    %101 = vector.shape_cast %100 : vector<1x64x64xf32> to vector<64x64xf32>
    %cst_68 = arith.constant dense<0.000000e+00> : vector<32x64xf32>
    %102 = tpu.matmul %99, %101, %cst_68 {dimension_numbers = #tpu.dot_dimension_numbers<[1], [0], [0], [1], [0, 0, 1, 1], [], []>} : vector<32x64xf32>, vector<64x64xf32>, vector<32x64xf32> -> vector<32x64xf32>
    %103 = arith.addf %96, %102 : vector<32x64xf32>
    %104 = vector.extract_strided_slice %81 {offsets = [0, 1, 0, 0, 0], sizes = [2, 2, 1, 8, 64], strides = [1, 1, 1, 1, 1]} : vector<2x3x3x8x64xf32> to vector<2x2x1x8x64xf32>
    %105 = vector.shape_cast %104 : vector<2x2x1x8x64xf32> to vector<2x2x8x64xf32>
    %106 = vector.shape_cast %105 : vector<2x2x8x64xf32> to vector<32x64xf32>
    %c3_69 = arith.constant 3 : index
    %c0_70 = arith.constant 0 : index
    %c0_71 = arith.constant 0 : index
    %107 = vector.load %arg7[%c3_69, %c0_70, %c0_71] : memref<6x64x64xf32, #tpu.memory_space<vmem>>, vector<1x64x64xf32>
    %108 = vector.shape_cast %107 : vector<1x64x64xf32> to vector<64x64xf32>
    %cst_72 = arith.constant dense<0.000000e+00> : vector<32x64xf32>
    %109 = tpu.matmul %106, %108, %cst_72 {dimension_numbers = #tpu.dot_dimension_numbers<[1], [0], [0], [1], [0, 0, 1, 1], [], []>} : vector<32x64xf32>, vector<64x64xf32>, vector<32x64xf32> -> vector<32x64xf32>
    %110 = arith.addf %103, %109 : vector<32x64xf32>
    %111 = vector.extract_strided_slice %81 {offsets = [0, 1, 1, 0, 0], sizes = [2, 2, 1, 8, 64], strides = [1, 1, 1, 1, 1]} : vector<2x3x3x8x64xf32> to vector<2x2x1x8x64xf32>
    %112 = vector.shape_cast %111 : vector<2x2x1x8x64xf32> to vector<2x2x8x64xf32>
    %113 = vector.shape_cast %112 : vector<2x2x8x64xf32> to vector<32x64xf32>
    %c4_73 = arith.constant 4 : index
    %c0_74 = arith.constant 0 : index
    %c0_75 = arith.constant 0 : index
    %114 = vector.load %arg7[%c4_73, %c0_74, %c0_75] : memref<6x64x64xf32, #tpu.memory_space<vmem>>, vector<1x64x64xf32>
    %115 = vector.shape_cast %114 : vector<1x64x64xf32> to vector<64x64xf32>
    %cst_76 = arith.constant dense<0.000000e+00> : vector<32x64xf32>
    %116 = tpu.matmul %113, %115, %cst_76 {dimension_numbers = #tpu.dot_dimension_numbers<[1], [0], [0], [1], [0, 0, 1, 1], [], []>} : vector<32x64xf32>, vector<64x64xf32>, vector<32x64xf32> -> vector<32x64xf32>
    %117 = arith.addf %110, %116 : vector<32x64xf32>
    %118 = vector.extract_strided_slice %81 {offsets = [0, 1, 2, 0, 0], sizes = [2, 2, 1, 8, 64], strides = [1, 1, 1, 1, 1]} : vector<2x3x3x8x64xf32> to vector<2x2x1x8x64xf32>
    %119 = vector.shape_cast %118 : vector<2x2x1x8x64xf32> to vector<2x2x8x64xf32>
    %120 = vector.shape_cast %119 : vector<2x2x8x64xf32> to vector<32x64xf32>
    %c5_77 = arith.constant 5 : index
    %c0_78 = arith.constant 0 : index
    %c0_79 = arith.constant 0 : index
    %121 = vector.load %arg7[%c5_77, %c0_78, %c0_79] : memref<6x64x64xf32, #tpu.memory_space<vmem>>, vector<1x64x64xf32>
    %122 = vector.shape_cast %121 : vector<1x64x64xf32> to vector<64x64xf32>
    %cst_80 = arith.constant dense<0.000000e+00> : vector<32x64xf32>
    %123 = tpu.matmul %120, %122, %cst_80 {dimension_numbers = #tpu.dot_dimension_numbers<[1], [0], [0], [1], [0, 0, 1, 1], [], []>} : vector<32x64xf32>, vector<64x64xf32>, vector<32x64xf32> -> vector<32x64xf32>
    %124 = arith.addf %117, %123 : vector<32x64xf32>
    %c0_81 = arith.constant 0 : index
    %c0_82 = arith.constant 0 : index
    %125 = vector.load %arg8[%c0_81, %c0_82] : memref<1x64xf32, #tpu.memory_space<vmem>>, vector<1x64xf32>
    %126 = vector.broadcast %125 : vector<1x64xf32> to vector<32x64xf32>
    %127 = arith.addf %124, %126 : vector<32x64xf32>
    %cst_83 = arith.constant 0.000000e+00 : f32
    %128 = vector.broadcast %cst_83 : f32 to vector<32x64xf32>
    %129 = arith.maximumf %127, %128 : vector<32x64xf32>
    %c0_84 = arith.constant 0 : index
    %c0_85 = arith.constant 0 : index
    %130 = vector.load %arg11[%c0_84, %c0_85] : memref<32x64xf32, #tpu.memory_space<vmem>>, vector<32x64xf32>
    tpu.vector_store %arg11[%c0_84, %c0_85], %129 {strides = array<i32>} : memref<32x64xf32, #tpu.memory_space<vmem>>, vector<32x64xf32>,
    %cst_86 = arith.constant 0.000000e+00 : f32
    %131 = vector.broadcast %cst_86 : f32 to vector<2x12xf32>
    %c0_87 = arith.constant 0 : index
    %c0_88 = arith.constant 0 : index
    %132 = tpu.strided_load %arg11[%c0_87, %c0_88] {strides = array<i32: 16, 1>} : memref<32x64xf32, #tpu.memory_space<vmem>>, vector<2x64xf32>
    %c0_89 = arith.constant 0 : index
    %c0_90 = arith.constant 0 : index
    %c0_91 = arith.constant 0 : index
    %133 = vector.load %arg9[%c0_89, %c0_90, %c0_91] : memref<16x64x12xf32, #tpu.memory_space<vmem>>, vector<1x64x12xf32>
    %134 = vector.shape_cast %133 : vector<1x64x12xf32> to vector<64x12xf32>
    %cst_92 = arith.constant dense<0.000000e+00> : vector<2x12xf32>
    %135 = tpu.matmul %132, %134, %cst_92 {dimension_numbers = #tpu.dot_dimension_numbers<[1], [0], [0], [1], [0, 0, 1, 1], [], []>} : vector<2x64xf32>, vector<64x12xf32>, vector<2x12xf32> -> vector<2x12xf32>
    %136 = arith.addf %131, %135 : vector<2x12xf32>
    %c1_93 = arith.constant 1 : index
    %c0_94 = arith.constant 0 : index
    %137 = tpu.strided_load %arg11[%c1_93, %c0_94] {strides = array<i32: 16, 1>} : memref<32x64xf32, #tpu.memory_space<vmem>>, vector<2x64xf32>
    %c1_95 = arith.constant 1 : index
    %c0_96 = arith.constant 0 : index
    %c0_97 = arith.constant 0 : index
    %138 = vector.load %arg9[%c1_95, %c0_96, %c0_97] : memref<16x64x12xf32, #tpu.memory_space<vmem>>, vector<1x64x12xf32>
    %139 = vector.shape_cast %138 : vector<1x64x12xf32> to vector<64x12xf32>
    %cst_98 = arith.constant dense<0.000000e+00> : vector<2x12xf32>
    %140 = tpu.matmul %137, %139, %cst_98 {dimension_numbers = #tpu.dot_dimension_numbers<[1], [0], [0], [1], [0, 0, 1, 1], [], []>} : vector<2x64xf32>, vector<64x12xf32>, vector<2x12xf32> -> vector<2x12xf32>
    %141 = arith.addf %136, %140 : vector<2x12xf32>
    %c2_99 = arith.constant 2 : index
    %c0_100 = arith.constant 0 : index
    %142 = tpu.strided_load %arg11[%c2_99, %c0_100] {strides = array<i32: 16, 1>} : memref<32x64xf32, #tpu.memory_space<vmem>>, vector<2x64xf32>
    %c2_101 = arith.constant 2 : index
    %c0_102 = arith.constant 0 : index
    %c0_103 = arith.constant 0 : index
    %143 = vector.load %arg9[%c2_101, %c0_102, %c0_103] : memref<16x64x12xf32, #tpu.memory_space<vmem>>, vector<1x64x12xf32>
    %144 = vector.shape_cast %143 : vector<1x64x12xf32> to vector<64x12xf32>
    %cst_104 = arith.constant dense<0.000000e+00> : vector<2x12xf32>
    %145 = tpu.matmul %142, %144, %cst_104 {dimension_numbers = #tpu.dot_dimension_numbers<[1], [0], [0], [1], [0, 0, 1, 1], [], []>} : vector<2x64xf32>, vector<64x12xf32>, vector<2x12xf32> -> vector<2x12xf32>
    %146 = arith.addf %141, %145 : vector<2x12xf32>
    %c3_105 = arith.constant 3 : index
    %c0_106 = arith.constant 0 : index
    %147 = tpu.strided_load %arg11[%c3_105, %c0_106] {strides = array<i32: 16, 1>} : memref<32x64xf32, #tpu.memory_space<vmem>>, vector<2x64xf32>
    %c3_107 = arith.constant 3 : index
    %c0_108 = arith.constant 0 : index
    %c0_109 = arith.constant 0 : index
    %148 = vector.load %arg9[%c3_107, %c0_108, %c0_109] : memref<16x64x12xf32, #tpu.memory_space<vmem>>, vector<1x64x12xf32>
    %149 = vector.shape_cast %148 : vector<1x64x12xf32> to vector<64x12xf32>
    %cst_110 = arith.constant dense<0.000000e+00> : vector<2x12xf32>
    %150 = tpu.matmul %147, %149, %cst_110 {dimension_numbers = #tpu.dot_dimension_numbers<[1], [0], [0], [1], [0, 0, 1, 1], [], []>} : vector<2x64xf32>, vector<64x12xf32>, vector<2x12xf32> -> vector<2x12xf32>
    %151 = arith.addf %146, %150 : vector<2x12xf32>
    %c4_111 = arith.constant 4 : index
    %c0_112 = arith.constant 0 : index
    %152 = tpu.strided_load %arg11[%c4_111, %c0_112] {strides = array<i32: 16, 1>} : memref<32x64xf32, #tpu.memory_space<vmem>>, vector<2x64xf32>
    %c4_113 = arith.constant 4 : index
    %c0_114 = arith.constant 0 : index
    %c0_115 = arith.constant 0 : index
    %153 = vector.load %arg9[%c4_113, %c0_114, %c0_115] : memref<16x64x12xf32, #tpu.memory_space<vmem>>, vector<1x64x12xf32>
    %154 = vector.shape_cast %153 : vector<1x64x12xf32> to vector<64x12xf32>
    %cst_116 = arith.constant dense<0.000000e+00> : vector<2x12xf32>
    %155 = tpu.matmul %152, %154, %cst_116 {dimension_numbers = #tpu.dot_dimension_numbers<[1], [0], [0], [1], [0, 0, 1, 1], [], []>} : vector<2x64xf32>, vector<64x12xf32>, vector<2x12xf32> -> vector<2x12xf32>
    %156 = arith.addf %151, %155 : vector<2x12xf32>
    %c5_117 = arith.constant 5 : index
    %c0_118 = arith.constant 0 : index
    %157 = tpu.strided_load %arg11[%c5_117, %c0_118] {strides = array<i32: 16, 1>} : memref<32x64xf32, #tpu.memory_space<vmem>>, vector<2x64xf32>
    %c5_119 = arith.constant 5 : index
    %c0_120 = arith.constant 0 : index
    %c0_121 = arith.constant 0 : index
    %158 = vector.load %arg9[%c5_119, %c0_120, %c0_121] : memref<16x64x12xf32, #tpu.memory_space<vmem>>, vector<1x64x12xf32>
    %159 = vector.shape_cast %158 : vector<1x64x12xf32> to vector<64x12xf32>
    %cst_122 = arith.constant dense<0.000000e+00> : vector<2x12xf32>
    %160 = tpu.matmul %157, %159, %cst_122 {dimension_numbers = #tpu.dot_dimension_numbers<[1], [0], [0], [1], [0, 0, 1, 1], [], []>} : vector<2x64xf32>, vector<64x12xf32>, vector<2x12xf32> -> vector<2x12xf32>
    %161 = arith.addf %156, %160 : vector<2x12xf32>
    %c6 = arith.constant 6 : index
    %c0_123 = arith.constant 0 : index
    %162 = tpu.strided_load %arg11[%c6, %c0_123] {strides = array<i32: 16, 1>} : memref<32x64xf32, #tpu.memory_space<vmem>>, vector<2x64xf32>
    %c6_124 = arith.constant 6 : index
    %c0_125 = arith.constant 0 : index
    %c0_126 = arith.constant 0 : index
    %163 = vector.load %arg9[%c6_124, %c0_125, %c0_126] : memref<16x64x12xf32, #tpu.memory_space<vmem>>, vector<1x64x12xf32>
    %164 = vector.shape_cast %163 : vector<1x64x12xf32> to vector<64x12xf32>
    %cst_127 = arith.constant dense<0.000000e+00> : vector<2x12xf32>
    %165 = tpu.matmul %162, %164, %cst_127 {dimension_numbers = #tpu.dot_dimension_numbers<[1], [0], [0], [1], [0, 0, 1, 1], [], []>} : vector<2x64xf32>, vector<64x12xf32>, vector<2x12xf32> -> vector<2x12xf32>
    %166 = arith.addf %161, %165 : vector<2x12xf32>
    %c7 = arith.constant 7 : index
    %c0_128 = arith.constant 0 : index
    %167 = tpu.strided_load %arg11[%c7, %c0_128] {strides = array<i32: 16, 1>} : memref<32x64xf32, #tpu.memory_space<vmem>>, vector<2x64xf32>
    %c7_129 = arith.constant 7 : index
    %c0_130 = arith.constant 0 : index
    %c0_131 = arith.constant 0 : index
    %168 = vector.load %arg9[%c7_129, %c0_130, %c0_131] : memref<16x64x12xf32, #tpu.memory_space<vmem>>, vector<1x64x12xf32>
    %169 = vector.shape_cast %168 : vector<1x64x12xf32> to vector<64x12xf32>
    %cst_132 = arith.constant dense<0.000000e+00> : vector<2x12xf32>
    %170 = tpu.matmul %167, %169, %cst_132 {dimension_numbers = #tpu.dot_dimension_numbers<[1], [0], [0], [1], [0, 0, 1, 1], [], []>} : vector<2x64xf32>, vector<64x12xf32>, vector<2x12xf32> -> vector<2x12xf32>
    %171 = arith.addf %166, %170 : vector<2x12xf32>
    %c8 = arith.constant 8 : index
    %c0_133 = arith.constant 0 : index
    %172 = tpu.strided_load %arg11[%c8, %c0_133] {strides = array<i32: 16, 1>} : memref<32x64xf32, #tpu.memory_space<vmem>>, vector<2x64xf32>
    %c8_134 = arith.constant 8 : index
    %c0_135 = arith.constant 0 : index
    %c0_136 = arith.constant 0 : index
    %173 = vector.load %arg9[%c8_134, %c0_135, %c0_136] : memref<16x64x12xf32, #tpu.memory_space<vmem>>, vector<1x64x12xf32>
    %174 = vector.shape_cast %173 : vector<1x64x12xf32> to vector<64x12xf32>
    %cst_137 = arith.constant dense<0.000000e+00> : vector<2x12xf32>
    %175 = tpu.matmul %172, %174, %cst_137 {dimension_numbers = #tpu.dot_dimension_numbers<[1], [0], [0], [1], [0, 0, 1, 1], [], []>} : vector<2x64xf32>, vector<64x12xf32>, vector<2x12xf32> -> vector<2x12xf32>
    %176 = arith.addf %171, %175 : vector<2x12xf32>
    %c9 = arith.constant 9 : index
    %c0_138 = arith.constant 0 : index
    %177 = tpu.strided_load %arg11[%c9, %c0_138] {strides = array<i32: 16, 1>} : memref<32x64xf32, #tpu.memory_space<vmem>>, vector<2x64xf32>
    %c9_139 = arith.constant 9 : index
    %c0_140 = arith.constant 0 : index
    %c0_141 = arith.constant 0 : index
    %178 = vector.load %arg9[%c9_139, %c0_140, %c0_141] : memref<16x64x12xf32, #tpu.memory_space<vmem>>, vector<1x64x12xf32>
    %179 = vector.shape_cast %178 : vector<1x64x12xf32> to vector<64x12xf32>
    %cst_142 = arith.constant dense<0.000000e+00> : vector<2x12xf32>
    %180 = tpu.matmul %177, %179, %cst_142 {dimension_numbers = #tpu.dot_dimension_numbers<[1], [0], [0], [1], [0, 0, 1, 1], [], []>} : vector<2x64xf32>, vector<64x12xf32>, vector<2x12xf32> -> vector<2x12xf32>
    %181 = arith.addf %176, %180 : vector<2x12xf32>
    %c10 = arith.constant 10 : index
    %c0_143 = arith.constant 0 : index
    %182 = tpu.strided_load %arg11[%c10, %c0_143] {strides = array<i32: 16, 1>} : memref<32x64xf32, #tpu.memory_space<vmem>>, vector<2x64xf32>
    %c10_144 = arith.constant 10 : index
    %c0_145 = arith.constant 0 : index
    %c0_146 = arith.constant 0 : index
    %183 = vector.load %arg9[%c10_144, %c0_145, %c0_146] : memref<16x64x12xf32, #tpu.memory_space<vmem>>, vector<1x64x12xf32>
    %184 = vector.shape_cast %183 : vector<1x64x12xf32> to vector<64x12xf32>
    %cst_147 = arith.constant dense<0.000000e+00> : vector<2x12xf32>
    %185 = tpu.matmul %182, %184, %cst_147 {dimension_numbers = #tpu.dot_dimension_numbers<[1], [0], [0], [1], [0, 0, 1, 1], [], []>} : vector<2x64xf32>, vector<64x12xf32>, vector<2x12xf32> -> vector<2x12xf32>
    %186 = arith.addf %181, %185 : vector<2x12xf32>
    %c11 = arith.constant 11 : index
    %c0_148 = arith.constant 0 : index
    %187 = tpu.strided_load %arg11[%c11, %c0_148] {strides = array<i32: 16, 1>} : memref<32x64xf32, #tpu.memory_space<vmem>>, vector<2x64xf32>
    %c11_149 = arith.constant 11 : index
    %c0_150 = arith.constant 0 : index
    %c0_151 = arith.constant 0 : index
    %188 = vector.load %arg9[%c11_149, %c0_150, %c0_151] : memref<16x64x12xf32, #tpu.memory_space<vmem>>, vector<1x64x12xf32>
    %189 = vector.shape_cast %188 : vector<1x64x12xf32> to vector<64x12xf32>
    %cst_152 = arith.constant dense<0.000000e+00> : vector<2x12xf32>
    %190 = tpu.matmul %187, %189, %cst_152 {dimension_numbers = #tpu.dot_dimension_numbers<[1], [0], [0], [1], [0, 0, 1, 1], [], []>} : vector<2x64xf32>, vector<64x12xf32>, vector<2x12xf32> -> vector<2x12xf32>
    %191 = arith.addf %186, %190 : vector<2x12xf32>
    %c12 = arith.constant 12 : index
    %c0_153 = arith.constant 0 : index
    %192 = tpu.strided_load %arg11[%c12, %c0_153] {strides = array<i32: 16, 1>} : memref<32x64xf32, #tpu.memory_space<vmem>>, vector<2x64xf32>
    %c12_154 = arith.constant 12 : index
    %c0_155 = arith.constant 0 : index
    %c0_156 = arith.constant 0 : index
    %193 = vector.load %arg9[%c12_154, %c0_155, %c0_156] : memref<16x64x12xf32, #tpu.memory_space<vmem>>, vector<1x64x12xf32>
    %194 = vector.shape_cast %193 : vector<1x64x12xf32> to vector<64x12xf32>
    %cst_157 = arith.constant dense<0.000000e+00> : vector<2x12xf32>
    %195 = tpu.matmul %192, %194, %cst_157 {dimension_numbers = #tpu.dot_dimension_numbers<[1], [0], [0], [1], [0, 0, 1, 1], [], []>} : vector<2x64xf32>, vector<64x12xf32>, vector<2x12xf32> -> vector<2x12xf32>
    %196 = arith.addf %191, %195 : vector<2x12xf32>
    %c13 = arith.constant 13 : index
    %c0_158 = arith.constant 0 : index
    %197 = tpu.strided_load %arg11[%c13, %c0_158] {strides = array<i32: 16, 1>} : memref<32x64xf32, #tpu.memory_space<vmem>>, vector<2x64xf32>
    %c13_159 = arith.constant 13 : index
    %c0_160 = arith.constant 0 : index
    %c0_161 = arith.constant 0 : index
    %198 = vector.load %arg9[%c13_159, %c0_160, %c0_161] : memref<16x64x12xf32, #tpu.memory_space<vmem>>, vector<1x64x12xf32>
    %199 = vector.shape_cast %198 : vector<1x64x12xf32> to vector<64x12xf32>
    %cst_162 = arith.constant dense<0.000000e+00> : vector<2x12xf32>
    %200 = tpu.matmul %197, %199, %cst_162 {dimension_numbers = #tpu.dot_dimension_numbers<[1], [0], [0], [1], [0, 0, 1, 1], [], []>} : vector<2x64xf32>, vector<64x12xf32>, vector<2x12xf32> -> vector<2x12xf32>
    %201 = arith.addf %196, %200 : vector<2x12xf32>
    %c14 = arith.constant 14 : index
    %c0_163 = arith.constant 0 : index
    %202 = tpu.strided_load %arg11[%c14, %c0_163] {strides = array<i32: 16, 1>} : memref<32x64xf32, #tpu.memory_space<vmem>>, vector<2x64xf32>
    %c14_164 = arith.constant 14 : index
    %c0_165 = arith.constant 0 : index
    %c0_166 = arith.constant 0 : index
    %203 = vector.load %arg9[%c14_164, %c0_165, %c0_166] : memref<16x64x12xf32, #tpu.memory_space<vmem>>, vector<1x64x12xf32>
    %204 = vector.shape_cast %203 : vector<1x64x12xf32> to vector<64x12xf32>
    %cst_167 = arith.constant dense<0.000000e+00> : vector<2x12xf32>
    %205 = tpu.matmul %202, %204, %cst_167 {dimension_numbers = #tpu.dot_dimension_numbers<[1], [0], [0], [1], [0, 0, 1, 1], [], []>} : vector<2x64xf32>, vector<64x12xf32>, vector<2x12xf32> -> vector<2x12xf32>
    %206 = arith.addf %201, %205 : vector<2x12xf32>
    %c15 = arith.constant 15 : index
    %c0_168 = arith.constant 0 : index
    %207 = tpu.strided_load %arg11[%c15, %c0_168] {strides = array<i32: 16, 1>} : memref<32x64xf32, #tpu.memory_space<vmem>>, vector<2x64xf32>
    %c15_169 = arith.constant 15 : index
    %c0_170 = arith.constant 0 : index
    %c0_171 = arith.constant 0 : index
    %208 = vector.load %arg9[%c15_169, %c0_170, %c0_171] : memref<16x64x12xf32, #tpu.memory_space<vmem>>, vector<1x64x12xf32>
    %209 = vector.shape_cast %208 : vector<1x64x12xf32> to vector<64x12xf32>
    %cst_172 = arith.constant dense<0.000000e+00> : vector<2x12xf32>
    %210 = tpu.matmul %207, %209, %cst_172 {dimension_numbers = #tpu.dot_dimension_numbers<[1], [0], [0], [1], [0, 0, 1, 1], [], []>} : vector<2x64xf32>, vector<64x12xf32>, vector<2x12xf32> -> vector<2x12xf32>
    %211 = arith.addf %206, %210 : vector<2x12xf32>
    %c0_173 = arith.constant 0 : index
    %c0_174 = arith.constant 0 : index
    %212 = vector.load %arg10[%c0_173, %c0_174] : memref<1x12xf32, #tpu.memory_space<vmem>>, vector<1x12xf32>
    %213 = vector.broadcast %212 : vector<1x12xf32> to vector<2x12xf32>
    %214 = arith.addf %211, %213 : vector<2x12xf32>
    %c0_175 = arith.constant 0 : index
    %c0_176 = arith.constant 0 : index
    %215 = vector.load %arg12[%c0_175, %c0_176] : memref<2x12xf32, #tpu.memory_space<vmem>>, vector<2x12xf32>
    tpu.vector_store %arg12[%c0_175, %c0_176], %214 {strides = array<i32>} : memref<2x12xf32, #tpu.memory_space<vmem>>, vector<2x12xf32>,
    return
  }
  func.func @transform_0(%arg0: i32) -> (i32, i32, i32, i32) {
    %c0_i32 = arith.constant 0 : i32
    %c0_i32_0 = arith.constant 0 : i32
    %c0_i32_1 = arith.constant 0 : i32
    %c0_i32_2 = arith.constant 0 : i32
    %c0_i32_3 = arith.constant 0 : i32
    return %c0_i32, %c0_i32_0, %c0_i32_1, %c0_i32_2 : i32, i32, i32, i32
  }
  func.func @transform_1(%arg0: i32) -> (i32, i32) {
    %c0_i32 = arith.constant 0 : i32
    %c0_i32_0 = arith.constant 0 : i32
    %c0_i32_1 = arith.constant 0 : i32
    return %c0_i32, %c0_i32_0 : i32, i32
  }
  func.func @transform_2(%arg0: i32) -> (i32, i32) {
    %c0_i32 = arith.constant 0 : i32
    %c0_i32_0 = arith.constant 0 : i32
    %c0_i32_1 = arith.constant 0 : i32
    return %c0_i32, %c0_i32_0 : i32, i32
  }
  func.func @transform_3(%arg0: i32) -> (i32, i32) {
    %c0_i32 = arith.constant 0 : i32
    %c0_i32_0 = arith.constant 0 : i32
    %c0_i32_1 = arith.constant 0 : i32
    return %c0_i32, %c0_i32_0 : i32, i32
  }
  func.func @transform_4(%arg0: i32) -> (i32, i32, i32) {
    %c0_i32 = arith.constant 0 : i32
    %c0_i32_0 = arith.constant 0 : i32
    %c0_i32_1 = arith.constant 0 : i32
    %c0_i32_2 = arith.constant 0 : i32
    return %c0_i32, %c0_i32_0, %c0_i32_1 : i32, i32, i32
  }
  func.func @transform_5(%arg0: i32) -> (i32, i32) {
    %c0_i32 = arith.constant 0 : i32
    %c0_i32_0 = arith.constant 0 : i32
    %c0_i32_1 = arith.constant 0 : i32
    return %c0_i32, %c0_i32_0 : i32, i32
  }
  func.func @transform_6(%arg0: i32) -> (i32, i32, i32) {
    %c0_i32 = arith.constant 0 : i32
    %c0_i32_0 = arith.constant 0 : i32
    %c0_i32_1 = arith.constant 0 : i32
    %c0_i32_2 = arith.constant 0 : i32
    return %c0_i32, %c0_i32_0, %c0_i32_1 : i32, i32, i32
  }
  func.func @transform_7(%arg0: i32) -> (i32, i32) {
    %c0_i32 = arith.constant 0 : i32
    %c0_i32_0 = arith.constant 0 : i32
    %c0_i32_1 = arith.constant 0 : i32
    return %c0_i32, %c0_i32_0 : i32, i32
  }
  func.func @transform_8(%arg0: i32) -> (i32, i32, i32) {
    %c0_i32 = arith.constant 0 : i32
    %c0_i32_0 = arith.constant 0 : i32
    %c0_i32_1 = arith.constant 0 : i32
    %c0_i32_2 = arith.constant 0 : i32
    return %c0_i32, %c0_i32_0, %c0_i32_1 : i32, i32, i32
  }
  func.func @transform_9(%arg0: i32) -> (i32, i32) {
    %c0_i32 = arith.constant 0 : i32
    %c0_i32_0 = arith.constant 0 : i32
    %c0_i32_1 = arith.constant 0 : i32
    return %c0_i32, %c0_i32_0 : i32, i32
  }
  func.func @transform_10(%arg0: i32) -> (i32, i32) {
    %c0_i32 = arith.constant 0 : i32
    %c0_i32_0 = arith.constant 0 : i32
    %c0_i32_1 = arith.constant 0 : i32
    return %c0_i32, %c0_i32_0 : i32, i32
  }
  func.func @transform_11(%arg0: i32) -> (i32, i32) {
    %c0_i32 = arith.constant 0 : i32
    %c0_i32_0 = arith.constant 0 : i32
    %c0_i32_1 = arith.constant 0 : i32
    return %c0_i32, %c0_i32_0 : i32, i32
  }
}

</mosaic_0001>

<llo_original>
// kernel: cnn_tiny_forward.1
$region0: #{cnn_tiny_forward.1}
  #allocation0 [shape = 'u32[]', space=smem, size = 0x4, offset = 0x4, fixed_abs, tag = 'smem constant byte address 0x4 - core index']
  #allocation1 [shape = 'u32[144,128]{1,0:T(1,128)}', space=vmem, size = 0x12000, scoped, tag = 'internal scratch']
  #allocation2 [shape = 'f32[1536,16]{1,0:T(8,128)}', space=vmem, size = 0xc0000, scoped, tag = 'scratch operand']
  #allocation3 [shape = 'f32[288,32]{1,0:T(8,128)}', space=vmem, size = 0x24000, scoped, tag = 'scratch operand']
  %s0 = inlined_call_operand.vmem [shape: f32[2,23,32,6], index: 0, kind: input, shape index: {}]
  %s1 = inlined_call_operand.vmem [shape: f32[6,16], index: 1, kind: input, shape index: {}]
  %s2 = inlined_call_operand.vmem [shape: f32[6,16], index: 2, kind: input, shape index: {}]
  %s3 = inlined_call_operand.vmem [shape: f32[1,16], index: 3, kind: input, shape index: {}]
  %s4 = inlined_call_operand.vmem [shape: f32[6,32,32], index: 4, kind: input, shape index: {}]
  %s5 = inlined_call_operand.vmem [shape: f32[1,32], index: 5, kind: input, shape index: {}]
  %s6 = inlined_call_operand.vmem [shape: f32[6,64,64], index: 6, kind: input, shape index: {}]
  %s7 = inlined_call_operand.vmem [shape: f32[1,64], index: 7, kind: input, shape index: {}]
  %s8 = inlined_call_operand.vmem [shape: f32[16,64,12], index: 8, kind: input, shape index: {}]
  %s9 = inlined_call_operand.vmem [shape: f32[1,12], index: 9, kind: input, shape index: {}]
  %s10 = inlined_call_operand.vmem [shape: f32[32,64], index: 10, kind: output, shape index: {0}]
  %s11 = inlined_call_operand.hbm [shape: f32[2,12], index: 11, kind: output, shape index: {1}]
  %12 = xla_tuple %s10, %s11
  %s13 = sld [smem:[#allocation0]]
  $region58: #{cnn_tiny_forward.1} parent=0
    _
  %s15 = ssub.s32 1, %s13
  %s16 = scalar_select 0, %s15, %s13
  $region1: #{cnn_tiny_forward.1} parent=0
    #allocation4 [shape = 'u8[1024]{0}', space=vmem, size = 0x400, scoped, tag = 'output window, operand 1, single buffered']
    #allocation5 [shape = 's32[1]{0}', space=sflag, size = 0x4, scoped, tag = 'scoped memory for cnn_tiny_forward.1']
    %17 = vsyncpa [#allocation5], 0
    // Predicated region
    $region2: #{cnn_tiny_forward.1} parent=1 // pred_check
      _
    $region3: #{cnn_tiny_forward.1} parent=1 // pred_check_branch
      %19 = sbr.rel (0) target = $region5
    $region4: #{cnn_tiny_forward.1} parent=1 // pred_region
      _
    $region5: #{cnn_tiny_forward.1} parent=1 // pred_fallthru
      _
    // Predicated region
    $region6: #{cnn_tiny_forward.1} parent=1 // pred_check
      _
    $region7: #{cnn_tiny_forward.1} parent=1 // pred_check_branch
      %21 = sbr.rel (0) target = $region9
    $region8: #{cnn_tiny_forward.1} parent=1 // pred_region
      _
    $region9: #{cnn_tiny_forward.1} parent=1 // pred_fallthru
      _
    // Predicated region
    $region10: #{cnn_tiny_forward.1} parent=1 // pred_check
      _
    $region11: #{cnn_tiny_forward.1} parent=1 // pred_check_branch
      %23 = sbr.rel (0) target = $region13
    $region12: #{cnn_tiny_forward.1} parent=1 // pred_region
      _
    $region13: #{cnn_tiny_forward.1} parent=1 // pred_fallthru
      _
    // Predicated region
    $region14: #{cnn_tiny_forward.1} parent=1 // pred_check
      _
    $region15: #{cnn_tiny_forward.1} parent=1 // pred_check_branch
      %25 = sbr.rel (0) target = $region17
    $region16: #{cnn_tiny_forward.1} parent=1 // pred_region
      _
    $region17: #{cnn_tiny_forward.1} parent=1 // pred_fallthru
      _
    // Predicated region
    $region18: #{cnn_tiny_forward.1} parent=1 // pred_check
      _
    $region19: #{cnn_tiny_forward.1} parent=1 // pred_check_branch
      %27 = sbr.rel (0) target = $region21
    $region20: #{cnn_tiny_forward.1} parent=1 // pred_region
      _
    $region21: #{cnn_tiny_forward.1} parent=1 // pred_fallthru
      _
    // Predicated region
    $region22: #{cnn_tiny_forward.1} parent=1 // pred_check
      _
    $region23: #{cnn_tiny_forward.1} parent=1 // pred_check_branch
      %29 = sbr.rel (0) target = $region25
    $region24: #{cnn_tiny_forward.1} parent=1 // pred_region
      _
    $region25: #{cnn_tiny_forward.1} parent=1 // pred_fallthru
      _
    // Predicated region
    $region26: #{cnn_tiny_forward.1} parent=1 // pred_check
      _
    $region27: #{cnn_tiny_forward.1} parent=1 // pred_check_branch
      %31 = sbr.rel (0) target = $region29
    $region28: #{cnn_tiny_forward.1} parent=1 // pred_region
      _
    $region29: #{cnn_tiny_forward.1} parent=1 // pred_fallthru
      _
    // Predicated region
    $region30: #{cnn_tiny_forward.1} parent=1 // pred_check
      _
    $region31: #{cnn_tiny_forward.1} parent=1 // pred_check_branch
      %33 = sbr.rel (0) target = $region33
    $region32: #{cnn_tiny_forward.1} parent=1 // pred_region
      _
    $region33: #{cnn_tiny_forward.1} parent=1 // pred_fallthru
      _
    // Predicated region
    $region34: #{cnn_tiny_forward.1} parent=1 // pred_check
      _
    $region35: #{cnn_tiny_forward.1} parent=1 // pred_check_branch
      %35 = sbr.rel (0) target = $region37
    $region36: #{cnn_tiny_forward.1} parent=1 // pred_region
      _
    $region37: #{cnn_tiny_forward.1} parent=1 // pred_fallthru
      _
    // Predicated region
    $region38: #{cnn_tiny_forward.1} parent=1 // pred_check
      _
    $region39: #{cnn_tiny_forward.1} parent=1 // pred_check_branch
      %37 = sbr.rel (0) target = $region41
    $region40: #{cnn_tiny_forward.1} parent=1 // pred_region
      _
    $region41: #{cnn_tiny_forward.1} parent=1 // pred_fallthru
      _
    %v38 = vld [vmem:[%s0] sm:$0xff]
    %v39 = vld [vmem:[%s0 + $0x8] sm:$0xff]
    %v40 = vld [vmem:[%s0 + $0x10] sm:$0xff]
    %v41 = vld [vmem:[%s0 + $0x18] sm:$0xff]
    %v42 = vld [vmem:[%s0 + $0x20] sm:$0xff]
    %v43 = vld [vmem:[%s0 + $0x28] sm:$0xff]
    %v44 = vld [vmem:[%s0 + $0x30] sm:$0xff]
    %v45 = vld [vmem:[%s0 + $0x38] sm:$0xff]
    %v46 = vld [vmem:[%s0 + $0x40] sm:$0xff]
    %v47 = vld [vmem:[%s0 + $0x48] sm:$0xff]
    %v48 = vld [vmem:[%s0 + $0x50] sm:$0xff]
    %v49 = vld [vmem:[%s0 + $0x58] sm:$0xff]
    %v50 = vld [vmem:[%s0 + $0x60] sm:$0xff]
    %v51 = vld [vmem:[%s0 + $0x68] sm:$0xff]
    %v52 = vld [vmem:[%s0 + $0x70] sm:$0xff]
    %v53 = vld [vmem:[%s0 + $0x78] sm:$0xff]
    %v54 = vld [vmem:[%s0 + $0x80] sm:$0xff]
    %v55 = vld [vmem:[%s0 + $0x88] sm:$0xff]
    %v56 = vld [vmem:[%s0 + $0x90] sm:$0xff]
    %v57 = vld [vmem:[%s0 + $0x98] sm:$0xff]
    %v58 = vld [vmem:[%s0 + $0xa0] sm:$0xff]
    %v59 = vld [vmem:[%s0 + $0xa8] sm:$0xff]
    %v60 = vld [vmem:[%s0 + $0xb0] sm:$0xff]
    %v61 = vld [vmem:[%s0 + $0xb8] sm:$0xff]
    %v62 = vld [vmem:[%s0 + $0xc0] sm:$0xff]
    %v63 = vld [vmem:[%s0 + $0xc8] sm:$0xff]
    %v64 = vld [vmem:[%s0 + $0xd0] sm:$0xff]
    %v65 = vld [vmem:[%s0 + $0xd8] sm:$0xff]
    %v66 = vld [vmem:[%s0 + $0xe0] sm:$0xff]
    %v67 = vld [vmem:[%s0 + $0xe8] sm:$0xff]
    %v68 = vld [vmem:[%s0 + $0xf0] sm:$0xff]
    %v69 = vld [vmem:[%s0 + $0xf8] sm:$0xff]
    %v70 = vld [vmem:[%s0 + $0x100] sm:$0xff]
    %v71 = vld [vmem:[%s0 + $0x108] sm:$0xff]
    %v72 = vld [vmem:[%s0 + $0x110] sm:$0xff]
    %v73 = vld [vmem:[%s0 + $0x118] sm:$0xff]
    %v74 = vld [vmem:[%s0 + $0x120] sm:$0xff]
    %v75 = vld [vmem:[%s0 + $0x128] sm:$0xff]
    %v76 = vld [vmem:[%s0 + $0x130] sm:$0xff]
    %v77 = vld [vmem:[%s0 + $0x138] sm:$0xff]
    %v78 = vld [vmem:[%s0 + $0x140] sm:$0xff]
    %v79 = vld [vmem:[%s0 + $0x148] sm:$0xff]
    %v80 = vld [vmem:[%s0 + $0x150] sm:$0xff]
    %v81 = vld [vmem:[%s0 + $0x158] sm:$0xff]
    %v82 = vld [vmem:[%s0 + $0x160] sm:$0xff]
    %v83 = vld [vmem:[%s0 + $0x168] sm:$0xff]
    %v84 = vld [vmem:[%s0 + $0x170] sm:$0xff]
    %v85 = vld [vmem:[%s0 + $0x178] sm:$0xff]
    %v86 = vld [vmem:[%s0 + $0x180] sm:$0xff]
    %v87 = vld [vmem:[%s0 + $0x188] sm:$0xff]
    %v88 = vld [vmem:[%s0 + $0x190] sm:$0xff]
    %v89 = vld [vmem:[%s0 + $0x198] sm:$0xff]
    %v90 = vld [vmem:[%s0 + $0x1a0] sm:$0xff]
    %v91 = vld [vmem:[%s0 + $0x1a8] sm:$0xff]
    %v92 = vld [vmem:[%s0 + $0x1b0] sm:$0xff]
    %v93 = vld [vmem:[%s0 + $0x1b8] sm:$0xff]
    %v94 = vld [vmem:[%s0 + $0x1c0] sm:$0xff]
    %v95 = vld [vmem:[%s0 + $0x1c8] sm:$0xff]
    %v96 = vld [vmem:[%s0 + $0x1d0] sm:$0xff]
    %v97 = vld [vmem:[%s0 + $0x1d8] sm:$0xff]
    %v98 = vld [vmem:[%s0 + $0x1e0] sm:$0xff]
    %v99 = vld [vmem:[%s0 + $0x1e8] sm:$0xff]
    %v100 = vld [vmem:[%s0 + $0x1f0] sm:$0xff]
    %v101 = vld [vmem:[%s0 + $0x1f8] sm:$0xff]
    %v102 = vld [vmem:[%s0 + $0x200] sm:$0xff]
    %v103 = vld [vmem:[%s0 + $0x208] sm:$0xff]
    %v104 = vld [vmem:[%s0 + $0x210] sm:$0xff]
    %v105 = vld [vmem:[%s0 + $0x218] sm:$0xff]
    %v106 = vld [vmem:[%s0 + $0x220] sm:$0xff]
    %v107 = vld [vmem:[%s0 + $0x228] sm:$0xff]
    %v108 = vld [vmem:[%s0 + $0x230] sm:$0xff]
    %v109 = vld [vmem:[%s0 + $0x238] sm:$0xff]
    %v110 = vld [vmem:[%s0 + $0x240] sm:$0xff]
    %v111 = vld [vmem:[%s0 + $0x248] sm:$0xff]
    %v112 = vld [vmem:[%s0 + $0x250] sm:$0xff]
    %v113 = vld [vmem:[%s0 + $0x258] sm:$0xff]
    %v114 = vld [vmem:[%s0 + $0x260] sm:$0xff]
    %v115 = vld [vmem:[%s0 + $0x268] sm:$0xff]
    %v116 = vld [vmem:[%s0 + $0x270] sm:$0xff]
    %v117 = vld [vmem:[%s0 + $0x278] sm:$0xff]
    %v118 = vld [vmem:[%s0 + $0x280] sm:$0xff]
    %v119 = vld [vmem:[%s0 + $0x288] sm:$0xff]
    %v120 = vld [vmem:[%s0 + $0x290] sm:$0xff]
    %v121 = vld [vmem:[%s0 + $0x298] sm:$0xff]
    %v122 = vld [vmem:[%s0 + $0x2a0] sm:$0xff]
    %v123 = vld [vmem:[%s0 + $0x2a8] sm:$0xff]
    %v124 = vld [vmem:[%s0 + $0x2b0] sm:$0xff]
    %v125 = vld [vmem:[%s0 + $0x2b8] sm:$0xff]
    %v126 = vld [vmem:[%s0 + $0x2e0] sm:$0xff]
    %v127 = vld [vmem:[%s0 + $0x2e8] sm:$0xff]
    %v128 = vld [vmem:[%s0 + $0x2f0] sm:$0xff]
    %v129 = vld [vmem:[%s0 + $0x2f8] sm:$0xff]
    %v130 = vld [vmem:[%s0 + $0x300] sm:$0xff]
    %v131 = vld [vmem:[%s0 + $0x308] sm:$0xff]
    %v132 = vld [vmem:[%s0 + $0x310] sm:$0xff]
    %v133 = vld [vmem:[%s0 + $0x318] sm:$0xff]
    %v134 = vld [vmem:[%s0 + $0x320] sm:$0xff]
    %v135 = vld [vmem:[%s0 + $0x328] sm:$0xff]
    %v136 = vld [vmem:[%s0 + $0x330] sm:$0xff]
    %v137 = vld [vmem:[%s0 + $0x338] sm:$0xff]
    %v138 = vld [vmem:[%s0 + $0x340] sm:$0xff]
    %v139 = vld [vmem:[%s0 + $0x348] sm:$0xff]
    %v140 = vld [vmem:[%s0 + $0x350] sm:$0xff]
    %v141 = vld [vmem:[%s0 + $0x358] sm:$0xff]
    %v142 = vld [vmem:[%s0 + $0x360] sm:$0xff]
    %v143 = vld [vmem:[%s0 + $0x368] sm:$0xff]
    %v144 = vld [vmem:[%s0 + $0x370] sm:$0xff]
    %v145 = vld [vmem:[%s0 + $0x378] sm:$0xff]
    %v146 = vld [vmem:[%s0 + $0x380] sm:$0xff]
    %v147 = vld [vmem:[%s0 + $0x388] sm:$0xff]
    %v148 = vld [vmem:[%s0 + $0x390] sm:$0xff]
    %v149 = vld [vmem:[%s0 + $0x398] sm:$0xff]
    %v150 = vld [vmem:[%s0 + $0x3a0] sm:$0xff]
    %v151 = vld [vmem:[%s0 + $0x3a8] sm:$0xff]
    %v152 = vld [vmem:[%s0 + $0x3b0] sm:$0xff]
    %v153 = vld [vmem:[%s0 + $0x3b8] sm:$0xff]
    %v154 = vld [vmem:[%s0 + $0x3c0] sm:$0xff]
    %v155 = vld [vmem:[%s0 + $0x3c8] sm:$0xff]
    %v156 = vld [vmem:[%s0 + $0x3d0] sm:$0xff]
    %v157 = vld [vmem:[%s0 + $0x3d8] sm:$0xff]
    %v158 = vld [vmem:[%s0 + $0x3e0] sm:$0xff]
    %v159 = vld [vmem:[%s0 + $0x3e8] sm:$0xff]
    %v160 = vld [vmem:[%s0 + $0x3f0] sm:$0xff]
    %v161 = vld [vmem:[%s0 + $0x3f8] sm:$0xff]
    %v162 = vld [vmem:[%s0 + $0x400] sm:$0xff]
    %v163 = vld [vmem:[%s0 + $0x408] sm:$0xff]
    %v164 = vld [vmem:[%s0 + $0x410] sm:$0xff]
    %v165 = vld [vmem:[%s0 + $0x418] sm:$0xff]
    %v166 = vld [vmem:[%s0 + $0x420] sm:$0xff]
    %v167 = vld [vmem:[%s0 + $0x428] sm:$0xff]
    %v168 = vld [vmem:[%s0 + $0x430] sm:$0xff]
    %v169 = vld [vmem:[%s0 + $0x438] sm:$0xff]
    %v170 = vld [vmem:[%s0 + $0x440] sm:$0xff]
    %v171 = vld [vmem:[%s0 + $0x448] sm:$0xff]
    %v172 = vld [vmem:[%s0 + $0x450] sm:$0xff]
    %v173 = vld [vmem:[%s0 + $0x458] sm:$0xff]
    %v174 = vld [vmem:[%s0 + $0x460] sm:$0xff]
    %v175 = vld [vmem:[%s0 + $0x468] sm:$0xff]
    %v176 = vld [vmem:[%s0 + $0x470] sm:$0xff]
    %v177 = vld [vmem:[%s0 + $0x478] sm:$0xff]
    %v178 = vld [vmem:[%s0 + $0x480] sm:$0xff]
    %v179 = vld [vmem:[%s0 + $0x488] sm:$0xff]
    %v180 = vld [vmem:[%s0 + $0x490] sm:$0xff]
    %v181 = vld [vmem:[%s0 + $0x498] sm:$0xff]
    %v182 = vld [vmem:[%s0 + $0x4a0] sm:$0xff]
    %v183 = vld [vmem:[%s0 + $0x4a8] sm:$0xff]
    %v184 = vld [vmem:[%s0 + $0x4b0] sm:$0xff]
    %v185 = vld [vmem:[%s0 + $0x4b8] sm:$0xff]
    %v186 = vld [vmem:[%s0 + $0x4c0] sm:$0xff]
    %v187 = vld [vmem:[%s0 + $0x4c8] sm:$0xff]
    %v188 = vld [vmem:[%s0 + $0x4d0] sm:$0xff]
    %v189 = vld [vmem:[%s0 + $0x4d8] sm:$0xff]
    %v190 = vld [vmem:[%s0 + $0x4e0] sm:$0xff]
    %v191 = vld [vmem:[%s0 + $0x4e8] sm:$0xff]
    %v192 = vld [vmem:[%s0 + $0x4f0] sm:$0xff]
    %v193 = vld [vmem:[%s0 + $0x4f8] sm:$0xff]
    %v194 = vld [vmem:[%s0 + $0x500] sm:$0xff]
    %v195 = vld [vmem:[%s0 + $0x508] sm:$0xff]
    %v196 = vld [vmem:[%s0 + $0x510] sm:$0xff]
    %v197 = vld [vmem:[%s0 + $0x518] sm:$0xff]
    %v198 = vld [vmem:[%s0 + $0x520] sm:$0xff]
    %v199 = vld [vmem:[%s0 + $0x528] sm:$0xff]
    %v200 = vld [vmem:[%s0 + $0x530] sm:$0xff]
    %v201 = vld [vmem:[%s0 + $0x538] sm:$0xff]
    %v202 = vld [vmem:[%s0 + $0x540] sm:$0xff]
    %v203 = vld [vmem:[%s0 + $0x548] sm:$0xff]
    %v204 = vld [vmem:[%s0 + $0x550] sm:$0xff]
    %v205 = vld [vmem:[%s0 + $0x558] sm:$0xff]
    %v206 = vld [vmem:[%s0 + $0x560] sm:$0xff]
    %v207 = vld [vmem:[%s0 + $0x568] sm:$0xff]
    %v208 = vld [vmem:[%s0 + $0x570] sm:$0xff]
    %v209 = vld [vmem:[%s0 + $0x578] sm:$0xff]
    %v210 = vld [vmem:[%s0 + $0x580] sm:$0xff]
    %v211 = vld [vmem:[%s0 + $0x588] sm:$0xff]
    %v212 = vld [vmem:[%s0 + $0x590] sm:$0xff]
    %v213 = vld [vmem:[%s0 + $0x598] sm:$0xff]
    %s214 = scalar_lea.vmem %s0, 32
    %v215 = vld [vmem:[%s214] sm:$0xff]
    %v216 = vld [vmem:[%s214 + $0x8] sm:$0xff]
    %v217 = vld [vmem:[%s214 + $0x10] sm:$0xff]
    %v218 = vld [vmem:[%s214 + $0x18] sm:$0xff]
    %v219 = vld [vmem:[%s214 + $0x20] sm:$0xff]
    %v220 = vld [vmem:[%s214 + $0x28] sm:$0xff]
    %v221 = vld [vmem:[%s214 + $0x30] sm:$0xff]
    %v222 = vld [vmem:[%s214 + $0x38] sm:$0xff]
    %v223 = vld [vmem:[%s214 + $0x40] sm:$0xff]
    %v224 = vld [vmem:[%s214 + $0x48] sm:$0xff]
    %v225 = vld [vmem:[%s214 + $0x50] sm:$0xff]
    %v226 = vld [vmem:[%s214 + $0x58] sm:$0xff]
    %v227 = vld [vmem:[%s214 + $0x60] sm:$0xff]
    %v228 = vld [vmem:[%s214 + $0x68] sm:$0xff]
    %v229 = vld [vmem:[%s214 + $0x70] sm:$0xff]
    %v230 = vld [vmem:[%s214 + $0x78] sm:$0xff]
    %v231 = vld [vmem:[%s214 + $0x80] sm:$0xff]
    %v232 = vld [vmem:[%s214 + $0x88] sm:$0xff]
    %v233 = vld [vmem:[%s214 + $0x90] sm:$0xff]
    %v234 = vld [vmem:[%s214 + $0x98] sm:$0xff]
    %v235 = vld [vmem:[%s214 + $0xa0] sm:$0xff]
    %v236 = vld [vmem:[%s214 + $0xa8] sm:$0xff]
    %v237 = vld [vmem:[%s214 + $0xb0] sm:$0xff]
    %v238 = vld [vmem:[%s214 + $0xb8] sm:$0xff]
    %v239 = vld [vmem:[%s214 + $0xc0] sm:$0xff]
    %v240 = vld [vmem:[%s214 + $0xc8] sm:$0xff]
    %v241 = vld [vmem:[%s214 + $0xd0] sm:$0xff]
    %v242 = vld [vmem:[%s214 + $0xd8] sm:$0xff]
    %v243 = vld [vmem:[%s214 + $0xe0] sm:$0xff]
    %v244 = vld [vmem:[%s214 + $0xe8] sm:$0xff]
    %v245 = vld [vmem:[%s214 + $0xf0] sm:$0xff]
    %v246 = vld [vmem:[%s214 + $0xf8] sm:$0xff]
    %v247 = vld [vmem:[%s214 + $0x100] sm:$0xff]
    %v248 = vld [vmem:[%s214 + $0x108] sm:$0xff]
    %v249 = vld [vmem:[%s214 + $0x110] sm:$0xff]
    %v250 = vld [vmem:[%s214 + $0x118] sm:$0xff]
    %v251 = vld [vmem:[%s214 + $0x120] sm:$0xff]
    %v252 = vld [vmem:[%s214 + $0x128] sm:$0xff]
    %v253 = vld [vmem:[%s214 + $0x130] sm:$0xff]
    %v254 = vld [vmem:[%s214 + $0x138] sm:$0xff]
    %v255 = vld [vmem:[%s214 + $0x140] sm:$0xff]
    %v256 = vld [vmem:[%s214 + $0x148] sm:$0xff]
    %v257 = vld [vmem:[%s214 + $0x150] sm:$0xff]
    %v258 = vld [vmem:[%s214 + $0x158] sm:$0xff]
    %v259 = vld [vmem:[%s214 + $0x160] sm:$0xff]
    %v260 = vld [vmem:[%s214 + $0x168] sm:$0xff]
    %v261 = vld [vmem:[%s214 + $0x170] sm:$0xff]
    %v262 = vld [vmem:[%s214 + $0x178] sm:$0xff]
    %v263 = vld [vmem:[%s214 + $0x180] sm:$0xff]
    %v264 = vld [vmem:[%s214 + $0x188] sm:$0xff]
    %v265 = vld [vmem:[%s214 + $0x190] sm:$0xff]
    %v266 = vld [vmem:[%s214 + $0x198] sm:$0xff]
    %v267 = vld [vmem:[%s214 + $0x1a0] sm:$0xff]
    %v268 = vld [vmem:[%s214 + $0x1a8] sm:$0xff]
    %v269 = vld [vmem:[%s214 + $0x1b0] sm:$0xff]
    %v270 = vld [vmem:[%s214 + $0x1b8] sm:$0xff]
    %v271 = vld [vmem:[%s214 + $0x1c0] sm:$0xff]
    %v272 = vld [vmem:[%s214 + $0x1c8] sm:$0xff]
    %v273 = vld [vmem:[%s214 + $0x1d0] sm:$0xff]
    %v274 = vld [vmem:[%s214 + $0x1d8] sm:$0xff]
    %v275 = vld [vmem:[%s214 + $0x1e0] sm:$0xff]
    %v276 = vld [vmem:[%s214 + $0x1e8] sm:$0xff]
    %v277 = vld [vmem:[%s214 + $0x1f0] sm:$0xff]
    %v278 = vld [vmem:[%s214 + $0x1f8] sm:$0xff]
    %v279 = vld [vmem:[%s214 + $0x200] sm:$0xff]
    %v280 = vld [vmem:[%s214 + $0x208] sm:$0xff]
    %v281 = vld [vmem:[%s214 + $0x210] sm:$0xff]
    %v282 = vld [vmem:[%s214 + $0x218] sm:$0xff]
    %v283 = vld [vmem:[%s214 + $0x220] sm:$0xff]
    %v284 = vld [vmem:[%s214 + $0x228] sm:$0xff]
    %v285 = vld [vmem:[%s214 + $0x230] sm:$0xff]
    %v286 = vld [vmem:[%s214 + $0x238] sm:$0xff]
    %v287 = vld [vmem:[%s214 + $0x240] sm:$0xff]
    %v288 = vld [vmem:[%s214 + $0x248] sm:$0xff]
    %v289 = vld [vmem:[%s214 + $0x250] sm:$0xff]
    %v290 = vld [vmem:[%s214 + $0x258] sm:$0xff]
    %v291 = vld [vmem:[%s214 + $0x260] sm:$0xff]
    %v292 = vld [vmem:[%s214 + $0x268] sm:$0xff]
    %v293 = vld [vmem:[%s214 + $0x270] sm:$0xff]
    %v294 = vld [vmem:[%s214 + $0x278] sm:$0xff]
    %v295 = vld [vmem:[%s214 + $0x280] sm:$0xff]
    %v296 = vld [vmem:[%s214 + $0x288] sm:$0xff]
    %v297 = vld [vmem:[%s214 + $0x290] sm:$0xff]
    %v298 = vld [vmem:[%s214 + $0x298] sm:$0xff]
    %v299 = vld [vmem:[%s214 + $0x2a0] sm:$0xff]
    %v300 = vld [vmem:[%s214 + $0x2a8] sm:$0xff]
    %v301 = vld [vmem:[%s214 + $0x2b0] sm:$0xff]
    %v302 = vld [vmem:[%s214 + $0x2b8] sm:$0xff]
    %v303 = vld [vmem:[%s214 + $0x2e0] sm:$0xff]
    %v304 = vld [vmem:[%s214 + $0x2e8] sm:$0xff]
    %v305 = vld [vmem:[%s214 + $0x2f0] sm:$0xff]
    %v306 = vld [vmem:[%s214 + $0x2f8] sm:$0xff]
    %v307 = vld [vmem:[%s214 + $0x300] sm:$0xff]
    %v308 = vld [vmem:[%s214 + $0x308] sm:$0xff]
    %v309 = vld [vmem:[%s214 + $0x310] sm:$0xff]
    %v310 = vld [vmem:[%s214 + $0x318] sm:$0xff]
    %v311 = vld [vmem:[%s214 + $0x320] sm:$0xff]
    %v312 = vld [vmem:[%s214 + $0x328] sm:$0xff]
    %v313 = vld [vmem:[%s214 + $0x330] sm:$0xff]
    %v314 = vld [vmem:[%s214 + $0x338] sm:$0xff]
    %v315 = vld [vmem:[%s214 + $0x340] sm:$0xff]
    %v316 = vld [vmem:[%s214 + $0x348] sm:$0xff]
    %v317 = vld [vmem:[%s214 + $0x350] sm:$0xff]
    %v318 = vld [vmem:[%s214 + $0x358] sm:$0xff]
    %v319 = vld [vmem:[%s214 + $0x360] sm:$0xff]
    %v320 = vld [vmem:[%s214 + $0x368] sm:$0xff]
    %v321 = vld [vmem:[%s214 + $0x370] sm:$0xff]
    %v322 = vld [vmem:[%s214 + $0x378] sm:$0xff]
    %v323 = vld [vmem:[%s214 + $0x380] sm:$0xff]
    %v324 = vld [vmem:[%s214 + $0x388] sm:$0xff]
    %v325 = vld [vmem:[%s214 + $0x390] sm:$0xff]
    %v326 = vld [vmem:[%s214 + $0x398] sm:$0xff]
    %v327 = vld [vmem:[%s214 + $0x3a0] sm:$0xff]
    %v328 = vld [vmem:[%s214 + $0x3a8] sm:$0xff]
    %v329 = vld [vmem:[%s214 + $0x3b0] sm:$0xff]
    %v330 = vld [vmem:[%s214 + $0x3b8] sm:$0xff]
    %v331 = vld [vmem:[%s214 + $0x3c0] sm:$0xff]
    %v332 = vld [vmem:[%s214 + $0x3c8] sm:$0xff]
    %v333 = vld [vmem:[%s214 + $0x3d0] sm:$0xff]
    %v334 = vld [vmem:[%s214 + $0x3d8] sm:$0xff]
    %v335 = vld [vmem:[%s214 + $0x3e0] sm:$0xff]
    %v336 = vld [vmem:[%s214 + $0x3e8] sm:$0xff]
    %v337 = vld [vmem:[%s214 + $0x3f0] sm:$0xff]
    %v338 = vld [vmem:[%s214 + $0x3f8] sm:$0xff]
    %v339 = vld [vmem:[%s214 + $0x400] sm:$0xff]
    %v340 = vld [vmem:[%s214 + $0x408] sm:$0xff]
    %v341 = vld [vmem:[%s214 + $0x410] sm:$0xff]
    %v342 = vld [vmem:[%s214 + $0x418] sm:$0xff]
    %v343 = vld [vmem:[%s214 + $0x420] sm:$0xff]
    %v344 = vld [vmem:[%s214 + $0x428] sm:$0xff]
    %v345 = vld [vmem:[%s214 + $0x430] sm:$0xff]
    %v346 = vld [vmem:[%s214 + $0x438] sm:$0xff]
    %v347 = vld [vmem:[%s214 + $0x440] sm:$0xff]
    %v348 = vld [vmem:[%s214 + $0x448] sm:$0xff]
    %v349 = vld [vmem:[%s214 + $0x450] sm:$0xff]
    %v350 = vld [vmem:[%s214 + $0x458] sm:$0xff]
    %v351 = vld [vmem:[%s214 + $0x460] sm:$0xff]
    %v352 = vld [vmem:[%s214 + $0x468] sm:$0xff]
    %v353 = vld [vmem:[%s214 + $0x470] sm:$0xff]
    %v354 = vld [vmem:[%s214 + $0x478] sm:$0xff]
    %v355 = vld [vmem:[%s214 + $0x480] sm:$0xff]
    %v356 = vld [vmem:[%s214 + $0x488] sm:$0xff]
    %v357 = vld [vmem:[%s214 + $0x490] sm:$0xff]
    %v358 = vld [vmem:[%s214 + $0x498] sm:$0xff]
    %v359 = vld [vmem:[%s214 + $0x4a0] sm:$0xff]
    %v360 = vld [vmem:[%s214 + $0x4a8] sm:$0xff]
    %v361 = vld [vmem:[%s214 + $0x4b0] sm:$0xff]
    %v362 = vld [vmem:[%s214 + $0x4b8] sm:$0xff]
    %v363 = vld [vmem:[%s214 + $0x4c0] sm:$0xff]
    %v364 = vld [vmem:[%s214 + $0x4c8] sm:$0xff]
    %v365 = vld [vmem:[%s214 + $0x4d0] sm:$0xff]
    %v366 = vld [vmem:[%s214 + $0x4d8] sm:$0xff]
    %v367 = vld [vmem:[%s214 + $0x4e0] sm:$0xff]
    %v368 = vld [vmem:[%s214 + $0x4e8] sm:$0xff]
    %v369 = vld [vmem:[%s214 + $0x4f0] sm:$0xff]
    %v370 = vld [vmem:[%s214 + $0x4f8] sm:$0xff]
    %v371 = vld [vmem:[%s214 + $0x500] sm:$0xff]
    %v372 = vld [vmem:[%s214 + $0x508] sm:$0xff]
    %v373 = vld [vmem:[%s214 + $0x510] sm:$0xff]
    %v374 = vld [vmem:[%s214 + $0x518] sm:$0xff]
    %v375 = vld [vmem:[%s214 + $0x520] sm:$0xff]
    %v376 = vld [vmem:[%s214 + $0x528] sm:$0xff]
    %v377 = vld [vmem:[%s214 + $0x530] sm:$0xff]
    %v378 = vld [vmem:[%s214 + $0x538] sm:$0xff]
    %v379 = vld [vmem:[%s214 + $0x540] sm:$0xff]
    %v380 = vld [vmem:[%s214 + $0x548] sm:$0xff]
    %v381 = vld [vmem:[%s214 + $0x550] sm:$0xff]
    %v382 = vld [vmem:[%s214 + $0x558] sm:$0xff]
    %v383 = vld [vmem:[%s214 + $0x560] sm:$0xff]
    %v384 = vld [vmem:[%s214 + $0x568] sm:$0xff]
    %v385 = vld [vmem:[%s214 + $0x570] sm:$0xff]
    %v386 = vld [vmem:[%s214 + $0x578] sm:$0xff]
    %v387 = vld [vmem:[%s214 + $0x580] sm:$0xff]
    %v388 = vld [vmem:[%s214 + $0x588] sm:$0xff]
    %v389 = vld [vmem:[%s214 + $0x590] sm:$0xff]
    %v390 = vld [vmem:[%s214 + $0x598] sm:$0xff]
    %v391 = vld [vmem:[%s1] sm:$0x3f]
    %v392 = vld [vmem:[%s2] sm:$0x3f]
    %vm393 = vcmask 48128
    %v395 = vsel %vm393, %v215, 0
    %v398 = vsel %vm393, %v216, 0
    %v401 = vsel %vm393, %v217, 0
    %v404 = vsel %vm393, %v218, 0
    %v407 = vsel %vm393, %v219, 0
    %v410 = vsel %vm393, %v220, 0
    %v413 = vsel %vm393, %v221, 0
    %v416 = vsel %vm393, %v222, 0
    %v419 = vsel %vm393, %v223, 0
    %v422 = vsel %vm393, %v224, 0
    %v425 = vsel %vm393, %v225, 0
    %v428 = vsel %vm393, %v226, 0
    %v431 = vsel %vm393, %v227, 0
    %v434 = vsel %vm393, %v228, 0
    %v437 = vsel %vm393, %v229, 0
    %v440 = vsel %vm393, %v230, 0
    %v443 = vsel %vm393, %v231, 0
    %v446 = vsel %vm393, %v232, 0
    %v449 = vsel %vm393, %v233, 0
    %v452 = vsel %vm393, %v234, 0
    %v455 = vsel %vm393, %v235, 0
    %v458 = vsel %vm393, %v236, 0
    %v461 = vsel %vm393, %v237, 0
    %v464 = vsel %vm393, %v238, 0
    %v467 = vsel %vm393, %v239, 0
    %v470 = vsel %vm393, %v240, 0
    %v473 = vsel %vm393, %v241, 0
    %v476 = vsel %vm393, %v242, 0
    %v479 = vsel %vm393, %v243, 0
    %v482 = vsel %vm393, %v244, 0
    %v485 = vsel %vm393, %v245, 0
    %v488 = vsel %vm393, %v246, 0
    %v491 = vsel %vm393, %v247, 0
    %v494 = vsel %vm393, %v248, 0
    %v497 = vsel %vm393, %v249, 0
    %v500 = vsel %vm393, %v250, 0
    %v503 = vsel %vm393, %v251, 0
    %v506 = vsel %vm393, %v252, 0
    %v509 = vsel %vm393, %v253, 0
    %v512 = vsel %vm393, %v254, 0
    %v515 = vsel %vm393, %v255, 0
    %v518 = vsel %vm393, %v256, 0
    %v521 = vsel %vm393, %v257, 0
    %v524 = vsel %vm393, %v258, 0
    %v527 = vsel %vm393, %v259, 0
    %v530 = vsel %vm393, %v260, 0
    %v533 = vsel %vm393, %v261, 0
    %v536 = vsel %vm393, %v262, 0
    %v539 = vsel %vm393, %v263, 0
    %v542 = vsel %vm393, %v264, 0
    %v545 = vsel %vm393, %v265, 0
    %v548 = vsel %vm393, %v266, 0
    %v551 = vsel %vm393, %v267, 0
    %v554 = vsel %vm393, %v268, 0
    %v557 = vsel %vm393, %v269, 0
    %v560 = vsel %vm393, %v270, 0
    %v563 = vsel %vm393, %v271, 0
    %v566 = vsel %vm393, %v272, 0
    %v569 = vsel %vm393, %v273, 0
    %v572 = vsel %vm393, %v274, 0
    %v575 = vsel %vm393, %v275, 0
    %v578 = vsel %vm393, %v276, 0
    %v581 = vsel %vm393, %v277, 0
    %v584 = vsel %vm393, %v278, 0
    %v587 = vsel %vm393, %v279, 0
    %v590 = vsel %vm393, %v280, 0
    %v593 = vsel %vm393, %v281, 0
    %v596 = vsel %vm393, %v282, 0
    %v599 = vsel %vm393, %v283, 0
    %v602 = vsel %vm393, %v284, 0
    %v605 = vsel %vm393, %v285, 0
    %v608 = vsel %vm393, %v286, 0
    %v611 = vsel %vm393, %v287, 0
    %v614 = vsel %vm393, %v288, 0
    %v617 = vsel %vm393, %v289, 0
    %v620 = vsel %vm393, %v290, 0
    %v623 = vsel %vm393, %v291, 0
    %v626 = vsel %vm393, %v292, 0
    %v629 = vsel %vm393, %v293, 0
    %v632 = vsel %vm393, %v294, 0
    %v635 = vsel %vm393, %v295, 0
    %v638 = vsel %vm393, %v296, 0
    %v641 = vsel %vm393, %v297, 0
    %v644 = vsel %vm393, %v298, 0
    %v647 = vsel %vm393, %v299, 0
    %v650 = vsel %vm393, %v300, 0
    %v653 = vsel %vm393, %v301, 0
    %v656 = vsel %vm393, %v302, 0
    %v659 = vsel %vm393, %v303, 0
    %v662 = vsel %vm393, %v304, 0
    %v665 = vsel %vm393, %v305, 0
    %v668 = vsel %vm393, %v306, 0
    %v671 = vsel %vm393, %v307, 0
    %v674 = vsel %vm393, %v308, 0
    %v677 = vsel %vm393, %v309, 0
    %v680 = vsel %vm393, %v310, 0
    %v683 = vsel %vm393, %v311, 0
    %v686 = vsel %vm393, %v312, 0
    %v689 = vsel %vm393, %v313, 0
    %v692 = vsel %vm393, %v314, 0
    %v695 = vsel %vm393, %v315, 0
    %v698 = vsel %vm393, %v316, 0
    %v701 = vsel %vm393, %v317, 0
    %v704 = vsel %vm393, %v318, 0
    %v707 = vsel %vm393, %v319, 0
    %v710 = vsel %vm393, %v320, 0
    %v713 = vsel %vm393, %v321, 0
    %v716 = vsel %vm393, %v322, 0
    %v719 = vsel %vm393, %v323, 0
    %v722 = vsel %vm393, %v324, 0
    %v725 = vsel %vm393, %v325, 0
    %v728 = vsel %vm393, %v326, 0
    %v731 = vsel %vm393, %v327, 0
    %v734 = vsel %vm393, %v328, 0
    %v737 = vsel %vm393, %v329, 0
    %v740 = vsel %vm393, %v330, 0
    %v743 = vsel %vm393, %v331, 0
    %v746 = vsel %vm393, %v332, 0
    %v749 = vsel %vm393, %v333, 0
    %v752 = vsel %vm393, %v334, 0
    %v755 = vsel %vm393, %v335, 0
    %v758 = vsel %vm393, %v336, 0
    %v761 = vsel %vm393, %v337, 0
    %v764 = vsel %vm393, %v338, 0
    %v767 = vsel %vm393, %v339, 0
    %v770 = vsel %vm393, %v340, 0
    %v773 = vsel %vm393, %v341, 0
    %v776 = vsel %vm393, %v342, 0
    %v779 = vsel %vm393, %v343, 0
    %v782 = vsel %vm393, %v344, 0
    %v785 = vsel %vm393, %v345, 0
    %v788 = vsel %vm393, %v346, 0
    %v791 = vsel %vm393, %v347, 0
    %v794 = vsel %vm393, %v348, 0
    %v797 = vsel %vm393, %v349, 0
    %v800 = vsel %vm393, %v350, 0
    %v803 = vsel %vm393, %v351, 0
    %v806 = vsel %vm393, %v352, 0
    %v809 = vsel %vm393, %v353, 0
    %v812 = vsel %vm393, %v354, 0
    %v815 = vsel %vm393, %v355, 0
    %v818 = vsel %vm393, %v356, 0
    %v821 = vsel %vm393, %v357, 0
    %v824 = vsel %vm393, %v358, 0
    %v827 = vsel %vm393, %v359, 0
    %v830 = vsel %vm393, %v360, 0
    %v833 = vsel %vm393, %v361, 0
    %v836 = vsel %vm393, %v362, 0
    %v839 = vsel %vm393, %v363, 0
    %v842 = vsel %vm393, %v364, 0
    %v845 = vsel %vm393, %v365, 0
    %v848 = vsel %vm393, %v366, 0
    %v851 = vsel %vm393, %v367, 0
    %v854 = vsel %vm393, %v368, 0
    %v857 = vsel %vm393, %v369, 0
    %v860 = vsel %vm393, %v370, 0
    %v863 = vsel %vm393, %v371, 0
    %v866 = vsel %vm393, %v372, 0
    %v869 = vsel %vm393, %v373, 0
    %v872 = vsel %vm393, %v374, 0
    %v875 = vsel %vm393, %v375, 0
    %v878 = vsel %vm393, %v376, 0
    %v881 = vsel %vm393, %v377, 0
    %v884 = vsel %vm393, %v378, 0
    %v887 = vsel %vm393, %v379, 0
    %v890 = vsel %vm393, %v380, 0
    %v893 = vsel %vm393, %v381, 0
    %v896 = vsel %vm393, %v382, 0
    %v899 = vsel %vm393, %v383, 0
    %v902 = vsel %vm393, %v384, 0
    %v905 = vsel %vm393, %v385, 0
    %v908 = vsel %vm393, %v386, 0
    %v911 = vsel %vm393, %v387, 0
    %v914 = vsel %vm393, %v388, 0
    %v917 = vsel %vm393, %v389, 0
    %v920 = vsel %vm393, %v390, 0
    %vm922 = vcmask 1045504
    %v924 = vsel %vm922, %v392, 0
    %926 = vmatprep.subr.mxu0 0.0
    %927 = vmatpush1.msra.mxu0 %v924
    %928 = vmatprep.subr.mxu0 0.0
    %929 = vmatpush1.msra.mxu0 0.0
    %930 = vmatprep.subr.mxu0 0.0
    %931 = vmatpush1.msra.mxu0 0.0
    %932 = vmatprep.subr.mxu0 0.0
    %933 = vmatpush1.msra.mxu0 0.0
    %934 = vmatprep.subr.mxu0 0.0
    %935 = vmatpush1.msra.mxu0 0.0
    %936 = vmatprep.subr.mxu0 0.0
    %937 = vmatpush1.msra.mxu0 0.0
    %938 = vmatprep.subr.mxu0 0.0
    %939 = vmatpush1.msra.mxu0 0.0
    %940 = vmatprep.subr.mxu0 0.0
    %941 = vmatpush1.msra.mxu0 0.0
    %942 = vmatprep.subr.mxu0 0.0
    %943 = vmatpush1.msra.mxu0 0.0
    %944 = vmatprep.subr.mxu0 0.0
    %945 = vmatpush1.msra.mxu0 0.0
    %946 = vmatprep.subr.mxu0 0.0
    %947 = vmatpush1.msra.mxu0 0.0
    %948 = vmatprep.subr.mxu0 0.0
    %949 = vmatpush1.msra.mxu0 0.0
    %950 = vmatprep.subr.mxu0 0.0
    %951 = vmatpush1.msra.mxu0 0.0
    %952 = vmatprep.subr.mxu0 0.0
    %953 = vmatpush1.msra.mxu0 0.0
    %954 = vmatprep.subr.mxu0 0.0
    %955 = vmatpush1.msra.mxu0 0.0
    %956 = vmatprep.subr.mxu0 0.0
    %957 = vmatpush1.msra.mxu0 0.0
    %958 = vmatprep.subr.mxu0 0.0
    %959 = vmatpush1.msra.mxu0 0.0
    %960 = vmatprep.subr.mxu0 0.0
    %961 = vmatpush1.msra.mxu0 0.0
    %962 = vmatprep.subr.mxu0 0.0
    %963 = vmatpush1.msra.mxu0 0.0
    %964 = vmatprep.subr.mxu0 0.0
    %965 = vmatpush1.msra.mxu0 0.0
    %966 = vmatprep.subr.mxu0 0.0
    %967 = vmatpush1.msra.mxu0 0.0
    %968 = vmatprep.subr.mxu0 0.0
    %969 = vmatpush1.msra.mxu0 0.0
    %970 = vmatprep.subr.mxu0 0.0
    %971 = vmatpush1.msra.mxu0 0.0
    %972 = vmatprep.subr.mxu0 0.0
    %973 = vmatpush1.msra.mxu0 0.0
    %974 = vmatprep.subr.mxu0 0.0
    %975 = vmatpush1.msra.mxu0 0.0
    %976 = vmatprep.subr.mxu0 0.0
    %977 = vmatpush1.msra.mxu0 0.0
    %978 = vmatprep.subr.mxu0 0.0
    %979 = vmatpush1.msra.mxu0 0.0
    %980 = vmatprep.subr.mxu0 0.0
    %981 = vmatpush1.msra.mxu0 0.0
    %982 = vmatprep.subr.mxu0 0.0
    %983 = vmatpush1.msra.mxu0 0.0
    %984 = vmatprep.subr.mxu0 0.0
    %985 = vmatpush1.msra.mxu0 0.0
    %986 = vmatprep.subr.mxu0 0.0
    %987 = vmatpush1.msra.mxu0 0.0
    %988 = vmatprep.subr.mxu0 0.0
    %989 = vmatpush1.msra.mxu0 0.0
    %990 = vmatprep.mubr.f32.mxu0 0.0
    %991 = vmatmul.mubr.f32.gmra.mrb[0].mxu0 %v395
    %v992 = vpop.f32.mrb[0].mxu0
    %v993 = vadd.f32 0.0, %v992
    %v994 = vpop.f32.mrb[0].mxu0
    %995 = vmatprep.mubr.f32.mxu0 0.0
    %996 = vmatmul.mubr.f32.gmra.mrb[0].mxu0 %v398
    %v997 = vpop.f32.mrb[0].mxu0
    %v998 = vadd.f32 0.0, %v997
    %v999 = vpop.f32.mrb[0].mxu0
    %1000 = vmatprep.mubr.f32.mxu0 0.0
    %1001 = vmatmul.mubr.f32.gmra.mrb[0].mxu0 %v401
    %v1002 = vpop.f32.mrb[0].mxu0
    %v1003 = vadd.f32 0.0, %v1002
    %v1004 = vpop.f32.mrb[0].mxu0
    %1005 = vmatprep.mubr.f32.mxu0 0.0
    %1006 = vmatmul.mubr.f32.gmra.mrb[0].mxu0 %v404
    %v1007 = vpop.f32.mrb[0].mxu0
    %v1008 = vadd.f32 0.0, %v1007
    %v1009 = vpop.f32.mrb[0].mxu0
    %1010 = vmatprep.mubr.f32.mxu0 0.0
    %1011 = vmatmul.mubr.f32.gmra.mrb[0].mxu0 %v407
    %v1012 = vpop.f32.mrb[0].mxu0
    %v1013 = vadd.f32 0.0, %v1012
    %v1014 = vpop.f32.mrb[0].mxu0
    %1015 = vmatprep.mubr.f32.mxu0 0.0
    %1016 = vmatmul.mubr.f32.gmra.mrb[0].mxu0 %v410
    %v1017 = vpop.f32.mrb[0].mxu0
    %v1018 = vadd.f32 0.0, %v1017
    %v1019 = vpop.f32.mrb[0].mxu0
    %1020 = vmatprep.mubr.f32.mxu0 0.0
    %1021 = vmatmul.mubr.f32.gmra.mrb[0].mxu0 %v413
    %v1022 = vpop.f32.mrb[0].mxu0
    %v1023 = vadd.f32 0.0, %v1022
    %v1024 = vpop.f32.mrb[0].mxu0
    %1025 = vmatprep.mubr.f32.mxu0 0.0
    %1026 = vmatmul.mubr.f32.gmra.mrb[0].mxu0 %v416
    %v1027 = vpop.f32.mrb[0].mxu0
    %v1028 = vadd.f32 0.0, %v1027
    %v1029 = vpop.f32.mrb[0].mxu0
    %1030 = vmatprep.mubr.f32.mxu0 0.0
    %1031 = vmatmul.mubr.f32.gmra.mrb[0].mxu0 %v419
    %v1032 = vpop.f32.mrb[0].mxu0
    %v1033 = vadd.f32 0.0, %v1032
    %v1034 = vpop.f32.mrb[0].mxu0
    %1035 = vmatprep.mubr.f32.mxu0 0.0
    %1036 = vmatmul.mubr.f32.gmra.mrb[0].mxu0 %v422
    %v1037 = vpop.f32.mrb[0].mxu0
    %v1038 = vadd.f32 0.0, %v1037
    %v1039 = vpop.f32.mrb[0].mxu0
    %1040 = vmatprep.mubr.f32.mxu0 0.0
    %1041 = vmatmul.mubr.f32.gmra.mrb[0].mxu0 %v425
    %v1042 = vpop.f32.mrb[0].mxu0
    %v1043 = vadd.f32 0.0, %v1042
    %v1044 = vpop.f32.mrb[0].mxu0
    %1045 = vmatprep.mubr.f32.mxu0 0.0
    %1046 = vmatmul.mubr.f32.gmra.mrb[0].mxu0 %v428
    %v1047 = vpop.f32.mrb[0].mxu0
    %v1048 = vadd.f32 0.0, %v1047
    %v1049 = vpop.f32.mrb[0].mxu0
    %1050 = vmatprep.mubr.f32.mxu0 0.0
    %1051 = vmatmul.mubr.f32.gmra.mrb[0].mxu0 %v431
    %v1052 = vpop.f32.mrb[0].mxu0
    %v1053 = vadd.f32 0.0, %v1052
    %v1054 = vpop.f32.mrb[0].mxu0
    %1055 = vmatprep.mubr.f32.mxu0 0.0
    %1056 = vmatmul.mubr.f32.gmra.mrb[0].mxu0 %v434
    %v1057 = vpop.f32.mrb[0].mxu0
    %v1058 = vadd.f32 0.0, %v1057
    %v1059 = vpop.f32.mrb[0].mxu0
    %1060 = vmatprep.mubr.f32.mxu0 0.0
    %1061 = vmatmul.mubr.f32.gmra.mrb[0].mxu0 %v437
    %v1062 = vpop.f32.mrb[0].mxu0
    %v1063 = vadd.f32 0.0, %v1062
    %v1064 = vpop.f32.mrb[0].mxu0
    %1065 = vmatprep.mubr.f32.mxu0 0.0
    %1066 = vmatmul.mubr.f32.gmra.mrb[0].mxu0 %v440
    %v1067 = vpop.f32.mrb[0].mxu0
    %v1068 = vadd.f32 0.0, %v1067
    %v1069 = vpop.f32.mrb[0].mxu0
    %1070 = vmatprep.mubr.f32.mxu0 0.0
    %1071 = vmatmul.mubr.f32.gmra.mrb[0].mxu0 %v443
    %v1072 = vpop.f32.mrb[0].mxu0
    %v1073 = vadd.f32 0.0, %v1072
    %v1074 = vpop.f32.mrb[0].mxu0
    %1075 = vmatprep.mubr.f32.mxu0 0.0
    %1076 = vmatmul.mubr.f32.gmra.mrb[0].mxu0 %v446
    %v1077 = vpop.f32.mrb[0].mxu0
    %v1078 = vadd.f32 0.0, %v1077
    %v1079 = vpop.f32.mrb[0].mxu0
    %1080 = vmatprep.mubr.f32.mxu0 0.0
    %1081 = vmatmul.mubr.f32.gmra.mrb[0].mxu0 %v449
    %v1082 = vpop.f32.mrb[0].mxu0
    %v1083 = vadd.f32 0.0, %v1082
    %v1084 = vpop.f32.mrb[0].mxu0
    %1085 = vmatprep.mubr.f32.mxu0 0.0
    %1086 = vmatmul.mubr.f32.gmra.mrb[0].mxu0 %v452
    %v1087 = vpop.f32.mrb[0].mxu0
    %v1088 = vadd.f32 0.0, %v1087
    %v1089 = vpop.f32.mrb[0].mxu0
    %1090 = vmatprep.mubr.f32.mxu0 0.0
    %1091 = vmatmul.mubr.f32.gmra.mrb[0].mxu0 %v455
    %v1092 = vpop.f32.mrb[0].mxu0
    %v1093 = vadd.f32 0.0, %v1092
    %v1094 = vpop.f32.mrb[0].mxu0
    %1095 = vmatprep.mubr.f32.mxu0 0.0
    %1096 = vmatmul.mubr.f32.gmra.mrb[0].mxu0 %v458
    %v1097 = vpop.f32.mrb[0].mxu0
    %v1098 = vadd.f32 0.0, %v1097
    %v1099 = vpop.f32.mrb[0].mxu0
    %1100 = vmatprep.mubr.f32.mxu0 0.0
    %1101 = vmatmul.mubr.f32.gmra.mrb[0].mxu0 %v461
    %v1102 = vpop.f32.mrb[0].mxu0
    %v1103 = vadd.f32 0.0, %v1102
    %v1104 = vpop.f32.mrb[0].mxu0
    %1105 = vmatprep.mubr.f32.mxu0 0.0
    %1106 = vmatmul.mubr.f32.gmra.mrb[0].mxu0 %v464
    %v1107 = vpop.f32.mrb[0].mxu0
    %v1108 = vadd.f32 0.0, %v1107
    %v1109 = vpop.f32.mrb[0].mxu0
    %1110 = vmatprep.mubr.f32.mxu0 0.0
    %1111 = vmatmul.mubr.f32.gmra.mrb[0].mxu0 %v467
    %v1112 = vpop.f32.mrb[0].mxu0
    %v1113 = vadd.f32 0.0, %v1112
    %v1114 = vpop.f32.mrb[0].mxu0
    %1115 = vmatprep.mubr.f32.mxu0 0.0
    %1116 = vmatmul.mubr.f32.gmra.mrb[0].mxu0 %v470
    %v1117 = vpop.f32.mrb[0].mxu0
    %v1118 = vadd.f32 0.0, %v1117
    %v1119 = vpop.f32.mrb[0].mxu0
    %1120 = vmatprep.mubr.f32.mxu0 0.0
    %1121 = vmatmul.mubr.f32.gmra.mrb[0].mxu0 %v473
    %v1122 = vpop.f32.mrb[0].mxu0
    %v1123 = vadd.f32 0.0, %v1122
    %v1124 = vpop.f32.mrb[0].mxu0
    %1125 = vmatprep.mubr.f32.mxu0 0.0
    %1126 = vmatmul.mubr.f32.gmra.mrb[0].mxu0 %v476
    %v1127 = vpop.f32.mrb[0].mxu0
    %v1128 = vadd.f32 0.0, %v1127
    %v1129 = vpop.f32.mrb[0].mxu0
    %1130 = vmatprep.mubr.f32.mxu0 0.0
    %1131 = vmatmul.mubr.f32.gmra.mrb[0].mxu0 %v479
    %v1132 = vpop.f32.mrb[0].mxu0
    %v1133 = vadd.f32 0.0, %v1132
    %v1134 = vpop.f32.mrb[0].mxu0
    %1135 = vmatprep.mubr.f32.mxu0 0.0
    %1136 = vmatmul.mubr.f32.gmra.mrb[0].mxu0 %v482
    %v1137 = vpop.f32.mrb[0].mxu0
    %v1138 = vadd.f32 0.0, %v1137
    %v1139 = vpop.f32.mrb[0].mxu0
    %1140 = vmatprep.mubr.f32.mxu0 0.0
    %1141 = vmatmul.mubr.f32.gmra.mrb[0].mxu0 %v485
    %v1142 = vpop.f32.mrb[0].mxu0
    %v1143 = vadd.f32 0.0, %v1142
    %v1144 = vpop.f32.mrb[0].mxu0
    %1145 = vmatprep.mubr.f32.mxu0 0.0
    %1146 = vmatmul.mubr.f32.gmra.mrb[0].mxu0 %v488
    %v1147 = vpop.f32.mrb[0].mxu0
    %v1148 = vadd.f32 0.0, %v1147
    %v1149 = vpop.f32.mrb[0].mxu0
    %1150 = vmatprep.mubr.f32.mxu0 0.0
    %1151 = vmatmul.mubr.f32.gmra.mrb[0].mxu0 %v491
    %v1152 = vpop.f32.mrb[0].mxu0
    %v1153 = vadd.f32 0.0, %v1152
    %v1154 = vpop.f32.mrb[0].mxu0
    %1155 = vmatprep.mubr.f32.mxu0 0.0
    %1156 = vmatmul.mubr.f32.gmra.mrb[0].mxu0 %v494
    %v1157 = vpop.f32.mrb[0].mxu0
    %v1158 = vadd.f32 0.0, %v1157
    %v1159 = vpop.f32.mrb[0].mxu0
    %1160 = vmatprep.mubr.f32.mxu0 0.0
    %1161 = vmatmul.mubr.f32.gmra.mrb[0].mxu0 %v497
    %v1162 = vpop.f32.mrb[0].mxu0
    %v1163 = vadd.f32 0.0, %v1162
    %v1164 = vpop.f32.mrb[0].mxu0
    %1165 = vmatprep.mubr.f32.mxu0 0.0
    %1166 = vmatmul.mubr.f32.gmra.mrb[0].mxu0 %v500
    %v1167 = vpop.f32.mrb[0].mxu0
    %v1168 = vadd.f32 0.0, %v1167
    %v1169 = vpop.f32.mrb[0].mxu0
    %1170 = vmatprep.mubr.f32.mxu0 0.0
    %1171 = vmatmul.mubr.f32.gmra.mrb[0].mxu0 %v503
    %v1172 = vpop.f32.mrb[0].mxu0
    %v1173 = vadd.f32 0.0, %v1172
    %v1174 = vpop.f32.mrb[0].mxu0
    %1175 = vmatprep.mubr.f32.mxu0 0.0
    %1176 = vmatmul.mubr.f32.gmra.mrb[0].mxu0 %v506
    %v1177 = vpop.f32.mrb[0].mxu0
    %v1178 = vadd.f32 0.0, %v1177
    %v1179 = vpop.f32.mrb[0].mxu0
    %1180 = vmatprep.mubr.f32.mxu0 0.0
    %1181 = vmatmul.mubr.f32.gmra.mrb[0].mxu0 %v509
    %v1182 = vpop.f32.mrb[0].mxu0
    %v1183 = vadd.f32 0.0, %v1182
    %v1184 = vpop.f32.mrb[0].mxu0
    %1185 = vmatprep.mubr.f32.mxu0 0.0
    %1186 = vmatmul.mubr.f32.gmra.mrb[0].mxu0 %v512
    %v1187 = vpop.f32.mrb[0].mxu0
    %v1188 = vadd.f32 0.0, %v1187
    %v1189 = vpop.f32.mrb[0].mxu0
    %1190 = vmatprep.mubr.f32.mxu0 0.0
    %1191 = vmatmul.mubr.f32.gmra.mrb[0].mxu0 %v515
    %v1192 = vpop.f32.mrb[0].mxu0
    %v1193 = vadd.f32 0.0, %v1192
    %v1194 = vpop.f32.mrb[0].mxu0
    %1195 = vmatprep.mubr.f32.mxu0 0.0
    %1196 = vmatmul.mubr.f32.gmra.mrb[0].mxu0 %v518
    %v1197 = vpop.f32.mrb[0].mxu0
    %v1198 = vadd.f32 0.0, %v1197
    %v1199 = vpop.f32.mrb[0].mxu0
    %1200 = vmatprep.mubr.f32.mxu0 0.0
    %1201 = vmatmul.mubr.f32.gmra.mrb[0].mxu0 %v521
    %v1202 = vpop.f32.mrb[0].mxu0
    %v1203 = vadd.f32 0.0, %v1202
    %v1204 = vpop.f32.mrb[0].mxu0
    %1205 = vmatprep.mubr.f32.mxu0 0.0
    %1206 = vmatmul.mubr.f32.gmra.mrb[0].mxu0 %v524
    %v1207 = vpop.f32.mrb[0].mxu0
    %v1208 = vadd.f32 0.0, %v1207
    %v1209 = vpop.f32.mrb[0].mxu0
    %1210 = vmatprep.mubr.f32.mxu0 0.0
    %1211 = vmatmul.mubr.f32.gmra.mrb[0].mxu0 %v527
    %v1212 = vpop.f32.mrb[0].mxu0
    %v1213 = vadd.f32 0.0, %v1212
    %v1214 = vpop.f32.mrb[0].mxu0
    %1215 = vmatprep.mubr.f32.mxu0 0.0
    %1216 = vmatmul.mubr.f32.gmra.mrb[0].mxu0 %v530
    %v1217 = vpop.f32.mrb[0].mxu0
    %v1218 = vadd.f32 0.0, %v1217
    %v1219 = vpop.f32.mrb[0].mxu0
    %1220 = vmatprep.mubr.f32.mxu0 0.0
    %1221 = vmatmul.mubr.f32.gmra.mrb[0].mxu0 %v533
    %v1222 = vpop.f32.mrb[0].mxu0
    %v1223 = vadd.f32 0.0, %v1222
    %v1224 = vpop.f32.mrb[0].mxu0
    %1225 = vmatprep.mubr.f32.mxu0 0.0
    %1226 = vmatmul.mubr.f32.gmra.mrb[0].mxu0 %v536
    %v1227 = vpop.f32.mrb[0].mxu0
    %v1228 = vadd.f32 0.0, %v1227
    %v1229 = vpop.f32.mrb[0].mxu0
    %1230 = vmatprep.mubr.f32.mxu0 0.0
    %1231 = vmatmul.mubr.f32.gmra.mrb[0].mxu0 %v539
    %v1232 = vpop.f32.mrb[0].mxu0
    %v1233 = vadd.f32 0.0, %v1232
    %v1234 = vpop.f32.mrb[0].mxu0
    %1235 = vmatprep.mubr.f32.mxu0 0.0
    %1236 = vmatmul.mubr.f32.gmra.mrb[0].mxu0 %v542
    %v1237 = vpop.f32.mrb[0].mxu0
    %v1238 = vadd.f32 0.0, %v1237
    %v1239 = vpop.f32.mrb[0].mxu0
    %1240 = vmatprep.mubr.f32.mxu0 0.0
    %1241 = vmatmul.mubr.f32.gmra.mrb[0].mxu0 %v545
    %v1242 = vpop.f32.mrb[0].mxu0
    %v1243 = vadd.f32 0.0, %v1242
    %v1244 = vpop.f32.mrb[0].mxu0
    %1245 = vmatprep.mubr.f32.mxu0 0.0
    %1246 = vmatmul.mubr.f32.gmra.mrb[0].mxu0 %v548
    %v1247 = vpop.f32.mrb[0].mxu0
    %v1248 = vadd.f32 0.0, %v1247
    %v1249 = vpop.f32.mrb[0].mxu0
    %1250 = vmatprep.mubr.f32.mxu0 0.0
    %1251 = vmatmul.mubr.f32.gmra.mrb[0].mxu0 %v551
    %v1252 = vpop.f32.mrb[0].mxu0
    %v1253 = vadd.f32 0.0, %v1252
    %v1254 = vpop.f32.mrb[0].mxu0
    %1255 = vmatprep.mubr.f32.mxu0 0.0
    %1256 = vmatmul.mubr.f32.gmra.mrb[0].mxu0 %v554
    %v1257 = vpop.f32.mrb[0].mxu0
    %v1258 = vadd.f32 0.0, %v1257
    %v1259 = vpop.f32.mrb[0].mxu0
    %1260 = vmatprep.mubr.f32.mxu0 0.0
    %1261 = vmatmul.mubr.f32.gmra.mrb[0].mxu0 %v557
    %v1262 = vpop.f32.mrb[0].mxu0
    %v1263 = vadd.f32 0.0, %v1262
    %v1264 = vpop.f32.mrb[0].mxu0
    %1265 = vmatprep.mubr.f32.mxu0 0.0
    %1266 = vmatmul.mubr.f32.gmra.mrb[0].mxu0 %v560
    %v1267 = vpop.f32.mrb[0].mxu0
    %v1268 = vadd.f32 0.0, %v1267
    %v1269 = vpop.f32.mrb[0].mxu0
    %1270 = vmatprep.mubr.f32.mxu0 0.0
    %1271 = vmatmul.mubr.f32.gmra.mrb[0].mxu0 %v563
    %v1272 = vpop.f32.mrb[0].mxu0
    %v1273 = vadd.f32 0.0, %v1272
    %v1274 = vpop.f32.mrb[0].mxu0
    %1275 = vmatprep.mubr.f32.mxu0 0.0
    %1276 = vmatmul.mubr.f32.gmra.mrb[0].mxu0 %v566
    %v1277 = vpop.f32.mrb[0].mxu0
    %v1278 = vadd.f32 0.0, %v1277
    %v1279 = vpop.f32.mrb[0].mxu0
    %1280 = vmatprep.mubr.f32.mxu0 0.0
    %1281 = vmatmul.mubr.f32.gmra.mrb[0].mxu0 %v569
    %v1282 = vpop.f32.mrb[0].mxu0
    %v1283 = vadd.f32 0.0, %v1282
    %v1284 = vpop.f32.mrb[0].mxu0
    %1285 = vmatprep.mubr.f32.mxu0 0.0
    %1286 = vmatmul.mubr.f32.gmra.mrb[0].mxu0 %v572
    %v1287 = vpop.f32.mrb[0].mxu0
    %v1288 = vadd.f32 0.0, %v1287
    %v1289 = vpop.f32.mrb[0].mxu0
    %1290 = vmatprep.mubr.f32.mxu0 0.0
    %1291 = vmatmul.mubr.f32.gmra.mrb[0].mxu0 %v575
    %v1292 = vpop.f32.mrb[0].mxu0
    %v1293 = vadd.f32 0.0, %v1292
    %v1294 = vpop.f32.mrb[0].mxu0
    %1295 = vmatprep.mubr.f32.mxu0 0.0
    %1296 = vmatmul.mubr.f32.gmra.mrb[0].mxu0 %v578
    %v1297 = vpop.f32.mrb[0].mxu0
    %v1298 = vadd.f32 0.0, %v1297
    %v1299 = vpop.f32.mrb[0].mxu0
    %1300 = vmatprep.mubr.f32.mxu0 0.0
    %1301 = vmatmul.mubr.f32.gmra.mrb[0].mxu0 %v581
    %v1302 = vpop.f32.mrb[0].mxu0
    %v1303 = vadd.f32 0.0, %v1302
    %v1304 = vpop.f32.mrb[0].mxu0
    %1305 = vmatprep.mubr.f32.mxu0 0.0
    %1306 = vmatmul.mubr.f32.gmra.mrb[0].mxu0 %v584
    %v1307 = vpop.f32.mrb[0].mxu0
    %v1308 = vadd.f32 0.0, %v1307
    %v1309 = vpop.f32.mrb[0].mxu0
    %1310 = vmatprep.mubr.f32.mxu0 0.0
    %1311 = vmatmul.mubr.f32.gmra.mrb[0].mxu0 %v587
    %v1312 = vpop.f32.mrb[0].mxu0
    %v1313 = vadd.f32 0.0, %v1312
    %v1314 = vpop.f32.mrb[0].mxu0
    %1315 = vmatprep.mubr.f32.mxu0 0.0
    %1316 = vmatmul.mubr.f32.gmra.mrb[0].mxu0 %v590
    %v1317 = vpop.f32.mrb[0].mxu0
    %v1318 = vadd.f32 0.0, %v1317
    %v1319 = vpop.f32.mrb[0].mxu0
    %1320 = vmatprep.mubr.f32.mxu0 0.0
    %1321 = vmatmul.mubr.f32.gmra.mrb[0].mxu0 %v593
    %v1322 = vpop.f32.mrb[0].mxu0
    %v1323 = vadd.f32 0.0, %v1322
    %v1324 = vpop.f32.mrb[0].mxu0
    %1325 = vmatprep.mubr.f32.mxu0 0.0
    %1326 = vmatmul.mubr.f32.gmra.mrb[0].mxu0 %v596
    %v1327 = vpop.f32.mrb[0].mxu0
    %v1328 = vadd.f32 0.0, %v1327
    %v1329 = vpop.f32.mrb[0].mxu0
    %1330 = vmatprep.mubr.f32.mxu0 0.0
    %1331 = vmatmul.mubr.f32.gmra.mrb[0].mxu0 %v599
    %v1332 = vpop.f32.mrb[0].mxu0
    %v1333 = vadd.f32 0.0, %v1332
    %v1334 = vpop.f32.mrb[0].mxu0
    %1335 = vmatprep.mubr.f32.mxu0 0.0
    %1336 = vmatmul.mubr.f32.gmra.mrb[0].mxu0 %v602
    %v1337 = vpop.f32.mrb[0].mxu0
    %v1338 = vadd.f32 0.0, %v1337
    %v1339 = vpop.f32.mrb[0].mxu0
    %1340 = vmatprep.mubr.f32.mxu0 0.0
    %1341 = vmatmul.mubr.f32.gmra.mrb[0].mxu0 %v605
    %v1342 = vpop.f32.mrb[0].mxu0
    %v1343 = vadd.f32 0.0, %v1342
    %v1344 = vpop.f32.mrb[0].mxu0
    %1345 = vmatprep.mubr.f32.mxu0 0.0
    %1346 = vmatmul.mubr.f32.gmra.mrb[0].mxu0 %v608
    %v1347 = vpop.f32.mrb[0].mxu0
    %v1348 = vadd.f32 0.0, %v1347
    %v1349 = vpop.f32.mrb[0].mxu0
    %1350 = vmatprep.mubr.f32.mxu0 0.0
    %1351 = vmatmul.mubr.f32.gmra.mrb[0].mxu0 %v611
    %v1352 = vpop.f32.mrb[0].mxu0
    %v1353 = vadd.f32 0.0, %v1352
    %v1354 = vpop.f32.mrb[0].mxu0
    %1355 = vmatprep.mubr.f32.mxu0 0.0
    %1356 = vmatmul.mubr.f32.gmra.mrb[0].mxu0 %v614
    %v1357 = vpop.f32.mrb[0].mxu0
    %v1358 = vadd.f32 0.0, %v1357
    %v1359 = vpop.f32.mrb[0].mxu0
    %1360 = vmatprep.mubr.f32.mxu0 0.0
    %1361 = vmatmul.mubr.f32.gmra.mrb[0].mxu0 %v617
    %v1362 = vpop.f32.mrb[0].mxu0
    %v1363 = vadd.f32 0.0, %v1362
    %v1364 = vpop.f32.mrb[0].mxu0
    %1365 = vmatprep.mubr.f32.mxu0 0.0
    %1366 = vmatmul.mubr.f32.gmra.mrb[0].mxu0 %v620
    %v1367 = vpop.f32.mrb[0].mxu0
    %v1368 = vadd.f32 0.0, %v1367
    %v1369 = vpop.f32.mrb[0].mxu0
    %1370 = vmatprep.mubr.f32.mxu0 0.0
    %1371 = vmatmul.mubr.f32.gmra.mrb[0].mxu0 %v623
    %v1372 = vpop.f32.mrb[0].mxu0
    %v1373 = vadd.f32 0.0, %v1372
    %v1374 = vpop.f32.mrb[0].mxu0
    %1375 = vmatprep.mubr.f32.mxu0 0.0
    %1376 = vmatmul.mubr.f32.gmra.mrb[0].mxu0 %v626
    %v1377 = vpop.f32.mrb[0].mxu0
    %v1378 = vadd.f32 0.0, %v1377
    %v1379 = vpop.f32.mrb[0].mxu0
    %1380 = vmatprep.mubr.f32.mxu0 0.0
    %1381 = vmatmul.mubr.f32.gmra.mrb[0].mxu0 %v629
    %v1382 = vpop.f32.mrb[0].mxu0
    %v1383 = vadd.f32 0.0, %v1382
    %v1384 = vpop.f32.mrb[0].mxu0
    %1385 = vmatprep.mubr.f32.mxu0 0.0
    %1386 = vmatmul.mubr.f32.gmra.mrb[0].mxu0 %v632
    %v1387 = vpop.f32.mrb[0].mxu0
    %v1388 = vadd.f32 0.0, %v1387
    %v1389 = vpop.f32.mrb[0].mxu0
    %1390 = vmatprep.mubr.f32.mxu0 0.0
    %1391 = vmatmul.mubr.f32.gmra.mrb[0].mxu0 %v635
    %v1392 = vpop.f32.mrb[0].mxu0
    %v1393 = vadd.f32 0.0, %v1392
    %v1394 = vpop.f32.mrb[0].mxu0
    %1395 = vmatprep.mubr.f32.mxu0 0.0
    %1396 = vmatmul.mubr.f32.gmra.mrb[0].mxu0 %v638
    %v1397 = vpop.f32.mrb[0].mxu0
    %v1398 = vadd.f32 0.0, %v1397
    %v1399 = vpop.f32.mrb[0].mxu0
    %1400 = vmatprep.mubr.f32.mxu0 0.0
    %1401 = vmatmul.mubr.f32.gmra.mrb[0].mxu0 %v641
    %v1402 = vpop.f32.mrb[0].mxu0
    %v1403 = vadd.f32 0.0, %v1402
    %v1404 = vpop.f32.mrb[0].mxu0
    %1405 = vmatprep.mubr.f32.mxu0 0.0
    %1406 = vmatmul.mubr.f32.gmra.mrb[0].mxu0 %v644
    %v1407 = vpop.f32.mrb[0].mxu0
    %v1408 = vadd.f32 0.0, %v1407
    %v1409 = vpop.f32.mrb[0].mxu0
    %1410 = vmatprep.mubr.f32.mxu0 0.0
    %1411 = vmatmul.mubr.f32.gmra.mrb[0].mxu0 %v647
    %v1412 = vpop.f32.mrb[0].mxu0
    %v1413 = vadd.f32 0.0, %v1412
    %v1414 = vpop.f32.mrb[0].mxu0
    %1415 = vmatprep.mubr.f32.mxu0 0.0
    %1416 = vmatmul.mubr.f32.gmra.mrb[0].mxu0 %v650
    %v1417 = vpop.f32.mrb[0].mxu0
    %v1418 = vadd.f32 0.0, %v1417
    %v1419 = vpop.f32.mrb[0].mxu0
    %1420 = vmatprep.mubr.f32.mxu0 0.0
    %1421 = vmatmul.mubr.f32.gmra.mrb[0].mxu0 %v653
    %v1422 = vpop.f32.mrb[0].mxu0
    %v1423 = vadd.f32 0.0, %v1422
    %v1424 = vpop.f32.mrb[0].mxu0
    %1425 = vmatprep.mubr.f32.mxu0 0.0
    %1426 = vmatmul.mubr.f32.gmra.mrb[0].mxu0 %v656
    %v1427 = vpop.f32.mrb[0].mxu0
    %v1428 = vadd.f32 0.0, %v1427
    %v1429 = vpop.f32.mrb[0].mxu0
    %1430 = vmatprep.mubr.f32.mxu0 0.0
    %1431 = vmatmul.mubr.f32.gmra.mrb[0].mxu0 %v659
    %v1432 = vpop.f32.mrb[0].mxu0
    %v1433 = vadd.f32 0.0, %v1432
    %v1434 = vpop.f32.mrb[0].mxu0
    %1435 = vmatprep.mubr.f32.mxu0 0.0
    %1436 = vmatmul.mubr.f32.gmra.mrb[0].mxu0 %v662
    %v1437 = vpop.f32.mrb[0].mxu0
    %v1438 = vadd.f32 0.0, %v1437
    %v1439 = vpop.f32.mrb[0].mxu0
    %1440 = vmatprep.mubr.f32.mxu0 0.0
    %1441 = vmatmul.mubr.f32.gmra.mrb[0].mxu0 %v665
    %v1442 = vpop.f32.mrb[0].mxu0
    %v1443 = vadd.f32 0.0, %v1442
    %v1444 = vpop.f32.mrb[0].mxu0
    %1445 = vmatprep.mubr.f32.mxu0 0.0
    %1446 = vmatmul.mubr.f32.gmra.mrb[0].mxu0 %v668
    %v1447 = vpop.f32.mrb[0].mxu0
    %v1448 = vadd.f32 0.0, %v1447
    %v1449 = vpop.f32.mrb[0].mxu0
    %1450 = vmatprep.mubr.f32.mxu0 0.0
    %1451 = vmatmul.mubr.f32.gmra.mrb[0].mxu0 %v671
    %v1452 = vpop.f32.mrb[0].mxu0
    %v1453 = vadd.f32 0.0, %v1452
    %v1454 = vpop.f32.mrb[0].mxu0
    %1455 = vmatprep.mubr.f32.mxu0 0.0
    %1456 = vmatmul.mubr.f32.gmra.mrb[0].mxu0 %v674
    %v1457 = vpop.f32.mrb[0].mxu0
    %v1458 = vadd.f32 0.0, %v1457
    %v1459 = vpop.f32.mrb[0].mxu0
    %1460 = vmatprep.mubr.f32.mxu0 0.0
    %1461 = vmatmul.mubr.f32.gmra.mrb[0].mxu0 %v677
    %v1462 = vpop.f32.mrb[0].mxu0
    %v1463 = vadd.f32 0.0, %v1462
    %v1464 = vpop.f32.mrb[0].mxu0
    %1465 = vmatprep.mubr.f32.mxu0 0.0
    %1466 = vmatmul.mubr.f32.gmra.mrb[0].mxu0 %v680
    %v1467 = vpop.f32.mrb[0].mxu0
    %v1468 = vadd.f32 0.0, %v1467
    %v1469 = vpop.f32.mrb[0].mxu0
    %1470 = vmatprep.mubr.f32.mxu0 0.0
    %1471 = vmatmul.mubr.f32.gmra.mrb[0].mxu0 %v683
    %v1472 = vpop.f32.mrb[0].mxu0
    %v1473 = vadd.f32 0.0, %v1472
    %v1474 = vpop.f32.mrb[0].mxu0
    %1475 = vmatprep.mubr.f32.mxu0 0.0
    %1476 = vmatmul.mubr.f32.gmra.mrb[0].mxu0 %v686
    %v1477 = vpop.f32.mrb[0].mxu0
    %v1478 = vadd.f32 0.0, %v1477
    %v1479 = vpop.f32.mrb[0].mxu0
    %1480 = vmatprep.mubr.f32.mxu0 0.0
    %1481 = vmatmul.mubr.f32.gmra.mrb[0].mxu0 %v689
    %v1482 = vpop.f32.mrb[0].mxu0
    %v1483 = vadd.f32 0.0, %v1482
    %v1484 = vpop.f32.mrb[0].mxu0
    %1485 = vmatprep.mubr.f32.mxu0 0.0
    %1486 = vmatmul.mubr.f32.gmra.mrb[0].mxu0 %v692
    %v1487 = vpop.f32.mrb[0].mxu0
    %v1488 = vadd.f32 0.0, %v1487
    %v1489 = vpop.f32.mrb[0].mxu0
    %1490 = vmatprep.mubr.f32.mxu0 0.0
    %1491 = vmatmul.mubr.f32.gmra.mrb[0].mxu0 %v695
    %v1492 = vpop.f32.mrb[0].mxu0
    %v1493 = vadd.f32 0.0, %v1492
    %v1494 = vpop.f32.mrb[0].mxu0
    %1495 = vmatprep.mubr.f32.mxu0 0.0
    %1496 = vmatmul.mubr.f32.gmra.mrb[0].mxu0 %v698
    %v1497 = vpop.f32.mrb[0].mxu0
    %v1498 = vadd.f32 0.0, %v1497
    %v1499 = vpop.f32.mrb[0].mxu0
    %1500 = vmatprep.mubr.f32.mxu0 0.0
    %1501 = vmatmul.mubr.f32.gmra.mrb[0].mxu0 %v701
    %v1502 = vpop.f32.mrb[0].mxu0
    %v1503 = vadd.f32 0.0, %v1502
    %v1504 = vpop.f32.mrb[0].mxu0
    %1505 = vmatprep.mubr.f32.mxu0 0.0
    %1506 = vmatmul.mubr.f32.gmra.mrb[0].mxu0 %v704
    %v1507 = vpop.f32.mrb[0].mxu0
    %v1508 = vadd.f32 0.0, %v1507
    %v1509 = vpop.f32.mrb[0].mxu0
    %1510 = vmatprep.mubr.f32.mxu0 0.0
    %1511 = vmatmul.mubr.f32.gmra.mrb[0].mxu0 %v707
    %v1512 = vpop.f32.mrb[0].mxu0
    %v1513 = vadd.f32 0.0, %v1512
    %v1514 = vpop.f32.mrb[0].mxu0
    %1515 = vmatprep.mubr.f32.mxu0 0.0
    %1516 = vmatmul.mubr.f32.gmra.mrb[0].mxu0 %v710
    %v1517 = vpop.f32.mrb[0].mxu0
    %v1518 = vadd.f32 0.0, %v1517
    %v1519 = vpop.f32.mrb[0].mxu0
    %1520 = vmatprep.mubr.f32.mxu0 0.0
    %1521 = vmatmul.mubr.f32.gmra.mrb[0].mxu0 %v713
    %v1522 = vpop.f32.mrb[0].mxu0
    %v1523 = vadd.f32 0.0, %v1522
    %v1524 = vpop.f32.mrb[0].mxu0
    %1525 = vmatprep.mubr.f32.mxu0 0.0
    %1526 = vmatmul.mubr.f32.gmra.mrb[0].mxu0 %v716
    %v1527 = vpop.f32.mrb[0].mxu0
    %v1528 = vadd.f32 0.0, %v1527
    %v1529 = vpop.f32.mrb[0].mxu0
    %1530 = vmatprep.mubr.f32.mxu0 0.0
    %1531 = vmatmul.mubr.f32.gmra.mrb[0].mxu0 %v719
    %v1532 = vpop.f32.mrb[0].mxu0
    %v1533 = vadd.f32 0.0, %v1532
    %v1534 = vpop.f32.mrb[0].mxu0
    %1535 = vmatprep.mubr.f32.mxu0 0.0
    %1536 = vmatmul.mubr.f32.gmra.mrb[0].mxu0 %v722
    %v1537 = vpop.f32.mrb[0].mxu0
    %v1538 = vadd.f32 0.0, %v1537
    %v1539 = vpop.f32.mrb[0].mxu0
    %1540 = vmatprep.mubr.f32.mxu0 0.0
    %1541 = vmatmul.mubr.f32.gmra.mrb[0].mxu0 %v725
    %v1542 = vpop.f32.mrb[0].mxu0
    %v1543 = vadd.f32 0.0, %v1542
    %v1544 = vpop.f32.mrb[0].mxu0
    %1545 = vmatprep.mubr.f32.mxu0 0.0
    %1546 = vmatmul.mubr.f32.gmra.mrb[0].mxu0 %v728
    %v1547 = vpop.f32.mrb[0].mxu0
    %v1548 = vadd.f32 0.0, %v1547
    %v1549 = vpop.f32.mrb[0].mxu0
    %1550 = vmatprep.mubr.f32.mxu0 0.0
    %1551 = vmatmul.mubr.f32.gmra.mrb[0].mxu0 %v731
    %v1552 = vpop.f32.mrb[0].mxu0
    %v1553 = vadd.f32 0.0, %v1552
    %v1554 = vpop.f32.mrb[0].mxu0
    %1555 = vmatprep.mubr.f32.mxu0 0.0
    %1556 = vmatmul.mubr.f32.gmra.mrb[0].mxu0 %v734
    %v1557 = vpop.f32.mrb[0].mxu0
    %v1558 = vadd.f32 0.0, %v1557
    %v1559 = vpop.f32.mrb[0].mxu0
    %1560 = vmatprep.mubr.f32.mxu0 0.0
    %1561 = vmatmul.mubr.f32.gmra.mrb[0].mxu0 %v737
    %v1562 = vpop.f32.mrb[0].mxu0
    %v1563 = vadd.f32 0.0, %v1562
    %v1564 = vpop.f32.mrb[0].mxu0
    %1565 = vmatprep.mubr.f32.mxu0 0.0
    %1566 = vmatmul.mubr.f32.gmra.mrb[0].mxu0 %v740
    %v1567 = vpop.f32.mrb[0].mxu0
    %v1568 = vadd.f32 0.0, %v1567
    %v1569 = vpop.f32.mrb[0].mxu0
    %1570 = vmatprep.mubr.f32.mxu0 0.0
    %1571 = vmatmul.mubr.f32.gmra.mrb[0].mxu0 %v743
    %v1572 = vpop.f32.mrb[0].mxu0
    %v1573 = vadd.f32 0.0, %v1572
    %v1574 = vpop.f32.mrb[0].mxu0
    %1575 = vmatprep.mubr.f32.mxu0 0.0
    %1576 = vmatmul.mubr.f32.gmra.mrb[0].mxu0 %v746
    %v1577 = vpop.f32.mrb[0].mxu0
    %v1578 = vadd.f32 0.0, %v1577
    %v1579 = vpop.f32.mrb[0].mxu0
    %1580 = vmatprep.mubr.f32.mxu0 0.0
    %1581 = vmatmul.mubr.f32.gmra.mrb[0].mxu0 %v749
    %v1582 = vpop.f32.mrb[0].mxu0
    %v1583 = vadd.f32 0.0, %v1582
    %v1584 = vpop.f32.mrb[0].mxu0
    %1585 = vmatprep.mubr.f32.mxu0 0.0
    %1586 = vmatmul.mubr.f32.gmra.mrb[0].mxu0 %v752
    %v1587 = vpop.f32.mrb[0].mxu0
    %v1588 = vadd.f32 0.0, %v1587
    %v1589 = vpop.f32.mrb[0].mxu0
    %1590 = vmatprep.mubr.f32.mxu0 0.0
    %1591 = vmatmul.mubr.f32.gmra.mrb[0].mxu0 %v755
    %v1592 = vpop.f32.mrb[0].mxu0
    %v1593 = vadd.f32 0.0, %v1592
    %v1594 = vpop.f32.mrb[0].mxu0
    %1595 = vmatprep.mubr.f32.mxu0 0.0
    %1596 = vmatmul.mubr.f32.gmra.mrb[0].mxu0 %v758
    %v1597 = vpop.f32.mrb[0].mxu0
    %v1598 = vadd.f32 0.0, %v1597
    %v1599 = vpop.f32.mrb[0].mxu0
    %1600 = vmatprep.mubr.f32.mxu0 0.0
    %1601 = vmatmul.mubr.f32.gmra.mrb[0].mxu0 %v761
    %v1602 = vpop.f32.mrb[0].mxu0
    %v1603 = vadd.f32 0.0, %v1602
    %v1604 = vpop.f32.mrb[0].mxu0
    %1605 = vmatprep.mubr.f32.mxu0 0.0
    %1606 = vmatmul.mubr.f32.gmra.mrb[0].mxu0 %v764
    %v1607 = vpop.f32.mrb[0].mxu0
    %v1608 = vadd.f32 0.0, %v1607
    %v1609 = vpop.f32.mrb[0].mxu0
    %1610 = vmatprep.mubr.f32.mxu0 0.0
    %1611 = vmatmul.mubr.f32.gmra.mrb[0].mxu0 %v767
    %v1612 = vpop.f32.mrb[0].mxu0
    %v1613 = vadd.f32 0.0, %v1612
    %v1614 = vpop.f32.mrb[0].mxu0
    %1615 = vmatprep.mubr.f32.mxu0 0.0
    %1616 = vmatmul.mubr.f32.gmra.mrb[0].mxu0 %v770
    %v1617 = vpop.f32.mrb[0].mxu0
    %v1618 = vadd.f32 0.0, %v1617
    %v1619 = vpop.f32.mrb[0].mxu0
    %1620 = vmatprep.mubr.f32.mxu0 0.0
    %1621 = vmatmul.mubr.f32.gmra.mrb[0].mxu0 %v773
    %v1622 = vpop.f32.mrb[0].mxu0
    %v1623 = vadd.f32 0.0, %v1622
    %v1624 = vpop.f32.mrb[0].mxu0
    %1625 = vmatprep.mubr.f32.mxu0 0.0
    %1626 = vmatmul.mubr.f32.gmra.mrb[0].mxu0 %v776
    %v1627 = vpop.f32.mrb[0].mxu0
    %v1628 = vadd.f32 0.0, %v1627
    %v1629 = vpop.f32.mrb[0].mxu0
    %1630 = vmatprep.mubr.f32.mxu0 0.0
    %1631 = vmatmul.mubr.f32.gmra.mrb[0].mxu0 %v779
    %v1632 = vpop.f32.mrb[0].mxu0
    %v1633 = vadd.f32 0.0, %v1632
    %v1634 = vpop.f32.mrb[0].mxu0
    %1635 = vmatprep.mubr.f32.mxu0 0.0
    %1636 = vmatmul.mubr.f32.gmra.mrb[0].mxu0 %v782
    %v1637 = vpop.f32.mrb[0].mxu0
    %v1638 = vadd.f32 0.0, %v1637
    %v1639 = vpop.f32.mrb[0].mxu0
    %1640 = vmatprep.mubr.f32.mxu0 0.0
    %1641 = vmatmul.mubr.f32.gmra.mrb[0].mxu0 %v785
    %v1642 = vpop.f32.mrb[0].mxu0
    %v1643 = vadd.f32 0.0, %v1642
    %v1644 = vpop.f32.mrb[0].mxu0
    %1645 = vmatprep.mubr.f32.mxu0 0.0
    %1646 = vmatmul.mubr.f32.gmra.mrb[0].mxu0 %v788
    %v1647 = vpop.f32.mrb[0].mxu0
    %v1648 = vadd.f32 0.0, %v1647
    %v1649 = vpop.f32.mrb[0].mxu0
    %1650 = vmatprep.mubr.f32.mxu0 0.0
    %1651 = vmatmul.mubr.f32.gmra.mrb[0].mxu0 %v791
    %v1652 = vpop.f32.mrb[0].mxu0
    %v1653 = vadd.f32 0.0, %v1652
    %v1654 = vpop.f32.mrb[0].mxu0
    %1655 = vmatprep.mubr.f32.mxu0 0.0
    %1656 = vmatmul.mubr.f32.gmra.mrb[0].mxu0 %v794
    %v1657 = vpop.f32.mrb[0].mxu0
    %v1658 = vadd.f32 0.0, %v1657
    %v1659 = vpop.f32.mrb[0].mxu0
    %1660 = vmatprep.mubr.f32.mxu0 0.0
    %1661 = vmatmul.mubr.f32.gmra.mrb[0].mxu0 %v797
    %v1662 = vpop.f32.mrb[0].mxu0
    %v1663 = vadd.f32 0.0, %v1662
    %v1664 = vpop.f32.mrb[0].mxu0
    %1665 = vmatprep.mubr.f32.mxu0 0.0
    %1666 = vmatmul.mubr.f32.gmra.mrb[0].mxu0 %v800
    %v1667 = vpop.f32.mrb[0].mxu0
    %v1668 = vadd.f32 0.0, %v1667
    %v1669 = vpop.f32.mrb[0].mxu0
    %1670 = vmatprep.mubr.f32.mxu0 0.0
    %1671 = vmatmul.mubr.f32.gmra.mrb[0].mxu0 %v803
    %v1672 = vpop.f32.mrb[0].mxu0
    %v1673 = vadd.f32 0.0, %v1672
    %v1674 = vpop.f32.mrb[0].mxu0
    %1675 = vmatprep.mubr.f32.mxu0 0.0
    %1676 = vmatmul.mubr.f32.gmra.mrb[0].mxu0 %v806
    %v1677 = vpop.f32.mrb[0].mxu0
    %v1678 = vadd.f32 0.0, %v1677
    %v1679 = vpop.f32.mrb[0].mxu0
    %1680 = vmatprep.mubr.f32.mxu0 0.0
    %1681 = vmatmul.mubr.f32.gmra.mrb[0].mxu0 %v809
    %v1682 = vpop.f32.mrb[0].mxu0
    %v1683 = vadd.f32 0.0, %v1682
    %v1684 = vpop.f32.mrb[0].mxu0
    %1685 = vmatprep.mubr.f32.mxu0 0.0
    %1686 = vmatmul.mubr.f32.gmra.mrb[0].mxu0 %v812
    %v1687 = vpop.f32.mrb[0].mxu0
    %v1688 = vadd.f32 0.0, %v1687
    %v1689 = vpop.f32.mrb[0].mxu0
    %1690 = vmatprep.mubr.f32.mxu0 0.0
    %1691 = vmatmul.mubr.f32.gmra.mrb[0].mxu0 %v815
    %v1692 = vpop.f32.mrb[0].mxu0
    %v1693 = vadd.f32 0.0, %v1692
    %v1694 = vpop.f32.mrb[0].mxu0
    %1695 = vmatprep.mubr.f32.mxu0 0.0
    %1696 = vmatmul.mubr.f32.gmra.mrb[0].mxu0 %v818
    %v1697 = vpop.f32.mrb[0].mxu0
    %v1698 = vadd.f32 0.0, %v1697
    %v1699 = vpop.f32.mrb[0].mxu0
    %1700 = vmatprep.mubr.f32.mxu0 0.0
    %1701 = vmatmul.mubr.f32.gmra.mrb[0].mxu0 %v821
    %v1702 = vpop.f32.mrb[0].mxu0
    %v1703 = vadd.f32 0.0, %v1702
    %v1704 = vpop.f32.mrb[0].mxu0
    %1705 = vmatprep.mubr.f32.mxu0 0.0
    %1706 = vmatmul.mubr.f32.gmra.mrb[0].mxu0 %v824
    %v1707 = vpop.f32.mrb[0].mxu0
    %v1708 = vadd.f32 0.0, %v1707
    %v1709 = vpop.f32.mrb[0].mxu0
    %1710 = vmatprep.mubr.f32.mxu0 0.0
    %1711 = vmatmul.mubr.f32.gmra.mrb[0].mxu0 %v827
    %v1712 = vpop.f32.mrb[0].mxu0
    %v1713 = vadd.f32 0.0, %v1712
    %v1714 = vpop.f32.mrb[0].mxu0
    %1715 = vmatprep.mubr.f32.mxu0 0.0
    %1716 = vmatmul.mubr.f32.gmra.mrb[0].mxu0 %v830
    %v1717 = vpop.f32.mrb[0].mxu0
    %v1718 = vadd.f32 0.0, %v1717
    %v1719 = vpop.f32.mrb[0].mxu0
    %1720 = vmatprep.mubr.f32.mxu0 0.0
    %1721 = vmatmul.mubr.f32.gmra.mrb[0].mxu0 %v833
    %v1722 = vpop.f32.mrb[0].mxu0
    %v1723 = vadd.f32 0.0, %v1722
    %v1724 = vpop.f32.mrb[0].mxu0
    %1725 = vmatprep.mubr.f32.mxu0 0.0
    %1726 = vmatmul.mubr.f32.gmra.mrb[0].mxu0 %v836
    %v1727 = vpop.f32.mrb[0].mxu0
    %v1728 = vadd.f32 0.0, %v1727
    %v1729 = vpop.f32.mrb[0].mxu0
    %1730 = vmatprep.mubr.f32.mxu0 0.0
    %1731 = vmatmul.mubr.f32.gmra.mrb[0].mxu0 %v839
    %v1732 = vpop.f32.mrb[0].mxu0
    %v1733 = vadd.f32 0.0, %v1732
    %v1734 = vpop.f32.mrb[0].mxu0
    %1735 = vmatprep.mubr.f32.mxu0 0.0
    %1736 = vmatmul.mubr.f32.gmra.mrb[0].mxu0 %v842
    %v1737 = vpop.f32.mrb[0].mxu0
    %v1738 = vadd.f32 0.0, %v1737
    %v1739 = vpop.f32.mrb[0].mxu0
    %1740 = vmatprep.mubr.f32.mxu0 0.0
    %1741 = vmatmul.mubr.f32.gmra.mrb[0].mxu0 %v845
    %v1742 = vpop.f32.mrb[0].mxu0
    %v1743 = vadd.f32 0.0, %v1742
    %v1744 = vpop.f32.mrb[0].mxu0
    %1745 = vmatprep.mubr.f32.mxu0 0.0
    %1746 = vmatmul.mubr.f32.gmra.mrb[0].mxu0 %v848
    %v1747 = vpop.f32.mrb[0].mxu0
    %v1748 = vadd.f32 0.0, %v1747
    %v1749 = vpop.f32.mrb[0].mxu0
    %1750 = vmatprep.mubr.f32.mxu0 0.0
    %1751 = vmatmul.mubr.f32.gmra.mrb[0].mxu0 %v851
    %v1752 = vpop.f32.mrb[0].mxu0
    %v1753 = vadd.f32 0.0, %v1752
    %v1754 = vpop.f32.mrb[0].mxu0
    %1755 = vmatprep.mubr.f32.mxu0 0.0
    %1756 = vmatmul.mubr.f32.gmra.mrb[0].mxu0 %v854
    %v1757 = vpop.f32.mrb[0].mxu0
    %v1758 = vadd.f32 0.0, %v1757
    %v1759 = vpop.f32.mrb[0].mxu0
    %1760 = vmatprep.mubr.f32.mxu0 0.0
    %1761 = vmatmul.mubr.f32.gmra.mrb[0].mxu0 %v857
    %v1762 = vpop.f32.mrb[0].mxu0
    %v1763 = vadd.f32 0.0, %v1762
    %v1764 = vpop.f32.mrb[0].mxu0
    %1765 = vmatprep.mubr.f32.mxu0 0.0
    %1766 = vmatmul.mubr.f32.gmra.mrb[0].mxu0 %v860
    %v1767 = vpop.f32.mrb[0].mxu0
    %v1768 = vadd.f32 0.0, %v1767
    %v1769 = vpop.f32.mrb[0].mxu0
    %1770 = vmatprep.mubr.f32.mxu0 0.0
    %1771 = vmatmul.mubr.f32.gmra.mrb[0].mxu0 %v863
    %v1772 = vpop.f32.mrb[0].mxu0
    %v1773 = vadd.f32 0.0, %v1772
    %v1774 = vpop.f32.mrb[0].mxu0
    %1775 = vmatprep.mubr.f32.mxu0 0.0
    %1776 = vmatmul.mubr.f32.gmra.mrb[0].mxu0 %v866
    %v1777 = vpop.f32.mrb[0].mxu0
    %v1778 = vadd.f32 0.0, %v1777
    %v1779 = vpop.f32.mrb[0].mxu0
    %1780 = vmatprep.mubr.f32.mxu0 0.0
    %1781 = vmatmul.mubr.f32.gmra.mrb[0].mxu0 %v869
    %v1782 = vpop.f32.mrb[0].mxu0
    %v1783 = vadd.f32 0.0, %v1782
    %v1784 = vpop.f32.mrb[0].mxu0
    %1785 = vmatprep.mubr.f32.mxu0 0.0
    %1786 = vmatmul.mubr.f32.gmra.mrb[0].mxu0 %v872
    %v1787 = vpop.f32.mrb[0].mxu0
    %v1788 = vadd.f32 0.0, %v1787
    %v1789 = vpop.f32.mrb[0].mxu0
    %1790 = vmatprep.mubr.f32.mxu0 0.0
    %1791 = vmatmul.mubr.f32.gmra.mrb[0].mxu0 %v875
    %v1792 = vpop.f32.mrb[0].mxu0
    %v1793 = vadd.f32 0.0, %v1792
    %v1794 = vpop.f32.mrb[0].mxu0
    %1795 = vmatprep.mubr.f32.mxu0 0.0
    %1796 = vmatmul.mubr.f32.gmra.mrb[0].mxu0 %v878
    %v1797 = vpop.f32.mrb[0].mxu0
    %v1798 = vadd.f32 0.0, %v1797
    %v1799 = vpop.f32.mrb[0].mxu0
    %1800 = vmatprep.mubr.f32.mxu0 0.0
    %1801 = vmatmul.mubr.f32.gmra.mrb[0].mxu0 %v881
    %v1802 = vpop.f32.mrb[0].mxu0
    %v1803 = vadd.f32 0.0, %v1802
    %v1804 = vpop.f32.mrb[0].mxu0
    %1805 = vmatprep.mubr.f32.mxu0 0.0
    %1806 = vmatmul.mubr.f32.gmra.mrb[0].mxu0 %v884
    %v1807 = vpop.f32.mrb[0].mxu0
    %v1808 = vadd.f32 0.0, %v1807
    %v1809 = vpop.f32.mrb[0].mxu0
    %1810 = vmatprep.mubr.f32.mxu0 0.0
    %1811 = vmatmul.mubr.f32.gmra.mrb[0].mxu0 %v887
    %v1812 = vpop.f32.mrb[0].mxu0
    %v1813 = vadd.f32 0.0, %v1812
    %v1814 = vpop.f32.mrb[0].mxu0
    %1815 = vmatprep.mubr.f32.mxu0 0.0
    %1816 = vmatmul.mubr.f32.gmra.mrb[0].mxu0 %v890
    %v1817 = vpop.f32.mrb[0].mxu0
    %v1818 = vadd.f32 0.0, %v1817
    %v1819 = vpop.f32.mrb[0].mxu0
    %1820 = vmatprep.mubr.f32.mxu0 0.0
    %1821 = vmatmul.mubr.f32.gmra.mrb[0].mxu0 %v893
    %v1822 = vpop.f32.mrb[0].mxu0
    %v1823 = vadd.f32 0.0, %v1822
    %v1824 = vpop.f32.mrb[0].mxu0
    %1825 = vmatprep.mubr.f32.mxu0 0.0
    %1826 = vmatmul.mubr.f32.gmra.mrb[0].mxu0 %v896
    %v1827 = vpop.f32.mrb[0].mxu0
    %v1828 = vadd.f32 0.0, %v1827
    %v1829 = vpop.f32.mrb[0].mxu0
    %1830 = vmatprep.mubr.f32.mxu0 0.0
    %1831 = vmatmul.mubr.f32.gmra.mrb[0].mxu0 %v899
    %v1832 = vpop.f32.mrb[0].mxu0
    %v1833 = vadd.f32 0.0, %v1832
    %v1834 = vpop.f32.mrb[0].mxu0
    %1835 = vmatprep.mubr.f32.mxu0 0.0
    %1836 = vmatmul.mubr.f32.gmra.mrb[0].mxu0 %v902
    %v1837 = vpop.f32.mrb[0].mxu0
    %v1838 = vadd.f32 0.0, %v1837
    %v1839 = vpop.f32.mrb[0].mxu0
    %1840 = vmatprep.mubr.f32.mxu0 0.0
    %1841 = vmatmul.mubr.f32.gmra.mrb[0].mxu0 %v905
    %v1842 = vpop.f32.mrb[0].mxu0
    %v1843 = vadd.f32 0.0, %v1842
    %v1844 = vpop.f32.mrb[0].mxu0
    %1845 = vmatprep.mubr.f32.mxu0 0.0
    %1846 = vmatmul.mubr.f32.gmra.mrb[0].mxu0 %v908
    %v1847 = vpop.f32.mrb[0].mxu0
    %v1848 = vadd.f32 0.0, %v1847
    %v1849 = vpop.f32.mrb[0].mxu0
    %1850 = vmatprep.mubr.f32.mxu0 0.0
    %1851 = vmatmul.mubr.f32.gmra.mrb[0].mxu0 %v911
    %v1852 = vpop.f32.mrb[0].mxu0
    %v1853 = vadd.f32 0.0, %v1852
    %v1854 = vpop.f32.mrb[0].mxu0
    %1855 = vmatprep.mubr.f32.mxu0 0.0
    %1856 = vmatmul.mubr.f32.gmra.mrb[0].mxu0 %v914
    %v1857 = vpop.f32.mrb[0].mxu0
    %v1858 = vadd.f32 0.0, %v1857
    %v1859 = vpop.f32.mrb[0].mxu0
    %1860 = vmatprep.mubr.f32.mxu0 0.0
    %1861 = vmatmul.mubr.f32.gmra.mrb[0].mxu0 %v917
    %v1862 = vpop.f32.mrb[0].mxu0
    %v1863 = vadd.f32 0.0, %v1862
    %v1864 = vpop.f32.mrb[0].mxu0
    %1865 = vmatprep.mubr.f32.mxu0 0.0
    %1866 = vmatmul.mubr.f32.gmra.mrb[0].mxu0 %v920
    %v1867 = vpop.f32.mrb[0].mxu0
    %v1868 = vadd.f32 0.0, %v1867
    %v1869 = vpop.f32.mrb[0].mxu0
    %1870 = vdwg.mxu0
    %v1872 = vsel %vm393, %v38, 0
    %v1875 = vsel %vm393, %v39, 0
    %v1878 = vsel %vm393, %v40, 0
    %v1881 = vsel %vm393, %v41, 0
    %v1884 = vsel %vm393, %v42, 0
    %v1887 = vsel %vm393, %v43, 0
    %v1890 = vsel %vm393, %v44, 0
    %v1893 = vsel %vm393, %v45, 0
    %v1896 = vsel %vm393, %v46, 0
    %v1899 = vsel %vm393, %v47, 0
    %v1902 = vsel %vm393, %v48, 0
    %v1905 = vsel %vm393, %v49, 0
    %v1908 = vsel %vm393, %v50, 0
    %v1911 = vsel %vm393, %v51, 0
    %v1914 = vsel %vm393, %v52, 0
    %v1917 = vsel %vm393, %v53, 0
    %v1920 = vsel %vm393, %v54, 0
    %v1923 = vsel %vm393, %v55, 0
    %v1926 = vsel %vm393, %v56, 0
    %v1929 = vsel %vm393, %v57, 0
    %v1932 = vsel %vm393, %v58, 0
    %v1935 = vsel %vm393, %v59, 0
    %v1938 = vsel %vm393, %v60, 0
    %v1941 = vsel %vm393, %v61, 0
    %v1944 = vsel %vm393, %v62, 0
    %v1947 = vsel %vm393, %v63, 0
    %v1950 = vsel %vm393, %v64, 0
    %v1953 = vsel %vm393, %v65, 0
    %v1956 = vsel %vm393, %v66, 0
    %v1959 = vsel %vm393, %v67, 0
    %v1962 = vsel %vm393, %v68, 0
    %v1965 = vsel %vm393, %v69, 0
    %v1968 = vsel %vm393, %v70, 0
    %v1971 = vsel %vm393, %v71, 0
    %v1974 = vsel %vm393, %v72, 0
    %v1977 = vsel %vm393, %v73, 0
    %v1980 = vsel %vm393, %v74, 0
    %v1983 = vsel %vm393, %v75, 0
    %v1986 = vsel %vm393, %v76, 0
    %v1989 = vsel %vm393, %v77, 0
    %v1992 = vsel %vm393, %v78, 0
    %v1995 = vsel %vm393, %v79, 0
    %v1998 = vsel %vm393, %v80, 0
    %v2001 = vsel %vm393, %v81, 0
    %v2004 = vsel %vm393, %v82, 0
    %v2007 = vsel %vm393, %v83, 0
    %v2010 = vsel %vm393, %v84, 0
    %v2013 = vsel %vm393, %v85, 0
    %v2016 = vsel %vm393, %v86, 0
    %v2019 = vsel %vm393, %v87, 0
    %v2022 = vsel %vm393, %v88, 0
    %v2025 = vsel %vm393, %v89, 0
    %v2028 = vsel %vm393, %v90, 0
    %v2031 = vsel %vm393, %v91, 0
    %v2034 = vsel %vm393, %v92, 0
    %v2037 = vsel %vm393, %v93, 0
    %v2040 = vsel %vm393, %v94, 0
    %v2043 = vsel %vm393, %v95, 0
    %v2046 = vsel %vm393, %v96, 0
    %v2049 = vsel %vm393, %v97, 0
    %v2052 = vsel %vm393, %v98, 0
    %v2055 = vsel %vm393, %v99, 0
    %v2058 = vsel %vm393, %v100, 0
    %v2061 = vsel %vm393, %v101, 0
    %v2064 = vsel %vm393, %v102, 0
    %v2067 = vsel %vm393, %v103, 0
    %v2070 = vsel %vm393, %v104, 0
    %v2073 = vsel %vm393, %v105, 0
    %v2076 = vsel %vm393, %v106, 0
    %v2079 = vsel %vm393, %v107, 0
    %v2082 = vsel %vm393, %v108, 0
    %v2085 = vsel %vm393, %v109, 0
    %v2088 = vsel %vm393, %v110, 0
    %v2091 = vsel %vm393, %v111, 0
    %v2094 = vsel %vm393, %v112, 0
    %v2097 = vsel %vm393, %v113, 0
    %v2100 = vsel %vm393, %v114, 0
    %v2103 = vsel %vm393, %v115, 0
    %v2106 = vsel %vm393, %v116, 0
    %v2109 = vsel %vm393, %v117, 0
    %v2112 = vsel %vm393, %v118, 0
    %v2115 = vsel %vm393, %v119, 0
    %v2118 = vsel %vm393, %v120, 0
    %v2121 = vsel %vm393, %v121, 0
    %v2124 = vsel %vm393, %v122, 0
    %v2127 = vsel %vm393, %v123, 0
    %v2130 = vsel %vm393, %v124, 0
    %v2133 = vsel %vm393, %v125, 0
    %v2136 = vsel %vm393, %v126, 0
    %v2139 = vsel %vm393, %v127, 0
    %v2142 = vsel %vm393, %v128, 0
    %v2145 = vsel %vm393, %v129, 0
    %v2148 = vsel %vm393, %v130, 0
    %v2151 = vsel %vm393, %v131, 0
    %v2154 = vsel %vm393, %v132, 0
    %v2157 = vsel %vm393, %v133, 0
    %v2160 = vsel %vm393, %v134, 0
    %v2163 = vsel %vm393, %v135, 0
    %v2166 = vsel %vm393, %v136, 0
    %v2169 = vsel %vm393, %v137, 0
    %v2172 = vsel %vm393, %v138, 0
    %v2175 = vsel %vm393, %v139, 0
    %v2178 = vsel %vm393, %v140, 0
    %v2181 = vsel %vm393, %v141, 0
    %v2184 = vsel %vm393, %v142, 0
    %v2187 = vsel %vm393, %v143, 0
    %v2190 = vsel %vm393, %v144, 0
    %v2193 = vsel %vm393, %v145, 0
    %v2196 = vsel %vm393, %v146, 0
    %v2199 = vsel %vm393, %v147, 0
    %v2202 = vsel %vm393, %v148, 0
    %v2205 = vsel %vm393, %v149, 0
    %v2208 = vsel %vm393, %v150, 0
    %v2211 = vsel %vm393, %v151, 0
    %v2214 = vsel %vm393, %v152, 0
    %v2217 = vsel %vm393, %v153, 0
    %v2220 = vsel %vm393, %v154, 0
    %v2223 = vsel %vm393, %v155, 0
    %v2226 = vsel %vm393, %v156, 0
    %v2229 = vsel %vm393, %v157, 0
    %v2232 = vsel %vm393, %v158, 0
    %v2235 = vsel %vm393, %v159, 0
    %v2238 = vsel %vm393, %v160, 0
    %v2241 = vsel %vm393, %v161, 0
    %v2244 = vsel %vm393, %v162, 0
    %v2247 = vsel %vm393, %v163, 0
    %v2250 = vsel %vm393, %v164, 0
    %v2253 = vsel %vm393, %v165, 0
    %v2256 = vsel %vm393, %v166, 0
    %v2259 = vsel %vm393, %v167, 0
    %v2262 = vsel %vm393, %v168, 0
    %v2265 = vsel %vm393, %v169, 0
    %v2268 = vsel %vm393, %v170, 0
    %v2271 = vsel %vm393, %v171, 0
    %v2274 = vsel %vm393, %v172, 0
    %v2277 = vsel %vm393, %v173, 0
    %v2280 = vsel %vm393, %v174, 0
    %v2283 = vsel %vm393, %v175, 0
    %v2286 = vsel %vm393, %v176, 0
    %v2289 = vsel %vm393, %v177, 0
    %v2292 = vsel %vm393, %v178, 0
    %v2295 = vsel %vm393, %v179, 0
    %v2298 = vsel %vm393, %v180, 0
    %v2301 = vsel %vm393, %v181, 0
    %v2304 = vsel %vm393, %v182, 0
    %v2307 = vsel %vm393, %v183, 0
    %v2310 = vsel %vm393, %v184, 0
    %v2313 = vsel %vm393, %v185, 0
    %v2316 = vsel %vm393, %v186, 0
    %v2319 = vsel %vm393, %v187, 0
    %v2322 = vsel %vm393, %v188, 0
    %v2325 = vsel %vm393, %v189, 0
    %v2328 = vsel %vm393, %v190, 0
    %v2331 = vsel %vm393, %v191, 0
    %v2334 = vsel %vm393, %v192, 0
    %v2337 = vsel %vm393, %v193, 0
    %v2340 = vsel %vm393, %v194, 0
    %v2343 = vsel %vm393, %v195, 0
    %v2346 = vsel %vm393, %v196, 0
    %v2349 = vsel %vm393, %v197, 0
    %v2352 = vsel %vm393, %v198, 0
    %v2355 = vsel %vm393, %v199, 0
    %v2358 = vsel %vm393, %v200, 0
    %v2361 = vsel %vm393, %v201, 0
    %v2364 = vsel %vm393, %v202, 0
    %v2367 = vsel %vm393, %v203, 0
    %v2370 = vsel %vm393, %v204, 0
    %v2373 = vsel %vm393, %v205, 0
    %v2376 = vsel %vm393, %v206, 0
    %v2379 = vsel %vm393, %v207, 0
    %v2382 = vsel %vm393, %v208, 0
    %v2385 = vsel %vm393, %v209, 0
    %v2388 = vsel %vm393, %v210, 0
    %v2391 = vsel %vm393, %v211, 0
    %v2394 = vsel %vm393, %v212, 0
    %v2397 = vsel %vm393, %v213, 0
    %v2400 = vsel %vm922, %v391, 0
    %2402 = vmatprep.subr.mxu0 0.0
    %2403 = vmatpush1.msra.mxu0 %v2400
    %2404 = vmatprep.subr.mxu0 0.0
    %2405 = vmatpush1.msra.mxu0 0.0
    %2406 = vmatprep.subr.mxu0 0.0
    %2407 = vmatpush1.msra.mxu0 0.0
    %2408 = vmatprep.subr.mxu0 0.0
    %2409 = vmatpush1.msra.mxu0 0.0
    %2410 = vmatprep.subr.mxu0 0.0
    %2411 = vmatpush1.msra.mxu0 0.0
    %2412 = vmatprep.subr.mxu0 0.0
    %2413 = vmatpush1.msra.mxu0 0.0
    %2414 = vmatprep.subr.mxu0 0.0
    %2415 = vmatpush1.msra.mxu0 0.0
    %2416 = vmatprep.subr.mxu0 0.0
    %2417 = vmatpush1.msra.mxu0 0.0
    %2418 = vmatprep.subr.mxu0 0.0
    %2419 = vmatpush1.msra.mxu0 0.0
    %2420 = vmatprep.subr.mxu0 0.0
    %2421 = vmatpush1.msra.mxu0 0.0
    %2422 = vmatprep.subr.mxu0 0.0
    %2423 = vmatpush1.msra.mxu0 0.0
    %2424 = vmatprep.subr.mxu0 0.0
    %2425 = vmatpush1.msra.mxu0 0.0
    %2426 = vmatprep.subr.mxu0 0.0
    %2427 = vmatpush1.msra.mxu0 0.0
    %2428 = vmatprep.subr.mxu0 0.0
    %2429 = vmatpush1.msra.mxu0 0.0
    %2430 = vmatprep.subr.mxu0 0.0
    %2431 = vmatpush1.msra.mxu0 0.0
    %2432 = vmatprep.subr.mxu0 0.0
    %2433 = vmatpush1.msra.mxu0 0.0
    %2434 = vmatprep.subr.mxu0 0.0
    %2435 = vmatpush1.msra.mxu0 0.0
    %2436 = vmatprep.subr.mxu0 0.0
    %2437 = vmatpush1.msra.mxu0 0.0
    %2438 = vmatprep.subr.mxu0 0.0
    %2439 = vmatpush1.msra.mxu0 0.0
    %2440 = vmatprep.subr.mxu0 0.0
    %2441 = vmatpush1.msra.mxu0 0.0
    %2442 = vmatprep.subr.mxu0 0.0
    %2443 = vmatpush1.msra.mxu0 0.0
    %2444 = vmatprep.subr.mxu0 0.0
    %2445 = vmatpush1.msra.mxu0 0.0
    %2446 = vmatprep.subr.mxu0 0.0
    %2447 = vmatpush1.msra.mxu0 0.0
    %2448 = vmatprep.subr.mxu0 0.0
    %2449 = vmatpush1.msra.mxu0 0.0
    %2450 = vmatprep.subr.mxu0 0.0
    %2451 = vmatpush1.msra.mxu0 0.0
    %2452 = vmatprep.subr.mxu0 0.0
    %2453 = vmatpush1.msra.mxu0 0.0
    %2454 = vmatprep.subr.mxu0 0.0
    %2455 = vmatpush1.msra.mxu0 0.0
    %2456 = vmatprep.subr.mxu0 0.0
    %2457 = vmatpush1.msra.mxu0 0.0
    %2458 = vmatprep.subr.mxu0 0.0
    %2459 = vmatpush1.msra.mxu0 0.0
    %2460 = vmatprep.subr.mxu0 0.0
    %2461 = vmatpush1.msra.mxu0 0.0
    %2462 = vmatprep.subr.mxu0 0.0
    %2463 = vmatpush1.msra.mxu0 0.0
    %2464 = vmatprep.subr.mxu0 0.0
    %2465 = vmatpush1.msra.mxu0 0.0
    %2466 = vmatprep.mubr.f32.mxu0 0.0
    %2467 = vmatmul.mubr.f32.gmra.mrb[0].mxu0 %v1872
    %v2468 = vpop.f32.mrb[0].mxu0
    %v2469 = vadd.f32 %v993, %v2468
    %v2470 = vpop.f32.mrb[0].mxu0
    %2471 = vmatprep.mubr.f32.mxu0 0.0
    %2472 = vmatmul.mubr.f32.gmra.mrb[0].mxu0 %v1875
    %v2473 = vpop.f32.mrb[0].mxu0
    %v2474 = vadd.f32 %v998, %v2473
    %v2475 = vpop.f32.mrb[0].mxu0
    %2476 = vmatprep.mubr.f32.mxu0 0.0
    %2477 = vmatmul.mubr.f32.gmra.mrb[0].mxu0 %v1878
    %v2478 = vpop.f32.mrb[0].mxu0
    %v2479 = vadd.f32 %v1003, %v2478
    %v2480 = vpop.f32.mrb[0].mxu0
    %2481 = vmatprep.mubr.f32.mxu0 0.0
    %2482 = vmatmul.mubr.f32.gmra.mrb[0].mxu0 %v1881
    %v2483 = vpop.f32.mrb[0].mxu0
    %v2484 = vadd.f32 %v1008, %v2483
    %v2485 = vpop.f32.mrb[0].mxu0
    %2486 = vmatprep.mubr.f32.mxu0 0.0
    %2487 = vmatmul.mubr.f32.gmra.mrb[0].mxu0 %v1884
    %v2488 = vpop.f32.mrb[0].mxu0
    %v2489 = vadd.f32 %v1013, %v2488
    %v2490 = vpop.f32.mrb[0].mxu0
    %2491 = vmatprep.mubr.f32.mxu0 0.0
    %2492 = vmatmul.mubr.f32.gmra.mrb[0].mxu0 %v1887
    %v2493 = vpop.f32.mrb[0].mxu0
    %v2494 = vadd.f32 %v1018, %v2493
    %v2495 = vpop.f32.mrb[0].mxu0
    %2496 = vmatprep.mubr.f32.mxu0 0.0
    %2497 = vmatmul.mubr.f32.gmra.mrb[0].mxu0 %v1890
    %v2498 = vpop.f32.mrb[0].mxu0
    %v2499 = vadd.f32 %v1023, %v2498
    %v2500 = vpop.f32.mrb[0].mxu0
    %2501 = vmatprep.mubr.f32.mxu0 0.0
    %2502 = vmatmul.mubr.f32.gmra.mrb[0].mxu0 %v1893
    %v2503 = vpop.f32.mrb[0].mxu0
    %v2504 = vadd.f32 %v1028, %v2503
    %v2505 = vpop.f32.mrb[0].mxu0
    %2506 = vmatprep.mubr.f32.mxu0 0.0
    %2507 = vmatmul.mubr.f32.gmra.mrb[0].mxu0 %v1896
    %v2508 = vpop.f32.mrb[0].mxu0
    %v2509 = vadd.f32 %v1033, %v2508
    %v2510 = vpop.f32.mrb[0].mxu0
    %2511 = vmatprep.mubr.f32.mxu0 0.0
    %2512 = vmatmul.mubr.f32.gmra.mrb[0].mxu0 %v1899
    %v2513 = vpop.f32.mrb[0].mxu0
    %v2514 = vadd.f32 %v1038, %v2513
    %v2515 = vpop.f32.mrb[0].mxu0
    %2516 = vmatprep.mubr.f32.mxu0 0.0
    %2517 = vmatmul.mubr.f32.gmra.mrb[0].mxu0 %v1902
    %v2518 = vpop.f32.mrb[0].mxu0
    %v2519 = vadd.f32 %v1043, %v2518
    %v2520 = vpop.f32.mrb[0].mxu0
    %2521 = vmatprep.mubr.f32.mxu0 0.0
    %2522 = vmatmul.mubr.f32.gmra.mrb[0].mxu0 %v1905
    %v2523 = vpop.f32.mrb[0].mxu0
    %v2524 = vadd.f32 %v1048, %v2523
    %v2525 = vpop.f32.mrb[0].mxu0
    %2526 = vmatprep.mubr.f32.mxu0 0.0
    %2527 = vmatmul.mubr.f32.gmra.mrb[0].mxu0 %v1908
    %v2528 = vpop.f32.mrb[0].mxu0
    %v2529 = vadd.f32 %v1053, %v2528
    %v2530 = vpop.f32.mrb[0].mxu0
    %2531 = vmatprep.mubr.f32.mxu0 0.0
    %2532 = vmatmul.mubr.f32.gmra.mrb[0].mxu0 %v1911
    %v2533 = vpop.f32.mrb[0].mxu0
    %v2534 = vadd.f32 %v1058, %v2533
    %v2535 = vpop.f32.mrb[0].mxu0
    %2536 = vmatprep.mubr.f32.mxu0 0.0
    %2537 = vmatmul.mubr.f32.gmra.mrb[0].mxu0 %v1914
    %v2538 = vpop.f32.mrb[0].mxu0
    %v2539 = vadd.f32 %v1063, %v2538
    %v2540 = vpop.f32.mrb[0].mxu0
    %2541 = vmatprep.mubr.f32.mxu0 0.0
    %2542 = vmatmul.mubr.f32.gmra.mrb[0].mxu0 %v1917
    %v2543 = vpop.f32.mrb[0].mxu0
    %v2544 = vadd.f32 %v1068, %v2543
    %v2545 = vpop.f32.mrb[0].mxu0
    %2546 = vmatprep.mubr.f32.mxu0 0.0
    %2547 = vmatmul.mubr.f32.gmra.mrb[0].mxu0 %v1920
    %v2548 = vpop.f32.mrb[0].mxu0
    %v2549 = vadd.f32 %v1073, %v2548
    %v2550 = vpop.f32.mrb[0].mxu0
    %2551 = vmatprep.mubr.f32.mxu0 0.0
    %2552 = vmatmul.mubr.f32.gmra.mrb[0].mxu0 %v1923
    %v2553 = vpop.f32.mrb[0].mxu0
    %v2554 = vadd.f32 %v1078, %v2553
    %v2555 = vpop.f32.mrb[0].mxu0
    %2556 = vmatprep.mubr.f32.mxu0 0.0
    %2557 = vmatmul.mubr.f32.gmra.mrb[0].mxu0 %v1926
    %v2558 = vpop.f32.mrb[0].mxu0
    %v2559 = vadd.f32 %v1083, %v2558
    %v2560 = vpop.f32.mrb[0].mxu0
    %2561 = vmatprep.mubr.f32.mxu0 0.0
    %2562 = vmatmul.mubr.f32.gmra.mrb[0].mxu0 %v1929
    %v2563 = vpop.f32.mrb[0].mxu0
    %v2564 = vadd.f32 %v1088, %v2563
    %v2565 = vpop.f32.mrb[0].mxu0
    %2566 = vmatprep.mubr.f32.mxu0 0.0
    %2567 = vmatmul.mubr.f32.gmra.mrb[0].mxu0 %v1932
    %v2568 = vpop.f32.mrb[0].mxu0
    %v2569 = vadd.f32 %v1093, %v2568
    %v2570 = vpop.f32.mrb[0].mxu0
    %2571 = vmatprep.mubr.f32.mxu0 0.0
    %2572 = vmatmul.mubr.f32.gmra.mrb[0].mxu0 %v1935
    %v2573 = vpop.f32.mrb[0].mxu0
    %v2574 = vadd.f32 %v1098, %v2573
    %v2575 = vpop.f32.mrb[0].mxu0
    %2576 = vmatprep.mubr.f32.mxu0 0.0
    %2577 = vmatmul.mubr.f32.gmra.mrb[0].mxu0 %v1938
    %v2578 = vpop.f32.mrb[0].mxu0
    %v2579 = vadd.f32 %v1103, %v2578
    %v2580 = vpop.f32.mrb[0].mxu0
    %2581 = vmatprep.mubr.f32.mxu0 0.0
    %2582 = vmatmul.mubr.f32.gmra.mrb[0].mxu0 %v1941
    %v2583 = vpop.f32.mrb[0].mxu0
    %v2584 = vadd.f32 %v1108, %v2583
    %v2585 = vpop.f32.mrb[0].mxu0
    %2586 = vmatprep.mubr.f32.mxu0 0.0
    %2587 = vmatmul.mubr.f32.gmra.mrb[0].mxu0 %v1944
    %v2588 = vpop.f32.mrb[0].mxu0
    %v2589 = vadd.f32 %v1113, %v2588
    %v2590 = vpop.f32.mrb[0].mxu0
    %2591 = vmatprep.mubr.f32.mxu0 0.0
    %2592 = vmatmul.mubr.f32.gmra.mrb[0].mxu0 %v1947
    %v2593 = vpop.f32.mrb[0].mxu0
    %v2594 = vadd.f32 %v1118, %v2593
    %v2595 = vpop.f32.mrb[0].mxu0
    %2596 = vmatprep.mubr.f32.mxu0 0.0
    %2597 = vmatmul.mubr.f32.gmra.mrb[0].mxu0 %v1950
    %v2598 = vpop.f32.mrb[0].mxu0
    %v2599 = vadd.f32 %v1123, %v2598
    %v2600 = vpop.f32.mrb[0].mxu0
    %2601 = vmatprep.mubr.f32.mxu0 0.0
    %2602 = vmatmul.mubr.f32.gmra.mrb[0].mxu0 %v1953
    %v2603 = vpop.f32.mrb[0].mxu0
    %v2604 = vadd.f32 %v1128, %v2603
    %v2605 = vpop.f32.mrb[0].mxu0
    %2606 = vmatprep.mubr.f32.mxu0 0.0
    %2607 = vmatmul.mubr.f32.gmra.mrb[0].mxu0 %v1956
    %v2608 = vpop.f32.mrb[0].mxu0
    %v2609 = vadd.f32 %v1133, %v2608
    %v2610 = vpop.f32.mrb[0].mxu0
    %2611 = vmatprep.mubr.f32.mxu0 0.0
    %2612 = vmatmul.mubr.f32.gmra.mrb[0].mxu0 %v1959
    %v2613 = vpop.f32.mrb[0].mxu0
    %v2614 = vadd.f32 %v1138, %v2613
    %v2615 = vpop.f32.mrb[0].mxu0
    %2616 = vmatprep.mubr.f32.mxu0 0.0
    %2617 = vmatmul.mubr.f32.gmra.mrb[0].mxu0 %v1962
    %v2618 = vpop.f32.mrb[0].mxu0
    %v2619 = vadd.f32 %v1143, %v2618
    %v2620 = vpop.f32.mrb[0].mxu0
    %2621 = vmatprep.mubr.f32.mxu0 0.0
    %2622 = vmatmul.mubr.f32.gmra.mrb[0].mxu0 %v1965
    %v2623 = vpop.f32.mrb[0].mxu0
    %v2624 = vadd.f32 %v1148, %v2623
    %v2625 = vpop.f32.mrb[0].mxu0
    %2626 = vmatprep.mubr.f32.mxu0 0.0
    %2627 = vmatmul.mubr.f32.gmra.mrb[0].mxu0 %v1968
    %v2628 = vpop.f32.mrb[0].mxu0
    %v2629 = vadd.f32 %v1153, %v2628
    %v2630 = vpop.f32.mrb[0].mxu0
    %2631 = vmatprep.mubr.f32.mxu0 0.0
    %2632 = vmatmul.mubr.f32.gmra.mrb[0].mxu0 %v1971
    %v2633 = vpop.f32.mrb[0].mxu0
    %v2634 = vadd.f32 %v1158, %v2633
    %v2635 = vpop.f32.mrb[0].mxu0
    %2636 = vmatprep.mubr.f32.mxu0 0.0
    %2637 = vmatmul.mubr.f32.gmra.mrb[0].mxu0 %v1974
    %v2638 = vpop.f32.mrb[0].mxu0
    %v2639 = vadd.f32 %v1163, %v2638
    %v2640 = vpop.f32.mrb[0].mxu0
    %2641 = vmatprep.mubr.f32.mxu0 0.0
    %2642 = vmatmul.mubr.f32.gmra.mrb[0].mxu0 %v1977
    %v2643 = vpop.f32.mrb[0].mxu0
    %v2644 = vadd.f32 %v1168, %v2643
    %v2645 = vpop.f32.mrb[0].mxu0
    %2646 = vmatprep.mubr.f32.mxu0 0.0
    %2647 = vmatmul.mubr.f32.gmra.mrb[0].mxu0 %v1980
    %v2648 = vpop.f32.mrb[0].mxu0
    %v2649 = vadd.f32 %v1173, %v2648
    %v2650 = vpop.f32.mrb[0].mxu0
    %2651 = vmatprep.mubr.f32.mxu0 0.0
    %2652 = vmatmul.mubr.f32.gmra.mrb[0].mxu0 %v1983
    %v2653 = vpop.f32.mrb[0].mxu0
    %v2654 = vadd.f32 %v1178, %v2653
    %v2655 = vpop.f32.mrb[0].mxu0
    %2656 = vmatprep.mubr.f32.mxu0 0.0
    %2657 = vmatmul.mubr.f32.gmra.mrb[0].mxu0 %v1986
    %v2658 = vpop.f32.mrb[0].mxu0
    %v2659 = vadd.f32 %v1183, %v2658
    %v2660 = vpop.f32.mrb[0].mxu0
    %2661 = vmatprep.mubr.f32.mxu0 0.0
    %2662 = vmatmul.mubr.f32.gmra.mrb[0].mxu0 %v1989
    %v2663 = vpop.f32.mrb[0].mxu0
    %v2664 = vadd.f32 %v1188, %v2663
    %v2665 = vpop.f32.mrb[0].mxu0
    %2666 = vmatprep.mubr.f32.mxu0 0.0
    %2667 = vmatmul.mubr.f32.gmra.mrb[0].mxu0 %v1992
    %v2668 = vpop.f32.mrb[0].mxu0
    %v2669 = vadd.f32 %v1193, %v2668
    %v2670 = vpop.f32.mrb[0].mxu0
    %2671 = vmatprep.mubr.f32.mxu0 0.0
    %2672 = vmatmul.mubr.f32.gmra.mrb[0].mxu0 %v1995
    %v2673 = vpop.f32.mrb[0].mxu0
    %v2674 = vadd.f32 %v1198, %v2673
    %v2675 = vpop.f32.mrb[0].mxu0
    %2676 = vmatprep.mubr.f32.mxu0 0.0
    %2677 = vmatmul.mubr.f32.gmra.mrb[0].mxu0 %v1998
    %v2678 = vpop.f32.mrb[0].mxu0
    %v2679 = vadd.f32 %v1203, %v2678
    %v2680 = vpop.f32.mrb[0].mxu0
    %2681 = vmatprep.mubr.f32.mxu0 0.0
    %2682 = vmatmul.mubr.f32.gmra.mrb[0].mxu0 %v2001
    %v2683 = vpop.f32.mrb[0].mxu0
    %v2684 = vadd.f32 %v1208, %v2683
    %v2685 = vpop.f32.mrb[0].mxu0
    %2686 = vmatprep.mubr.f32.mxu0 0.0
    %2687 = vmatmul.mubr.f32.gmra.mrb[0].mxu0 %v2004
    %v2688 = vpop.f32.mrb[0].mxu0
    %v2689 = vadd.f32 %v1213, %v2688
    %v2690 = vpop.f32.mrb[0].mxu0
    %2691 = vmatprep.mubr.f32.mxu0 0.0
    %2692 = vmatmul.mubr.f32.gmra.mrb[0].mxu0 %v2007
    %v2693 = vpop.f32.mrb[0].mxu0
    %v2694 = vadd.f32 %v1218, %v2693
    %v2695 = vpop.f32.mrb[0].mxu0
    %2696 = vmatprep.mubr.f32.mxu0 0.0
    %2697 = vmatmul.mubr.f32.gmra.mrb[0].mxu0 %v2010
    %v2698 = vpop.f32.mrb[0].mxu0
    %v2699 = vadd.f32 %v1223, %v2698
    %v2700 = vpop.f32.mrb[0].mxu0
    %2701 = vmatprep.mubr.f32.mxu0 0.0
    %2702 = vmatmul.mubr.f32.gmra.mrb[0].mxu0 %v2013
    %v2703 = vpop.f32.mrb[0].mxu0
    %v2704 = vadd.f32 %v1228, %v2703
    %v2705 = vpop.f32.mrb[0].mxu0
    %2706 = vmatprep.mubr.f32.mxu0 0.0
    %2707 = vmatmul.mubr.f32.gmra.mrb[0].mxu0 %v2016
    %v2708 = vpop.f32.mrb[0].mxu0
    %v2709 = vadd.f32 %v1233, %v2708
    %v2710 = vpop.f32.mrb[0].mxu0
    %2711 = vmatprep.mubr.f32.mxu0 0.0
    %2712 = vmatmul.mubr.f32.gmra.mrb[0].mxu0 %v2019
    %v2713 = vpop.f32.mrb[0].mxu0
    %v2714 = vadd.f32 %v1238, %v2713
    %v2715 = vpop.f32.mrb[0].mxu0
    %2716 = vmatprep.mubr.f32.mxu0 0.0
    %2717 = vmatmul.mubr.f32.gmra.mrb[0].mxu0 %v2022
    %v2718 = vpop.f32.mrb[0].mxu0
    %v2719 = vadd.f32 %v1243, %v2718
    %v2720 = vpop.f32.mrb[0].mxu0
    %2721 = vmatprep.mubr.f32.mxu0 0.0
    %2722 = vmatmul.mubr.f32.gmra.mrb[0].mxu0 %v2025
    %v2723 = vpop.f32.mrb[0].mxu0
    %v2724 = vadd.f32 %v1248, %v2723
    %v2725 = vpop.f32.mrb[0].mxu0
    %2726 = vmatprep.mubr.f32.mxu0 0.0
    %2727 = vmatmul.mubr.f32.gmra.mrb[0].mxu0 %v2028
    %v2728 = vpop.f32.mrb[0].mxu0
    %v2729 = vadd.f32 %v1253, %v2728
    %v2730 = vpop.f32.mrb[0].mxu0
    %2731 = vmatprep.mubr.f32.mxu0 0.0
    %2732 = vmatmul.mubr.f32.gmra.mrb[0].mxu0 %v2031
    %v2733 = vpop.f32.mrb[0].mxu0
    %v2734 = vadd.f32 %v1258, %v2733
    %v2735 = vpop.f32.mrb[0].mxu0
    %2736 = vmatprep.mubr.f32.mxu0 0.0
    %2737 = vmatmul.mubr.f32.gmra.mrb[0].mxu0 %v2034
    %v2738 = vpop.f32.mrb[0].mxu0
    %v2739 = vadd.f32 %v1263, %v2738
    %v2740 = vpop.f32.mrb[0].mxu0
    %2741 = vmatprep.mubr.f32.mxu0 0.0
    %2742 = vmatmul.mubr.f32.gmra.mrb[0].mxu0 %v2037
    %v2743 = vpop.f32.mrb[0].mxu0
    %v2744 = vadd.f32 %v1268, %v2743
    %v2745 = vpop.f32.mrb[0].mxu0
    %2746 = vmatprep.mubr.f32.mxu0 0.0
    %2747 = vmatmul.mubr.f32.gmra.mrb[0].mxu0 %v2040
    %v2748 = vpop.f32.mrb[0].mxu0
    %v2749 = vadd.f32 %v1273, %v2748
    %v2750 = vpop.f32.mrb[0].mxu0
    %2751 = vmatprep.mubr.f32.mxu0 0.0
    %2752 = vmatmul.mubr.f32.gmra.mrb[0].mxu0 %v2043
    %v2753 = vpop.f32.mrb[0].mxu0
    %v2754 = vadd.f32 %v1278, %v2753
    %v2755 = vpop.f32.mrb[0].mxu0
    %2756 = vmatprep.mubr.f32.mxu0 0.0
    %2757 = vmatmul.mubr.f32.gmra.mrb[0].mxu0 %v2046
    %v2758 = vpop.f32.mrb[0].mxu0
    %v2759 = vadd.f32 %v1283, %v2758
    %v2760 = vpop.f32.mrb[0].mxu0
    %2761 = vmatprep.mubr.f32.mxu0 0.0
    %2762 = vmatmul.mubr.f32.gmra.mrb[0].mxu0 %v2049
    %v2763 = vpop.f32.mrb[0].mxu0
    %v2764 = vadd.f32 %v1288, %v2763
    %v2765 = vpop.f32.mrb[0].mxu0
    %2766 = vmatprep.mubr.f32.mxu0 0.0
    %2767 = vmatmul.mubr.f32.gmra.mrb[0].mxu0 %v2052
    %v2768 = vpop.f32.mrb[0].mxu0
    %v2769 = vadd.f32 %v1293, %v2768
    %v2770 = vpop.f32.mrb[0].mxu0
    %2771 = vmatprep.mubr.f32.mxu0 0.0
    %2772 = vmatmul.mubr.f32.gmra.mrb[0].mxu0 %v2055
    %v2773 = vpop.f32.mrb[0].mxu0
    %v2774 = vadd.f32 %v1298, %v2773
    %v2775 = vpop.f32.mrb[0].mxu0
    %2776 = vmatprep.mubr.f32.mxu0 0.0
    %2777 = vmatmul.mubr.f32.gmra.mrb[0].mxu0 %v2058
    %v2778 = vpop.f32.mrb[0].mxu0
    %v2779 = vadd.f32 %v1303, %v2778
    %v2780 = vpop.f32.mrb[0].mxu0
    %2781 = vmatprep.mubr.f32.mxu0 0.0
    %2782 = vmatmul.mubr.f32.gmra.mrb[0].mxu0 %v2061
    %v2783 = vpop.f32.mrb[0].mxu0
    %v2784 = vadd.f32 %v1308, %v2783
    %v2785 = vpop.f32.mrb[0].mxu0
    %2786 = vmatprep.mubr.f32.mxu0 0.0
    %2787 = vmatmul.mubr.f32.gmra.mrb[0].mxu0 %v2064
    %v2788 = vpop.f32.mrb[0].mxu0
    %v2789 = vadd.f32 %v1313, %v2788
    %v2790 = vpop.f32.mrb[0].mxu0
    %2791 = vmatprep.mubr.f32.mxu0 0.0
    %2792 = vmatmul.mubr.f32.gmra.mrb[0].mxu0 %v2067
    %v2793 = vpop.f32.mrb[0].mxu0
    %v2794 = vadd.f32 %v1318, %v2793
    %v2795 = vpop.f32.mrb[0].mxu0
    %2796 = vmatprep.mubr.f32.mxu0 0.0
    %2797 = vmatmul.mubr.f32.gmra.mrb[0].mxu0 %v2070
    %v2798 = vpop.f32.mrb[0].mxu0
    %v2799 = vadd.f32 %v1323, %v2798
    %v2800 = vpop.f32.mrb[0].mxu0
    %2801 = vmatprep.mubr.f32.mxu0 0.0
    %2802 = vmatmul.mubr.f32.gmra.mrb[0].mxu0 %v2073
    %v2803 = vpop.f32.mrb[0].mxu0
    %v2804 = vadd.f32 %v1328, %v2803
    %v2805 = vpop.f32.mrb[0].mxu0
    %2806 = vmatprep.mubr.f32.mxu0 0.0
    %2807 = vmatmul.mubr.f32.gmra.mrb[0].mxu0 %v2076
    %v2808 = vpop.f32.mrb[0].mxu0
    %v2809 = vadd.f32 %v1333, %v2808
    %v2810 = vpop.f32.mrb[0].mxu0
    %2811 = vmatprep.mubr.f32.mxu0 0.0
    %2812 = vmatmul.mubr.f32.gmra.mrb[0].mxu0 %v2079
    %v2813 = vpop.f32.mrb[0].mxu0
    %v2814 = vadd.f32 %v1338, %v2813
    %v2815 = vpop.f32.mrb[0].mxu0
    %2816 = vmatprep.mubr.f32.mxu0 0.0
    %2817 = vmatmul.mubr.f32.gmra.mrb[0].mxu0 %v2082
    %v2818 = vpop.f32.mrb[0].mxu0
    %v2819 = vadd.f32 %v1343, %v2818
    %v2820 = vpop.f32.mrb[0].mxu0
    %2821 = vmatprep.mubr.f32.mxu0 0.0
    %2822 = vmatmul.mubr.f32.gmra.mrb[0].mxu0 %v2085
    %v2823 = vpop.f32.mrb[0].mxu0
    %v2824 = vadd.f32 %v1348, %v2823
    %v2825 = vpop.f32.mrb[0].mxu0
    %2826 = vmatprep.mubr.f32.mxu0 0.0
    %2827 = vmatmul.mubr.f32.gmra.mrb[0].mxu0 %v2088
    %v2828 = vpop.f32.mrb[0].mxu0
    %v2829 = vadd.f32 %v1353, %v2828
    %v2830 = vpop.f32.mrb[0].mxu0
    %2831 = vmatprep.mubr.f32.mxu0 0.0
    %2832 = vmatmul.mubr.f32.gmra.mrb[0].mxu0 %v2091
    %v2833 = vpop.f32.mrb[0].mxu0
    %v2834 = vadd.f32 %v1358, %v2833
    %v2835 = vpop.f32.mrb[0].mxu0
    %2836 = vmatprep.mubr.f32.mxu0 0.0
    %2837 = vmatmul.mubr.f32.gmra.mrb[0].mxu0 %v2094
    %v2838 = vpop.f32.mrb[0].mxu0
    %v2839 = vadd.f32 %v1363, %v2838
    %v2840 = vpop.f32.mrb[0].mxu0
    %2841 = vmatprep.mubr.f32.mxu0 0.0
    %2842 = vmatmul.mubr.f32.gmra.mrb[0].mxu0 %v2097
    %v2843 = vpop.f32.mrb[0].mxu0
    %v2844 = vadd.f32 %v1368, %v2843
    %v2845 = vpop.f32.mrb[0].mxu0
    %2846 = vmatprep.mubr.f32.mxu0 0.0
    %2847 = vmatmul.mubr.f32.gmra.mrb[0].mxu0 %v2100
    %v2848 = vpop.f32.mrb[0].mxu0
    %v2849 = vadd.f32 %v1373, %v2848
    %v2850 = vpop.f32.mrb[0].mxu0
    %2851 = vmatprep.mubr.f32.mxu0 0.0
    %2852 = vmatmul.mubr.f32.gmra.mrb[0].mxu0 %v2103
    %v2853 = vpop.f32.mrb[0].mxu0
    %v2854 = vadd.f32 %v1378, %v2853
    %v2855 = vpop.f32.mrb[0].mxu0
    %2856 = vmatprep.mubr.f32.mxu0 0.0
    %2857 = vmatmul.mubr.f32.gmra.mrb[0].mxu0 %v2106
    %v2858 = vpop.f32.mrb[0].mxu0
    %v2859 = vadd.f32 %v1383, %v2858
    %v2860 = vpop.f32.mrb[0].mxu0
    %2861 = vmatprep.mubr.f32.mxu0 0.0
    %2862 = vmatmul.mubr.f32.gmra.mrb[0].mxu0 %v2109
    %v2863 = vpop.f32.mrb[0].mxu0
    %v2864 = vadd.f32 %v1388, %v2863
    %v2865 = vpop.f32.mrb[0].mxu0
    %2866 = vmatprep.mubr.f32.mxu0 0.0
    %2867 = vmatmul.mubr.f32.gmra.mrb[0].mxu0 %v2112
    %v2868 = vpop.f32.mrb[0].mxu0
    %v2869 = vadd.f32 %v1393, %v2868
    %v2870 = vpop.f32.mrb[0].mxu0
    %2871 = vmatprep.mubr.f32.mxu0 0.0
    %2872 = vmatmul.mubr.f32.gmra.mrb[0].mxu0 %v2115
    %v2873 = vpop.f32.mrb[0].mxu0
    %v2874 = vadd.f32 %v1398, %v2873
    %v2875 = vpop.f32.mrb[0].mxu0
    %2876 = vmatprep.mubr.f32.mxu0 0.0
    %2877 = vmatmul.mubr.f32.gmra.mrb[0].mxu0 %v2118
    %v2878 = vpop.f32.mrb[0].mxu0
    %v2879 = vadd.f32 %v1403, %v2878
    %v2880 = vpop.f32.mrb[0].mxu0
    %2881 = vmatprep.mubr.f32.mxu0 0.0
    %2882 = vmatmul.mubr.f32.gmra.mrb[0].mxu0 %v2121
    %v2883 = vpop.f32.mrb[0].mxu0
    %v2884 = vadd.f32 %v1408, %v2883
    %v2885 = vpop.f32.mrb[0].mxu0
    %2886 = vmatprep.mubr.f32.mxu0 0.0
    %2887 = vmatmul.mubr.f32.gmra.mrb[0].mxu0 %v2124
    %v2888 = vpop.f32.mrb[0].mxu0
    %v2889 = vadd.f32 %v1413, %v2888
    %v2890 = vpop.f32.mrb[0].mxu0
    %2891 = vmatprep.mubr.f32.mxu0 0.0
    %2892 = vmatmul.mubr.f32.gmra.mrb[0].mxu0 %v2127
    %v2893 = vpop.f32.mrb[0].mxu0
    %v2894 = vadd.f32 %v1418, %v2893
    %v2895 = vpop.f32.mrb[0].mxu0
    %2896 = vmatprep.mubr.f32.mxu0 0.0
    %2897 = vmatmul.mubr.f32.gmra.mrb[0].mxu0 %v2130
    %v2898 = vpop.f32.mrb[0].mxu0
    %v2899 = vadd.f32 %v1423, %v2898
    %v2900 = vpop.f32.mrb[0].mxu0
    %2901 = vmatprep.mubr.f32.mxu0 0.0
    %2902 = vmatmul.mubr.f32.gmra.mrb[0].mxu0 %v2133
    %v2903 = vpop.f32.mrb[0].mxu0
    %v2904 = vadd.f32 %v1428, %v2903
    %v2905 = vpop.f32.mrb[0].mxu0
    %2906 = vmatprep.mubr.f32.mxu0 0.0
    %2907 = vmatmul.mubr.f32.gmra.mrb[0].mxu0 %v2136
    %v2908 = vpop.f32.mrb[0].mxu0
    %v2909 = vadd.f32 %v1433, %v2908
    %v2910 = vpop.f32.mrb[0].mxu0
    %2911 = vmatprep.mubr.f32.mxu0 0.0
    %2912 = vmatmul.mubr.f32.gmra.mrb[0].mxu0 %v2139
    %v2913 = vpop.f32.mrb[0].mxu0
    %v2914 = vadd.f32 %v1438, %v2913
    %v2915 = vpop.f32.mrb[0].mxu0
    %2916 = vmatprep.mubr.f32.mxu0 0.0
    %2917 = vmatmul.mubr.f32.gmra.mrb[0].mxu0 %v2142
    %v2918 = vpop.f32.mrb[0].mxu0
    %v2919 = vadd.f32 %v1443, %v2918
    %v2920 = vpop.f32.mrb[0].mxu0
    %2921 = vmatprep.mubr.f32.mxu0 0.0
    %2922 = vmatmul.mubr.f32.gmra.mrb[0].mxu0 %v2145
    %v2923 = vpop.f32.mrb[0].mxu0
    %v2924 = vadd.f32 %v1448, %v2923
    %v2925 = vpop.f32.mrb[0].mxu0
    %2926 = vmatprep.mubr.f32.mxu0 0.0
    %2927 = vmatmul.mubr.f32.gmra.mrb[0].mxu0 %v2148
    %v2928 = vpop.f32.mrb[0].mxu0
    %v2929 = vadd.f32 %v1453, %v2928
    %v2930 = vpop.f32.mrb[0].mxu0
    %2931 = vmatprep.mubr.f32.mxu0 0.0
    %2932 = vmatmul.mubr.f32.gmra.mrb[0].mxu0 %v2151
    %v2933 = vpop.f32.mrb[0].mxu0
    %v2934 = vadd.f32 %v1458, %v2933
    %v2935 = vpop.f32.mrb[0].mxu0
    %2936 = vmatprep.mubr.f32.mxu0 0.0
    %2937 = vmatmul.mubr.f32.gmra.mrb[0].mxu0 %v2154
    %v2938 = vpop.f32.mrb[0].mxu0
    %v2939 = vadd.f32 %v1463, %v2938
    %v2940 = vpop.f32.mrb[0].mxu0
    %2941 = vmatprep.mubr.f32.mxu0 0.0
    %2942 = vmatmul.mubr.f32.gmra.mrb[0].mxu0 %v2157
    %v2943 = vpop.f32.mrb[0].mxu0
    %v2944 = vadd.f32 %v1468, %v2943
    %v2945 = vpop.f32.mrb[0].mxu0
    %2946 = vmatprep.mubr.f32.mxu0 0.0
    %2947 = vmatmul.mubr.f32.gmra.mrb[0].mxu0 %v2160
    %v2948 = vpop.f32.mrb[0].mxu0
    %v2949 = vadd.f32 %v1473, %v2948
    %v2950 = vpop.f32.mrb[0].mxu0
    %2951 = vmatprep.mubr.f32.mxu0 0.0
    %2952 = vmatmul.mubr.f32.gmra.mrb[0].mxu0 %v2163
    %v2953 = vpop.f32.mrb[0].mxu0
    %v2954 = vadd.f32 %v1478, %v2953
    %v2955 = vpop.f32.mrb[0].mxu0
    %2956 = vmatprep.mubr.f32.mxu0 0.0
    %2957 = vmatmul.mubr.f32.gmra.mrb[0].mxu0 %v2166
    %v2958 = vpop.f32.mrb[0].mxu0
    %v2959 = vadd.f32 %v1483, %v2958
    %v2960 = vpop.f32.mrb[0].mxu0
    %2961 = vmatprep.mubr.f32.mxu0 0.0
    %2962 = vmatmul.mubr.f32.gmra.mrb[0].mxu0 %v2169
    %v2963 = vpop.f32.mrb[0].mxu0
    %v2964 = vadd.f32 %v1488, %v2963
    %v2965 = vpop.f32.mrb[0].mxu0
    %2966 = vmatprep.mubr.f32.mxu0 0.0
    %2967 = vmatmul.mubr.f32.gmra.mrb[0].mxu0 %v2172
    %v2968 = vpop.f32.mrb[0].mxu0
    %v2969 = vadd.f32 %v1493, %v2968
    %v2970 = vpop.f32.mrb[0].mxu0
    %2971 = vmatprep.mubr.f32.mxu0 0.0
    %2972 = vmatmul.mubr.f32.gmra.mrb[0].mxu0 %v2175
    %v2973 = vpop.f32.mrb[0].mxu0
    %v2974 = vadd.f32 %v1498, %v2973
    %v2975 = vpop.f32.mrb[0].mxu0
    %2976 = vmatprep.mubr.f32.mxu0 0.0
    %2977 = vmatmul.mubr.f32.gmra.mrb[0].mxu0 %v2178
    %v2978 = vpop.f32.mrb[0].mxu0
    %v2979 = vadd.f32 %v1503, %v2978
    %v2980 = vpop.f32.mrb[0].mxu0
    %2981 = vmatprep.mubr.f32.mxu0 0.0
    %2982 = vmatmul.mubr.f32.gmra.mrb[0].mxu0 %v2181
    %v2983 = vpop.f32.mrb[0].mxu0
    %v2984 = vadd.f32 %v1508, %v2983
    %v2985 = vpop.f32.mrb[0].mxu0
    %2986 = vmatprep.mubr.f32.mxu0 0.0
    %2987 = vmatmul.mubr.f32.gmra.mrb[0].mxu0 %v2184
    %v2988 = vpop.f32.mrb[0].mxu0
    %v2989 = vadd.f32 %v1513, %v2988
    %v2990 = vpop.f32.mrb[0].mxu0
    %2991 = vmatprep.mubr.f32.mxu0 0.0
    %2992 = vmatmul.mubr.f32.gmra.mrb[0].mxu0 %v2187
    %v2993 = vpop.f32.mrb[0].mxu0
    %v2994 = vadd.f32 %v1518, %v2993
    %v2995 = vpop.f32.mrb[0].mxu0
    %2996 = vmatprep.mubr.f32.mxu0 0.0
    %2997 = vmatmul.mubr.f32.gmra.mrb[0].mxu0 %v2190
    %v2998 = vpop.f32.mrb[0].mxu0
    %v2999 = vadd.f32 %v1523, %v2998
    %v3000 = vpop.f32.mrb[0].mxu0
    %3001 = vmatprep.mubr.f32.mxu0 0.0
    %3002 = vmatmul.mubr.f32.gmra.mrb[0].mxu0 %v2193
    %v3003 = vpop.f32.mrb[0].mxu0
    %v3004 = vadd.f32 %v1528, %v3003
    %v3005 = vpop.f32.mrb[0].mxu0
    %3006 = vmatprep.mubr.f32.mxu0 0.0
    %3007 = vmatmul.mubr.f32.gmra.mrb[0].mxu0 %v2196
    %v3008 = vpop.f32.mrb[0].mxu0
    %v3009 = vadd.f32 %v1533, %v3008
    %v3010 = vpop.f32.mrb[0].mxu0
    %3011 = vmatprep.mubr.f32.mxu0 0.0
    %3012 = vmatmul.mubr.f32.gmra.mrb[0].mxu0 %v2199
    %v3013 = vpop.f32.mrb[0].mxu0
    %v3014 = vadd.f32 %v1538, %v3013
    %v3015 = vpop.f32.mrb[0].mxu0
    %3016 = vmatprep.mubr.f32.mxu0 0.0
    %3017 = vmatmul.mubr.f32.gmra.mrb[0].mxu0 %v2202
    %v3018 = vpop.f32.mrb[0].mxu0
    %v3019 = vadd.f32 %v1543, %v3018
    %v3020 = vpop.f32.mrb[0].mxu0
    %3021 = vmatprep.mubr.f32.mxu0 0.0
    %3022 = vmatmul.mubr.f32.gmra.mrb[0].mxu0 %v2205
    %v3023 = vpop.f32.mrb[0].mxu0
    %v3024 = vadd.f32 %v1548, %v3023
    %v3025 = vpop.f32.mrb[0].mxu0
    %3026 = vmatprep.mubr.f32.mxu0 0.0
    %3027 = vmatmul.mubr.f32.gmra.mrb[0].mxu0 %v2208
    %v3028 = vpop.f32.mrb[0].mxu0
    %v3029 = vadd.f32 %v1553, %v3028
    %v3030 = vpop.f32.mrb[0].mxu0
    %3031 = vmatprep.mubr.f32.mxu0 0.0
    %3032 = vmatmul.mubr.f32.gmra.mrb[0].mxu0 %v2211
    %v3033 = vpop.f32.mrb[0].mxu0
    %v3034 = vadd.f32 %v1558, %v3033
    %v3035 = vpop.f32.mrb[0].mxu0
    %3036 = vmatprep.mubr.f32.mxu0 0.0
    %3037 = vmatmul.mubr.f32.gmra.mrb[0].mxu0 %v2214
    %v3038 = vpop.f32.mrb[0].mxu0
    %v3039 = vadd.f32 %v1563, %v3038
    %v3040 = vpop.f32.mrb[0].mxu0
    %3041 = vmatprep.mubr.f32.mxu0 0.0
    %3042 = vmatmul.mubr.f32.gmra.mrb[0].mxu0 %v2217
    %v3043 = vpop.f32.mrb[0].mxu0
    %v3044 = vadd.f32 %v1568, %v3043
    %v3045 = vpop.f32.mrb[0].mxu0
    %3046 = vmatprep.mubr.f32.mxu0 0.0
    %3047 = vmatmul.mubr.f32.gmra.mrb[0].mxu0 %v2220
    %v3048 = vpop.f32.mrb[0].mxu0
    %v3049 = vadd.f32 %v1573, %v3048
    %v3050 = vpop.f32.mrb[0].mxu0
    %3051 = vmatprep.mubr.f32.mxu0 0.0
    %3052 = vmatmul.mubr.f32.gmra.mrb[0].mxu0 %v2223
    %v3053 = vpop.f32.mrb[0].mxu0
    %v3054 = vadd.f32 %v1578, %v3053
    %v3055 = vpop.f32.mrb[0].mxu0
    %3056 = vmatprep.mubr.f32.mxu0 0.0
    %3057 = vmatmul.mubr.f32.gmra.mrb[0].mxu0 %v2226
    %v3058 = vpop.f32.mrb[0].mxu0
    %v3059 = vadd.f32 %v1583, %v3058
    %v3060 = vpop.f32.mrb[0].mxu0
    %3061 = vmatprep.mubr.f32.mxu0 0.0
    %3062 = vmatmul.mubr.f32.gmra.mrb[0].mxu0 %v2229
    %v3063 = vpop.f32.mrb[0].mxu0
    %v3064 = vadd.f32 %v1588, %v3063
    %v3065 = vpop.f32.mrb[0].mxu0
    %3066 = vmatprep.mubr.f32.mxu0 0.0
    %3067 = vmatmul.mubr.f32.gmra.mrb[0].mxu0 %v2232
    %v3068 = vpop.f32.mrb[0].mxu0
    %v3069 = vadd.f32 %v1593, %v3068
    %v3070 = vpop.f32.mrb[0].mxu0
    %3071 = vmatprep.mubr.f32.mxu0 0.0
    %3072 = vmatmul.mubr.f32.gmra.mrb[0].mxu0 %v2235
    %v3073 = vpop.f32.mrb[0].mxu0
    %v3074 = vadd.f32 %v1598, %v3073
    %v3075 = vpop.f32.mrb[0].mxu0
    %3076 = vmatprep.mubr.f32.mxu0 0.0
    %3077 = vmatmul.mubr.f32.gmra.mrb[0].mxu0 %v2238
    %v3078 = vpop.f32.mrb[0].mxu0
    %v3079 = vadd.f32 %v1603, %v3078
    %v3080 = vpop.f32.mrb[0].mxu0
    %3081 = vmatprep.mubr.f32.mxu0 0.0
    %3082 = vmatmul.mubr.f32.gmra.mrb[0].mxu0 %v2241
    %v3083 = vpop.f32.mrb[0].mxu0
    %v3084 = vadd.f32 %v1608, %v3083
    %v3085 = vpop.f32.mrb[0].mxu0
    %3086 = vmatprep.mubr.f32.mxu0 0.0
    %3087 = vmatmul.mubr.f32.gmra.mrb[0].mxu0 %v2244
    %v3088 = vpop.f32.mrb[0].mxu0
    %v3089 = vadd.f32 %v1613, %v3088
    %v3090 = vpop.f32.mrb[0].mxu0
    %3091 = vmatprep.mubr.f32.mxu0 0.0
    %3092 = vmatmul.mubr.f32.gmra.mrb[0].mxu0 %v2247
    %v3093 = vpop.f32.mrb[0].mxu0
    %v3094 = vadd.f32 %v1618, %v3093
    %v3095 = vpop.f32.mrb[0].mxu0
    %3096 = vmatprep.mubr.f32.mxu0 0.0
    %3097 = vmatmul.mubr.f32.gmra.mrb[0].mxu0 %v2250
    %v3098 = vpop.f32.mrb[0].mxu0
    %v3099 = vadd.f32 %v1623, %v3098
    %v3100 = vpop.f32.mrb[0].mxu0
    %3101 = vmatprep.mubr.f32.mxu0 0.0
    %3102 = vmatmul.mubr.f32.gmra.mrb[0].mxu0 %v2253
    %v3103 = vpop.f32.mrb[0].mxu0
    %v3104 = vadd.f32 %v1628, %v3103
    %v3105 = vpop.f32.mrb[0].mxu0
    %3106 = vmatprep.mubr.f32.mxu0 0.0
    %3107 = vmatmul.mubr.f32.gmra.mrb[0].mxu0 %v2256
    %v3108 = vpop.f32.mrb[0].mxu0
    %v3109 = vadd.f32 %v1633, %v3108
    %v3110 = vpop.f32.mrb[0].mxu0
    %3111 = vmatprep.mubr.f32.mxu0 0.0
    %3112 = vmatmul.mubr.f32.gmra.mrb[0].mxu0 %v2259
    %v3113 = vpop.f32.mrb[0].mxu0
    %v3114 = vadd.f32 %v1638, %v3113
    %v3115 = vpop.f32.mrb[0].mxu0
    %3116 = vmatprep.mubr.f32.mxu0 0.0
    %3117 = vmatmul.mubr.f32.gmra.mrb[0].mxu0 %v2262
    %v3118 = vpop.f32.mrb[0].mxu0
    %v3119 = vadd.f32 %v1643, %v3118
    %v3120 = vpop.f32.mrb[0].mxu0
    %3121 = vmatprep.mubr.f32.mxu0 0.0
    %3122 = vmatmul.mubr.f32.gmra.mrb[0].mxu0 %v2265
    %v3123 = vpop.f32.mrb[0].mxu0
    %v3124 = vadd.f32 %v1648, %v3123
    %v3125 = vpop.f32.mrb[0].mxu0
    %3126 = vmatprep.mubr.f32.mxu0 0.0
    %3127 = vmatmul.mubr.f32.gmra.mrb[0].mxu0 %v2268
    %v3128 = vpop.f32.mrb[0].mxu0
    %v3129 = vadd.f32 %v1653, %v3128
    %v3130 = vpop.f32.mrb[0].mxu0
    %3131 = vmatprep.mubr.f32.mxu0 0.0
    %3132 = vmatmul.mubr.f32.gmra.mrb[0].mxu0 %v2271
    %v3133 = vpop.f32.mrb[0].mxu0
    %v3134 = vadd.f32 %v1658, %v3133
    %v3135 = vpop.f32.mrb[0].mxu0
    %3136 = vmatprep.mubr.f32.mxu0 0.0
    %3137 = vmatmul.mubr.f32.gmra.mrb[0].mxu0 %v2274
    %v3138 = vpop.f32.mrb[0].mxu0
    %v3139 = vadd.f32 %v1663, %v3138
    %v3140 = vpop.f32.mrb[0].mxu0
    %3141 = vmatprep.mubr.f32.mxu0 0.0
    %3142 = vmatmul.mubr.f32.gmra.mrb[0].mxu0 %v2277
    %v3143 = vpop.f32.mrb[0].mxu0
    %v3144 = vadd.f32 %v1668, %v3143
    %v3145 = vpop.f32.mrb[0].mxu0
    %3146 = vmatprep.mubr.f32.mxu0 0.0
    %3147 = vmatmul.mubr.f32.gmra.mrb[0].mxu0 %v2280
    %v3148 = vpop.f32.mrb[0].mxu0
    %v3149 = vadd.f32 %v1673, %v3148
    %v3150 = vpop.f32.mrb[0].mxu0
    %3151 = vmatprep.mubr.f32.mxu0 0.0
    %3152 = vmatmul.mubr.f32.gmra.mrb[0].mxu0 %v2283
    %v3153 = vpop.f32.mrb[0].mxu0
    %v3154 = vadd.f32 %v1678, %v3153
    %v3155 = vpop.f32.mrb[0].mxu0
    %3156 = vmatprep.mubr.f32.mxu0 0.0
    %3157 = vmatmul.mubr.f32.gmra.mrb[0].mxu0 %v2286
    %v3158 = vpop.f32.mrb[0].mxu0
    %v3159 = vadd.f32 %v1683, %v3158
    %v3160 = vpop.f32.mrb[0].mxu0
    %3161 = vmatprep.mubr.f32.mxu0 0.0
    %3162 = vmatmul.mubr.f32.gmra.mrb[0].mxu0 %v2289
    %v3163 = vpop.f32.mrb[0].mxu0
    %v3164 = vadd.f32 %v1688, %v3163
    %v3165 = vpop.f32.mrb[0].mxu0
    %3166 = vmatprep.mubr.f32.mxu0 0.0
    %3167 = vmatmul.mubr.f32.gmra.mrb[0].mxu0 %v2292
    %v3168 = vpop.f32.mrb[0].mxu0
    %v3169 = vadd.f32 %v1693, %v3168
    %v3170 = vpop.f32.mrb[0].mxu0
    %3171 = vmatprep.mubr.f32.mxu0 0.0
    %3172 = vmatmul.mubr.f32.gmra.mrb[0].mxu0 %v2295
    %v3173 = vpop.f32.mrb[0].mxu0
    %v3174 = vadd.f32 %v1698, %v3173
    %v3175 = vpop.f32.mrb[0].mxu0
    %3176 = vmatprep.mubr.f32.mxu0 0.0
    %3177 = vmatmul.mubr.f32.gmra.mrb[0].mxu0 %v2298
    %v3178 = vpop.f32.mrb[0].mxu0
    %v3179 = vadd.f32 %v1703, %v3178
    %v3180 = vpop.f32.mrb[0].mxu0
    %3181 = vmatprep.mubr.f32.mxu0 0.0
    %3182 = vmatmul.mubr.f32.gmra.mrb[0].mxu0 %v2301
    %v3183 = vpop.f32.mrb[0].mxu0
    %v3184 = vadd.f32 %v1708, %v3183
    %v3185 = vpop.f32.mrb[0].mxu0
    %3186 = vmatprep.mubr.f32.mxu0 0.0
    %3187 = vmatmul.mubr.f32.gmra.mrb[0].mxu0 %v2304
    %v3188 = vpop.f32.mrb[0].mxu0
    %v3189 = vadd.f32 %v1713, %v3188
    %v3190 = vpop.f32.mrb[0].mxu0
    %3191 = vmatprep.mubr.f32.mxu0 0.0
    %3192 = vmatmul.mubr.f32.gmra.mrb[0].mxu0 %v2307
    %v3193 = vpop.f32.mrb[0].mxu0
    %v3194 = vadd.f32 %v1718, %v3193
    %v3195 = vpop.f32.mrb[0].mxu0
    %3196 = vmatprep.mubr.f32.mxu0 0.0
    %3197 = vmatmul.mubr.f32.gmra.mrb[0].mxu0 %v2310
    %v3198 = vpop.f32.mrb[0].mxu0
    %v3199 = vadd.f32 %v1723, %v3198
    %v3200 = vpop.f32.mrb[0].mxu0
    %3201 = vmatprep.mubr.f32.mxu0 0.0
    %3202 = vmatmul.mubr.f32.gmra.mrb[0].mxu0 %v2313
    %v3203 = vpop.f32.mrb[0].mxu0
    %v3204 = vadd.f32 %v1728, %v3203
    %v3205 = vpop.f32.mrb[0].mxu0
    %3206 = vmatprep.mubr.f32.mxu0 0.0
    %3207 = vmatmul.mubr.f32.gmra.mrb[0].mxu0 %v2316
    %v3208 = vpop.f32.mrb[0].mxu0
    %v3209 = vadd.f32 %v1733, %v3208
    %v3210 = vpop.f32.mrb[0].mxu0
    %3211 = vmatprep.mubr.f32.mxu0 0.0
    %3212 = vmatmul.mubr.f32.gmra.mrb[0].mxu0 %v2319
    %v3213 = vpop.f32.mrb[0].mxu0
    %v3214 = vadd.f32 %v1738, %v3213
    %v3215 = vpop.f32.mrb[0].mxu0
    %3216 = vmatprep.mubr.f32.mxu0 0.0
    %3217 = vmatmul.mubr.f32.gmra.mrb[0].mxu0 %v2322
    %v3218 = vpop.f32.mrb[0].mxu0
    %v3219 = vadd.f32 %v1743, %v3218
    %v3220 = vpop.f32.mrb[0].mxu0
    %3221 = vmatprep.mubr.f32.mxu0 0.0
    %3222 = vmatmul.mubr.f32.gmra.mrb[0].mxu0 %v2325
    %v3223 = vpop.f32.mrb[0].mxu0
    %v3224 = vadd.f32 %v1748, %v3223
    %v3225 = vpop.f32.mrb[0].mxu0
    %3226 = vmatprep.mubr.f32.mxu0 0.0
    %3227 = vmatmul.mubr.f32.gmra.mrb[0].mxu0 %v2328
    %v3228 = vpop.f32.mrb[0].mxu0
    %v3229 = vadd.f32 %v1753, %v3228
    %v3230 = vpop.f32.mrb[0].mxu0
    %3231 = vmatprep.mubr.f32.mxu0 0.0
    %3232 = vmatmul.mubr.f32.gmra.mrb[0].mxu0 %v2331
    %v3233 = vpop.f32.mrb[0].mxu0
    %v3234 = vadd.f32 %v1758, %v3233
    %v3235 = vpop.f32.mrb[0].mxu0
    %3236 = vmatprep.mubr.f32.mxu0 0.0
    %3237 = vmatmul.mubr.f32.gmra.mrb[0].mxu0 %v2334
    %v3238 = vpop.f32.mrb[0].mxu0
    %v3239 = vadd.f32 %v1763, %v3238
    %v3240 = vpop.f32.mrb[0].mxu0
    %3241 = vmatprep.mubr.f32.mxu0 0.0
    %3242 = vmatmul.mubr.f32.gmra.mrb[0].mxu0 %v2337
    %v3243 = vpop.f32.mrb[0].mxu0
    %v3244 = vadd.f32 %v1768, %v3243
    %v3245 = vpop.f32.mrb[0].mxu0
    %3246 = vmatprep.mubr.f32.mxu0 0.0
    %3247 = vmatmul.mubr.f32.gmra.mrb[0].mxu0 %v2340
    %v3248 = vpop.f32.mrb[0].mxu0
    %v3249 = vadd.f32 %v1773, %v3248
    %v3250 = vpop.f32.mrb[0].mxu0
    %3251 = vmatprep.mubr.f32.mxu0 0.0
    %3252 = vmatmul.mubr.f32.gmra.mrb[0].mxu0 %v2343
    %v3253 = vpop.f32.mrb[0].mxu0
    %v3254 = vadd.f32 %v1778, %v3253
    %v3255 = vpop.f32.mrb[0].mxu0
    %3256 = vmatprep.mubr.f32.mxu0 0.0
    %3257 = vmatmul.mubr.f32.gmra.mrb[0].mxu0 %v2346
    %v3258 = vpop.f32.mrb[0].mxu0
    %v3259 = vadd.f32 %v1783, %v3258
    %v3260 = vpop.f32.mrb[0].mxu0
    %3261 = vmatprep.mubr.f32.mxu0 0.0
    %3262 = vmatmul.mubr.f32.gmra.mrb[0].mxu0 %v2349
    %v3263 = vpop.f32.mrb[0].mxu0
    %v3264 = vadd.f32 %v1788, %v3263
    %v3265 = vpop.f32.mrb[0].mxu0
    %3266 = vmatprep.mubr.f32.mxu0 0.0
    %3267 = vmatmul.mubr.f32.gmra.mrb[0].mxu0 %v2352
    %v3268 = vpop.f32.mrb[0].mxu0
    %v3269 = vadd.f32 %v1793, %v3268
    %v3270 = vpop.f32.mrb[0].mxu0
    %3271 = vmatprep.mubr.f32.mxu0 0.0
    %3272 = vmatmul.mubr.f32.gmra.mrb[0].mxu0 %v2355
    %v3273 = vpop.f32.mrb[0].mxu0
    %v3274 = vadd.f32 %v1798, %v3273
    %v3275 = vpop.f32.mrb[0].mxu0
    %3276 = vmatprep.mubr.f32.mxu0 0.0
    %3277 = vmatmul.mubr.f32.gmra.mrb[0].mxu0 %v2358
    %v3278 = vpop.f32.mrb[0].mxu0
    %v3279 = vadd.f32 %v1803, %v3278
    %v3280 = vpop.f32.mrb[0].mxu0
    %3281 = vmatprep.mubr.f32.mxu0 0.0
    %3282 = vmatmul.mubr.f32.gmra.mrb[0].mxu0 %v2361
    %v3283 = vpop.f32.mrb[0].mxu0
    %v3284 = vadd.f32 %v1808, %v3283
    %v3285 = vpop.f32.mrb[0].mxu0
    %3286 = vmatprep.mubr.f32.mxu0 0.0
    %3287 = vmatmul.mubr.f32.gmra.mrb[0].mxu0 %v2364
    %v3288 = vpop.f32.mrb[0].mxu0
    %v3289 = vadd.f32 %v1813, %v3288
    %v3290 = vpop.f32.mrb[0].mxu0
    %3291 = vmatprep.mubr.f32.mxu0 0.0
    %3292 = vmatmul.mubr.f32.gmra.mrb[0].mxu0 %v2367
    %v3293 = vpop.f32.mrb[0].mxu0
    %v3294 = vadd.f32 %v1818, %v3293
    %v3295 = vpop.f32.mrb[0].mxu0
    %3296 = vmatprep.mubr.f32.mxu0 0.0
    %3297 = vmatmul.mubr.f32.gmra.mrb[0].mxu0 %v2370
    %v3298 = vpop.f32.mrb[0].mxu0
    %v3299 = vadd.f32 %v1823, %v3298
    %v3300 = vpop.f32.mrb[0].mxu0
    %3301 = vmatprep.mubr.f32.mxu0 0.0
    %3302 = vmatmul.mubr.f32.gmra.mrb[0].mxu0 %v2373
    %v3303 = vpop.f32.mrb[0].mxu0
    %v3304 = vadd.f32 %v1828, %v3303
    %v3305 = vpop.f32.mrb[0].mxu0
    %3306 = vmatprep.mubr.f32.mxu0 0.0
    %3307 = vmatmul.mubr.f32.gmra.mrb[0].mxu0 %v2376
    %v3308 = vpop.f32.mrb[0].mxu0
    %v3309 = vadd.f32 %v1833, %v3308
    %v3310 = vpop.f32.mrb[0].mxu0
    %3311 = vmatprep.mubr.f32.mxu0 0.0
    %3312 = vmatmul.mubr.f32.gmra.mrb[0].mxu0 %v2379
    %v3313 = vpop.f32.mrb[0].mxu0
    %v3314 = vadd.f32 %v1838, %v3313
    %v3315 = vpop.f32.mrb[0].mxu0
    %3316 = vmatprep.mubr.f32.mxu0 0.0
    %3317 = vmatmul.mubr.f32.gmra.mrb[0].mxu0 %v2382
    %v3318 = vpop.f32.mrb[0].mxu0
    %v3319 = vadd.f32 %v1843, %v3318
    %v3320 = vpop.f32.mrb[0].mxu0
    %3321 = vmatprep.mubr.f32.mxu0 0.0
    %3322 = vmatmul.mubr.f32.gmra.mrb[0].mxu0 %v2385
    %v3323 = vpop.f32.mrb[0].mxu0
    %v3324 = vadd.f32 %v1848, %v3323
    %v3325 = vpop.f32.mrb[0].mxu0
    %3326 = vmatprep.mubr.f32.mxu0 0.0
    %3327 = vmatmul.mubr.f32.gmra.mrb[0].mxu0 %v2388
    %v3328 = vpop.f32.mrb[0].mxu0
    %v3329 = vadd.f32 %v1853, %v3328
    %v3330 = vpop.f32.mrb[0].mxu0
    %3331 = vmatprep.mubr.f32.mxu0 0.0
    %3332 = vmatmul.mubr.f32.gmra.mrb[0].mxu0 %v2391
    %v3333 = vpop.f32.mrb[0].mxu0
    %v3334 = vadd.f32 %v1858, %v3333
    %v3335 = vpop.f32.mrb[0].mxu0
    %3336 = vmatprep.mubr.f32.mxu0 0.0
    %3337 = vmatmul.mubr.f32.gmra.mrb[0].mxu0 %v2394
    %v3338 = vpop.f32.mrb[0].mxu0
    %v3339 = vadd.f32 %v1863, %v3338
    %v3340 = vpop.f32.mrb[0].mxu0
    %3341 = vmatprep.mubr.f32.mxu0 0.0
    %3342 = vmatmul.mubr.f32.gmra.mrb[0].mxu0 %v2397
    %v3343 = vpop.f32.mrb[0].mxu0
    %v3344 = vadd.f32 %v1868, %v3343
    %v3345 = vpop.f32.mrb[0].mxu0
    %3346 = vdwg.mxu0
    %v3347 = vld [vmem:[%s3] sm:$0x1]
    %v3349 = vlaneseq
    %v3350 = vshrl.u32 %v3349, 7
    %v3351 = vsub.s32 0, %v3350
    %v3352 = vrot.slane %v3347, %v3351
    %v3354 = vadd.f32 %v2469, %v3352
    %v3355 = vadd.f32 %v2474, %v3352
    %v3356 = vadd.f32 %v2479, %v3352
    %v3357 = vadd.f32 %v2484, %v3352
    %v3358 = vadd.f32 %v2489, %v3352
    %v3359 = vadd.f32 %v2494, %v3352
    %v3360 = vadd.f32 %v2499, %v3352
    %v3361 = vadd.f32 %v2504, %v3352
    %v3362 = vadd.f32 %v2509, %v3352
    %v3363 = vadd.f32 %v2514, %v3352
    %v3364 = vadd.f32 %v2519, %v3352
    %v3365 = vadd.f32 %v2524, %v3352
    %v3366 = vadd.f32 %v2529, %v3352
    %v3367 = vadd.f32 %v2534, %v3352
    %v3368 = vadd.f32 %v2539, %v3352
    %v3369 = vadd.f32 %v2544, %v3352
    %v3370 = vadd.f32 %v2549, %v3352
    %v3371 = vadd.f32 %v2554, %v3352
    %v3372 = vadd.f32 %v2559, %v3352
    %v3373 = vadd.f32 %v2564, %v3352
    %v3374 = vadd.f32 %v2569, %v3352
    %v3375 = vadd.f32 %v2574, %v3352
    %v3376 = vadd.f32 %v2579, %v3352
    %v3377 = vadd.f32 %v2584, %v3352
    %v3378 = vadd.f32 %v2589, %v3352
    %v3379 = vadd.f32 %v2594, %v3352
    %v3380 = vadd.f32 %v2599, %v3352
    %v3381 = vadd.f32 %v2604, %v3352
    %v3382 = vadd.f32 %v2609, %v3352
    %v3383 = vadd.f32 %v2614, %v3352
    %v3384 = vadd.f32 %v2619, %v3352
    %v3385 = vadd.f32 %v2624, %v3352
    %v3386 = vadd.f32 %v2629, %v3352
    %v3387 = vadd.f32 %v2634, %v3352
    %v3388 = vadd.f32 %v2639, %v3352
    %v3389 = vadd.f32 %v2644, %v3352
    %v3390 = vadd.f32 %v2649, %v3352
    %v3391 = vadd.f32 %v2654, %v3352
    %v3392 = vadd.f32 %v2659, %v3352
    %v3393 = vadd.f32 %v2664, %v3352
    %v3394 = vadd.f32 %v2669, %v3352
    %v3395 = vadd.f32 %v2674, %v3352
    %v3396 = vadd.f32 %v2679, %v3352
    %v3397 = vadd.f32 %v2684, %v3352
    %v3398 = vadd.f32 %v2689, %v3352
    %v3399 = vadd.f32 %v2694, %v3352
    %v3400 = vadd.f32 %v2699, %v3352
    %v3401 = vadd.f32 %v2704, %v3352
    %v3402 = vadd.f32 %v2709, %v3352
    %v3403 = vadd.f32 %v2714, %v3352
    %v3404 = vadd.f32 %v2719, %v3352
    %v3405 = vadd.f32 %v2724, %v3352
    %v3406 = vadd.f32 %v2729, %v3352
    %v3407 = vadd.f32 %v2734, %v3352
    %v3408 = vadd.f32 %v2739, %v3352
    %v3409 = vadd.f32 %v2744, %v3352
    %v3410 = vadd.f32 %v2749, %v3352
    %v3411 = vadd.f32 %v2754, %v3352
    %v3412 = vadd.f32 %v2759, %v3352
    %v3413 = vadd.f32 %v2764, %v3352
    %v3414 = vadd.f32 %v2769, %v3352
    %v3415 = vadd.f32 %v2774, %v3352
    %v3416 = vadd.f32 %v2779, %v3352
    %v3417 = vadd.f32 %v2784, %v3352
    %v3418 = vadd.f32 %v2789, %v3352
    %v3419 = vadd.f32 %v2794, %v3352
    %v3420 = vadd.f32 %v2799, %v3352
    %v3421 = vadd.f32 %v2804, %v3352
    %v3422 = vadd.f32 %v2809, %v3352
    %v3423 = vadd.f32 %v2814, %v3352
    %v3424 = vadd.f32 %v2819, %v3352
    %v3425 = vadd.f32 %v2824, %v3352
    %v3426 = vadd.f32 %v2829, %v3352
    %v3427 = vadd.f32 %v2834, %v3352
    %v3428 = vadd.f32 %v2839, %v3352
    %v3429 = vadd.f32 %v2844, %v3352
    %v3430 = vadd.f32 %v2849, %v3352
    %v3431 = vadd.f32 %v2854, %v3352
    %v3432 = vadd.f32 %v2859, %v3352
    %v3433 = vadd.f32 %v2864, %v3352
    %v3434 = vadd.f32 %v2869, %v3352
    %v3435 = vadd.f32 %v2874, %v3352
    %v3436 = vadd.f32 %v2879, %v3352
    %v3437 = vadd.f32 %v2884, %v3352
    %v3438 = vadd.f32 %v2889, %v3352
    %v3439 = vadd.f32 %v2894, %v3352
    %v3440 = vadd.f32 %v2899, %v3352
    %v3441 = vadd.f32 %v2904, %v3352
    %v3442 = vadd.f32 %v2909, %v3352
    %v3443 = vadd.f32 %v2914, %v3352
    %v3444 = vadd.f32 %v2919, %v3352
    %v3445 = vadd.f32 %v2924, %v3352
    %v3446 = vadd.f32 %v2929, %v3352
    %v3447 = vadd.f32 %v2934, %v3352
    %v3448 = vadd.f32 %v2939, %v3352
    %v3449 = vadd.f32 %v2944, %v3352
    %v3450 = vadd.f32 %v2949, %v3352
    %v3451 = vadd.f32 %v2954, %v3352
    %v3452 = vadd.f32 %v2959, %v3352
    %v3453 = vadd.f32 %v2964, %v3352
    %v3454 = vadd.f32 %v2969, %v3352
    %v3455 = vadd.f32 %v2974, %v3352
    %v3456 = vadd.f32 %v2979, %v3352
    %v3457 = vadd.f32 %v2984, %v3352
    %v3458 = vadd.f32 %v2989, %v3352
    %v3459 = vadd.f32 %v2994, %v3352
    %v3460 = vadd.f32 %v2999, %v3352
    %v3461 = vadd.f32 %v3004, %v3352
    %v3462 = vadd.f32 %v3009, %v3352
    %v3463 = vadd.f32 %v3014, %v3352
    %v3464 = vadd.f32 %v3019, %v3352
    %v3465 = vadd.f32 %v3024, %v3352
    %v3466 = vadd.f32 %v3029, %v3352
    %v3467 = vadd.f32 %v3034, %v3352
    %v3468 = vadd.f32 %v3039, %v3352
    %v3469 = vadd.f32 %v3044, %v3352
    %v3470 = vadd.f32 %v3049, %v3352
    %v3471 = vadd.f32 %v3054, %v3352
    %v3472 = vadd.f32 %v3059, %v3352
    %v3473 = vadd.f32 %v3064, %v3352
    %v3474 = vadd.f32 %v3069, %v3352
    %v3475 = vadd.f32 %v3074, %v3352
    %v3476 = vadd.f32 %v3079, %v3352
    %v3477 = vadd.f32 %v3084, %v3352
    %v3478 = vadd.f32 %v3089, %v3352
    %v3479 = vadd.f32 %v3094, %v3352
    %v3480 = vadd.f32 %v3099, %v3352
    %v3481 = vadd.f32 %v3104, %v3352
    %v3482 = vadd.f32 %v3109, %v3352
    %v3483 = vadd.f32 %v3114, %v3352
    %v3484 = vadd.f32 %v3119, %v3352
    %v3485 = vadd.f32 %v3124, %v3352
    %v3486 = vadd.f32 %v3129, %v3352
    %v3487 = vadd.f32 %v3134, %v3352
    %v3488 = vadd.f32 %v3139, %v3352
    %v3489 = vadd.f32 %v3144, %v3352
    %v3490 = vadd.f32 %v3149, %v3352
    %v3491 = vadd.f32 %v3154, %v3352
    %v3492 = vadd.f32 %v3159, %v3352
    %v3493 = vadd.f32 %v3164, %v3352
    %v3494 = vadd.f32 %v3169, %v3352
    %v3495 = vadd.f32 %v3174, %v3352
    %v3496 = vadd.f32 %v3179, %v3352
    %v3497 = vadd.f32 %v3184, %v3352
    %v3498 = vadd.f32 %v3189, %v3352
    %v3499 = vadd.f32 %v3194, %v3352
    %v3500 = vadd.f32 %v3199, %v3352
    %v3501 = vadd.f32 %v3204, %v3352
    %v3502 = vadd.f32 %v3209, %v3352
    %v3503 = vadd.f32 %v3214, %v3352
    %v3504 = vadd.f32 %v3219, %v3352
    %v3505 = vadd.f32 %v3224, %v3352
    %v3506 = vadd.f32 %v3229, %v3352
    %v3507 = vadd.f32 %v3234, %v3352
    %v3508 = vadd.f32 %v3239, %v3352
    %v3509 = vadd.f32 %v3244, %v3352
    %v3510 = vadd.f32 %v3249, %v3352
    %v3511 = vadd.f32 %v3254, %v3352
    %v3512 = vadd.f32 %v3259, %v3352
    %v3513 = vadd.f32 %v3264, %v3352
    %v3514 = vadd.f32 %v3269, %v3352
    %v3515 = vadd.f32 %v3274, %v3352
    %v3516 = vadd.f32 %v3279, %v3352
    %v3517 = vadd.f32 %v3284, %v3352
    %v3518 = vadd.f32 %v3289, %v3352
    %v3519 = vadd.f32 %v3294, %v3352
    %v3520 = vadd.f32 %v3299, %v3352
    %v3521 = vadd.f32 %v3304, %v3352
    %v3522 = vadd.f32 %v3309, %v3352
    %v3523 = vadd.f32 %v3314, %v3352
    %v3524 = vadd.f32 %v3319, %v3352
    %v3525 = vadd.f32 %v3324, %v3352
    %v3526 = vadd.f32 %v3329, %v3352
    %v3527 = vadd.f32 %v3334, %v3352
    %v3528 = vadd.f32 %v3339, %v3352
    %v3529 = vadd.f32 %v3344, %v3352
    %v3530 = vmax.f32 %v3354, 0.0
    %v3531 = vmax.f32 %v3355, 0.0
    %v3532 = vmax.f32 %v3356, 0.0
    %v3533 = vmax.f32 %v3357, 0.0
    %v3534 = vmax.f32 %v3358, 0.0
    %v3535 = vmax.f32 %v3359, 0.0
    %v3536 = vmax.f32 %v3360, 0.0
    %v3537 = vmax.f32 %v3361, 0.0
    %v3538 = vmax.f32 %v3362, 0.0
    %v3539 = vmax.f32 %v3363, 0.0
    %v3540 = vmax.f32 %v3364, 0.0
    %v3541 = vmax.f32 %v3365, 0.0
    %v3542 = vmax.f32 %v3366, 0.0
    %v3543 = vmax.f32 %v3367, 0.0
    %v3544 = vmax.f32 %v3368, 0.0
    %v3545 = vmax.f32 %v3369, 0.0
    %v3546 = vmax.f32 %v3370, 0.0
    %v3547 = vmax.f32 %v3371, 0.0
    %v3548 = vmax.f32 %v3372, 0.0
    %v3549 = vmax.f32 %v3373, 0.0
    %v3550 = vmax.f32 %v3374, 0.0
    %v3551 = vmax.f32 %v3375, 0.0
    %v3552 = vmax.f32 %v3376, 0.0
    %v3553 = vmax.f32 %v3377, 0.0
    %v3554 = vmax.f32 %v3378, 0.0
    %v3555 = vmax.f32 %v3379, 0.0
    %v3556 = vmax.f32 %v3380, 0.0
    %v3557 = vmax.f32 %v3381, 0.0
    %v3558 = vmax.f32 %v3382, 0.0
    %v3559 = vmax.f32 %v3383, 0.0
    %v3560 = vmax.f32 %v3384, 0.0
    %v3561 = vmax.f32 %v3385, 0.0
    %v3562 = vmax.f32 %v3386, 0.0
    %v3563 = vmax.f32 %v3387, 0.0
    %v3564 = vmax.f32 %v3388, 0.0
    %v3565 = vmax.f32 %v3389, 0.0
    %v3566 = vmax.f32 %v3390, 0.0
    %v3567 = vmax.f32 %v3391, 0.0
    %v3568 = vmax.f32 %v3392, 0.0
    %v3569 = vmax.f32 %v3393, 0.0
    %v3570 = vmax.f32 %v3394, 0.0
    %v3571 = vmax.f32 %v3395, 0.0
    %v3572 = vmax.f32 %v3396, 0.0
    %v3573 = vmax.f32 %v3397, 0.0
    %v3574 = vmax.f32 %v3398, 0.0
    %v3575 = vmax.f32 %v3399, 0.0
    %v3576 = vmax.f32 %v3400, 0.0
    %v3577 = vmax.f32 %v3401, 0.0
    %v3578 = vmax.f32 %v3402, 0.0
    %v3579 = vmax.f32 %v3403, 0.0
    %v3580 = vmax.f32 %v3404, 0.0
    %v3581 = vmax.f32 %v3405, 0.0
    %v3582 = vmax.f32 %v3406, 0.0
    %v3583 = vmax.f32 %v3407, 0.0
    %v3584 = vmax.f32 %v3408, 0.0
    %v3585 = vmax.f32 %v3409, 0.0
    %v3586 = vmax.f32 %v3410, 0.0
    %v3587 = vmax.f32 %v3411, 0.0
    %v3588 = vmax.f32 %v3412, 0.0
    %v3589 = vmax.f32 %v3413, 0.0
    %v3590 = vmax.f32 %v3414, 0.0
    %v3591 = vmax.f32 %v3415, 0.0
    %v3592 = vmax.f32 %v3416, 0.0
    %v3593 = vmax.f32 %v3417, 0.0
    %v3594 = vmax.f32 %v3418, 0.0
    %v3595 = vmax.f32 %v3419, 0.0
    %v3596 = vmax.f32 %v3420, 0.0
    %v3597 = vmax.f32 %v3421, 0.0
    %v3598 = vmax.f32 %v3422, 0.0
    %v3599 = vmax.f32 %v3423, 0.0
    %v3600 = vmax.f32 %v3424, 0.0
    %v3601 = vmax.f32 %v3425, 0.0
    %v3602 = vmax.f32 %v3426, 0.0
    %v3603 = vmax.f32 %v3427, 0.0
    %v3604 = vmax.f32 %v3428, 0.0
    %v3605 = vmax.f32 %v3429, 0.0
    %v3606 = vmax.f32 %v3430, 0.0
    %v3607 = vmax.f32 %v3431, 0.0
    %v3608 = vmax.f32 %v3432, 0.0
    %v3609 = vmax.f32 %v3433, 0.0
    %v3610 = vmax.f32 %v3434, 0.0
    %v3611 = vmax.f32 %v3435, 0.0
    %v3612 = vmax.f32 %v3436, 0.0
    %v3613 = vmax.f32 %v3437, 0.0
    %v3614 = vmax.f32 %v3438, 0.0
    %v3615 = vmax.f32 %v3439, 0.0
    %v3616 = vmax.f32 %v3440, 0.0
    %v3617 = vmax.f32 %v3441, 0.0
    %v3618 = vmax.f32 %v3442, 0.0
    %v3619 = vmax.f32 %v3443, 0.0
    %v3620 = vmax.f32 %v3444, 0.0
    %v3621 = vmax.f32 %v3445, 0.0
    %v3622 = vmax.f32 %v3446, 0.0
    %v3623 = vmax.f32 %v3447, 0.0
    %v3624 = vmax.f32 %v3448, 0.0
    %v3625 = vmax.f32 %v3449, 0.0
    %v3626 = vmax.f32 %v3450, 0.0
    %v3627 = vmax.f32 %v3451, 0.0
    %v3628 = vmax.f32 %v3452, 0.0
    %v3629 = vmax.f32 %v3453, 0.0
    %v3630 = vmax.f32 %v3454, 0.0
    %v3631 = vmax.f32 %v3455, 0.0
    %v3632 = vmax.f32 %v3456, 0.0
    %v3633 = vmax.f32 %v3457, 0.0
    %v3634 = vmax.f32 %v3458, 0.0
    %v3635 = vmax.f32 %v3459, 0.0
    %v3636 = vmax.f32 %v3460, 0.0
    %v3637 = vmax.f32 %v3461, 0.0
    %v3638 = vmax.f32 %v3462, 0.0
    %v3639 = vmax.f32 %v3463, 0.0
    %v3640 = vmax.f32 %v3464, 0.0
    %v3641 = vmax.f32 %v3465, 0.0
    %v3642 = vmax.f32 %v3466, 0.0
    %v3643 = vmax.f32 %v3467, 0.0
    %v3644 = vmax.f32 %v3468, 0.0
    %v3645 = vmax.f32 %v3469, 0.0
    %v3646 = vmax.f32 %v3470, 0.0
    %v3647 = vmax.f32 %v3471, 0.0
    %v3648 = vmax.f32 %v3472, 0.0
    %v3649 = vmax.f32 %v3473, 0.0
    %v3650 = vmax.f32 %v3474, 0.0
    %v3651 = vmax.f32 %v3475, 0.0
    %v3652 = vmax.f32 %v3476, 0.0
    %v3653 = vmax.f32 %v3477, 0.0
    %v3654 = vmax.f32 %v3478, 0.0
    %v3655 = vmax.f32 %v3479, 0.0
    %v3656 = vmax.f32 %v3480, 0.0
    %v3657 = vmax.f32 %v3481, 0.0
    %v3658 = vmax.f32 %v3482, 0.0
    %v3659 = vmax.f32 %v3483, 0.0
    %v3660 = vmax.f32 %v3484, 0.0
    %v3661 = vmax.f32 %v3485, 0.0
    %v3662 = vmax.f32 %v3486, 0.0
    %v3663 = vmax.f32 %v3487, 0.0
    %v3664 = vmax.f32 %v3488, 0.0
    %v3665 = vmax.f32 %v3489, 0.0
    %v3666 = vmax.f32 %v3490, 0.0
    %v3667 = vmax.f32 %v3491, 0.0
    %v3668 = vmax.f32 %v3492, 0.0
    %v3669 = vmax.f32 %v3493, 0.0
    %v3670 = vmax.f32 %v3494, 0.0
    %v3671 = vmax.f32 %v3495, 0.0
    %v3672 = vmax.f32 %v3496, 0.0
    %v3673 = vmax.f32 %v3497, 0.0
    %v3674 = vmax.f32 %v3498, 0.0
    %v3675 = vmax.f32 %v3499, 0.0
    %v3676 = vmax.f32 %v3500, 0.0
    %v3677 = vmax.f32 %v3501, 0.0
    %v3678 = vmax.f32 %v3502, 0.0
    %v3679 = vmax.f32 %v3503, 0.0
    %v3680 = vmax.f32 %v3504, 0.0
    %v3681 = vmax.f32 %v3505, 0.0
    %v3682 = vmax.f32 %v3506, 0.0
    %v3683 = vmax.f32 %v3507, 0.0
    %v3684 = vmax.f32 %v3508, 0.0
    %v3685 = vmax.f32 %v3509, 0.0
    %v3686 = vmax.f32 %v3510, 0.0
    %v3687 = vmax.f32 %v3511, 0.0
    %v3688 = vmax.f32 %v3512, 0.0
    %v3689 = vmax.f32 %v3513, 0.0
    %v3690 = vmax.f32 %v3514, 0.0
    %v3691 = vmax.f32 %v3515, 0.0
    %v3692 = vmax.f32 %v3516, 0.0
    %v3693 = vmax.f32 %v3517, 0.0
    %v3694 = vmax.f32 %v3518, 0.0
    %v3695 = vmax.f32 %v3519, 0.0
    %v3696 = vmax.f32 %v3520, 0.0
    %v3697 = vmax.f32 %v3521, 0.0
    %v3698 = vmax.f32 %v3522, 0.0
    %v3699 = vmax.f32 %v3523, 0.0
    %v3700 = vmax.f32 %v3524, 0.0
    %v3701 = vmax.f32 %v3525, 0.0
    %v3702 = vmax.f32 %v3526, 0.0
    %v3703 = vmax.f32 %v3527, 0.0
    %v3704 = vmax.f32 %v3528, 0.0
    %v3705 = vmax.f32 %v3529, 0.0
    %vm3706 = vcmask 130048
    %3707 = vst.msk [vmem:[#allocation2] sm:$0xff] %vm3706, 0.0
    %3708 = vst.msk [vmem:[#allocation2 + $0x8] sm:$0xff] %vm3706, 0.0
    %3709 = vst.msk [vmem:[#allocation2 + $0x10] sm:$0xff] %vm3706, 0.0
    %3710 = vst.msk [vmem:[#allocation2 + $0x18] sm:$0xff] %vm3706, 0.0
    %3711 = vst.msk [vmem:[#allocation2 + $0x20] sm:$0xff] %vm3706, 0.0
    %3712 = vst.msk [vmem:[#allocation2 + $0x28] sm:$0xff] %vm3706, 0.0
    %3713 = vst.msk [vmem:[#allocation2 + $0x30] sm:$0xff] %vm3706, 0.0
    %3714 = vst.msk [vmem:[#allocation2 + $0x38] sm:$0xff] %vm3706, 0.0
    %3715 = vst.msk [vmem:[#allocation2 + $0x40] sm:$0xff] %vm3706, 0.0
    %3716 = vst.msk [vmem:[#allocation2 + $0x48] sm:$0xff] %vm3706, 0.0
    %3717 = vst.msk [vmem:[#allocation2 + $0x50] sm:$0xff] %vm3706, 0.0
    %3718 = vst.msk [vmem:[#allocation2 + $0x58] sm:$0xff] %vm3706, 0.0
    %3719 = vst.msk [vmem:[#allocation2 + $0x60] sm:$0xff] %vm3706, 0.0
    %3720 = vst.msk [vmem:[#allocation2 + $0x68] sm:$0xff] %vm3706, 0.0
    %3721 = vst.msk [vmem:[#allocation2 + $0x70] sm:$0xff] %vm3706, 0.0
    %3722 = vst.msk [vmem:[#allocation2 + $0x78] sm:$0xff] %vm3706, 0.0
    %3723 = vst.msk [vmem:[#allocation2 + $0x80] sm:$0xff] %vm3706, 0.0
    %3724 = vst.msk [vmem:[#allocation2 + $0x88] sm:$0xff] %vm3706, 0.0
    %3725 = vst.msk [vmem:[#allocation2 + $0x90] sm:$0xff] %vm3706, 0.0
    %3726 = vst.msk [vmem:[#allocation2 + $0x98] sm:$0xff] %vm3706, 0.0
    %3727 = vst.msk [vmem:[#allocation2 + $0xa0] sm:$0xff] %vm3706, 0.0
    %3728 = vst.msk [vmem:[#allocation2 + $0xa8] sm:$0xff] %vm3706, 0.0
    %3729 = vst.msk [vmem:[#allocation2 + $0xb0] sm:$0xff] %vm3706, 0.0
    %3730 = vst.msk [vmem:[#allocation2 + $0xb8] sm:$0xff] %vm3706, 0.0
    %3731 = vst.msk [vmem:[#allocation2 + $0xc0] sm:$0xff] %vm3706, 0.0
    %3732 = vst.msk [vmem:[#allocation2 + $0xc8] sm:$0xff] %vm3706, 0.0
    %3733 = vst.msk [vmem:[#allocation2 + $0xd0] sm:$0xff] %vm3706, 0.0
    %3734 = vst.msk [vmem:[#allocation2 + $0xd8] sm:$0xff] %vm3706, 0.0
    %3735 = vst.msk [vmem:[#allocation2 + $0xe0] sm:$0xff] %vm3706, 0.0
    %3736 = vst.msk [vmem:[#allocation2 + $0xe8] sm:$0xff] %vm3706, 0.0
    %3737 = vst.msk [vmem:[#allocation2 + $0xf0] sm:$0xff] %vm3706, 0.0
    %3738 = vst.msk [vmem:[#allocation2 + $0xf8] sm:$0xff] %vm3706, 0.0
    %3739 = vst.msk [vmem:[#allocation2 + $0x100] sm:$0xff] %vm3706, 0.0
    %3740 = vst.msk [vmem:[#allocation2 + $0x108] sm:$0xff] %vm3706, 0.0
    %3741 = vst.msk [vmem:[#allocation2 + $0x110] sm:$0xff] %vm3706, 0.0
    %3742 = vst.msk [vmem:[#allocation2 + $0x118] sm:$0xff] %vm3706, 0.0
    %3743 = vst.msk [vmem:[#allocation2 + $0x120] sm:$0xff] %vm3706, 0.0
    %3744 = vst.msk [vmem:[#allocation2 + $0x128] sm:$0xff] %vm3706, 0.0
    %3745 = vst.msk [vmem:[#allocation2 + $0x130] sm:$0xff] %vm3706, 0.0
    %3746 = vst.msk [vmem:[#allocation2 + $0x138] sm:$0xff] %vm3706, 0.0
    %3747 = vst.msk [vmem:[#allocation2 + $0x140] sm:$0xff] %vm3706, 0.0
    %3748 = vst.msk [vmem:[#allocation2 + $0x148] sm:$0xff] %vm3706, 0.0
    %3749 = vst.msk [vmem:[#allocation2 + $0x150] sm:$0xff] %vm3706, 0.0
    %3750 = vst.msk [vmem:[#allocation2 + $0x158] sm:$0xff] %vm3706, 0.0
    %3751 = vst.msk [vmem:[#allocation2 + $0x160] sm:$0xff] %vm3706, 0.0
    %3752 = vst.msk [vmem:[#allocation2 + $0x168] sm:$0xff] %vm3706, 0.0
    %3753 = vst.msk [vmem:[#allocation2 + $0x170] sm:$0xff] %vm3706, 0.0
    %3754 = vst.msk [vmem:[#allocation2 + $0x178] sm:$0xff] %vm3706, 0.0
    %3755 = vst.msk [vmem:[#allocation2 + $0x180] sm:$0xff] %vm3706, 0.0
    %3756 = vst.msk [vmem:[#allocation2 + $0x188] sm:$0xff] %vm3706, 0.0
    %3757 = vst.msk [vmem:[#allocation2 + $0x190] sm:$0xff] %vm3706, 0.0
    %3758 = vst.msk [vmem:[#allocation2 + $0x198] sm:$0xff] %vm3706, 0.0
    %3759 = vst.msk [vmem:[#allocation2 + $0x1a0] sm:$0xff] %vm3706, 0.0
    %3760 = vst.msk [vmem:[#allocation2 + $0x1a8] sm:$0xff] %vm3706, 0.0
    %3761 = vst.msk [vmem:[#allocation2 + $0x1b0] sm:$0xff] %vm3706, 0.0
    %3762 = vst.msk [vmem:[#allocation2 + $0x1b8] sm:$0xff] %vm3706, 0.0
    %3763 = vst.msk [vmem:[#allocation2 + $0x1c0] sm:$0xff] %vm3706, 0.0
    %3764 = vst.msk [vmem:[#allocation2 + $0x1c8] sm:$0xff] %vm3706, 0.0
    %3765 = vst.msk [vmem:[#allocation2 + $0x1d0] sm:$0xff] %vm3706, 0.0
    %3766 = vst.msk [vmem:[#allocation2 + $0x1d8] sm:$0xff] %vm3706, 0.0
    %3767 = vst.msk [vmem:[#allocation2 + $0x1e0] sm:$0xff] %vm3706, 0.0
    %3768 = vst.msk [vmem:[#allocation2 + $0x1e8] sm:$0xff] %vm3706, 0.0
    %3769 = vst.msk [vmem:[#allocation2 + $0x1f0] sm:$0xff] %vm3706, 0.0
    %3770 = vst.msk [vmem:[#allocation2 + $0x1f8] sm:$0xff] %vm3706, 0.0
    %3771 = vst.msk [vmem:[#allocation2 + $0x200] sm:$0xff] %vm3706, 0.0
    %3772 = vst.msk [vmem:[#allocation2 + $0x208] sm:$0xff] %vm3706, 0.0
    %3773 = vst.msk [vmem:[#allocation2 + $0x210] sm:$0xff] %vm3706, 0.0
    %3774 = vst.msk [vmem:[#allocation2 + $0x218] sm:$0xff] %vm3706, 0.0
    %3775 = vst.msk [vmem:[#allocation2 + $0x220] sm:$0xff] %vm3706, 0.0
    %3776 = vst.msk [vmem:[#allocation2 + $0x228] sm:$0xff] %vm3706, 0.0
    %3777 = vst.msk [vmem:[#allocation2 + $0x230] sm:$0xff] %vm3706, 0.0
    %3778 = vst.msk [vmem:[#allocation2 + $0x238] sm:$0xff] %vm3706, 0.0
    %3779 = vst.msk [vmem:[#allocation2 + $0x240] sm:$0xff] %vm3706, 0.0
    %3780 = vst.msk [vmem:[#allocation2 + $0x248] sm:$0xff] %vm3706, 0.0
    %3781 = vst.msk [vmem:[#allocation2 + $0x250] sm:$0xff] %vm3706, 0.0
    %3782 = vst.msk [vmem:[#allocation2 + $0x258] sm:$0xff] %vm3706, 0.0
    %3783 = vst.msk [vmem:[#allocation2 + $0x260] sm:$0xff] %vm3706, 0.0
    %3784 = vst.msk [vmem:[#allocation2 + $0x268] sm:$0xff] %vm3706, 0.0
    %3785 = vst.msk [vmem:[#allocation2 + $0x270] sm:$0xff] %vm3706, 0.0
    %3786 = vst.msk [vmem:[#allocation2 + $0x278] sm:$0xff] %vm3706, 0.0
    %3787 = vst.msk [vmem:[#allocation2 + $0x280] sm:$0xff] %vm3706, 0.0
    %3788 = vst.msk [vmem:[#allocation2 + $0x288] sm:$0xff] %vm3706, 0.0
    %3789 = vst.msk [vmem:[#allocation2 + $0x290] sm:$0xff] %vm3706, 0.0
    %3790 = vst.msk [vmem:[#allocation2 + $0x298] sm:$0xff] %vm3706, 0.0
    %3791 = vst.msk [vmem:[#allocation2 + $0x2a0] sm:$0xff] %vm3706, 0.0
    %3792 = vst.msk [vmem:[#allocation2 + $0x2a8] sm:$0xff] %vm3706, 0.0
    %3793 = vst.msk [vmem:[#allocation2 + $0x2b0] sm:$0xff] %vm3706, 0.0
    %3794 = vst.msk [vmem:[#allocation2 + $0x2b8] sm:$0xff] %vm3706, 0.0
    %3795 = vst.msk [vmem:[#allocation2 + $0x2c0] sm:$0xff] %vm3706, 0.0
    %3796 = vst.msk [vmem:[#allocation2 + $0x2c8] sm:$0xff] %vm3706, 0.0
    %3797 = vst.msk [vmem:[#allocation2 + $0x2d0] sm:$0xff] %vm3706, 0.0
    %3798 = vst.msk [vmem:[#allocation2 + $0x2d8] sm:$0xff] %vm3706, 0.0
    %3799 = vst.msk [vmem:[#allocation2 + $0x2e0] sm:$0xff] %vm3706, 0.0
    %3800 = vst.msk [vmem:[#allocation2 + $0x2e8] sm:$0xff] %vm3706, 0.0
    %3801 = vst.msk [vmem:[#allocation2 + $0x2f0] sm:$0xff] %vm3706, 0.0
    %3802 = vst.msk [vmem:[#allocation2 + $0x2f8] sm:$0xff] %vm3706, 0.0
    %3803 = vst.msk [vmem:[#allocation2 + $0x300] sm:$0xff] %vm3706, 0.0
    %3804 = vst.msk [vmem:[#allocation2 + $0x308] sm:$0xff] %vm3706, 0.0
    %3805 = vst.msk [vmem:[#allocation2 + $0x310] sm:$0xff] %vm3706, 0.0
    %3806 = vst.msk [vmem:[#allocation2 + $0x318] sm:$0xff] %vm3706, 0.0
    %3807 = vst.msk [vmem:[#allocation2 + $0x320] sm:$0xff] %vm3706, 0.0
    %3808 = vst.msk [vmem:[#allocation2 + $0x328] sm:$0xff] %vm3706, 0.0
    %3809 = vst.msk [vmem:[#allocation2 + $0x330] sm:$0xff] %vm3706, 0.0
    %3810 = vst.msk [vmem:[#allocation2 + $0x338] sm:$0xff] %vm3706, 0.0
    %3811 = vst.msk [vmem:[#allocation2 + $0x340] sm:$0xff] %vm3706, 0.0
    %3812 = vst.msk [vmem:[#allocation2 + $0x348] sm:$0xff] %vm3706, 0.0
    %3813 = vst.msk [vmem:[#allocation2 + $0x350] sm:$0xff] %vm3706, 0.0
    %3814 = vst.msk [vmem:[#allocation2 + $0x358] sm:$0xff] %vm3706, 0.0
    %3815 = vst.msk [vmem:[#allocation2 + $0x360] sm:$0xff] %vm3706, 0.0
    %3816 = vst.msk [vmem:[#allocation2 + $0x368] sm:$0xff] %vm3706, 0.0
    %3817 = vst.msk [vmem:[#allocation2 + $0x370] sm:$0xff] %vm3706, 0.0
    %3818 = vst.msk [vmem:[#allocation2 + $0x378] sm:$0xff] %vm3706, 0.0
    %3819 = vst.msk [vmem:[#allocation2 + $0x380] sm:$0xff] %vm3706, 0.0
    %3820 = vst.msk [vmem:[#allocation2 + $0x388] sm:$0xff] %vm3706, 0.0
    %3821 = vst.msk [vmem:[#allocation2 + $0x390] sm:$0xff] %vm3706, 0.0
    %3822 = vst.msk [vmem:[#allocation2 + $0x398] sm:$0xff] %vm3706, 0.0
    %3823 = vst.msk [vmem:[#allocation2 + $0x3a0] sm:$0xff] %vm3706, 0.0
    %3824 = vst.msk [vmem:[#allocation2 + $0x3a8] sm:$0xff] %vm3706, 0.0
    %3825 = vst.msk [vmem:[#allocation2 + $0x3b0] sm:$0xff] %vm3706, 0.0
    %3826 = vst.msk [vmem:[#allocation2 + $0x3b8] sm:$0xff] %vm3706, 0.0
    %3827 = vst.msk [vmem:[#allocation2 + $0x3c0] sm:$0xff] %vm3706, 0.0
    %3828 = vst.msk [vmem:[#allocation2 + $0x3c8] sm:$0xff] %vm3706, 0.0
    %3829 = vst.msk [vmem:[#allocation2 + $0x3d0] sm:$0xff] %vm3706, 0.0
    %3830 = vst.msk [vmem:[#allocation2 + $0x3d8] sm:$0xff] %vm3706, 0.0
    %3831 = vst.msk [vmem:[#allocation2 + $0x3e0] sm:$0xff] %vm3706, 0.0
    %3832 = vst.msk [vmem:[#allocation2 + $0x3e8] sm:$0xff] %vm3706, 0.0
    %3833 = vst.msk [vmem:[#allocation2 + $0x3f0] sm:$0xff] %vm3706, 0.0
    %3834 = vst.msk [vmem:[#allocation2 + $0x3f8] sm:$0xff] %vm3706, 0.0
    %3835 = vst.msk [vmem:[#allocation2 + $0x400] sm:$0xff] %vm3706, 0.0
    %3836 = vst.msk [vmem:[#allocation2 + $0x408] sm:$0xff] %vm3706, 0.0
    %3837 = vst.msk [vmem:[#allocation2 + $0x410] sm:$0xff] %vm3706, 0.0
    %3838 = vst.msk [vmem:[#allocation2 + $0x418] sm:$0xff] %vm3706, 0.0
    %3839 = vst.msk [vmem:[#allocation2 + $0x420] sm:$0xff] %vm3706, 0.0
    %3840 = vst.msk [vmem:[#allocation2 + $0x428] sm:$0xff] %vm3706, 0.0
    %3841 = vst.msk [vmem:[#allocation2 + $0x430] sm:$0xff] %vm3706, 0.0
    %3842 = vst.msk [vmem:[#allocation2 + $0x438] sm:$0xff] %vm3706, 0.0
    %3843 = vst.msk [vmem:[#allocation2 + $0x440] sm:$0xff] %vm3706, 0.0
    %3844 = vst.msk [vmem:[#allocation2 + $0x448] sm:$0xff] %vm3706, 0.0
    %3845 = vst.msk [vmem:[#allocation2 + $0x450] sm:$0xff] %vm3706, 0.0
    %3846 = vst.msk [vmem:[#allocation2 + $0x458] sm:$0xff] %vm3706, 0.0
    %3847 = vst.msk [vmem:[#allocation2 + $0x460] sm:$0xff] %vm3706, 0.0
    %3848 = vst.msk [vmem:[#allocation2 + $0x468] sm:$0xff] %vm3706, 0.0
    %3849 = vst.msk [vmem:[#allocation2 + $0x470] sm:$0xff] %vm3706, 0.0
    %3850 = vst.msk [vmem:[#allocation2 + $0x478] sm:$0xff] %vm3706, 0.0
    %3851 = vst.msk [vmem:[#allocation2 + $0x480] sm:$0xff] %vm3706, 0.0
    %3852 = vst.msk [vmem:[#allocation2 + $0x488] sm:$0xff] %vm3706, 0.0
    %3853 = vst.msk [vmem:[#allocation2 + $0x490] sm:$0xff] %vm3706, 0.0
    %3854 = vst.msk [vmem:[#allocation2 + $0x498] sm:$0xff] %vm3706, 0.0
    %3855 = vst.msk [vmem:[#allocation2 + $0x4a0] sm:$0xff] %vm3706, 0.0
    %3856 = vst.msk [vmem:[#allocation2 + $0x4a8] sm:$0xff] %vm3706, 0.0
    %3857 = vst.msk [vmem:[#allocation2 + $0x4b0] sm:$0xff] %vm3706, 0.0
    %3858 = vst.msk [vmem:[#allocation2 + $0x4b8] sm:$0xff] %vm3706, 0.0
    %3859 = vst.msk [vmem:[#allocation2 + $0x4c0] sm:$0xff] %vm3706, 0.0
    %3860 = vst.msk [vmem:[#allocation2 + $0x4c8] sm:$0xff] %vm3706, 0.0
    %3861 = vst.msk [vmem:[#allocation2 + $0x4d0] sm:$0xff] %vm3706, 0.0
    %3862 = vst.msk [vmem:[#allocation2 + $0x4d8] sm:$0xff] %vm3706, 0.0
    %3863 = vst.msk [vmem:[#allocation2 + $0x4e0] sm:$0xff] %vm3706, 0.0
    %3864 = vst.msk [vmem:[#allocation2 + $0x4e8] sm:$0xff] %vm3706, 0.0
    %3865 = vst.msk [vmem:[#allocation2 + $0x4f0] sm:$0xff] %vm3706, 0.0
    %3866 = vst.msk [vmem:[#allocation2 + $0x4f8] sm:$0xff] %vm3706, 0.0
    %3867 = vst.msk [vmem:[#allocation2 + $0x500] sm:$0xff] %vm3706, 0.0
    %3868 = vst.msk [vmem:[#allocation2 + $0x508] sm:$0xff] %vm3706, 0.0
    %3869 = vst.msk [vmem:[#allocation2 + $0x510] sm:$0xff] %vm3706, 0.0
    %3870 = vst.msk [vmem:[#allocation2 + $0x518] sm:$0xff] %vm3706, 0.0
    %3871 = vst.msk [vmem:[#allocation2 + $0x520] sm:$0xff] %vm3706, 0.0
    %3872 = vst.msk [vmem:[#allocation2 + $0x528] sm:$0xff] %vm3706, 0.0
    %3873 = vst.msk [vmem:[#allocation2 + $0x530] sm:$0xff] %vm3706, 0.0
    %3874 = vst.msk [vmem:[#allocation2 + $0x538] sm:$0xff] %vm3706, 0.0
    %3875 = vst.msk [vmem:[#allocation2 + $0x540] sm:$0xff] %vm3706, 0.0
    %3876 = vst.msk [vmem:[#allocation2 + $0x548] sm:$0xff] %vm3706, 0.0
    %3877 = vst.msk [vmem:[#allocation2 + $0x550] sm:$0xff] %vm3706, 0.0
    %3878 = vst.msk [vmem:[#allocation2 + $0x558] sm:$0xff] %vm3706, 0.0
    %3879 = vst.msk [vmem:[#allocation2 + $0x560] sm:$0xff] %vm3706, 0.0
    %3880 = vst.msk [vmem:[#allocation2 + $0x568] sm:$0xff] %vm3706, 0.0
    %3881 = vst.msk [vmem:[#allocation2 + $0x570] sm:$0xff] %vm3706, 0.0
    %3882 = vst.msk [vmem:[#allocation2 + $0x578] sm:$0xff] %vm3706, 0.0
    %3883 = vst.msk [vmem:[#allocation2 + $0x580] sm:$0xff] %vm3706, 0.0
    %3884 = vst.msk [vmem:[#allocation2 + $0x588] sm:$0xff] %vm3706, 0.0
    %3885 = vst.msk [vmem:[#allocation2 + $0x590] sm:$0xff] %vm3706, 0.0
    %3886 = vst.msk [vmem:[#allocation2 + $0x598] sm:$0xff] %vm3706, 0.0
    %3887 = vst.msk [vmem:[#allocation2 + $0x5a0] sm:$0xff] %vm3706, 0.0
    %3888 = vst.msk [vmem:[#allocation2 + $0x5a8] sm:$0xff] %vm3706, 0.0
    %3889 = vst.msk [vmem:[#allocation2 + $0x5b0] sm:$0xff] %vm3706, 0.0
    %3890 = vst.msk [vmem:[#allocation2 + $0x5b8] sm:$0xff] %vm3706, 0.0
    %3891 = vst.msk [vmem:[#allocation2 + $0x5c0] sm:$0xff] %vm3706, 0.0
    %3892 = vst.msk [vmem:[#allocation2 + $0x5c8] sm:$0xff] %vm3706, 0.0
    %3893 = vst.msk [vmem:[#allocation2 + $0x5d0] sm:$0xff] %vm3706, 0.0
    %3894 = vst.msk [vmem:[#allocation2 + $0x5d8] sm:$0xff] %vm3706, 0.0
    %3895 = vst.msk [vmem:[#allocation2 + $0x5e0] sm:$0xff] %vm3706, 0.0
    %3896 = vst.msk [vmem:[#allocation2 + $0x5e8] sm:$0xff] %vm3706, 0.0
    %3897 = vst.msk [vmem:[#allocation2 + $0x5f0] sm:$0xff] %vm3706, 0.0
    %3898 = vst.msk [vmem:[#allocation2 + $0x5f8] sm:$0xff] %vm3706, 0.0
    %3899 = vst.msk [vmem:[#allocation2 + $0x20] sm:$0xff] %vm3706, %v3530
    %3900 = vst.msk [vmem:[#allocation2 + $0x28] sm:$0xff] %vm3706, %v3531
    %3901 = vst.msk [vmem:[#allocation2 + $0x30] sm:$0xff] %vm3706, %v3532
    %3902 = vst.msk [vmem:[#allocation2 + $0x38] sm:$0xff] %vm3706, %v3533
    %3903 = vst.msk [vmem:[#allocation2 + $0x40] sm:$0xff] %vm3706, %v3534
    %3904 = vst.msk [vmem:[#allocation2 + $0x48] sm:$0xff] %vm3706, %v3535
    %3905 = vst.msk [vmem:[#allocation2 + $0x50] sm:$0xff] %vm3706, %v3536
    %3906 = vst.msk [vmem:[#allocation2 + $0x58] sm:$0xff] %vm3706, %v3537
    %3907 = vst.msk [vmem:[#allocation2 + $0x60] sm:$0xff] %vm3706, %v3538
    %3908 = vst.msk [vmem:[#allocation2 + $0x68] sm:$0xff] %vm3706, %v3539
    %3909 = vst.msk [vmem:[#allocation2 + $0x70] sm:$0xff] %vm3706, %v3540
    %3910 = vst.msk [vmem:[#allocation2 + $0x78] sm:$0xff] %vm3706, %v3541
    %3911 = vst.msk [vmem:[#allocation2 + $0x80] sm:$0xff] %vm3706, %v3542
    %3912 = vst.msk [vmem:[#allocation2 + $0x88] sm:$0xff] %vm3706, %v3543
    %3913 = vst.msk [vmem:[#allocation2 + $0x90] sm:$0xff] %vm3706, %v3544
    %3914 = vst.msk [vmem:[#allocation2 + $0x98] sm:$0xff] %vm3706, %v3545
    %3915 = vst.msk [vmem:[#allocation2 + $0xa0] sm:$0xff] %vm3706, %v3546
    %3916 = vst.msk [vmem:[#allocation2 + $0xa8] sm:$0xff] %vm3706, %v3547
    %3917 = vst.msk [vmem:[#allocation2 + $0xb0] sm:$0xff] %vm3706, %v3548
    %3918 = vst.msk [vmem:[#allocation2 + $0xb8] sm:$0xff] %vm3706, %v3549
    %3919 = vst.msk [vmem:[#allocation2 + $0xc0] sm:$0xff] %vm3706, %v3550
    %3920 = vst.msk [vmem:[#allocation2 + $0xc8] sm:$0xff] %vm3706, %v3551
    %3921 = vst.msk [vmem:[#allocation2 + $0xd0] sm:$0xff] %vm3706, %v3552
    %3922 = vst.msk [vmem:[#allocation2 + $0xd8] sm:$0xff] %vm3706, %v3553
    %3923 = vst.msk [vmem:[#allocation2 + $0xe0] sm:$0xff] %vm3706, %v3554
    %3924 = vst.msk [vmem:[#allocation2 + $0xe8] sm:$0xff] %vm3706, %v3555
    %3925 = vst.msk [vmem:[#allocation2 + $0xf0] sm:$0xff] %vm3706, %v3556
    %3926 = vst.msk [vmem:[#allocation2 + $0xf8] sm:$0xff] %vm3706, %v3557
    %3927 = vst.msk [vmem:[#allocation2 + $0x100] sm:$0xff] %vm3706, %v3558
    %3928 = vst.msk [vmem:[#allocation2 + $0x108] sm:$0xff] %vm3706, %v3559
    %3929 = vst.msk [vmem:[#allocation2 + $0x110] sm:$0xff] %vm3706, %v3560
    %3930 = vst.msk [vmem:[#allocation2 + $0x118] sm:$0xff] %vm3706, %v3561
    %3931 = vst.msk [vmem:[#allocation2 + $0x120] sm:$0xff] %vm3706, %v3562
    %3932 = vst.msk [vmem:[#allocation2 + $0x128] sm:$0xff] %vm3706, %v3563
    %3933 = vst.msk [vmem:[#allocation2 + $0x130] sm:$0xff] %vm3706, %v3564
    %3934 = vst.msk [vmem:[#allocation2 + $0x138] sm:$0xff] %vm3706, %v3565
    %3935 = vst.msk [vmem:[#allocation2 + $0x140] sm:$0xff] %vm3706, %v3566
    %3936 = vst.msk [vmem:[#allocation2 + $0x148] sm:$0xff] %vm3706, %v3567
    %3937 = vst.msk [vmem:[#allocation2 + $0x150] sm:$0xff] %vm3706, %v3568
    %3938 = vst.msk [vmem:[#allocation2 + $0x158] sm:$0xff] %vm3706, %v3569
    %3939 = vst.msk [vmem:[#allocation2 + $0x160] sm:$0xff] %vm3706, %v3570
    %3940 = vst.msk [vmem:[#allocation2 + $0x168] sm:$0xff] %vm3706, %v3571
    %3941 = vst.msk [vmem:[#allocation2 + $0x170] sm:$0xff] %vm3706, %v3572
    %3942 = vst.msk [vmem:[#allocation2 + $0x178] sm:$0xff] %vm3706, %v3573
    %3943 = vst.msk [vmem:[#allocation2 + $0x180] sm:$0xff] %vm3706, %v3574
    %3944 = vst.msk [vmem:[#allocation2 + $0x188] sm:$0xff] %vm3706, %v3575
    %3945 = vst.msk [vmem:[#allocation2 + $0x190] sm:$0xff] %vm3706, %v3576
    %3946 = vst.msk [vmem:[#allocation2 + $0x198] sm:$0xff] %vm3706, %v3577
    %3947 = vst.msk [vmem:[#allocation2 + $0x1a0] sm:$0xff] %vm3706, %v3578
    %3948 = vst.msk [vmem:[#allocation2 + $0x1a8] sm:$0xff] %vm3706, %v3579
    %3949 = vst.msk [vmem:[#allocation2 + $0x1b0] sm:$0xff] %vm3706, %v3580
    %3950 = vst.msk [vmem:[#allocation2 + $0x1b8] sm:$0xff] %vm3706, %v3581
    %3951 = vst.msk [vmem:[#allocation2 + $0x1c0] sm:$0xff] %vm3706, %v3582
    %3952 = vst.msk [vmem:[#allocation2 + $0x1c8] sm:$0xff] %vm3706, %v3583
    %3953 = vst.msk [vmem:[#allocation2 + $0x1d0] sm:$0xff] %vm3706, %v3584
    %3954 = vst.msk [vmem:[#allocation2 + $0x1d8] sm:$0xff] %vm3706, %v3585
    %3955 = vst.msk [vmem:[#allocation2 + $0x1e0] sm:$0xff] %vm3706, %v3586
    %3956 = vst.msk [vmem:[#allocation2 + $0x1e8] sm:$0xff] %vm3706, %v3587
    %3957 = vst.msk [vmem:[#allocation2 + $0x1f0] sm:$0xff] %vm3706, %v3588
    %3958 = vst.msk [vmem:[#allocation2 + $0x1f8] sm:$0xff] %vm3706, %v3589
    %3959 = vst.msk [vmem:[#allocation2 + $0x200] sm:$0xff] %vm3706, %v3590
    %3960 = vst.msk [vmem:[#allocation2 + $0x208] sm:$0xff] %vm3706, %v3591
    %3961 = vst.msk [vmem:[#allocation2 + $0x210] sm:$0xff] %vm3706, %v3592
    %3962 = vst.msk [vmem:[#allocation2 + $0x218] sm:$0xff] %vm3706, %v3593
    %3963 = vst.msk [vmem:[#allocation2 + $0x220] sm:$0xff] %vm3706, %v3594
    %3964 = vst.msk [vmem:[#allocation2 + $0x228] sm:$0xff] %vm3706, %v3595
    %3965 = vst.msk [vmem:[#allocation2 + $0x230] sm:$0xff] %vm3706, %v3596
    %3966 = vst.msk [vmem:[#allocation2 + $0x238] sm:$0xff] %vm3706, %v3597
    %3967 = vst.msk [vmem:[#allocation2 + $0x240] sm:$0xff] %vm3706, %v3598
    %3968 = vst.msk [vmem:[#allocation2 + $0x248] sm:$0xff] %vm3706, %v3599
    %3969 = vst.msk [vmem:[#allocation2 + $0x250] sm:$0xff] %vm3706, %v3600
    %3970 = vst.msk [vmem:[#allocation2 + $0x258] sm:$0xff] %vm3706, %v3601
    %3971 = vst.msk [vmem:[#allocation2 + $0x260] sm:$0xff] %vm3706, %v3602
    %3972 = vst.msk [vmem:[#allocation2 + $0x268] sm:$0xff] %vm3706, %v3603
    %3973 = vst.msk [vmem:[#allocation2 + $0x270] sm:$0xff] %vm3706, %v3604
    %3974 = vst.msk [vmem:[#allocation2 + $0x278] sm:$0xff] %vm3706, %v3605
    %3975 = vst.msk [vmem:[#allocation2 + $0x280] sm:$0xff] %vm3706, %v3606
    %3976 = vst.msk [vmem:[#allocation2 + $0x288] sm:$0xff] %vm3706, %v3607
    %3977 = vst.msk [vmem:[#allocation2 + $0x290] sm:$0xff] %vm3706, %v3608
    %3978 = vst.msk [vmem:[#allocation2 + $0x298] sm:$0xff] %vm3706, %v3609
    %3979 = vst.msk [vmem:[#allocation2 + $0x2a0] sm:$0xff] %vm3706, %v3610
    %3980 = vst.msk [vmem:[#allocation2 + $0x2a8] sm:$0xff] %vm3706, %v3611
    %3981 = vst.msk [vmem:[#allocation2 + $0x2b0] sm:$0xff] %vm3706, %v3612
    %3982 = vst.msk [vmem:[#allocation2 + $0x2b8] sm:$0xff] %vm3706, %v3613
    %3983 = vst.msk [vmem:[#allocation2 + $0x2c0] sm:$0xff] %vm3706, %v3614
    %3984 = vst.msk [vmem:[#allocation2 + $0x2c8] sm:$0xff] %vm3706, %v3615
    %3985 = vst.msk [vmem:[#allocation2 + $0x2d0] sm:$0xff] %vm3706, %v3616
    %3986 = vst.msk [vmem:[#allocation2 + $0x2d8] sm:$0xff] %vm3706, %v3617
    %3987 = vst.msk [vmem:[#allocation2 + $0x320] sm:$0xff] %vm3706, %v3618
    %3988 = vst.msk [vmem:[#allocation2 + $0x328] sm:$0xff] %vm3706, %v3619
    %3989 = vst.msk [vmem:[#allocation2 + $0x330] sm:$0xff] %vm3706, %v3620
    %3990 = vst.msk [vmem:[#allocation2 + $0x338] sm:$0xff] %vm3706, %v3621
    %3991 = vst.msk [vmem:[#allocation2 + $0x340] sm:$0xff] %vm3706, %v3622
    %3992 = vst.msk [vmem:[#allocation2 + $0x348] sm:$0xff] %vm3706, %v3623
    %3993 = vst.msk [vmem:[#allocation2 + $0x350] sm:$0xff] %vm3706, %v3624
    %3994 = vst.msk [vmem:[#allocation2 + $0x358] sm:$0xff] %vm3706, %v3625
    %3995 = vst.msk [vmem:[#allocation2 + $0x360] sm:$0xff] %vm3706, %v3626
    %3996 = vst.msk [vmem:[#allocation2 + $0x368] sm:$0xff] %vm3706, %v3627
    %3997 = vst.msk [vmem:[#allocation2 + $0x370] sm:$0xff] %vm3706, %v3628
    %3998 = vst.msk [vmem:[#allocation2 + $0x378] sm:$0xff] %vm3706, %v3629
    %3999 = vst.msk [vmem:[#allocation2 + $0x380] sm:$0xff] %vm3706, %v3630
    %4000 = vst.msk [vmem:[#allocation2 + $0x388] sm:$0xff] %vm3706, %v3631
    %4001 = vst.msk [vmem:[#allocation2 + $0x390] sm:$0xff] %vm3706, %v3632
    %4002 = vst.msk [vmem:[#allocation2 + $0x398] sm:$0xff] %vm3706, %v3633
    %4003 = vst.msk [vmem:[#allocation2 + $0x3a0] sm:$0xff] %vm3706, %v3634
    %4004 = vst.msk [vmem:[#allocation2 + $0x3a8] sm:$0xff] %vm3706, %v3635
    %4005 = vst.msk [vmem:[#allocation2 + $0x3b0] sm:$0xff] %vm3706, %v3636
    %4006 = vst.msk [vmem:[#allocation2 + $0x3b8] sm:$0xff] %vm3706, %v3637
    %4007 = vst.msk [vmem:[#allocation2 + $0x3c0] sm:$0xff] %vm3706, %v3638
    %4008 = vst.msk [vmem:[#allocation2 + $0x3c8] sm:$0xff] %vm3706, %v3639
    %4009 = vst.msk [vmem:[#allocation2 + $0x3d0] sm:$0xff] %vm3706, %v3640
    %4010 = vst.msk [vmem:[#allocation2 + $0x3d8] sm:$0xff] %vm3706, %v3641
    %4011 = vst.msk [vmem:[#allocation2 + $0x3e0] sm:$0xff] %vm3706, %v3642
    %4012 = vst.msk [vmem:[#allocation2 + $0x3e8] sm:$0xff] %vm3706, %v3643
    %4013 = vst.msk [vmem:[#allocation2 + $0x3f0] sm:$0xff] %vm3706, %v3644
    %4014 = vst.msk [vmem:[#allocation2 + $0x3f8] sm:$0xff] %vm3706, %v3645
    %4015 = vst.msk [vmem:[#allocation2 + $0x400] sm:$0xff] %vm3706, %v3646
    %4016 = vst.msk [vmem:[#allocation2 + $0x408] sm:$0xff] %vm3706, %v3647
    %4017 = vst.msk [vmem:[#allocation2 + $0x410] sm:$0xff] %vm3706, %v3648
    %4018 = vst.msk [vmem:[#allocation2 + $0x418] sm:$0xff] %vm3706, %v3649
    %4019 = vst.msk [vmem:[#allocation2 + $0x420] sm:$0xff] %vm3706, %v3650
    %4020 = vst.msk [vmem:[#allocation2 + $0x428] sm:$0xff] %vm3706, %v3651
    %4021 = vst.msk [vmem:[#allocation2 + $0x430] sm:$0xff] %vm3706, %v3652
    %4022 = vst.msk [vmem:[#allocation2 + $0x438] sm:$0xff] %vm3706, %v3653
    %4023 = vst.msk [vmem:[#allocation2 + $0x440] sm:$0xff] %vm3706, %v3654
    %4024 = vst.msk [vmem:[#allocation2 + $0x448] sm:$0xff] %vm3706, %v3655
    %4025 = vst.msk [vmem:[#allocation2 + $0x450] sm:$0xff] %vm3706, %v3656
    %4026 = vst.msk [vmem:[#allocation2 + $0x458] sm:$0xff] %vm3706, %v3657
    %4027 = vst.msk [vmem:[#allocation2 + $0x460] sm:$0xff] %vm3706, %v3658
    %4028 = vst.msk [vmem:[#allocation2 + $0x468] sm:$0xff] %vm3706, %v3659
    %4029 = vst.msk [vmem:[#allocation2 + $0x470] sm:$0xff] %vm3706, %v3660
    %4030 = vst.msk [vmem:[#allocation2 + $0x478] sm:$0xff] %vm3706, %v3661
    %4031 = vst.msk [vmem:[#allocation2 + $0x480] sm:$0xff] %vm3706, %v3662
    %4032 = vst.msk [vmem:[#allocation2 + $0x488] sm:$0xff] %vm3706, %v3663
    %4033 = vst.msk [vmem:[#allocation2 + $0x490] sm:$0xff] %vm3706, %v3664
    %4034 = vst.msk [vmem:[#allocation2 + $0x498] sm:$0xff] %vm3706, %v3665
    %4035 = vst.msk [vmem:[#allocation2 + $0x4a0] sm:$0xff] %vm3706, %v3666
    %4036 = vst.msk [vmem:[#allocation2 + $0x4a8] sm:$0xff] %vm3706, %v3667
    %4037 = vst.msk [vmem:[#allocation2 + $0x4b0] sm:$0xff] %vm3706, %v3668
    %4038 = vst.msk [vmem:[#allocation2 + $0x4b8] sm:$0xff] %vm3706, %v3669
    %4039 = vst.msk [vmem:[#allocation2 + $0x4c0] sm:$0xff] %vm3706, %v3670
    %4040 = vst.msk [vmem:[#allocation2 + $0x4c8] sm:$0xff] %vm3706, %v3671
    %4041 = vst.msk [vmem:[#allocation2 + $0x4d0] sm:$0xff] %vm3706, %v3672
    %4042 = vst.msk [vmem:[#allocation2 + $0x4d8] sm:$0xff] %vm3706, %v3673
    %4043 = vst.msk [vmem:[#allocation2 + $0x4e0] sm:$0xff] %vm3706, %v3674
    %4044 = vst.msk [vmem:[#allocation2 + $0x4e8] sm:$0xff] %vm3706, %v3675
    %4045 = vst.msk [vmem:[#allocation2 + $0x4f0] sm:$0xff] %vm3706, %v3676
    %4046 = vst.msk [vmem:[#allocation2 + $0x4f8] sm:$0xff] %vm3706, %v3677
    %4047 = vst.msk [vmem:[#allocation2 + $0x500] sm:$0xff] %vm3706, %v3678
    %4048 = vst.msk [vmem:[#allocation2 + $0x508] sm:$0xff] %vm3706, %v3679
    %4049 = vst.msk [vmem:[#allocation2 + $0x510] sm:$0xff] %vm3706, %v3680
    %4050 = vst.msk [vmem:[#allocation2 + $0x518] sm:$0xff] %vm3706, %v3681
    %4051 = vst.msk [vmem:[#allocation2 + $0x520] sm:$0xff] %vm3706, %v3682
    %4052 = vst.msk [vmem:[#allocation2 + $0x528] sm:$0xff] %vm3706, %v3683
    %4053 = vst.msk [vmem:[#allocation2 + $0x530] sm:$0xff] %vm3706, %v3684
    %4054 = vst.msk [vmem:[#allocation2 + $0x538] sm:$0xff] %vm3706, %v3685
    %4055 = vst.msk [vmem:[#allocation2 + $0x540] sm:$0xff] %vm3706, %v3686
    %4056 = vst.msk [vmem:[#allocation2 + $0x548] sm:$0xff] %vm3706, %v3687
    %4057 = vst.msk [vmem:[#allocation2 + $0x550] sm:$0xff] %vm3706, %v3688
    %4058 = vst.msk [vmem:[#allocation2 + $0x558] sm:$0xff] %vm3706, %v3689
    %4059 = vst.msk [vmem:[#allocation2 + $0x560] sm:$0xff] %vm3706, %v3690
    %4060 = vst.msk [vmem:[#allocation2 + $0x568] sm:$0xff] %vm3706, %v3691
    %4061 = vst.msk [vmem:[#allocation2 + $0x570] sm:$0xff] %vm3706, %v3692
    %4062 = vst.msk [vmem:[#allocation2 + $0x578] sm:$0xff] %vm3706, %v3693
    %4063 = vst.msk [vmem:[#allocation2 + $0x580] sm:$0xff] %vm3706, %v3694
    %4064 = vst.msk [vmem:[#allocation2 + $0x588] sm:$0xff] %vm3706, %v3695
    %4065 = vst.msk [vmem:[#allocation2 + $0x590] sm:$0xff] %vm3706, %v3696
    %4066 = vst.msk [vmem:[#allocation2 + $0x598] sm:$0xff] %vm3706, %v3697
    %4067 = vst.msk [vmem:[#allocation2 + $0x5a0] sm:$0xff] %vm3706, %v3698
    %4068 = vst.msk [vmem:[#allocation2 + $0x5a8] sm:$0xff] %vm3706, %v3699
    %4069 = vst.msk [vmem:[#allocation2 + $0x5b0] sm:$0xff] %vm3706, %v3700
    %4070 = vst.msk [vmem:[#allocation2 + $0x5b8] sm:$0xff] %vm3706, %v3701
    %4071 = vst.msk [vmem:[#allocation2 + $0x5c0] sm:$0xff] %vm3706, %v3702
    %4072 = vst.msk [vmem:[#allocation2 + $0x5c8] sm:$0xff] %vm3706, %v3703
    %4073 = vst.msk [vmem:[#allocation2 + $0x5d0] sm:$0xff] %vm3706, %v3704
    %4074 = vst.msk [vmem:[#allocation2 + $0x5d8] sm:$0xff] %vm3706, %v3705
    %v4075 = vld [vmem:[#allocation2] ss:$2 sm:$0xff]
    %s4076 = scalar_lea.vmem [#allocation2], 16
    %v4077 = vld [vmem:[%s4076] ss:$2 sm:$0xff]
    %s4078 = scalar_lea.vmem [#allocation2], 32
    %v4079 = vld [vmem:[%s4078] ss:$2 sm:$0xff]
    %s4080 = scalar_lea.vmem [#allocation2], 48
    %v4081 = vld [vmem:[%s4080] ss:$2 sm:$0xff]
    %s4082 = scalar_lea.vmem [#allocation2], 64
    %v4083 = vld [vmem:[%s4082] ss:$2 sm:$0xff]
    %s4084 = scalar_lea.vmem [#allocation2], 80
    %v4085 = vld [vmem:[%s4084] ss:$2 sm:$0xff]
    %s4086 = scalar_lea.vmem [#allocation2], 96
    %v4087 = vld [vmem:[%s4086] ss:$2 sm:$0xff]
    %s4088 = scalar_lea.vmem [#allocation2], 112
    %v4089 = vld [vmem:[%s4088] ss:$2 sm:$0xff]
    %s4090 = scalar_lea.vmem [#allocation2], 128
    %v4091 = vld [vmem:[%s4090] ss:$2 sm:$0xff]
    %s4092 = scalar_lea.vmem [#allocation2], 144
    %v4093 = vld [vmem:[%s4092] ss:$2 sm:$0xff]
    %s4094 = scalar_lea.vmem [#allocation2], 160
    %v4095 = vld [vmem:[%s4094] ss:$2 sm:$0xff]
    %s4096 = scalar_lea.vmem [#allocation2], 176
    %v4097 = vld [vmem:[%s4096] ss:$2 sm:$0xff]
    %s4098 = scalar_lea.vmem [#allocation2], 192
    %v4099 = vld [vmem:[%s4098] ss:$2 sm:$0xff]
    %s4100 = scalar_lea.vmem [#allocation2], 208
    %v4101 = vld [vmem:[%s4100] ss:$2 sm:$0xff]
    %s4102 = scalar_lea.vmem [#allocation2], 224
    %v4103 = vld [vmem:[%s4102] ss:$2 sm:$0xff]
    %s4104 = scalar_lea.vmem [#allocation2], 240
    %v4105 = vld [vmem:[%s4104] ss:$2 sm:$0xff]
    %s4106 = scalar_lea.vmem [#allocation2], 256
    %v4107 = vld [vmem:[%s4106] ss:$2 sm:$0xff]
    %s4108 = scalar_lea.vmem [#allocation2], 272
    %v4109 = vld [vmem:[%s4108] ss:$2 sm:$0xff]
    %s4110 = scalar_lea.vmem [#allocation2], 288
    %v4111 = vld [vmem:[%s4110] ss:$2 sm:$0xff]
    %s4112 = scalar_lea.vmem [#allocation2], 304
    %v4113 = vld [vmem:[%s4112] ss:$2 sm:$0xff]
    %s4114 = scalar_lea.vmem [#allocation2], 320
    %v4115 = vld [vmem:[%s4114] ss:$2 sm:$0xff]
    %s4116 = scalar_lea.vmem [#allocation2], 336
    %v4117 = vld [vmem:[%s4116] ss:$2 sm:$0xff]
    %s4118 = scalar_lea.vmem [#allocation2], 352
    %v4119 = vld [vmem:[%s4118] ss:$2 sm:$0xff]
    %s4120 = scalar_lea.vmem [#allocation2], 368
    %v4121 = vld [vmem:[%s4120] ss:$2 sm:$0xff]
    %s4122 = scalar_lea.vmem [#allocation2], 384
    %v4123 = vld [vmem:[%s4122] ss:$2 sm:$0xff]
    %s4124 = scalar_lea.vmem [#allocation2], 400
    %v4125 = vld [vmem:[%s4124] ss:$2 sm:$0xff]
    %s4126 = scalar_lea.vmem [#allocation2], 416
    %v4127 = vld [vmem:[%s4126] ss:$2 sm:$0xff]
    %s4128 = scalar_lea.vmem [#allocation2], 432
    %v4129 = vld [vmem:[%s4128] ss:$2 sm:$0xff]
    %s4130 = scalar_lea.vmem [#allocation2], 448
    %v4131 = vld [vmem:[%s4130] ss:$2 sm:$0xff]
    %s4132 = scalar_lea.vmem [#allocation2], 464
    %v4133 = vld [vmem:[%s4132] ss:$2 sm:$0xff]
    %s4134 = scalar_lea.vmem [#allocation2], 480
    %v4135 = vld [vmem:[%s4134] ss:$2 sm:$0xff]
    %s4136 = scalar_lea.vmem [#allocation2], 496
    %v4137 = vld [vmem:[%s4136] ss:$2 sm:$0xff]
    %s4138 = scalar_lea.vmem [#allocation2], 512
    %v4139 = vld [vmem:[%s4138] ss:$2 sm:$0xff]
    %s4140 = scalar_lea.vmem [#allocation2], 528
    %v4141 = vld [vmem:[%s4140] ss:$2 sm:$0xff]
    %s4142 = scalar_lea.vmem [#allocation2], 544
    %v4143 = vld [vmem:[%s4142] ss:$2 sm:$0xff]
    %s4144 = scalar_lea.vmem [#allocation2], 560
    %v4145 = vld [vmem:[%s4144] ss:$2 sm:$0xff]
    %s4146 = scalar_lea.vmem [#allocation2], 576
    %v4147 = vld [vmem:[%s4146] ss:$2 sm:$0xff]
    %s4148 = scalar_lea.vmem [#allocation2], 592
    %v4149 = vld [vmem:[%s4148] ss:$2 sm:$0xff]
    %s4150 = scalar_lea.vmem [#allocation2], 608
    %v4151 = vld [vmem:[%s4150] ss:$2 sm:$0xff]
    %s4152 = scalar_lea.vmem [#allocation2], 624
    %v4153 = vld [vmem:[%s4152] ss:$2 sm:$0xff]
    %s4154 = scalar_lea.vmem [#allocation2], 640
    %v4155 = vld [vmem:[%s4154] ss:$2 sm:$0xff]
    %s4156 = scalar_lea.vmem [#allocation2], 656
    %v4157 = vld [vmem:[%s4156] ss:$2 sm:$0xff]
    %s4158 = scalar_lea.vmem [#allocation2], 672
    %v4159 = vld [vmem:[%s4158] ss:$2 sm:$0xff]
    %s4160 = scalar_lea.vmem [#allocation2], 688
    %v4161 = vld [vmem:[%s4160] ss:$2 sm:$0xff]
    %s4162 = scalar_lea.vmem [#allocation2], 704
    %v4163 = vld [vmem:[%s4162] ss:$2 sm:$0xff]
    %s4164 = scalar_lea.vmem [#allocation2], 720
    %v4165 = vld [vmem:[%s4164] ss:$2 sm:$0xff]
    %s4166 = scalar_lea.vmem [#allocation2], 736
    %v4167 = vld [vmem:[%s4166] ss:$2 sm:$0xff]
    %s4168 = scalar_lea.vmem [#allocation2], 752
    %v4169 = vld [vmem:[%s4168] ss:$2 sm:$0xff]
    %s4170 = scalar_lea.vmem [#allocation2], 768
    %v4171 = vld [vmem:[%s4170] ss:$2 sm:$0xff]
    %s4172 = scalar_lea.vmem [#allocation2], 784
    %v4173 = vld [vmem:[%s4172] ss:$2 sm:$0xff]
    %s4174 = scalar_lea.vmem [#allocation2], 800
    %v4175 = vld [vmem:[%s4174] ss:$2 sm:$0xff]
    %s4176 = scalar_lea.vmem [#allocation2], 816
    %v4177 = vld [vmem:[%s4176] ss:$2 sm:$0xff]
    %s4178 = scalar_lea.vmem [#allocation2], 832
    %v4179 = vld [vmem:[%s4178] ss:$2 sm:$0xff]
    %s4180 = scalar_lea.vmem [#allocation2], 848
    %v4181 = vld [vmem:[%s4180] ss:$2 sm:$0xff]
    %s4182 = scalar_lea.vmem [#allocation2], 864
    %v4183 = vld [vmem:[%s4182] ss:$2 sm:$0xff]
    %s4184 = scalar_lea.vmem [#allocation2], 880
    %v4185 = vld [vmem:[%s4184] ss:$2 sm:$0xff]
    %s4186 = scalar_lea.vmem [#allocation2], 896
    %v4187 = vld [vmem:[%s4186] ss:$2 sm:$0xff]
    %s4188 = scalar_lea.vmem [#allocation2], 912
    %v4189 = vld [vmem:[%s4188] ss:$2 sm:$0xff]
    %s4190 = scalar_lea.vmem [#allocation2], 928
    %v4191 = vld [vmem:[%s4190] ss:$2 sm:$0xff]
    %s4192 = scalar_lea.vmem [#allocation2], 944
    %v4193 = vld [vmem:[%s4192] ss:$2 sm:$0xff]
    %s4194 = scalar_lea.vmem [#allocation2], 960
    %v4195 = vld [vmem:[%s4194] ss:$2 sm:$0xff]
    %s4196 = scalar_lea.vmem [#allocation2], 976
    %v4197 = vld [vmem:[%s4196] ss:$2 sm:$0xff]
    %s4198 = scalar_lea.vmem [#allocation2], 992
    %v4199 = vld [vmem:[%s4198] ss:$2 sm:$0xff]
    %s4200 = scalar_lea.vmem [#allocation2], 1008
    %v4201 = vld [vmem:[%s4200] ss:$2 sm:$0xff]
    %s4202 = scalar_lea.vmem [#allocation2], 1024
    %v4203 = vld [vmem:[%s4202] ss:$2 sm:$0xff]
    %s4204 = scalar_lea.vmem [#allocation2], 1040
    %v4205 = vld [vmem:[%s4204] ss:$2 sm:$0xff]
    %s4206 = scalar_lea.vmem [#allocation2], 1056
    %v4207 = vld [vmem:[%s4206] ss:$2 sm:$0xff]
    %s4208 = scalar_lea.vmem [#allocation2], 1072
    %v4209 = vld [vmem:[%s4208] ss:$2 sm:$0xff]
    %s4210 = scalar_lea.vmem [#allocation2], 1088
    %v4211 = vld [vmem:[%s4210] ss:$2 sm:$0xff]
    %s4212 = scalar_lea.vmem [#allocation2], 1104
    %v4213 = vld [vmem:[%s4212] ss:$2 sm:$0xff]
    %s4214 = scalar_lea.vmem [#allocation2], 1120
    %v4215 = vld [vmem:[%s4214] ss:$2 sm:$0xff]
    %s4216 = scalar_lea.vmem [#allocation2], 1136
    %v4217 = vld [vmem:[%s4216] ss:$2 sm:$0xff]
    %s4218 = scalar_lea.vmem [#allocation2], 1152
    %v4219 = vld [vmem:[%s4218] ss:$2 sm:$0xff]
    %s4220 = scalar_lea.vmem [#allocation2], 1168
    %v4221 = vld [vmem:[%s4220] ss:$2 sm:$0xff]
    %s4222 = scalar_lea.vmem [#allocation2], 1184
    %v4223 = vld [vmem:[%s4222] ss:$2 sm:$0xff]
    %s4224 = scalar_lea.vmem [#allocation2], 1200
    %v4225 = vld [vmem:[%s4224] ss:$2 sm:$0xff]
    %s4226 = scalar_lea.vmem [#allocation2], 1216
    %v4227 = vld [vmem:[%s4226] ss:$2 sm:$0xff]
    %s4228 = scalar_lea.vmem [#allocation2], 1232
    %v4229 = vld [vmem:[%s4228] ss:$2 sm:$0xff]
    %s4230 = scalar_lea.vmem [#allocation2], 1248
    %v4231 = vld [vmem:[%s4230] ss:$2 sm:$0xff]
    %s4232 = scalar_lea.vmem [#allocation2], 1264
    %v4233 = vld [vmem:[%s4232] ss:$2 sm:$0xff]
    %s4234 = scalar_lea.vmem [#allocation2], 1280
    %v4235 = vld [vmem:[%s4234] ss:$2 sm:$0xff]
    %s4236 = scalar_lea.vmem [#allocation2], 1296
    %v4237 = vld [vmem:[%s4236] ss:$2 sm:$0xff]
    %s4238 = scalar_lea.vmem [#allocation2], 1312
    %v4239 = vld [vmem:[%s4238] ss:$2 sm:$0xff]
    %s4240 = scalar_lea.vmem [#allocation2], 1328
    %v4241 = vld [vmem:[%s4240] ss:$2 sm:$0xff]
    %s4242 = scalar_lea.vmem [#allocation2], 1344
    %v4243 = vld [vmem:[%s4242] ss:$2 sm:$0xff]
    %s4244 = scalar_lea.vmem [#allocation2], 1360
    %v4245 = vld [vmem:[%s4244] ss:$2 sm:$0xff]
    %s4246 = scalar_lea.vmem [#allocation2], 1376
    %v4247 = vld [vmem:[%s4246] ss:$2 sm:$0xff]
    %s4248 = scalar_lea.vmem [#allocation2], 1392
    %v4249 = vld [vmem:[%s4248] ss:$2 sm:$0xff]
    %s4250 = scalar_lea.vmem [#allocation2], 1408
    %v4251 = vld [vmem:[%s4250] ss:$2 sm:$0xff]
    %s4252 = scalar_lea.vmem [#allocation2], 1424
    %v4253 = vld [vmem:[%s4252] ss:$2 sm:$0xff]
    %s4254 = scalar_lea.vmem [#allocation2], 1440
    %v4255 = vld [vmem:[%s4254] ss:$2 sm:$0xff]
    %s4256 = scalar_lea.vmem [#allocation2], 1456
    %v4257 = vld [vmem:[%s4256] ss:$2 sm:$0xff]
    %s4258 = scalar_lea.vmem [#allocation2], 1472
    %v4259 = vld [vmem:[%s4258] ss:$2 sm:$0xff]
    %s4260 = scalar_lea.vmem [#allocation2], 1488
    %v4261 = vld [vmem:[%s4260] ss:$2 sm:$0xff]
    %s4262 = scalar_lea.vmem [#allocation2], 1504
    %v4263 = vld [vmem:[%s4262] ss:$2 sm:$0xff]
    %s4264 = scalar_lea.vmem [#allocation2], 1520
    %v4265 = vld [vmem:[%s4264] ss:$2 sm:$0xff]
    %s4266 = scalar_lea.vmem [#allocation2], 1
    %v4267 = vld [vmem:[%s4266] ss:$2 sm:$0xff]
    %s4268 = scalar_lea.vmem [#allocation2], 17
    %v4269 = vld [vmem:[%s4268] ss:$2 sm:$0xff]
    %s4270 = scalar_lea.vmem [#allocation2], 33
    %v4271 = vld [vmem:[%s4270] ss:$2 sm:$0xff]
    %s4272 = scalar_lea.vmem [#allocation2], 49
    %v4273 = vld [vmem:[%s4272] ss:$2 sm:$0xff]
    %s4274 = scalar_lea.vmem [#allocation2], 65
    %v4275 = vld [vmem:[%s4274] ss:$2 sm:$0xff]
    %s4276 = scalar_lea.vmem [#allocation2], 81
    %v4277 = vld [vmem:[%s4276] ss:$2 sm:$0xff]
    %s4278 = scalar_lea.vmem [#allocation2], 97
    %v4279 = vld [vmem:[%s4278] ss:$2 sm:$0xff]
    %s4280 = scalar_lea.vmem [#allocation2], 113
    %v4281 = vld [vmem:[%s4280] ss:$2 sm:$0xff]
    %s4282 = scalar_lea.vmem [#allocation2], 129
    %v4283 = vld [vmem:[%s4282] ss:$2 sm:$0xff]
    %s4284 = scalar_lea.vmem [#allocation2], 145
    %v4285 = vld [vmem:[%s4284] ss:$2 sm:$0xff]
    %s4286 = scalar_lea.vmem [#allocation2], 161
    %v4287 = vld [vmem:[%s4286] ss:$2 sm:$0xff]
    %s4288 = scalar_lea.vmem [#allocation2], 177
    %v4289 = vld [vmem:[%s4288] ss:$2 sm:$0xff]
    %s4290 = scalar_lea.vmem [#allocation2], 193
    %v4291 = vld [vmem:[%s4290] ss:$2 sm:$0xff]
    %s4292 = scalar_lea.vmem [#allocation2], 209
    %v4293 = vld [vmem:[%s4292] ss:$2 sm:$0xff]
    %s4294 = scalar_lea.vmem [#allocation2], 225
    %v4295 = vld [vmem:[%s4294] ss:$2 sm:$0xff]
    %s4296 = scalar_lea.vmem [#allocation2], 241
    %v4297 = vld [vmem:[%s4296] ss:$2 sm:$0xff]
    %s4298 = scalar_lea.vmem [#allocation2], 257
    %v4299 = vld [vmem:[%s4298] ss:$2 sm:$0xff]
    %s4300 = scalar_lea.vmem [#allocation2], 273
    %v4301 = vld [vmem:[%s4300] ss:$2 sm:$0xff]
    %s4302 = scalar_lea.vmem [#allocation2], 289
    %v4303 = vld [vmem:[%s4302] ss:$2 sm:$0xff]
    %s4304 = scalar_lea.vmem [#allocation2], 305
    %v4305 = vld [vmem:[%s4304] ss:$2 sm:$0xff]
    %s4306 = scalar_lea.vmem [#allocation2], 321
    %v4307 = vld [vmem:[%s4306] ss:$2 sm:$0xff]
    %s4308 = scalar_lea.vmem [#allocation2], 337
    %v4309 = vld [vmem:[%s4308] ss:$2 sm:$0xff]
    %s4310 = scalar_lea.vmem [#allocation2], 353
    %v4311 = vld [vmem:[%s4310] ss:$2 sm:$0xff]
    %s4312 = scalar_lea.vmem [#allocation2], 369
    %v4313 = vld [vmem:[%s4312] ss:$2 sm:$0xff]
    %s4314 = scalar_lea.vmem [#allocation2], 385
    %v4315 = vld [vmem:[%s4314] ss:$2 sm:$0xff]
    %s4316 = scalar_lea.vmem [#allocation2], 401
    %v4317 = vld [vmem:[%s4316] ss:$2 sm:$0xff]
    %s4318 = scalar_lea.vmem [#allocation2], 417
    %v4319 = vld [vmem:[%s4318] ss:$2 sm:$0xff]
    %s4320 = scalar_lea.vmem [#allocation2], 433
    %v4321 = vld [vmem:[%s4320] ss:$2 sm:$0xff]
    %s4322 = scalar_lea.vmem [#allocation2], 449
    %v4323 = vld [vmem:[%s4322] ss:$2 sm:$0xff]
    %s4324 = scalar_lea.vmem [#allocation2], 465
    %v4325 = vld [vmem:[%s4324] ss:$2 sm:$0xff]
    %s4326 = scalar_lea.vmem [#allocation2], 481
    %v4327 = vld [vmem:[%s4326] ss:$2 sm:$0xff]
    %s4328 = scalar_lea.vmem [#allocation2], 497
    %v4329 = vld [vmem:[%s4328] ss:$2 sm:$0xff]
    %s4330 = scalar_lea.vmem [#allocation2], 513
    %v4331 = vld [vmem:[%s4330] ss:$2 sm:$0xff]
    %s4332 = scalar_lea.vmem [#allocation2], 529
    %v4333 = vld [vmem:[%s4332] ss:$2 sm:$0xff]
    %s4334 = scalar_lea.vmem [#allocation2], 545
    %v4335 = vld [vmem:[%s4334] ss:$2 sm:$0xff]
    %s4336 = scalar_lea.vmem [#allocation2], 561
    %v4337 = vld [vmem:[%s4336] ss:$2 sm:$0xff]
    %s4338 = scalar_lea.vmem [#allocation2], 577
    %v4339 = vld [vmem:[%s4338] ss:$2 sm:$0xff]
    %s4340 = scalar_lea.vmem [#allocation2], 593
    %v4341 = vld [vmem:[%s4340] ss:$2 sm:$0xff]
    %s4342 = scalar_lea.vmem [#allocation2], 609
    %v4343 = vld [vmem:[%s4342] ss:$2 sm:$0xff]
    %s4344 = scalar_lea.vmem [#allocation2], 625
    %v4345 = vld [vmem:[%s4344] ss:$2 sm:$0xff]
    %s4346 = scalar_lea.vmem [#allocation2], 641
    %v4347 = vld [vmem:[%s4346] ss:$2 sm:$0xff]
    %s4348 = scalar_lea.vmem [#allocation2], 657
    %v4349 = vld [vmem:[%s4348] ss:$2 sm:$0xff]
    %s4350 = scalar_lea.vmem [#allocation2], 673
    %v4351 = vld [vmem:[%s4350] ss:$2 sm:$0xff]
    %s4352 = scalar_lea.vmem [#allocation2], 689
    %v4353 = vld [vmem:[%s4352] ss:$2 sm:$0xff]
    %s4354 = scalar_lea.vmem [#allocation2], 705
    %v4355 = vld [vmem:[%s4354] ss:$2 sm:$0xff]
    %s4356 = scalar_lea.vmem [#allocation2], 721
    %v4357 = vld [vmem:[%s4356] ss:$2 sm:$0xff]
    %s4358 = scalar_lea.vmem [#allocation2], 737
    %v4359 = vld [vmem:[%s4358] ss:$2 sm:$0xff]
    %s4360 = scalar_lea.vmem [#allocation2], 753
    %v4361 = vld [vmem:[%s4360] ss:$2 sm:$0xff]
    %s4362 = scalar_lea.vmem [#allocation2], 769
    %v4363 = vld [vmem:[%s4362] ss:$2 sm:$0xff]
    %s4364 = scalar_lea.vmem [#allocation2], 785
    %v4365 = vld [vmem:[%s4364] ss:$2 sm:$0xff]
    %s4366 = scalar_lea.vmem [#allocation2], 801
    %v4367 = vld [vmem:[%s4366] ss:$2 sm:$0xff]
    %s4368 = scalar_lea.vmem [#allocation2], 817
    %v4369 = vld [vmem:[%s4368] ss:$2 sm:$0xff]
    %s4370 = scalar_lea.vmem [#allocation2], 833
    %v4371 = vld [vmem:[%s4370] ss:$2 sm:$0xff]
    %s4372 = scalar_lea.vmem [#allocation2], 849
    %v4373 = vld [vmem:[%s4372] ss:$2 sm:$0xff]
    %s4374 = scalar_lea.vmem [#allocation2], 865
    %v4375 = vld [vmem:[%s4374] ss:$2 sm:$0xff]
    %s4376 = scalar_lea.vmem [#allocation2], 881
    %v4377 = vld [vmem:[%s4376] ss:$2 sm:$0xff]
    %s4378 = scalar_lea.vmem [#allocation2], 897
    %v4379 = vld [vmem:[%s4378] ss:$2 sm:$0xff]
    %s4380 = scalar_lea.vmem [#allocation2], 913
    %v4381 = vld [vmem:[%s4380] ss:$2 sm:$0xff]
    %s4382 = scalar_lea.vmem [#allocation2], 929
    %v4383 = vld [vmem:[%s4382] ss:$2 sm:$0xff]
    %s4384 = scalar_lea.vmem [#allocation2], 945
    %v4385 = vld [vmem:[%s4384] ss:$2 sm:$0xff]
    %s4386 = scalar_lea.vmem [#allocation2], 961
    %v4387 = vld [vmem:[%s4386] ss:$2 sm:$0xff]
    %s4388 = scalar_lea.vmem [#allocation2], 977
    %v4389 = vld [vmem:[%s4388] ss:$2 sm:$0xff]
    %s4390 = scalar_lea.vmem [#allocation2], 993
    %v4391 = vld [vmem:[%s4390] ss:$2 sm:$0xff]
    %s4392 = scalar_lea.vmem [#allocation2], 1009
    %v4393 = vld [vmem:[%s4392] ss:$2 sm:$0xff]
    %s4394 = scalar_lea.vmem [#allocation2], 1025
    %v4395 = vld [vmem:[%s4394] ss:$2 sm:$0xff]
    %s4396 = scalar_lea.vmem [#allocation2], 1041
    %v4397 = vld [vmem:[%s4396] ss:$2 sm:$0xff]
    %s4398 = scalar_lea.vmem [#allocation2], 1057
    %v4399 = vld [vmem:[%s4398] ss:$2 sm:$0xff]
    %s4400 = scalar_lea.vmem [#allocation2], 1073
    %v4401 = vld [vmem:[%s4400] ss:$2 sm:$0xff]
    %s4402 = scalar_lea.vmem [#allocation2], 1089
    %v4403 = vld [vmem:[%s4402] ss:$2 sm:$0xff]
    %s4404 = scalar_lea.vmem [#allocation2], 1105
    %v4405 = vld [vmem:[%s4404] ss:$2 sm:$0xff]
    %s4406 = scalar_lea.vmem [#allocation2], 1121
    %v4407 = vld [vmem:[%s4406] ss:$2 sm:$0xff]
    %s4408 = scalar_lea.vmem [#allocation2], 1137
    %v4409 = vld [vmem:[%s4408] ss:$2 sm:$0xff]
    %s4410 = scalar_lea.vmem [#allocation2], 1153
    %v4411 = vld [vmem:[%s4410] ss:$2 sm:$0xff]
    %s4412 = scalar_lea.vmem [#allocation2], 1169
    %v4413 = vld [vmem:[%s4412] ss:$2 sm:$0xff]
    %s4414 = scalar_lea.vmem [#allocation2], 1185
    %v4415 = vld [vmem:[%s4414] ss:$2 sm:$0xff]
    %s4416 = scalar_lea.vmem [#allocation2], 1201
    %v4417 = vld [vmem:[%s4416] ss:$2 sm:$0xff]
    %s4418 = scalar_lea.vmem [#allocation2], 1217
    %v4419 = vld [vmem:[%s4418] ss:$2 sm:$0xff]
    %s4420 = scalar_lea.vmem [#allocation2], 1233
    %v4421 = vld [vmem:[%s4420] ss:$2 sm:$0xff]
    %s4422 = scalar_lea.vmem [#allocation2], 1249
    %v4423 = vld [vmem:[%s4422] ss:$2 sm:$0xff]
    %s4424 = scalar_lea.vmem [#allocation2], 1265
    %v4425 = vld [vmem:[%s4424] ss:$2 sm:$0xff]
    %s4426 = scalar_lea.vmem [#allocation2], 1281
    %v4427 = vld [vmem:[%s4426] ss:$2 sm:$0xff]
    %s4428 = scalar_lea.vmem [#allocation2], 1297
    %v4429 = vld [vmem:[%s4428] ss:$2 sm:$0xff]
    %s4430 = scalar_lea.vmem [#allocation2], 1313
    %v4431 = vld [vmem:[%s4430] ss:$2 sm:$0xff]
    %s4432 = scalar_lea.vmem [#allocation2], 1329
    %v4433 = vld [vmem:[%s4432] ss:$2 sm:$0xff]
    %s4434 = scalar_lea.vmem [#allocation2], 1345
    %v4435 = vld [vmem:[%s4434] ss:$2 sm:$0xff]
    %s4436 = scalar_lea.vmem [#allocation2], 1361
    %v4437 = vld [vmem:[%s4436] ss:$2 sm:$0xff]
    %s4438 = scalar_lea.vmem [#allocation2], 1377
    %v4439 = vld [vmem:[%s4438] ss:$2 sm:$0xff]
    %s4440 = scalar_lea.vmem [#allocation2], 1393
    %v4441 = vld [vmem:[%s4440] ss:$2 sm:$0xff]
    %s4442 = scalar_lea.vmem [#allocation2], 1409
    %v4443 = vld [vmem:[%s4442] ss:$2 sm:$0xff]
    %s4444 = scalar_lea.vmem [#allocation2], 1425
    %v4445 = vld [vmem:[%s4444] ss:$2 sm:$0xff]
    %s4446 = scalar_lea.vmem [#allocation2], 1441
    %v4447 = vld [vmem:[%s4446] ss:$2 sm:$0xff]
    %s4448 = scalar_lea.vmem [#allocation2], 1457
    %v4449 = vld [vmem:[%s4448] ss:$2 sm:$0xff]
    %s4450 = scalar_lea.vmem [#allocation2], 1473
    %v4451 = vld [vmem:[%s4450] ss:$2 sm:$0xff]
    %s4452 = scalar_lea.vmem [#allocation2], 1489
    %v4453 = vld [vmem:[%s4452] ss:$2 sm:$0xff]
    %s4454 = scalar_lea.vmem [#allocation2], 1505
    %v4455 = vld [vmem:[%s4454] ss:$2 sm:$0xff]
    %s4456 = scalar_lea.vmem [#allocation2], 1521
    %v4457 = vld [vmem:[%s4456] ss:$2 sm:$0xff]
    %4554 = vrot.lane.b32.xlu0 %v4267, 16
    %v4555 = vpop.permute.xlu0 %4554
    %4556 = vrot.lane.b32.xlu0 %v4269, 16
    %v4557 = vpop.permute.xlu0 %4556
    %4558 = vrot.lane.b32.xlu0 %v4271, 16
    %v4559 = vpop.permute.xlu0 %4558
    %4560 = vrot.lane.b32.xlu0 %v4273, 16
    %v4561 = vpop.permute.xlu0 %4560
    %4562 = vrot.lane.b32.xlu0 %v4275, 16
    %v4563 = vpop.permute.xlu0 %4562
    %4564 = vrot.lane.b32.xlu0 %v4277, 16
    %v4565 = vpop.permute.xlu0 %4564
    %4566 = vrot.lane.b32.xlu0 %v4279, 16
    %v4567 = vpop.permute.xlu0 %4566
    %4568 = vrot.lane.b32.xlu0 %v4281, 16
    %v4569 = vpop.permute.xlu0 %4568
    %4570 = vrot.lane.b32.xlu0 %v4283, 16
    %v4571 = vpop.permute.xlu0 %4570
    %4572 = vrot.lane.b32.xlu0 %v4285, 16
    %v4573 = vpop.permute.xlu0 %4572
    %4574 = vrot.lane.b32.xlu0 %v4287, 16
    %v4575 = vpop.permute.xlu0 %4574
    %4576 = vrot.lane.b32.xlu0 %v4289, 16
    %v4577 = vpop.permute.xlu0 %4576
    %4578 = vrot.lane.b32.xlu0 %v4291, 16
    %v4579 = vpop.permute.xlu0 %4578
    %4580 = vrot.lane.b32.xlu0 %v4293, 16
    %v4581 = vpop.permute.xlu0 %4580
    %4582 = vrot.lane.b32.xlu0 %v4295, 16
    %v4583 = vpop.permute.xlu0 %4582
    %4584 = vrot.lane.b32.xlu0 %v4297, 16
    %v4585 = vpop.permute.xlu0 %4584
    %4586 = vrot.lane.b32.xlu0 %v4299, 16
    %v4587 = vpop.permute.xlu0 %4586
    %4588 = vrot.lane.b32.xlu0 %v4301, 16
    %v4589 = vpop.permute.xlu0 %4588
    %4590 = vrot.lane.b32.xlu0 %v4303, 16
    %v4591 = vpop.permute.xlu0 %4590
    %4592 = vrot.lane.b32.xlu0 %v4305, 16
    %v4593 = vpop.permute.xlu0 %4592
    %4594 = vrot.lane.b32.xlu0 %v4307, 16
    %v4595 = vpop.permute.xlu0 %4594
    %4596 = vrot.lane.b32.xlu0 %v4309, 16
    %v4597 = vpop.permute.xlu0 %4596
    %4598 = vrot.lane.b32.xlu0 %v4311, 16
    %v4599 = vpop.permute.xlu0 %4598
    %4600 = vrot.lane.b32.xlu0 %v4313, 16
    %v4601 = vpop.permute.xlu0 %4600
    %4602 = vrot.lane.b32.xlu0 %v4315, 16
    %v4603 = vpop.permute.xlu0 %4602
    %4604 = vrot.lane.b32.xlu0 %v4317, 16
    %v4605 = vpop.permute.xlu0 %4604
    %4606 = vrot.lane.b32.xlu0 %v4319, 16
    %v4607 = vpop.permute.xlu0 %4606
    %4608 = vrot.lane.b32.xlu0 %v4321, 16
    %v4609 = vpop.permute.xlu0 %4608
    %4610 = vrot.lane.b32.xlu0 %v4323, 16
    %v4611 = vpop.permute.xlu0 %4610
    %4612 = vrot.lane.b32.xlu0 %v4325, 16
    %v4613 = vpop.permute.xlu0 %4612
    %4614 = vrot.lane.b32.xlu0 %v4327, 16
    %v4615 = vpop.permute.xlu0 %4614
    %4616 = vrot.lane.b32.xlu0 %v4329, 16
    %v4617 = vpop.permute.xlu0 %4616
    %4618 = vrot.lane.b32.xlu0 %v4331, 16
    %v4619 = vpop.permute.xlu0 %4618
    %4620 = vrot.lane.b32.xlu0 %v4333, 16
    %v4621 = vpop.permute.xlu0 %4620
    %4622 = vrot.lane.b32.xlu0 %v4335, 16
    %v4623 = vpop.permute.xlu0 %4622
    %4624 = vrot.lane.b32.xlu0 %v4337, 16
    %v4625 = vpop.permute.xlu0 %4624
    %4626 = vrot.lane.b32.xlu0 %v4339, 16
    %v4627 = vpop.permute.xlu0 %4626
    %4628 = vrot.lane.b32.xlu0 %v4341, 16
    %v4629 = vpop.permute.xlu0 %4628
    %4630 = vrot.lane.b32.xlu0 %v4343, 16
    %v4631 = vpop.permute.xlu0 %4630
    %4632 = vrot.lane.b32.xlu0 %v4345, 16
    %v4633 = vpop.permute.xlu0 %4632
    %4634 = vrot.lane.b32.xlu0 %v4347, 16
    %v4635 = vpop.permute.xlu0 %4634
    %4636 = vrot.lane.b32.xlu0 %v4349, 16
    %v4637 = vpop.permute.xlu0 %4636
    %4638 = vrot.lane.b32.xlu0 %v4351, 16
    %v4639 = vpop.permute.xlu0 %4638
    %4640 = vrot.lane.b32.xlu0 %v4353, 16
    %v4641 = vpop.permute.xlu0 %4640
    %4642 = vrot.lane.b32.xlu0 %v4355, 16
    %v4643 = vpop.permute.xlu0 %4642
    %4644 = vrot.lane.b32.xlu0 %v4357, 16
    %v4645 = vpop.permute.xlu0 %4644
    %4646 = vrot.lane.b32.xlu0 %v4359, 16
    %v4647 = vpop.permute.xlu0 %4646
    %4648 = vrot.lane.b32.xlu0 %v4361, 16
    %v4649 = vpop.permute.xlu0 %4648
    %4650 = vrot.lane.b32.xlu0 %v4363, 16
    %v4651 = vpop.permute.xlu0 %4650
    %4652 = vrot.lane.b32.xlu0 %v4365, 16
    %v4653 = vpop.permute.xlu0 %4652
    %4654 = vrot.lane.b32.xlu0 %v4367, 16
    %v4655 = vpop.permute.xlu0 %4654
    %4656 = vrot.lane.b32.xlu0 %v4369, 16
    %v4657 = vpop.permute.xlu0 %4656
    %4658 = vrot.lane.b32.xlu0 %v4371, 16
    %v4659 = vpop.permute.xlu0 %4658
    %4660 = vrot.lane.b32.xlu0 %v4373, 16
    %v4661 = vpop.permute.xlu0 %4660
    %4662 = vrot.lane.b32.xlu0 %v4375, 16
    %v4663 = vpop.permute.xlu0 %4662
    %4664 = vrot.lane.b32.xlu0 %v4377, 16
    %v4665 = vpop.permute.xlu0 %4664
    %4666 = vrot.lane.b32.xlu0 %v4379, 16
    %v4667 = vpop.permute.xlu0 %4666
    %4668 = vrot.lane.b32.xlu0 %v4381, 16
    %v4669 = vpop.permute.xlu0 %4668
    %4670 = vrot.lane.b32.xlu0 %v4383, 16
    %v4671 = vpop.permute.xlu0 %4670
    %4672 = vrot.lane.b32.xlu0 %v4385, 16
    %v4673 = vpop.permute.xlu0 %4672
    %4674 = vrot.lane.b32.xlu0 %v4387, 16
    %v4675 = vpop.permute.xlu0 %4674
    %4676 = vrot.lane.b32.xlu0 %v4389, 16
    %v4677 = vpop.permute.xlu0 %4676
    %4678 = vrot.lane.b32.xlu0 %v4391, 16
    %v4679 = vpop.permute.xlu0 %4678
    %4680 = vrot.lane.b32.xlu0 %v4393, 16
    %v4681 = vpop.permute.xlu0 %4680
    %4682 = vrot.lane.b32.xlu0 %v4395, 16
    %v4683 = vpop.permute.xlu0 %4682
    %4684 = vrot.lane.b32.xlu0 %v4397, 16
    %v4685 = vpop.permute.xlu0 %4684
    %4686 = vrot.lane.b32.xlu0 %v4399, 16
    %v4687 = vpop.permute.xlu0 %4686
    %4688 = vrot.lane.b32.xlu0 %v4401, 16
    %v4689 = vpop.permute.xlu0 %4688
    %4690 = vrot.lane.b32.xlu0 %v4403, 16
    %v4691 = vpop.permute.xlu0 %4690
    %4692 = vrot.lane.b32.xlu0 %v4405, 16
    %v4693 = vpop.permute.xlu0 %4692
    %4694 = vrot.lane.b32.xlu0 %v4407, 16
    %v4695 = vpop.permute.xlu0 %4694
    %4696 = vrot.lane.b32.xlu0 %v4409, 16
    %v4697 = vpop.permute.xlu0 %4696
    %4698 = vrot.lane.b32.xlu0 %v4411, 16
    %v4699 = vpop.permute.xlu0 %4698
    %4700 = vrot.lane.b32.xlu0 %v4413, 16
    %v4701 = vpop.permute.xlu0 %4700
    %4702 = vrot.lane.b32.xlu0 %v4415, 16
    %v4703 = vpop.permute.xlu0 %4702
    %4704 = vrot.lane.b32.xlu0 %v4417, 16
    %v4705 = vpop.permute.xlu0 %4704
    %4706 = vrot.lane.b32.xlu0 %v4419, 16
    %v4707 = vpop.permute.xlu0 %4706
    %4708 = vrot.lane.b32.xlu0 %v4421, 16
    %v4709 = vpop.permute.xlu0 %4708
    %4710 = vrot.lane.b32.xlu0 %v4423, 16
    %v4711 = vpop.permute.xlu0 %4710
    %4712 = vrot.lane.b32.xlu0 %v4425, 16
    %v4713 = vpop.permute.xlu0 %4712
    %4714 = vrot.lane.b32.xlu0 %v4427, 16
    %v4715 = vpop.permute.xlu0 %4714
    %4716 = vrot.lane.b32.xlu0 %v4429, 16
    %v4717 = vpop.permute.xlu0 %4716
    %4718 = vrot.lane.b32.xlu0 %v4431, 16
    %v4719 = vpop.permute.xlu0 %4718
    %4720 = vrot.lane.b32.xlu0 %v4433, 16
    %v4721 = vpop.permute.xlu0 %4720
    %4722 = vrot.lane.b32.xlu0 %v4435, 16
    %v4723 = vpop.permute.xlu0 %4722
    %4724 = vrot.lane.b32.xlu0 %v4437, 16
    %v4725 = vpop.permute.xlu0 %4724
    %4726 = vrot.lane.b32.xlu0 %v4439, 16
    %v4727 = vpop.permute.xlu0 %4726
    %4728 = vrot.lane.b32.xlu0 %v4441, 16
    %v4729 = vpop.permute.xlu0 %4728
    %4730 = vrot.lane.b32.xlu0 %v4443, 16
    %v4731 = vpop.permute.xlu0 %4730
    %4732 = vrot.lane.b32.xlu0 %v4445, 16
    %v4733 = vpop.permute.xlu0 %4732
    %4734 = vrot.lane.b32.xlu0 %v4447, 16
    %v4735 = vpop.permute.xlu0 %4734
    %4736 = vrot.lane.b32.xlu0 %v4449, 16
    %v4737 = vpop.permute.xlu0 %4736
    %4738 = vrot.lane.b32.xlu0 %v4451, 16
    %v4739 = vpop.permute.xlu0 %4738
    %4740 = vrot.lane.b32.xlu0 %v4453, 16
    %v4741 = vpop.permute.xlu0 %4740
    %4742 = vrot.lane.b32.xlu0 %v4455, 16
    %v4743 = vpop.permute.xlu0 %4742
    %4744 = vrot.lane.b32.xlu0 %v4457, 16
    %v4745 = vpop.permute.xlu0 %4744
    %v4842 = vsel %vm3706, %v4075, %v4555
    %v4843 = vsel %vm3706, %v4077, %v4557
    %v4844 = vsel %vm3706, %v4079, %v4559
    %v4845 = vsel %vm3706, %v4081, %v4561
    %v4846 = vsel %vm3706, %v4083, %v4563
    %v4847 = vsel %vm3706, %v4085, %v4565
    %v4848 = vsel %vm3706, %v4087, %v4567
    %v4849 = vsel %vm3706, %v4089, %v4569
    %v4850 = vsel %vm3706, %v4091, %v4571
    %v4851 = vsel %vm3706, %v4093, %v4573
    %v4852 = vsel %vm3706, %v4095, %v4575
    %v4853 = vsel %vm3706, %v4097, %v4577
    %v4854 = vsel %vm3706, %v4099, %v4579
    %v4855 = vsel %vm3706, %v4101, %v4581
    %v4856 = vsel %vm3706, %v4103, %v4583
    %v4857 = vsel %vm3706, %v4105, %v4585
    %v4858 = vsel %vm3706, %v4107, %v4587
    %v4859 = vsel %vm3706, %v4109, %v4589
    %v4860 = vsel %vm3706, %v4111, %v4591
    %v4861 = vsel %vm3706, %v4113, %v4593
    %v4862 = vsel %vm3706, %v4115, %v4595
    %v4863 = vsel %vm3706, %v4117, %v4597
    %v4864 = vsel %vm3706, %v4119, %v4599
    %v4865 = vsel %vm3706, %v4121, %v4601
    %v4866 = vsel %vm3706, %v4123, %v4603
    %v4867 = vsel %vm3706, %v4125, %v4605
    %v4868 = vsel %vm3706, %v4127, %v4607
    %v4869 = vsel %vm3706, %v4129, %v4609
    %v4870 = vsel %vm3706, %v4131, %v4611
    %v4871 = vsel %vm3706, %v4133, %v4613
    %v4872 = vsel %vm3706, %v4135, %v4615
    %v4873 = vsel %vm3706, %v4137, %v4617
    %v4874 = vsel %vm3706, %v4139, %v4619
    %v4875 = vsel %vm3706, %v4141, %v4621
    %v4876 = vsel %vm3706, %v4143, %v4623
    %v4877 = vsel %vm3706, %v4145, %v4625
    %v4878 = vsel %vm3706, %v4147, %v4627
    %v4879 = vsel %vm3706, %v4149, %v4629
    %v4880 = vsel %vm3706, %v4151, %v4631
    %v4881 = vsel %vm3706, %v4153, %v4633
    %v4882 = vsel %vm3706, %v4155, %v4635
    %v4883 = vsel %vm3706, %v4157, %v4637
    %v4884 = vsel %vm3706, %v4159, %v4639
    %v4885 = vsel %vm3706, %v4161, %v4641
    %v4886 = vsel %vm3706, %v4163, %v4643
    %v4887 = vsel %vm3706, %v4165, %v4645
    %v4888 = vsel %vm3706, %v4167, %v4647
    %v4889 = vsel %vm3706, %v4169, %v4649
    %v4890 = vsel %vm3706, %v4171, %v4651
    %v4891 = vsel %vm3706, %v4173, %v4653
    %v4892 = vsel %vm3706, %v4175, %v4655
    %v4893 = vsel %vm3706, %v4177, %v4657
    %v4894 = vsel %vm3706, %v4179, %v4659
    %v4895 = vsel %vm3706, %v4181, %v4661
    %v4896 = vsel %vm3706, %v4183, %v4663
    %v4897 = vsel %vm3706, %v4185, %v4665
    %v4898 = vsel %vm3706, %v4187, %v4667
    %v4899 = vsel %vm3706, %v4189, %v4669
    %v4900 = vsel %vm3706, %v4191, %v4671
    %v4901 = vsel %vm3706, %v4193, %v4673
    %v4902 = vsel %vm3706, %v4195, %v4675
    %v4903 = vsel %vm3706, %v4197, %v4677
    %v4904 = vsel %vm3706, %v4199, %v4679
    %v4905 = vsel %vm3706, %v4201, %v4681
    %v4906 = vsel %vm3706, %v4203, %v4683
    %v4907 = vsel %vm3706, %v4205, %v4685
    %v4908 = vsel %vm3706, %v4207, %v4687
    %v4909 = vsel %vm3706, %v4209, %v4689
    %v4910 = vsel %vm3706, %v4211, %v4691
    %v4911 = vsel %vm3706, %v4213, %v4693
    %v4912 = vsel %vm3706, %v4215, %v4695
    %v4913 = vsel %vm3706, %v4217, %v4697
    %v4914 = vsel %vm3706, %v4219, %v4699
    %v4915 = vsel %vm3706, %v4221, %v4701
    %v4916 = vsel %vm3706, %v4223, %v4703
    %v4917 = vsel %vm3706, %v4225, %v4705
    %v4918 = vsel %vm3706, %v4227, %v4707
    %v4919 = vsel %vm3706, %v4229, %v4709
    %v4920 = vsel %vm3706, %v4231, %v4711
    %v4921 = vsel %vm3706, %v4233, %v4713
    %v4922 = vsel %vm3706, %v4235, %v4715
    %v4923 = vsel %vm3706, %v4237, %v4717
    %v4924 = vsel %vm3706, %v4239, %v4719
    %v4925 = vsel %vm3706, %v4241, %v4721
    %v4926 = vsel %vm3706, %v4243, %v4723
    %v4927 = vsel %vm3706, %v4245, %v4725
    %v4928 = vsel %vm3706, %v4247, %v4727
    %v4929 = vsel %vm3706, %v4249, %v4729
    %v4930 = vsel %vm3706, %v4251, %v4731
    %v4931 = vsel %vm3706, %v4253, %v4733
    %v4932 = vsel %vm3706, %v4255, %v4735
    %v4933 = vsel %vm3706, %v4257, %v4737
    %v4934 = vsel %vm3706, %v4259, %v4739
    %v4935 = vsel %vm3706, %v4261, %v4741
    %v4936 = vsel %vm3706, %v4263, %v4743
    %v4937 = vsel %vm3706, %v4265, %v4745
    %v4938 = vld [vmem:[%s4] sm:$0xff]
    %v4939 = vld [vmem:[%s4 + $0x8] sm:$0xff]
    %v4940 = vld [vmem:[%s4 + $0x10] sm:$0xff]
    %v4941 = vld [vmem:[%s4 + $0x18] sm:$0xff]
    %s4942 = scalar_lea.vmem %s4, 32
    %v4943 = vld [vmem:[%s4942] sm:$0xff]
    %v4944 = vld [vmem:[%s4942 + $0x8] sm:$0xff]
    %v4945 = vld [vmem:[%s4942 + $0x10] sm:$0xff]
    %v4946 = vld [vmem:[%s4942 + $0x18] sm:$0xff]
    %vm4947 = vcmask 261120
    %v4949 = vsel %vm4947, %v4844, 0
    %v4952 = vsel %vm4947, %v4845, 0
    %v4955 = vsel %vm4947, %v4850, 0
    %v4958 = vsel %vm4947, %v4851, 0
    %v4961 = vsel %vm4947, %v4856, 0
    %v4964 = vsel %vm4947, %v4857, 0
    %v4967 = vsel %vm4947, %v4862, 0
    %v4970 = vsel %vm4947, %v4863, 0
    %v4973 = vsel %vm4947, %v4868, 0
    %v4976 = vsel %vm4947, %v4869, 0
    %v4979 = vsel %vm4947, %v4874, 0
    %v4982 = vsel %vm4947, %v4875, 0
    %v4985 = vsel %vm4947, %v4880, 0
    %v4988 = vsel %vm4947, %v4881, 0
    %v4991 = vsel %vm4947, %v4892, 0
    %v4994 = vsel %vm4947, %v4893, 0
    %v4997 = vsel %vm4947, %v4898, 0
    %v5000 = vsel %vm4947, %v4899, 0
    %v5003 = vsel %vm4947, %v4904, 0
    %v5006 = vsel %vm4947, %v4905, 0
    %v5009 = vsel %vm4947, %v4910, 0
    %v5012 = vsel %vm4947, %v4911, 0
    %v5015 = vsel %vm4947, %v4916, 0
    %v5018 = vsel %vm4947, %v4917, 0
    %v5021 = vsel %vm4947, %v4922, 0
    %v5024 = vsel %vm4947, %v4923, 0
    %v5027 = vsel %vm4947, %v4928, 0
    %v5030 = vsel %vm4947, %v4929, 0
    %5032 = vmatprep.subr.mxu0 0.0
    %5033 = vmatpush1.msra.mxu0 %v4943
    %5034 = vmatprep.subr.mxu0 0.0
    %5035 = vmatpush1.msra.mxu0 %v4944
    %5036 = vmatprep.subr.mxu0 0.0
    %5037 = vmatpush1.msra.mxu0 %v4945
    %5038 = vmatprep.subr.mxu0 0.0
    %5039 = vmatpush1.msra.mxu0 %v4946
    %5040 = vmatprep.subr.mxu0 0.0
    %5041 = vmatpush1.msra.mxu0 0.0
    %5042 = vmatprep.subr.mxu0 0.0
    %5043 = vmatpush1.msra.mxu0 0.0
    %5044 = vmatprep.subr.mxu0 0.0
    %5045 = vmatpush1.msra.mxu0 0.0
    %5046 = vmatprep.subr.mxu0 0.0
    %5047 = vmatpush1.msra.mxu0 0.0
    %5048 = vmatprep.subr.mxu0 0.0
    %5049 = vmatpush1.msra.mxu0 0.0
    %5050 = vmatprep.subr.mxu0 0.0
    %5051 = vmatpush1.msra.mxu0 0.0
    %5052 = vmatprep.subr.mxu0 0.0
    %5053 = vmatpush1.msra.mxu0 0.0
    %5054 = vmatprep.subr.mxu0 0.0
    %5055 = vmatpush1.msra.mxu0 0.0
    %5056 = vmatprep.subr.mxu0 0.0
    %5057 = vmatpush1.msra.mxu0 0.0
    %5058 = vmatprep.subr.mxu0 0.0
    %5059 = vmatpush1.msra.mxu0 0.0
    %5060 = vmatprep.subr.mxu0 0.0
    %5061 = vmatpush1.msra.mxu0 0.0
    %5062 = vmatprep.subr.mxu0 0.0
    %5063 = vmatpush1.msra.mxu0 0.0
    %5064 = vmatprep.subr.mxu0 0.0
    %5065 = vmatpush1.msra.mxu0 0.0
    %5066 = vmatprep.subr.mxu0 0.0
    %5067 = vmatpush1.msra.mxu0 0.0
    %5068 = vmatprep.subr.mxu0 0.0
    %5069 = vmatpush1.msra.mxu0 0.0
    %5070 = vmatprep.subr.mxu0 0.0
    %5071 = vmatpush1.msra.mxu0 0.0
    %5072 = vmatprep.subr.mxu0 0.0
    %5073 = vmatpush1.msra.mxu0 0.0
    %5074 = vmatprep.subr.mxu0 0.0
    %5075 = vmatpush1.msra.mxu0 0.0
    %5076 = vmatprep.subr.mxu0 0.0
    %5077 = vmatpush1.msra.mxu0 0.0
    %5078 = vmatprep.subr.mxu0 0.0
    %5079 = vmatpush1.msra.mxu0 0.0
    %5080 = vmatprep.subr.mxu0 0.0
    %5081 = vmatpush1.msra.mxu0 0.0
    %5082 = vmatprep.subr.mxu0 0.0
    %5083 = vmatpush1.msra.mxu0 0.0
    %5084 = vmatprep.subr.mxu0 0.0
    %5085 = vmatpush1.msra.mxu0 0.0
    %5086 = vmatprep.subr.mxu0 0.0
    %5087 = vmatpush1.msra.mxu0 0.0
    %5088 = vmatprep.subr.mxu0 0.0
    %5089 = vmatpush1.msra.mxu0 0.0
    %5090 = vmatprep.subr.mxu0 0.0
    %5091 = vmatpush1.msra.mxu0 0.0
    %5092 = vmatprep.subr.mxu0 0.0
    %5093 = vmatpush1.msra.mxu0 0.0
    %5094 = vmatprep.subr.mxu0 0.0
    %5095 = vmatpush1.msra.mxu0 0.0
    %5096 = vmatprep.mubr.f32.mxu0 0.0
    %5097 = vmatmul.mubr.f32.gmra.mrb[0].mxu0 %v4949
    %v5098 = vpop.f32.mrb[0].mxu0
    %v5099 = vadd.f32 0.0, %v5098
    %v5100 = vpop.f32.mrb[0].mxu0
    %5101 = vmatprep.mubr.f32.mxu0 0.0
    %5102 = vmatmul.mubr.f32.gmra.mrb[0].mxu0 %v4952
    %v5103 = vpop.f32.mrb[0].mxu0
    %v5104 = vadd.f32 0.0, %v5103
    %v5105 = vpop.f32.mrb[0].mxu0
    %5106 = vmatprep.mubr.f32.mxu0 0.0
    %5107 = vmatmul.mubr.f32.gmra.mrb[0].mxu0 %v4955
    %v5108 = vpop.f32.mrb[0].mxu0
    %v5109 = vadd.f32 0.0, %v5108
    %v5110 = vpop.f32.mrb[0].mxu0
    %5111 = vmatprep.mubr.f32.mxu0 0.0
    %5112 = vmatmul.mubr.f32.gmra.mrb[0].mxu0 %v4958
    %v5113 = vpop.f32.mrb[0].mxu0
    %v5114 = vadd.f32 0.0, %v5113
    %v5115 = vpop.f32.mrb[0].mxu0
    %5116 = vmatprep.mubr.f32.mxu0 0.0
    %5117 = vmatmul.mubr.f32.gmra.mrb[0].mxu0 %v4961
    %v5118 = vpop.f32.mrb[0].mxu0
    %v5119 = vadd.f32 0.0, %v5118
    %v5120 = vpop.f32.mrb[0].mxu0
    %5121 = vmatprep.mubr.f32.mxu0 0.0
    %5122 = vmatmul.mubr.f32.gmra.mrb[0].mxu0 %v4964
    %v5123 = vpop.f32.mrb[0].mxu0
    %v5124 = vadd.f32 0.0, %v5123
    %v5125 = vpop.f32.mrb[0].mxu0
    %5126 = vmatprep.mubr.f32.mxu0 0.0
    %5127 = vmatmul.mubr.f32.gmra.mrb[0].mxu0 %v4967
    %v5128 = vpop.f32.mrb[0].mxu0
    %v5129 = vadd.f32 0.0, %v5128
    %v5130 = vpop.f32.mrb[0].mxu0
    %5131 = vmatprep.mubr.f32.mxu0 0.0
    %5132 = vmatmul.mubr.f32.gmra.mrb[0].mxu0 %v4970
    %v5133 = vpop.f32.mrb[0].mxu0
    %v5134 = vadd.f32 0.0, %v5133
    %v5135 = vpop.f32.mrb[0].mxu0
    %5136 = vmatprep.mubr.f32.mxu0 0.0
    %5137 = vmatmul.mubr.f32.gmra.mrb[0].mxu0 %v4973
    %v5138 = vpop.f32.mrb[0].mxu0
    %v5139 = vadd.f32 0.0, %v5138
    %v5140 = vpop.f32.mrb[0].mxu0
    %5141 = vmatprep.mubr.f32.mxu0 0.0
    %5142 = vmatmul.mubr.f32.gmra.mrb[0].mxu0 %v4976
    %v5143 = vpop.f32.mrb[0].mxu0
    %v5144 = vadd.f32 0.0, %v5143
    %v5145 = vpop.f32.mrb[0].mxu0
    %5146 = vmatprep.mubr.f32.mxu0 0.0
    %5147 = vmatmul.mubr.f32.gmra.mrb[0].mxu0 %v4979
    %v5148 = vpop.f32.mrb[0].mxu0
    %v5149 = vadd.f32 0.0, %v5148
    %v5150 = vpop.f32.mrb[0].mxu0
    %5151 = vmatprep.mubr.f32.mxu0 0.0
    %5152 = vmatmul.mubr.f32.gmra.mrb[0].mxu0 %v4982
    %v5153 = vpop.f32.mrb[0].mxu0
    %v5154 = vadd.f32 0.0, %v5153
    %v5155 = vpop.f32.mrb[0].mxu0
    %5156 = vmatprep.mubr.f32.mxu0 0.0
    %5157 = vmatmul.mubr.f32.gmra.mrb[0].mxu0 %v4985
    %v5158 = vpop.f32.mrb[0].mxu0
    %v5159 = vadd.f32 0.0, %v5158
    %v5160 = vpop.f32.mrb[0].mxu0
    %5161 = vmatprep.mubr.f32.mxu0 0.0
    %5162 = vmatmul.mubr.f32.gmra.mrb[0].mxu0 %v4988
    %v5163 = vpop.f32.mrb[0].mxu0
    %v5164 = vadd.f32 0.0, %v5163
    %v5165 = vpop.f32.mrb[0].mxu0
    %5166 = vmatprep.mubr.f32.mxu0 0.0
    %5167 = vmatmul.mubr.f32.gmra.mrb[0].mxu0 %v4991
    %v5168 = vpop.f32.mrb[0].mxu0
    %v5169 = vadd.f32 0.0, %v5168
    %v5170 = vpop.f32.mrb[0].mxu0
    %5171 = vmatprep.mubr.f32.mxu0 0.0
    %5172 = vmatmul.mubr.f32.gmra.mrb[0].mxu0 %v4994
    %v5173 = vpop.f32.mrb[0].mxu0
    %v5174 = vadd.f32 0.0, %v5173
    %v5175 = vpop.f32.mrb[0].mxu0
    %5176 = vmatprep.mubr.f32.mxu0 0.0
    %5177 = vmatmul.mubr.f32.gmra.mrb[0].mxu0 %v4997
    %v5178 = vpop.f32.mrb[0].mxu0
    %v5179 = vadd.f32 0.0, %v5178
    %v5180 = vpop.f32.mrb[0].mxu0
    %5181 = vmatprep.mubr.f32.mxu0 0.0
    %5182 = vmatmul.mubr.f32.gmra.mrb[0].mxu0 %v5000
    %v5183 = vpop.f32.mrb[0].mxu0
    %v5184 = vadd.f32 0.0, %v5183
    %v5185 = vpop.f32.mrb[0].mxu0
    %5186 = vmatprep.mubr.f32.mxu0 0.0
    %5187 = vmatmul.mubr.f32.gmra.mrb[0].mxu0 %v5003
    %v5188 = vpop.f32.mrb[0].mxu0
    %v5189 = vadd.f32 0.0, %v5188
    %v5190 = vpop.f32.mrb[0].mxu0
    %5191 = vmatprep.mubr.f32.mxu0 0.0
    %5192 = vmatmul.mubr.f32.gmra.mrb[0].mxu0 %v5006
    %v5193 = vpop.f32.mrb[0].mxu0
    %v5194 = vadd.f32 0.0, %v5193
    %v5195 = vpop.f32.mrb[0].mxu0
    %5196 = vmatprep.mubr.f32.mxu0 0.0
    %5197 = vmatmul.mubr.f32.gmra.mrb[0].mxu0 %v5009
    %v5198 = vpop.f32.mrb[0].mxu0
    %v5199 = vadd.f32 0.0, %v5198
    %v5200 = vpop.f32.mrb[0].mxu0
    %5201 = vmatprep.mubr.f32.mxu0 0.0
    %5202 = vmatmul.mubr.f32.gmra.mrb[0].mxu0 %v5012
    %v5203 = vpop.f32.mrb[0].mxu0
    %v5204 = vadd.f32 0.0, %v5203
    %v5205 = vpop.f32.mrb[0].mxu0
    %5206 = vmatprep.mubr.f32.mxu0 0.0
    %5207 = vmatmul.mubr.f32.gmra.mrb[0].mxu0 %v5015
    %v5208 = vpop.f32.mrb[0].mxu0
    %v5209 = vadd.f32 0.0, %v5208
    %v5210 = vpop.f32.mrb[0].mxu0
    %5211 = vmatprep.mubr.f32.mxu0 0.0
    %5212 = vmatmul.mubr.f32.gmra.mrb[0].mxu0 %v5018
    %v5213 = vpop.f32.mrb[0].mxu0
    %v5214 = vadd.f32 0.0, %v5213
    %v5215 = vpop.f32.mrb[0].mxu0
    %5216 = vmatprep.mubr.f32.mxu0 0.0
    %5217 = vmatmul.mubr.f32.gmra.mrb[0].mxu0 %v5021
    %v5218 = vpop.f32.mrb[0].mxu0
    %v5219 = vadd.f32 0.0, %v5218
    %v5220 = vpop.f32.mrb[0].mxu0
    %5221 = vmatprep.mubr.f32.mxu0 0.0
    %5222 = vmatmul.mubr.f32.gmra.mrb[0].mxu0 %v5024
    %v5223 = vpop.f32.mrb[0].mxu0
    %v5224 = vadd.f32 0.0, %v5223
    %v5225 = vpop.f32.mrb[0].mxu0
    %5226 = vmatprep.mubr.f32.mxu0 0.0
    %5227 = vmatmul.mubr.f32.gmra.mrb[0].mxu0 %v5027
    %v5228 = vpop.f32.mrb[0].mxu0
    %v5229 = vadd.f32 0.0, %v5228
    %v5230 = vpop.f32.mrb[0].mxu0
    %5231 = vmatprep.mubr.f32.mxu0 0.0
    %5232 = vmatmul.mubr.f32.gmra.mrb[0].mxu0 %v5030
    %v5233 = vpop.f32.mrb[0].mxu0
    %v5234 = vadd.f32 0.0, %v5233
    %v5235 = vpop.f32.mrb[0].mxu0
    %5236 = vdwg.mxu0
    %v5238 = vsel %vm4947, %v4842, 0
    %v5241 = vsel %vm4947, %v4843, 0
    %v5244 = vsel %vm4947, %v4848, 0
    %v5247 = vsel %vm4947, %v4849, 0
    %v5250 = vsel %vm4947, %v4854, 0
    %v5253 = vsel %vm4947, %v4855, 0
    %v5256 = vsel %vm4947, %v4860, 0
    %v5259 = vsel %vm4947, %v4861, 0
    %v5262 = vsel %vm4947, %v4866, 0
    %v5265 = vsel %vm4947, %v4867, 0
    %v5268 = vsel %vm4947, %v4872, 0
    %v5271 = vsel %vm4947, %v4873, 0
    %v5274 = vsel %vm4947, %v4878, 0
    %v5277 = vsel %vm4947, %v4879, 0
    %v5280 = vsel %vm4947, %v4890, 0
    %v5283 = vsel %vm4947, %v4891, 0
    %v5286 = vsel %vm4947, %v4896, 0
    %v5289 = vsel %vm4947, %v4897, 0
    %v5292 = vsel %vm4947, %v4902, 0
    %v5295 = vsel %vm4947, %v4903, 0
    %v5298 = vsel %vm4947, %v4908, 0
    %v5301 = vsel %vm4947, %v4909, 0
    %v5304 = vsel %vm4947, %v4914, 0
    %v5307 = vsel %vm4947, %v4915, 0
    %v5310 = vsel %vm4947, %v4920, 0
    %v5313 = vsel %vm4947, %v4921, 0
    %v5316 = vsel %vm4947, %v4926, 0
    %v5319 = vsel %vm4947, %v4927, 0
    %5321 = vmatprep.subr.mxu0 0.0
    %5322 = vmatpush1.msra.mxu0 %v4938
    %5323 = vmatprep.subr.mxu0 0.0
    %5324 = vmatpush1.msra.mxu0 %v4939
    %5325 = vmatprep.subr.mxu0 0.0
    %5326 = vmatpush1.msra.mxu0 %v4940
    %5327 = vmatprep.subr.mxu0 0.0
    %5328 = vmatpush1.msra.mxu0 %v4941
    %5329 = vmatprep.subr.mxu0 0.0
    %5330 = vmatpush1.msra.mxu0 0.0
    %5331 = vmatprep.subr.mxu0 0.0
    %5332 = vmatpush1.msra.mxu0 0.0
    %5333 = vmatprep.subr.mxu0 0.0
    %5334 = vmatpush1.msra.mxu0 0.0
    %5335 = vmatprep.subr.mxu0 0.0
    %5336 = vmatpush1.msra.mxu0 0.0
    %5337 = vmatprep.subr.mxu0 0.0
    %5338 = vmatpush1.msra.mxu0 0.0
    %5339 = vmatprep.subr.mxu0 0.0
    %5340 = vmatpush1.msra.mxu0 0.0
    %5341 = vmatprep.subr.mxu0 0.0
    %5342 = vmatpush1.msra.mxu0 0.0
    %5343 = vmatprep.subr.mxu0 0.0
    %5344 = vmatpush1.msra.mxu0 0.0
    %5345 = vmatprep.subr.mxu0 0.0
    %5346 = vmatpush1.msra.mxu0 0.0
    %5347 = vmatprep.subr.mxu0 0.0
    %5348 = vmatpush1.msra.mxu0 0.0
    %5349 = vmatprep.subr.mxu0 0.0
    %5350 = vmatpush1.msra.mxu0 0.0
    %5351 = vmatprep.subr.mxu0 0.0
    %5352 = vmatpush1.msra.mxu0 0.0
    %5353 = vmatprep.subr.mxu0 0.0
    %5354 = vmatpush1.msra.mxu0 0.0
    %5355 = vmatprep.subr.mxu0 0.0
    %5356 = vmatpush1.msra.mxu0 0.0
    %5357 = vmatprep.subr.mxu0 0.0
    %5358 = vmatpush1.msra.mxu0 0.0
    %5359 = vmatprep.subr.mxu0 0.0
    %5360 = vmatpush1.msra.mxu0 0.0
    %5361 = vmatprep.subr.mxu0 0.0
    %5362 = vmatpush1.msra.mxu0 0.0
    %5363 = vmatprep.subr.mxu0 0.0
    %5364 = vmatpush1.msra.mxu0 0.0
    %5365 = vmatprep.subr.mxu0 0.0
    %5366 = vmatpush1.msra.mxu0 0.0
    %5367 = vmatprep.subr.mxu0 0.0
    %5368 = vmatpush1.msra.mxu0 0.0
    %5369 = vmatprep.subr.mxu0 0.0
    %5370 = vmatpush1.msra.mxu0 0.0
    %5371 = vmatprep.subr.mxu0 0.0
    %5372 = vmatpush1.msra.mxu0 0.0
    %5373 = vmatprep.subr.mxu0 0.0
    %5374 = vmatpush1.msra.mxu0 0.0
    %5375 = vmatprep.subr.mxu0 0.0
    %5376 = vmatpush1.msra.mxu0 0.0
    %5377 = vmatprep.subr.mxu0 0.0
    %5378 = vmatpush1.msra.mxu0 0.0
    %5379 = vmatprep.subr.mxu0 0.0
    %5380 = vmatpush1.msra.mxu0 0.0
    %5381 = vmatprep.subr.mxu0 0.0
    %5382 = vmatpush1.msra.mxu0 0.0
    %5383 = vmatprep.subr.mxu0 0.0
    %5384 = vmatpush1.msra.mxu0 0.0
    %5385 = vmatprep.mubr.f32.mxu0 0.0
    %5386 = vmatmul.mubr.f32.gmra.mrb[0].mxu0 %v5238
    %v5387 = vpop.f32.mrb[0].mxu0
    %v5388 = vadd.f32 %v5099, %v5387
    %v5389 = vpop.f32.mrb[0].mxu0
    %5390 = vmatprep.mubr.f32.mxu0 0.0
    %5391 = vmatmul.mubr.f32.gmra.mrb[0].mxu0 %v5241
    %v5392 = vpop.f32.mrb[0].mxu0
    %v5393 = vadd.f32 %v5104, %v5392
    %v5394 = vpop.f32.mrb[0].mxu0
    %5395 = vmatprep.mubr.f32.mxu0 0.0
    %5396 = vmatmul.mubr.f32.gmra.mrb[0].mxu0 %v5244
    %v5397 = vpop.f32.mrb[0].mxu0
    %v5398 = vadd.f32 %v5109, %v5397
    %v5399 = vpop.f32.mrb[0].mxu0
    %5400 = vmatprep.mubr.f32.mxu0 0.0
    %5401 = vmatmul.mubr.f32.gmra.mrb[0].mxu0 %v5247
    %v5402 = vpop.f32.mrb[0].mxu0
    %v5403 = vadd.f32 %v5114, %v5402
    %v5404 = vpop.f32.mrb[0].mxu0
    %5405 = vmatprep.mubr.f32.mxu0 0.0
    %5406 = vmatmul.mubr.f32.gmra.mrb[0].mxu0 %v5250
    %v5407 = vpop.f32.mrb[0].mxu0
    %v5408 = vadd.f32 %v5119, %v5407
    %v5409 = vpop.f32.mrb[0].mxu0
    %5410 = vmatprep.mubr.f32.mxu0 0.0
    %5411 = vmatmul.mubr.f32.gmra.mrb[0].mxu0 %v5253
    %v5412 = vpop.f32.mrb[0].mxu0
    %v5413 = vadd.f32 %v5124, %v5412
    %v5414 = vpop.f32.mrb[0].mxu0
    %5415 = vmatprep.mubr.f32.mxu0 0.0
    %5416 = vmatmul.mubr.f32.gmra.mrb[0].mxu0 %v5256
    %v5417 = vpop.f32.mrb[0].mxu0
    %v5418 = vadd.f32 %v5129, %v5417
    %v5419 = vpop.f32.mrb[0].mxu0
    %5420 = vmatprep.mubr.f32.mxu0 0.0
    %5421 = vmatmul.mubr.f32.gmra.mrb[0].mxu0 %v5259
    %v5422 = vpop.f32.mrb[0].mxu0
    %v5423 = vadd.f32 %v5134, %v5422
    %v5424 = vpop.f32.mrb[0].mxu0
    %5425 = vmatprep.mubr.f32.mxu0 0.0
    %5426 = vmatmul.mubr.f32.gmra.mrb[0].mxu0 %v5262
    %v5427 = vpop.f32.mrb[0].mxu0
    %v5428 = vadd.f32 %v5139, %v5427
    %v5429 = vpop.f32.mrb[0].mxu0
    %5430 = vmatprep.mubr.f32.mxu0 0.0
    %5431 = vmatmul.mubr.f32.gmra.mrb[0].mxu0 %v5265
    %v5432 = vpop.f32.mrb[0].mxu0
    %v5433 = vadd.f32 %v5144, %v5432
    %v5434 = vpop.f32.mrb[0].mxu0
    %5435 = vmatprep.mubr.f32.mxu0 0.0
    %5436 = vmatmul.mubr.f32.gmra.mrb[0].mxu0 %v5268
    %v5437 = vpop.f32.mrb[0].mxu0
    %v5438 = vadd.f32 %v5149, %v5437
    %v5439 = vpop.f32.mrb[0].mxu0
    %5440 = vmatprep.mubr.f32.mxu0 0.0
    %5441 = vmatmul.mubr.f32.gmra.mrb[0].mxu0 %v5271
    %v5442 = vpop.f32.mrb[0].mxu0
    %v5443 = vadd.f32 %v5154, %v5442
    %v5444 = vpop.f32.mrb[0].mxu0
    %5445 = vmatprep.mubr.f32.mxu0 0.0
    %5446 = vmatmul.mubr.f32.gmra.mrb[0].mxu0 %v5274
    %v5447 = vpop.f32.mrb[0].mxu0
    %v5448 = vadd.f32 %v5159, %v5447
    %v5449 = vpop.f32.mrb[0].mxu0
    %5450 = vmatprep.mubr.f32.mxu0 0.0
    %5451 = vmatmul.mubr.f32.gmra.mrb[0].mxu0 %v5277
    %v5452 = vpop.f32.mrb[0].mxu0
    %v5453 = vadd.f32 %v5164, %v5452
    %v5454 = vpop.f32.mrb[0].mxu0
    %5455 = vmatprep.mubr.f32.mxu0 0.0
    %5456 = vmatmul.mubr.f32.gmra.mrb[0].mxu0 %v5280
    %v5457 = vpop.f32.mrb[0].mxu0
    %v5458 = vadd.f32 %v5169, %v5457
    %v5459 = vpop.f32.mrb[0].mxu0
    %5460 = vmatprep.mubr.f32.mxu0 0.0
    %5461 = vmatmul.mubr.f32.gmra.mrb[0].mxu0 %v5283
    %v5462 = vpop.f32.mrb[0].mxu0
    %v5463 = vadd.f32 %v5174, %v5462
    %v5464 = vpop.f32.mrb[0].mxu0
    %5465 = vmatprep.mubr.f32.mxu0 0.0
    %5466 = vmatmul.mubr.f32.gmra.mrb[0].mxu0 %v5286
    %v5467 = vpop.f32.mrb[0].mxu0
    %v5468 = vadd.f32 %v5179, %v5467
    %v5469 = vpop.f32.mrb[0].mxu0
    %5470 = vmatprep.mubr.f32.mxu0 0.0
    %5471 = vmatmul.mubr.f32.gmra.mrb[0].mxu0 %v5289
    %v5472 = vpop.f32.mrb[0].mxu0
    %v5473 = vadd.f32 %v5184, %v5472
    %v5474 = vpop.f32.mrb[0].mxu0
    %5475 = vmatprep.mubr.f32.mxu0 0.0
    %5476 = vmatmul.mubr.f32.gmra.mrb[0].mxu0 %v5292
    %v5477 = vpop.f32.mrb[0].mxu0
    %v5478 = vadd.f32 %v5189, %v5477
    %v5479 = vpop.f32.mrb[0].mxu0
    %5480 = vmatprep.mubr.f32.mxu0 0.0
    %5481 = vmatmul.mubr.f32.gmra.mrb[0].mxu0 %v5295
    %v5482 = vpop.f32.mrb[0].mxu0
    %v5483 = vadd.f32 %v5194, %v5482
    %v5484 = vpop.f32.mrb[0].mxu0
    %5485 = vmatprep.mubr.f32.mxu0 0.0
    %5486 = vmatmul.mubr.f32.gmra.mrb[0].mxu0 %v5298
    %v5487 = vpop.f32.mrb[0].mxu0
    %v5488 = vadd.f32 %v5199, %v5487
    %v5489 = vpop.f32.mrb[0].mxu0
    %5490 = vmatprep.mubr.f32.mxu0 0.0
    %5491 = vmatmul.mubr.f32.gmra.mrb[0].mxu0 %v5301
    %v5492 = vpop.f32.mrb[0].mxu0
    %v5493 = vadd.f32 %v5204, %v5492
    %v5494 = vpop.f32.mrb[0].mxu0
    %5495 = vmatprep.mubr.f32.mxu0 0.0
    %5496 = vmatmul.mubr.f32.gmra.mrb[0].mxu0 %v5304
    %v5497 = vpop.f32.mrb[0].mxu0
    %v5498 = vadd.f32 %v5209, %v5497
    %v5499 = vpop.f32.mrb[0].mxu0
    %5500 = vmatprep.mubr.f32.mxu0 0.0
    %5501 = vmatmul.mubr.f32.gmra.mrb[0].mxu0 %v5307
    %v5502 = vpop.f32.mrb[0].mxu0
    %v5503 = vadd.f32 %v5214, %v5502
    %v5504 = vpop.f32.mrb[0].mxu0
    %5505 = vmatprep.mubr.f32.mxu0 0.0
    %5506 = vmatmul.mubr.f32.gmra.mrb[0].mxu0 %v5310
    %v5507 = vpop.f32.mrb[0].mxu0
    %v5508 = vadd.f32 %v5219, %v5507
    %v5509 = vpop.f32.mrb[0].mxu0
    %5510 = vmatprep.mubr.f32.mxu0 0.0
    %5511 = vmatmul.mubr.f32.gmra.mrb[0].mxu0 %v5313
    %v5512 = vpop.f32.mrb[0].mxu0
    %v5513 = vadd.f32 %v5224, %v5512
    %v5514 = vpop.f32.mrb[0].mxu0
    %5515 = vmatprep.mubr.f32.mxu0 0.0
    %5516 = vmatmul.mubr.f32.gmra.mrb[0].mxu0 %v5316
    %v5517 = vpop.f32.mrb[0].mxu0
    %v5518 = vadd.f32 %v5229, %v5517
    %v5519 = vpop.f32.mrb[0].mxu0
    %5520 = vmatprep.mubr.f32.mxu0 0.0
    %5521 = vmatmul.mubr.f32.gmra.mrb[0].mxu0 %v5319
    %v5522 = vpop.f32.mrb[0].mxu0
    %v5523 = vadd.f32 %v5234, %v5522
    %v5524 = vpop.f32.mrb[0].mxu0
    %5525 = vdwg.mxu0
    %s5526 = scalar_lea.vmem %s4, 64
    %v5527 = vld [vmem:[%s5526] sm:$0xff]
    %v5528 = vld [vmem:[%s5526 + $0x8] sm:$0xff]
    %v5529 = vld [vmem:[%s5526 + $0x10] sm:$0xff]
    %v5530 = vld [vmem:[%s5526 + $0x18] sm:$0xff]
    %v5532 = vsel %vm4947, %v4846, 0
    %v5535 = vsel %vm4947, %v4847, 0
    %v5538 = vsel %vm4947, %v4852, 0
    %v5541 = vsel %vm4947, %v4853, 0
    %v5544 = vsel %vm4947, %v4858, 0
    %v5547 = vsel %vm4947, %v4859, 0
    %v5550 = vsel %vm4947, %v4864, 0
    %v5553 = vsel %vm4947, %v4865, 0
    %v5556 = vsel %vm4947, %v4870, 0
    %v5559 = vsel %vm4947, %v4871, 0
    %v5562 = vsel %vm4947, %v4876, 0
    %v5565 = vsel %vm4947, %v4877, 0
    %v5568 = vsel %vm4947, %v4882, 0
    %v5571 = vsel %vm4947, %v4883, 0
    %v5574 = vsel %vm4947, %v4894, 0
    %v5577 = vsel %vm4947, %v4895, 0
    %v5580 = vsel %vm4947, %v4900, 0
    %v5583 = vsel %vm4947, %v4901, 0
    %v5586 = vsel %vm4947, %v4906, 0
    %v5589 = vsel %vm4947, %v4907, 0
    %v5592 = vsel %vm4947, %v4912, 0
    %v5595 = vsel %vm4947, %v4913, 0
    %v5598 = vsel %vm4947, %v4918, 0
    %v5601 = vsel %vm4947, %v4919, 0
    %v5604 = vsel %vm4947, %v4924, 0
    %v5607 = vsel %vm4947, %v4925, 0
    %v5610 = vsel %vm4947, %v4930, 0
    %v5613 = vsel %vm4947, %v4931, 0
    %5615 = vmatprep.subr.mxu0 0.0
    %5616 = vmatpush1.msra.mxu0 %v5527
    %5617 = vmatprep.subr.mxu0 0.0
    %5618 = vmatpush1.msra.mxu0 %v5528
    %5619 = vmatprep.subr.mxu0 0.0
    %5620 = vmatpush1.msra.mxu0 %v5529
    %5621 = vmatprep.subr.mxu0 0.0
    %5622 = vmatpush1.msra.mxu0 %v5530
    %5623 = vmatprep.subr.mxu0 0.0
    %5624 = vmatpush1.msra.mxu0 0.0
    %5625 = vmatprep.subr.mxu0 0.0
    %5626 = vmatpush1.msra.mxu0 0.0
    %5627 = vmatprep.subr.mxu0 0.0
    %5628 = vmatpush1.msra.mxu0 0.0
    %5629 = vmatprep.subr.mxu0 0.0
    %5630 = vmatpush1.msra.mxu0 0.0
    %5631 = vmatprep.subr.mxu0 0.0
    %5632 = vmatpush1.msra.mxu0 0.0
    %5633 = vmatprep.subr.mxu0 0.0
    %5634 = vmatpush1.msra.mxu0 0.0
    %5635 = vmatprep.subr.mxu0 0.0
    %5636 = vmatpush1.msra.mxu0 0.0
    %5637 = vmatprep.subr.mxu0 0.0
    %5638 = vmatpush1.msra.mxu0 0.0
    %5639 = vmatprep.subr.mxu0 0.0
    %5640 = vmatpush1.msra.mxu0 0.0
    %5641 = vmatprep.subr.mxu0 0.0
    %5642 = vmatpush1.msra.mxu0 0.0
    %5643 = vmatprep.subr.mxu0 0.0
    %5644 = vmatpush1.msra.mxu0 0.0
    %5645 = vmatprep.subr.mxu0 0.0
    %5646 = vmatpush1.msra.mxu0 0.0
    %5647 = vmatprep.subr.mxu0 0.0
    %5648 = vmatpush1.msra.mxu0 0.0
    %5649 = vmatprep.subr.mxu0 0.0
    %5650 = vmatpush1.msra.mxu0 0.0
    %5651 = vmatprep.subr.mxu0 0.0
    %5652 = vmatpush1.msra.mxu0 0.0
    %5653 = vmatprep.subr.mxu0 0.0
    %5654 = vmatpush1.msra.mxu0 0.0
    %5655 = vmatprep.subr.mxu0 0.0
    %5656 = vmatpush1.msra.mxu0 0.0
    %5657 = vmatprep.subr.mxu0 0.0
    %5658 = vmatpush1.msra.mxu0 0.0
    %5659 = vmatprep.subr.mxu0 0.0
    %5660 = vmatpush1.msra.mxu0 0.0
    %5661 = vmatprep.subr.mxu0 0.0
    %5662 = vmatpush1.msra.mxu0 0.0
    %5663 = vmatprep.subr.mxu0 0.0
    %5664 = vmatpush1.msra.mxu0 0.0
    %5665 = vmatprep.subr.mxu0 0.0
    %5666 = vmatpush1.msra.mxu0 0.0
    %5667 = vmatprep.subr.mxu0 0.0
    %5668 = vmatpush1.msra.mxu0 0.0
    %5669 = vmatprep.subr.mxu0 0.0
    %5670 = vmatpush1.msra.mxu0 0.0
    %5671 = vmatprep.subr.mxu0 0.0
    %5672 = vmatpush1.msra.mxu0 0.0
    %5673 = vmatprep.subr.mxu0 0.0
    %5674 = vmatpush1.msra.mxu0 0.0
    %5675 = vmatprep.subr.mxu0 0.0
    %5676 = vmatpush1.msra.mxu0 0.0
    %5677 = vmatprep.subr.mxu0 0.0
    %5678 = vmatpush1.msra.mxu0 0.0
    %5679 = vmatprep.mubr.f32.mxu0 0.0
    %5680 = vmatmul.mubr.f32.gmra.mrb[0].mxu0 %v5532
    %v5681 = vpop.f32.mrb[0].mxu0
    %v5682 = vadd.f32 0.0, %v5681
    %v5683 = vpop.f32.mrb[0].mxu0
    %5684 = vmatprep.mubr.f32.mxu0 0.0
    %5685 = vmatmul.mubr.f32.gmra.mrb[0].mxu0 %v5535
    %v5686 = vpop.f32.mrb[0].mxu0
    %v5687 = vadd.f32 0.0, %v5686
    %v5688 = vpop.f32.mrb[0].mxu0
    %5689 = vmatprep.mubr.f32.mxu0 0.0
    %5690 = vmatmul.mubr.f32.gmra.mrb[0].mxu0 %v5538
    %v5691 = vpop.f32.mrb[0].mxu0
    %v5692 = vadd.f32 0.0, %v5691
    %v5693 = vpop.f32.mrb[0].mxu0
    %5694 = vmatprep.mubr.f32.mxu0 0.0
    %5695 = vmatmul.mubr.f32.gmra.mrb[0].mxu0 %v5541
    %v5696 = vpop.f32.mrb[0].mxu0
    %v5697 = vadd.f32 0.0, %v5696
    %v5698 = vpop.f32.mrb[0].mxu0
    %5699 = vmatprep.mubr.f32.mxu0 0.0
    %5700 = vmatmul.mubr.f32.gmra.mrb[0].mxu0 %v5544
    %v5701 = vpop.f32.mrb[0].mxu0
    %v5702 = vadd.f32 0.0, %v5701
    %v5703 = vpop.f32.mrb[0].mxu0
    %5704 = vmatprep.mubr.f32.mxu0 0.0
    %5705 = vmatmul.mubr.f32.gmra.mrb[0].mxu0 %v5547
    %v5706 = vpop.f32.mrb[0].mxu0
    %v5707 = vadd.f32 0.0, %v5706
    %v5708 = vpop.f32.mrb[0].mxu0
    %5709 = vmatprep.mubr.f32.mxu0 0.0
    %5710 = vmatmul.mubr.f32.gmra.mrb[0].mxu0 %v5550
    %v5711 = vpop.f32.mrb[0].mxu0
    %v5712 = vadd.f32 0.0, %v5711
    %v5713 = vpop.f32.mrb[0].mxu0
    %5714 = vmatprep.mubr.f32.mxu0 0.0
    %5715 = vmatmul.mubr.f32.gmra.mrb[0].mxu0 %v5553
    %v5716 = vpop.f32.mrb[0].mxu0
    %v5717 = vadd.f32 0.0, %v5716
    %v5718 = vpop.f32.mrb[0].mxu0
    %5719 = vmatprep.mubr.f32.mxu0 0.0
    %5720 = vmatmul.mubr.f32.gmra.mrb[0].mxu0 %v5556
    %v5721 = vpop.f32.mrb[0].mxu0
    %v5722 = vadd.f32 0.0, %v5721
    %v5723 = vpop.f32.mrb[0].mxu0
    %5724 = vmatprep.mubr.f32.mxu0 0.0
    %5725 = vmatmul.mubr.f32.gmra.mrb[0].mxu0 %v5559
    %v5726 = vpop.f32.mrb[0].mxu0
    %v5727 = vadd.f32 0.0, %v5726
    %v5728 = vpop.f32.mrb[0].mxu0
    %5729 = vmatprep.mubr.f32.mxu0 0.0
    %5730 = vmatmul.mubr.f32.gmra.mrb[0].mxu0 %v5562
    %v5731 = vpop.f32.mrb[0].mxu0
    %v5732 = vadd.f32 0.0, %v5731
    %v5733 = vpop.f32.mrb[0].mxu0
    %5734 = vmatprep.mubr.f32.mxu0 0.0
    %5735 = vmatmul.mubr.f32.gmra.mrb[0].mxu0 %v5565
    %v5736 = vpop.f32.mrb[0].mxu0
    %v5737 = vadd.f32 0.0, %v5736
    %v5738 = vpop.f32.mrb[0].mxu0
    %5739 = vmatprep.mubr.f32.mxu0 0.0
    %5740 = vmatmul.mubr.f32.gmra.mrb[0].mxu0 %v5568
    %v5741 = vpop.f32.mrb[0].mxu0
    %v5742 = vadd.f32 0.0, %v5741
    %v5743 = vpop.f32.mrb[0].mxu0
    %5744 = vmatprep.mubr.f32.mxu0 0.0
    %5745 = vmatmul.mubr.f32.gmra.mrb[0].mxu0 %v5571
    %v5746 = vpop.f32.mrb[0].mxu0
    %v5747 = vadd.f32 0.0, %v5746
    %v5748 = vpop.f32.mrb[0].mxu0
    %5749 = vmatprep.mubr.f32.mxu0 0.0
    %5750 = vmatmul.mubr.f32.gmra.mrb[0].mxu0 %v5574
    %v5751 = vpop.f32.mrb[0].mxu0
    %v5752 = vadd.f32 0.0, %v5751
    %v5753 = vpop.f32.mrb[0].mxu0
    %5754 = vmatprep.mubr.f32.mxu0 0.0
    %5755 = vmatmul.mubr.f32.gmra.mrb[0].mxu0 %v5577
    %v5756 = vpop.f32.mrb[0].mxu0
    %v5757 = vadd.f32 0.0, %v5756
    %v5758 = vpop.f32.mrb[0].mxu0
    %5759 = vmatprep.mubr.f32.mxu0 0.0
    %5760 = vmatmul.mubr.f32.gmra.mrb[0].mxu0 %v5580
    %v5761 = vpop.f32.mrb[0].mxu0
    %v5762 = vadd.f32 0.0, %v5761
    %v5763 = vpop.f32.mrb[0].mxu0
    %5764 = vmatprep.mubr.f32.mxu0 0.0
    %5765 = vmatmul.mubr.f32.gmra.mrb[0].mxu0 %v5583
    %v5766 = vpop.f32.mrb[0].mxu0
    %v5767 = vadd.f32 0.0, %v5766
    %v5768 = vpop.f32.mrb[0].mxu0
    %5769 = vmatprep.mubr.f32.mxu0 0.0
    %5770 = vmatmul.mubr.f32.gmra.mrb[0].mxu0 %v5586
    %v5771 = vpop.f32.mrb[0].mxu0
    %v5772 = vadd.f32 0.0, %v5771
    %v5773 = vpop.f32.mrb[0].mxu0
    %5774 = vmatprep.mubr.f32.mxu0 0.0
    %5775 = vmatmul.mubr.f32.gmra.mrb[0].mxu0 %v5589
    %v5776 = vpop.f32.mrb[0].mxu0
    %v5777 = vadd.f32 0.0, %v5776
    %v5778 = vpop.f32.mrb[0].mxu0
    %5779 = vmatprep.mubr.f32.mxu0 0.0
    %5780 = vmatmul.mubr.f32.gmra.mrb[0].mxu0 %v5592
    %v5781 = vpop.f32.mrb[0].mxu0
    %v5782 = vadd.f32 0.0, %v5781
    %v5783 = vpop.f32.mrb[0].mxu0
    %5784 = vmatprep.mubr.f32.mxu0 0.0
    %5785 = vmatmul.mubr.f32.gmra.mrb[0].mxu0 %v5595
    %v5786 = vpop.f32.mrb[0].mxu0
    %v5787 = vadd.f32 0.0, %v5786
    %v5788 = vpop.f32.mrb[0].mxu0
    %5789 = vmatprep.mubr.f32.mxu0 0.0
    %5790 = vmatmul.mubr.f32.gmra.mrb[0].mxu0 %v5598
    %v5791 = vpop.f32.mrb[0].mxu0
    %v5792 = vadd.f32 0.0, %v5791
    %v5793 = vpop.f32.mrb[0].mxu0
    %5794 = vmatprep.mubr.f32.mxu0 0.0
    %5795 = vmatmul.mubr.f32.gmra.mrb[0].mxu0 %v5601
    %v5796 = vpop.f32.mrb[0].mxu0
    %v5797 = vadd.f32 0.0, %v5796
    %v5798 = vpop.f32.mrb[0].mxu0
    %5799 = vmatprep.mubr.f32.mxu0 0.0
    %5800 = vmatmul.mubr.f32.gmra.mrb[0].mxu0 %v5604
    %v5801 = vpop.f32.mrb[0].mxu0
    %v5802 = vadd.f32 0.0, %v5801
    %v5803 = vpop.f32.mrb[0].mxu0
    %5804 = vmatprep.mubr.f32.mxu0 0.0
    %5805 = vmatmul.mubr.f32.gmra.mrb[0].mxu0 %v5607
    %v5806 = vpop.f32.mrb[0].mxu0
    %v5807 = vadd.f32 0.0, %v5806
    %v5808 = vpop.f32.mrb[0].mxu0
    %5809 = vmatprep.mubr.f32.mxu0 0.0
    %5810 = vmatmul.mubr.f32.gmra.mrb[0].mxu0 %v5610
    %v5811 = vpop.f32.mrb[0].mxu0
    %v5812 = vadd.f32 0.0, %v5811
    %v5813 = vpop.f32.mrb[0].mxu0
    %5814 = vmatprep.mubr.f32.mxu0 0.0
    %5815 = vmatmul.mubr.f32.gmra.mrb[0].mxu0 %v5613
    %v5816 = vpop.f32.mrb[0].mxu0
    %v5817 = vadd.f32 0.0, %v5816
    %v5818 = vpop.f32.mrb[0].mxu0
    %5819 = vdwg.mxu0
    %v5820 = vadd.f32 %v5388, %v5682
    %v5821 = vadd.f32 %v5393, %v5687
    %v5822 = vadd.f32 %v5398, %v5692
    %v5823 = vadd.f32 %v5403, %v5697
    %v5824 = vadd.f32 %v5408, %v5702
    %v5825 = vadd.f32 %v5413, %v5707
    %v5826 = vadd.f32 %v5418, %v5712
    %v5827 = vadd.f32 %v5423, %v5717
    %v5828 = vadd.f32 %v5428, %v5722
    %v5829 = vadd.f32 %v5433, %v5727
    %v5830 = vadd.f32 %v5438, %v5732
    %v5831 = vadd.f32 %v5443, %v5737
    %v5832 = vadd.f32 %v5448, %v5742
    %v5833 = vadd.f32 %v5453, %v5747
    %v5834 = vadd.f32 %v5458, %v5752
    %v5835 = vadd.f32 %v5463, %v5757
    %v5836 = vadd.f32 %v5468, %v5762
    %v5837 = vadd.f32 %v5473, %v5767
    %v5838 = vadd.f32 %v5478, %v5772
    %v5839 = vadd.f32 %v5483, %v5777
    %v5840 = vadd.f32 %v5488, %v5782
    %v5841 = vadd.f32 %v5493, %v5787
    %v5842 = vadd.f32 %v5498, %v5792
    %v5843 = vadd.f32 %v5503, %v5797
    %v5844 = vadd.f32 %v5508, %v5802
    %v5845 = vadd.f32 %v5513, %v5807
    %v5846 = vadd.f32 %v5518, %v5812
    %v5847 = vadd.f32 %v5523, %v5817
    %s5848 = scalar_lea.vmem %s4, 96
    %v5849 = vld [vmem:[%s5848] sm:$0xff]
    %v5850 = vld [vmem:[%s5848 + $0x8] sm:$0xff]
    %v5851 = vld [vmem:[%s5848 + $0x10] sm:$0xff]
    %v5852 = vld [vmem:[%s5848 + $0x18] sm:$0xff]
    %v5854 = vsel %vm4947, %v4884, 0
    %v5857 = vsel %vm4947, %v4885, 0
    %v5860 = vsel %vm4947, %v4932, 0
    %v5863 = vsel %vm4947, %v4933, 0
    %5865 = vmatprep.subr.mxu0 0.0
    %5866 = vmatpush1.msra.mxu0 %v5849
    %5867 = vmatprep.subr.mxu0 0.0
    %5868 = vmatpush1.msra.mxu0 %v5850
    %5869 = vmatprep.subr.mxu0 0.0
    %5870 = vmatpush1.msra.mxu0 %v5851
    %5871 = vmatprep.subr.mxu0 0.0
    %5872 = vmatpush1.msra.mxu0 %v5852
    %5873 = vmatprep.subr.mxu0 0.0
    %5874 = vmatpush1.msra.mxu0 0.0
    %5875 = vmatprep.subr.mxu0 0.0
    %5876 = vmatpush1.msra.mxu0 0.0
    %5877 = vmatprep.subr.mxu0 0.0
    %5878 = vmatpush1.msra.mxu0 0.0
    %5879 = vmatprep.subr.mxu0 0.0
    %5880 = vmatpush1.msra.mxu0 0.0
    %5881 = vmatprep.subr.mxu0 0.0
    %5882 = vmatpush1.msra.mxu0 0.0
    %5883 = vmatprep.subr.mxu0 0.0
    %5884 = vmatpush1.msra.mxu0 0.0
    %5885 = vmatprep.subr.mxu0 0.0
    %5886 = vmatpush1.msra.mxu0 0.0
    %5887 = vmatprep.subr.mxu0 0.0
    %5888 = vmatpush1.msra.mxu0 0.0
    %5889 = vmatprep.subr.mxu0 0.0
    %5890 = vmatpush1.msra.mxu0 0.0
    %5891 = vmatprep.subr.mxu0 0.0
    %5892 = vmatpush1.msra.mxu0 0.0
    %5893 = vmatprep.subr.mxu0 0.0
    %5894 = vmatpush1.msra.mxu0 0.0
    %5895 = vmatprep.subr.mxu0 0.0
    %5896 = vmatpush1.msra.mxu0 0.0
    %5897 = vmatprep.subr.mxu0 0.0
    %5898 = vmatpush1.msra.mxu0 0.0
    %5899 = vmatprep.subr.mxu0 0.0
    %5900 = vmatpush1.msra.mxu0 0.0
    %5901 = vmatprep.subr.mxu0 0.0
    %5902 = vmatpush1.msra.mxu0 0.0
    %5903 = vmatprep.subr.mxu0 0.0
    %5904 = vmatpush1.msra.mxu0 0.0
    %5905 = vmatprep.subr.mxu0 0.0
    %5906 = vmatpush1.msra.mxu0 0.0
    %5907 = vmatprep.subr.mxu0 0.0
    %5908 = vmatpush1.msra.mxu0 0.0
    %5909 = vmatprep.subr.mxu0 0.0
    %5910 = vmatpush1.msra.mxu0 0.0
    %5911 = vmatprep.subr.mxu0 0.0
    %5912 = vmatpush1.msra.mxu0 0.0
    %5913 = vmatprep.subr.mxu0 0.0
    %5914 = vmatpush1.msra.mxu0 0.0
    %5915 = vmatprep.subr.mxu0 0.0
    %5916 = vmatpush1.msra.mxu0 0.0
    %5917 = vmatprep.subr.mxu0 0.0
    %5918 = vmatpush1.msra.mxu0 0.0
    %5919 = vmatprep.subr.mxu0 0.0
    %5920 = vmatpush1.msra.mxu0 0.0
    %5921 = vmatprep.subr.mxu0 0.0
    %5922 = vmatpush1.msra.mxu0 0.0
    %5923 = vmatprep.subr.mxu0 0.0
    %5924 = vmatpush1.msra.mxu0 0.0
    %5925 = vmatprep.subr.mxu0 0.0
    %5926 = vmatpush1.msra.mxu0 0.0
    %5927 = vmatprep.subr.mxu0 0.0
    %5928 = vmatpush1.msra.mxu0 0.0
    %5929 = vmatprep.mubr.f32.mxu0 0.0
    %5930 = vmatmul.mubr.f32.gmra.mrb[0].mxu0 %v5244
    %v5931 = vpop.f32.mrb[0].mxu0
    %v5932 = vadd.f32 0.0, %v5931
    %v5933 = vpop.f32.mrb[0].mxu0
    %5934 = vmatprep.mubr.f32.mxu0 0.0
    %5935 = vmatmul.mubr.f32.gmra.mrb[0].mxu0 %v5247
    %v5936 = vpop.f32.mrb[0].mxu0
    %v5937 = vadd.f32 0.0, %v5936
    %v5938 = vpop.f32.mrb[0].mxu0
    %5939 = vmatprep.mubr.f32.mxu0 0.0
    %5940 = vmatmul.mubr.f32.gmra.mrb[0].mxu0 %v5250
    %v5941 = vpop.f32.mrb[0].mxu0
    %v5942 = vadd.f32 0.0, %v5941
    %v5943 = vpop.f32.mrb[0].mxu0
    %5944 = vmatprep.mubr.f32.mxu0 0.0
    %5945 = vmatmul.mubr.f32.gmra.mrb[0].mxu0 %v5253
    %v5946 = vpop.f32.mrb[0].mxu0
    %v5947 = vadd.f32 0.0, %v5946
    %v5948 = vpop.f32.mrb[0].mxu0
    %5949 = vmatprep.mubr.f32.mxu0 0.0
    %5950 = vmatmul.mubr.f32.gmra.mrb[0].mxu0 %v5256
    %v5951 = vpop.f32.mrb[0].mxu0
    %v5952 = vadd.f32 0.0, %v5951
    %v5953 = vpop.f32.mrb[0].mxu0
    %5954 = vmatprep.mubr.f32.mxu0 0.0
    %5955 = vmatmul.mubr.f32.gmra.mrb[0].mxu0 %v5259
    %v5956 = vpop.f32.mrb[0].mxu0
    %v5957 = vadd.f32 0.0, %v5956
    %v5958 = vpop.f32.mrb[0].mxu0
    %5959 = vmatprep.mubr.f32.mxu0 0.0
    %5960 = vmatmul.mubr.f32.gmra.mrb[0].mxu0 %v5262
    %v5961 = vpop.f32.mrb[0].mxu0
    %v5962 = vadd.f32 0.0, %v5961
    %v5963 = vpop.f32.mrb[0].mxu0
    %5964 = vmatprep.mubr.f32.mxu0 0.0
    %5965 = vmatmul.mubr.f32.gmra.mrb[0].mxu0 %v5265
    %v5966 = vpop.f32.mrb[0].mxu0
    %v5967 = vadd.f32 0.0, %v5966
    %v5968 = vpop.f32.mrb[0].mxu0
    %5969 = vmatprep.mubr.f32.mxu0 0.0
    %5970 = vmatmul.mubr.f32.gmra.mrb[0].mxu0 %v5268
    %v5971 = vpop.f32.mrb[0].mxu0
    %v5972 = vadd.f32 0.0, %v5971
    %v5973 = vpop.f32.mrb[0].mxu0
    %5974 = vmatprep.mubr.f32.mxu0 0.0
    %5975 = vmatmul.mubr.f32.gmra.mrb[0].mxu0 %v5271
    %v5976 = vpop.f32.mrb[0].mxu0
    %v5977 = vadd.f32 0.0, %v5976
    %v5978 = vpop.f32.mrb[0].mxu0
    %5979 = vmatprep.mubr.f32.mxu0 0.0
    %5980 = vmatmul.mubr.f32.gmra.mrb[0].mxu0 %v5274
    %v5981 = vpop.f32.mrb[0].mxu0
    %v5982 = vadd.f32 0.0, %v5981
    %v5983 = vpop.f32.mrb[0].mxu0
    %5984 = vmatprep.mubr.f32.mxu0 0.0
    %5985 = vmatmul.mubr.f32.gmra.mrb[0].mxu0 %v5277
    %v5986 = vpop.f32.mrb[0].mxu0
    %v5987 = vadd.f32 0.0, %v5986
    %v5988 = vpop.f32.mrb[0].mxu0
    %5989 = vmatprep.mubr.f32.mxu0 0.0
    %5990 = vmatmul.mubr.f32.gmra.mrb[0].mxu0 %v5854
    %v5991 = vpop.f32.mrb[0].mxu0
    %v5992 = vadd.f32 0.0, %v5991
    %v5993 = vpop.f32.mrb[0].mxu0
    %5994 = vmatprep.mubr.f32.mxu0 0.0
    %5995 = vmatmul.mubr.f32.gmra.mrb[0].mxu0 %v5857
    %v5996 = vpop.f32.mrb[0].mxu0
    %v5997 = vadd.f32 0.0, %v5996
    %v5998 = vpop.f32.mrb[0].mxu0
    %5999 = vmatprep.mubr.f32.mxu0 0.0
    %6000 = vmatmul.mubr.f32.gmra.mrb[0].mxu0 %v5286
    %v6001 = vpop.f32.mrb[0].mxu0
    %v6002 = vadd.f32 0.0, %v6001
    %v6003 = vpop.f32.mrb[0].mxu0
    %6004 = vmatprep.mubr.f32.mxu0 0.0
    %6005 = vmatmul.mubr.f32.gmra.mrb[0].mxu0 %v5289
    %v6006 = vpop.f32.mrb[0].mxu0
    %v6007 = vadd.f32 0.0, %v6006
    %v6008 = vpop.f32.mrb[0].mxu0
    %6009 = vmatprep.mubr.f32.mxu0 0.0
    %6010 = vmatmul.mubr.f32.gmra.mrb[0].mxu0 %v5292
    %v6011 = vpop.f32.mrb[0].mxu0
    %v6012 = vadd.f32 0.0, %v6011
    %v6013 = vpop.f32.mrb[0].mxu0
    %6014 = vmatprep.mubr.f32.mxu0 0.0
    %6015 = vmatmul.mubr.f32.gmra.mrb[0].mxu0 %v5295
    %v6016 = vpop.f32.mrb[0].mxu0
    %v6017 = vadd.f32 0.0, %v6016
    %v6018 = vpop.f32.mrb[0].mxu0
    %6019 = vmatprep.mubr.f32.mxu0 0.0
    %6020 = vmatmul.mubr.f32.gmra.mrb[0].mxu0 %v5298
    %v6021 = vpop.f32.mrb[0].mxu0
    %v6022 = vadd.f32 0.0, %v6021
    %v6023 = vpop.f32.mrb[0].mxu0
    %6024 = vmatprep.mubr.f32.mxu0 0.0
    %6025 = vmatmul.mubr.f32.gmra.mrb[0].mxu0 %v5301
    %v6026 = vpop.f32.mrb[0].mxu0
    %v6027 = vadd.f32 0.0, %v6026
    %v6028 = vpop.f32.mrb[0].mxu0
    %6029 = vmatprep.mubr.f32.mxu0 0.0
    %6030 = vmatmul.mubr.f32.gmra.mrb[0].mxu0 %v5304
    %v6031 = vpop.f32.mrb[0].mxu0
    %v6032 = vadd.f32 0.0, %v6031
    %v6033 = vpop.f32.mrb[0].mxu0
    %6034 = vmatprep.mubr.f32.mxu0 0.0
    %6035 = vmatmul.mubr.f32.gmra.mrb[0].mxu0 %v5307
    %v6036 = vpop.f32.mrb[0].mxu0
    %v6037 = vadd.f32 0.0, %v6036
    %v6038 = vpop.f32.mrb[0].mxu0
    %6039 = vmatprep.mubr.f32.mxu0 0.0
    %6040 = vmatmul.mubr.f32.gmra.mrb[0].mxu0 %v5310
    %v6041 = vpop.f32.mrb[0].mxu0
    %v6042 = vadd.f32 0.0, %v6041
    %v6043 = vpop.f32.mrb[0].mxu0
    %6044 = vmatprep.mubr.f32.mxu0 0.0
    %6045 = vmatmul.mubr.f32.gmra.mrb[0].mxu0 %v5313
    %v6046 = vpop.f32.mrb[0].mxu0
    %v6047 = vadd.f32 0.0, %v6046
    %v6048 = vpop.f32.mrb[0].mxu0
    %6049 = vmatprep.mubr.f32.mxu0 0.0
    %6050 = vmatmul.mubr.f32.gmra.mrb[0].mxu0 %v5316
    %v6051 = vpop.f32.mrb[0].mxu0
    %v6052 = vadd.f32 0.0, %v6051
    %v6053 = vpop.f32.mrb[0].mxu0
    %6054 = vmatprep.mubr.f32.mxu0 0.0
    %6055 = vmatmul.mubr.f32.gmra.mrb[0].mxu0 %v5319
    %v6056 = vpop.f32.mrb[0].mxu0
    %v6057 = vadd.f32 0.0, %v6056
    %v6058 = vpop.f32.mrb[0].mxu0
    %6059 = vmatprep.mubr.f32.mxu0 0.0
    %6060 = vmatmul.mubr.f32.gmra.mrb[0].mxu0 %v5860
    %v6061 = vpop.f32.mrb[0].mxu0
    %v6062 = vadd.f32 0.0, %v6061
    %v6063 = vpop.f32.mrb[0].mxu0
    %6064 = vmatprep.mubr.f32.mxu0 0.0
    %6065 = vmatmul.mubr.f32.gmra.mrb[0].mxu0 %v5863
    %v6066 = vpop.f32.mrb[0].mxu0
    %v6067 = vadd.f32 0.0, %v6066
    %v6068 = vpop.f32.mrb[0].mxu0
    %6069 = vdwg.mxu0
    %v6070 = vadd.f32 %v5820, %v5932
    %v6071 = vadd.f32 %v5821, %v5937
    %v6072 = vadd.f32 %v5822, %v5942
    %v6073 = vadd.f32 %v5823, %v5947
    %v6074 = vadd.f32 %v5824, %v5952
    %v6075 = vadd.f32 %v5825, %v5957
    %v6076 = vadd.f32 %v5826, %v5962
    %v6077 = vadd.f32 %v5827, %v5967
    %v6078 = vadd.f32 %v5828, %v5972
    %v6079 = vadd.f32 %v5829, %v5977
    %v6080 = vadd.f32 %v5830, %v5982
    %v6081 = vadd.f32 %v5831, %v5987
    %v6082 = vadd.f32 %v5832, %v5992
    %v6083 = vadd.f32 %v5833, %v5997
    %v6084 = vadd.f32 %v5834, %v6002
    %v6085 = vadd.f32 %v5835, %v6007
    %v6086 = vadd.f32 %v5836, %v6012
    %v6087 = vadd.f32 %v5837, %v6017
    %v6088 = vadd.f32 %v5838, %v6022
    %v6089 = vadd.f32 %v5839, %v6027
    %v6090 = vadd.f32 %v5840, %v6032
    %v6091 = vadd.f32 %v5841, %v6037
    %v6092 = vadd.f32 %v5842, %v6042
    %v6093 = vadd.f32 %v5843, %v6047
    %v6094 = vadd.f32 %v5844, %v6052
    %v6095 = vadd.f32 %v5845, %v6057
    %v6096 = vadd.f32 %v5846, %v6062
    %v6097 = vadd.f32 %v5847, %v6067
    %s6098 = scalar_lea.vmem %s4, 128
    %v6099 = vld [vmem:[%s6098] sm:$0xff]
    %v6100 = vld [vmem:[%s6098 + $0x8] sm:$0xff]
    %v6101 = vld [vmem:[%s6098 + $0x10] sm:$0xff]
    %v6102 = vld [vmem:[%s6098 + $0x18] sm:$0xff]
    %v6104 = vsel %vm4947, %v4886, 0
    %v6107 = vsel %vm4947, %v4887, 0
    %v6110 = vsel %vm4947, %v4934, 0
    %v6113 = vsel %vm4947, %v4935, 0
    %6115 = vmatprep.subr.mxu0 0.0
    %6116 = vmatpush1.msra.mxu0 %v6099
    %6117 = vmatprep.subr.mxu0 0.0
    %6118 = vmatpush1.msra.mxu0 %v6100
    %6119 = vmatprep.subr.mxu0 0.0
    %6120 = vmatpush1.msra.mxu0 %v6101
    %6121 = vmatprep.subr.mxu0 0.0
    %6122 = vmatpush1.msra.mxu0 %v6102
    %6123 = vmatprep.subr.mxu0 0.0
    %6124 = vmatpush1.msra.mxu0 0.0
    %6125 = vmatprep.subr.mxu0 0.0
    %6126 = vmatpush1.msra.mxu0 0.0
    %6127 = vmatprep.subr.mxu0 0.0
    %6128 = vmatpush1.msra.mxu0 0.0
    %6129 = vmatprep.subr.mxu0 0.0
    %6130 = vmatpush1.msra.mxu0 0.0
    %6131 = vmatprep.subr.mxu0 0.0
    %6132 = vmatpush1.msra.mxu0 0.0
    %6133 = vmatprep.subr.mxu0 0.0
    %6134 = vmatpush1.msra.mxu0 0.0
    %6135 = vmatprep.subr.mxu0 0.0
    %6136 = vmatpush1.msra.mxu0 0.0
    %6137 = vmatprep.subr.mxu0 0.0
    %6138 = vmatpush1.msra.mxu0 0.0
    %6139 = vmatprep.subr.mxu0 0.0
    %6140 = vmatpush1.msra.mxu0 0.0
    %6141 = vmatprep.subr.mxu0 0.0
    %6142 = vmatpush1.msra.mxu0 0.0
    %6143 = vmatprep.subr.mxu0 0.0
    %6144 = vmatpush1.msra.mxu0 0.0
    %6145 = vmatprep.subr.mxu0 0.0
    %6146 = vmatpush1.msra.mxu0 0.0
    %6147 = vmatprep.subr.mxu0 0.0
    %6148 = vmatpush1.msra.mxu0 0.0
    %6149 = vmatprep.subr.mxu0 0.0
    %6150 = vmatpush1.msra.mxu0 0.0
    %6151 = vmatprep.subr.mxu0 0.0
    %6152 = vmatpush1.msra.mxu0 0.0
    %6153 = vmatprep.subr.mxu0 0.0
    %6154 = vmatpush1.msra.mxu0 0.0
    %6155 = vmatprep.subr.mxu0 0.0
    %6156 = vmatpush1.msra.mxu0 0.0
    %6157 = vmatprep.subr.mxu0 0.0
    %6158 = vmatpush1.msra.mxu0 0.0
    %6159 = vmatprep.subr.mxu0 0.0
    %6160 = vmatpush1.msra.mxu0 0.0
    %6161 = vmatprep.subr.mxu0 0.0
    %6162 = vmatpush1.msra.mxu0 0.0
    %6163 = vmatprep.subr.mxu0 0.0
    %6164 = vmatpush1.msra.mxu0 0.0
    %6165 = vmatprep.subr.mxu0 0.0
    %6166 = vmatpush1.msra.mxu0 0.0
    %6167 = vmatprep.subr.mxu0 0.0
    %6168 = vmatpush1.msra.mxu0 0.0
    %6169 = vmatprep.subr.mxu0 0.0
    %6170 = vmatpush1.msra.mxu0 0.0
    %6171 = vmatprep.subr.mxu0 0.0
    %6172 = vmatpush1.msra.mxu0 0.0
    %6173 = vmatprep.subr.mxu0 0.0
    %6174 = vmatpush1.msra.mxu0 0.0
    %6175 = vmatprep.subr.mxu0 0.0
    %6176 = vmatpush1.msra.mxu0 0.0
    %6177 = vmatprep.subr.mxu0 0.0
    %6178 = vmatpush1.msra.mxu0 0.0
    %6179 = vmatprep.mubr.f32.mxu0 0.0
    %6180 = vmatmul.mubr.f32.gmra.mrb[0].mxu0 %v4955
    %v6181 = vpop.f32.mrb[0].mxu0
    %v6182 = vadd.f32 0.0, %v6181
    %v6183 = vpop.f32.mrb[0].mxu0
    %6184 = vmatprep.mubr.f32.mxu0 0.0
    %6185 = vmatmul.mubr.f32.gmra.mrb[0].mxu0 %v4958
    %v6186 = vpop.f32.mrb[0].mxu0
    %v6187 = vadd.f32 0.0, %v6186
    %v6188 = vpop.f32.mrb[0].mxu0
    %6189 = vmatprep.mubr.f32.mxu0 0.0
    %6190 = vmatmul.mubr.f32.gmra.mrb[0].mxu0 %v4961
    %v6191 = vpop.f32.mrb[0].mxu0
    %v6192 = vadd.f32 0.0, %v6191
    %v6193 = vpop.f32.mrb[0].mxu0
    %6194 = vmatprep.mubr.f32.mxu0 0.0
    %6195 = vmatmul.mubr.f32.gmra.mrb[0].mxu0 %v4964
    %v6196 = vpop.f32.mrb[0].mxu0
    %v6197 = vadd.f32 0.0, %v6196
    %v6198 = vpop.f32.mrb[0].mxu0
    %6199 = vmatprep.mubr.f32.mxu0 0.0
    %6200 = vmatmul.mubr.f32.gmra.mrb[0].mxu0 %v4967
    %v6201 = vpop.f32.mrb[0].mxu0
    %v6202 = vadd.f32 0.0, %v6201
    %v6203 = vpop.f32.mrb[0].mxu0
    %6204 = vmatprep.mubr.f32.mxu0 0.0
    %6205 = vmatmul.mubr.f32.gmra.mrb[0].mxu0 %v4970
    %v6206 = vpop.f32.mrb[0].mxu0
    %v6207 = vadd.f32 0.0, %v6206
    %v6208 = vpop.f32.mrb[0].mxu0
    %6209 = vmatprep.mubr.f32.mxu0 0.0
    %6210 = vmatmul.mubr.f32.gmra.mrb[0].mxu0 %v4973
    %v6211 = vpop.f32.mrb[0].mxu0
    %v6212 = vadd.f32 0.0, %v6211
    %v6213 = vpop.f32.mrb[0].mxu0
    %6214 = vmatprep.mubr.f32.mxu0 0.0
    %6215 = vmatmul.mubr.f32.gmra.mrb[0].mxu0 %v4976
    %v6216 = vpop.f32.mrb[0].mxu0
    %v6217 = vadd.f32 0.0, %v6216
    %v6218 = vpop.f32.mrb[0].mxu0
    %6219 = vmatprep.mubr.f32.mxu0 0.0
    %6220 = vmatmul.mubr.f32.gmra.mrb[0].mxu0 %v4979
    %v6221 = vpop.f32.mrb[0].mxu0
    %v6222 = vadd.f32 0.0, %v6221
    %v6223 = vpop.f32.mrb[0].mxu0
    %6224 = vmatprep.mubr.f32.mxu0 0.0
    %6225 = vmatmul.mubr.f32.gmra.mrb[0].mxu0 %v4982
    %v6226 = vpop.f32.mrb[0].mxu0
    %v6227 = vadd.f32 0.0, %v6226
    %v6228 = vpop.f32.mrb[0].mxu0
    %6229 = vmatprep.mubr.f32.mxu0 0.0
    %6230 = vmatmul.mubr.f32.gmra.mrb[0].mxu0 %v4985
    %v6231 = vpop.f32.mrb[0].mxu0
    %v6232 = vadd.f32 0.0, %v6231
    %v6233 = vpop.f32.mrb[0].mxu0
    %6234 = vmatprep.mubr.f32.mxu0 0.0
    %6235 = vmatmul.mubr.f32.gmra.mrb[0].mxu0 %v4988
    %v6236 = vpop.f32.mrb[0].mxu0
    %v6237 = vadd.f32 0.0, %v6236
    %v6238 = vpop.f32.mrb[0].mxu0
    %6239 = vmatprep.mubr.f32.mxu0 0.0
    %6240 = vmatmul.mubr.f32.gmra.mrb[0].mxu0 %v6104
    %v6241 = vpop.f32.mrb[0].mxu0
    %v6242 = vadd.f32 0.0, %v6241
    %v6243 = vpop.f32.mrb[0].mxu0
    %6244 = vmatprep.mubr.f32.mxu0 0.0
    %6245 = vmatmul.mubr.f32.gmra.mrb[0].mxu0 %v6107
    %v6246 = vpop.f32.mrb[0].mxu0
    %v6247 = vadd.f32 0.0, %v6246
    %v6248 = vpop.f32.mrb[0].mxu0
    %6249 = vmatprep.mubr.f32.mxu0 0.0
    %6250 = vmatmul.mubr.f32.gmra.mrb[0].mxu0 %v4997
    %v6251 = vpop.f32.mrb[0].mxu0
    %v6252 = vadd.f32 0.0, %v6251
    %v6253 = vpop.f32.mrb[0].mxu0
    %6254 = vmatprep.mubr.f32.mxu0 0.0
    %6255 = vmatmul.mubr.f32.gmra.mrb[0].mxu0 %v5000
    %v6256 = vpop.f32.mrb[0].mxu0
    %v6257 = vadd.f32 0.0, %v6256
    %v6258 = vpop.f32.mrb[0].mxu0
    %6259 = vmatprep.mubr.f32.mxu0 0.0
    %6260 = vmatmul.mubr.f32.gmra.mrb[0].mxu0 %v5003
    %v6261 = vpop.f32.mrb[0].mxu0
    %v6262 = vadd.f32 0.0, %v6261
    %v6263 = vpop.f32.mrb[0].mxu0
    %6264 = vmatprep.mubr.f32.mxu0 0.0
    %6265 = vmatmul.mubr.f32.gmra.mrb[0].mxu0 %v5006
    %v6266 = vpop.f32.mrb[0].mxu0
    %v6267 = vadd.f32 0.0, %v6266
    %v6268 = vpop.f32.mrb[0].mxu0
    %6269 = vmatprep.mubr.f32.mxu0 0.0
    %6270 = vmatmul.mubr.f32.gmra.mrb[0].mxu0 %v5009
    %v6271 = vpop.f32.mrb[0].mxu0
    %v6272 = vadd.f32 0.0, %v6271
    %v6273 = vpop.f32.mrb[0].mxu0
    %6274 = vmatprep.mubr.f32.mxu0 0.0
    %6275 = vmatmul.mubr.f32.gmra.mrb[0].mxu0 %v5012
    %v6276 = vpop.f32.mrb[0].mxu0
    %v6277 = vadd.f32 0.0, %v6276
    %v6278 = vpop.f32.mrb[0].mxu0
    %6279 = vmatprep.mubr.f32.mxu0 0.0
    %6280 = vmatmul.mubr.f32.gmra.mrb[0].mxu0 %v5015
    %v6281 = vpop.f32.mrb[0].mxu0
    %v6282 = vadd.f32 0.0, %v6281
    %v6283 = vpop.f32.mrb[0].mxu0
    %6284 = vmatprep.mubr.f32.mxu0 0.0
    %6285 = vmatmul.mubr.f32.gmra.mrb[0].mxu0 %v5018
    %v6286 = vpop.f32.mrb[0].mxu0
    %v6287 = vadd.f32 0.0, %v6286
    %v6288 = vpop.f32.mrb[0].mxu0
    %6289 = vmatprep.mubr.f32.mxu0 0.0
    %6290 = vmatmul.mubr.f32.gmra.mrb[0].mxu0 %v5021
    %v6291 = vpop.f32.mrb[0].mxu0
    %v6292 = vadd.f32 0.0, %v6291
    %v6293 = vpop.f32.mrb[0].mxu0
    %6294 = vmatprep.mubr.f32.mxu0 0.0
    %6295 = vmatmul.mubr.f32.gmra.mrb[0].mxu0 %v5024
    %v6296 = vpop.f32.mrb[0].mxu0
    %v6297 = vadd.f32 0.0, %v6296
    %v6298 = vpop.f32.mrb[0].mxu0
    %6299 = vmatprep.mubr.f32.mxu0 0.0
    %6300 = vmatmul.mubr.f32.gmra.mrb[0].mxu0 %v5027
    %v6301 = vpop.f32.mrb[0].mxu0
    %v6302 = vadd.f32 0.0, %v6301
    %v6303 = vpop.f32.mrb[0].mxu0
    %6304 = vmatprep.mubr.f32.mxu0 0.0
    %6305 = vmatmul.mubr.f32.gmra.mrb[0].mxu0 %v5030
    %v6306 = vpop.f32.mrb[0].mxu0
    %v6307 = vadd.f32 0.0, %v6306
    %v6308 = vpop.f32.mrb[0].mxu0
    %6309 = vmatprep.mubr.f32.mxu0 0.0
    %6310 = vmatmul.mubr.f32.gmra.mrb[0].mxu0 %v6110
    %v6311 = vpop.f32.mrb[0].mxu0
    %v6312 = vadd.f32 0.0, %v6311
    %v6313 = vpop.f32.mrb[0].mxu0
    %6314 = vmatprep.mubr.f32.mxu0 0.0
    %6315 = vmatmul.mubr.f32.gmra.mrb[0].mxu0 %v6113
    %v6316 = vpop.f32.mrb[0].mxu0
    %v6317 = vadd.f32 0.0, %v6316
    %v6318 = vpop.f32.mrb[0].mxu0
    %6319 = vdwg.mxu0
    %v6320 = vadd.f32 %v6070, %v6182
    %v6321 = vadd.f32 %v6071, %v6187
    %v6322 = vadd.f32 %v6072, %v6192
    %v6323 = vadd.f32 %v6073, %v6197
    %v6324 = vadd.f32 %v6074, %v6202
    %v6325 = vadd.f32 %v6075, %v6207
    %v6326 = vadd.f32 %v6076, %v6212
    %v6327 = vadd.f32 %v6077, %v6217
    %v6328 = vadd.f32 %v6078, %v6222
    %v6329 = vadd.f32 %v6079, %v6227
    %v6330 = vadd.f32 %v6080, %v6232
    %v6331 = vadd.f32 %v6081, %v6237
    %v6332 = vadd.f32 %v6082, %v6242
    %v6333 = vadd.f32 %v6083, %v6247
    %v6334 = vadd.f32 %v6084, %v6252
    %v6335 = vadd.f32 %v6085, %v6257
    %v6336 = vadd.f32 %v6086, %v6262
    %v6337 = vadd.f32 %v6087, %v6267
    %v6338 = vadd.f32 %v6088, %v6272
    %v6339 = vadd.f32 %v6089, %v6277
    %v6340 = vadd.f32 %v6090, %v6282
    %v6341 = vadd.f32 %v6091, %v6287
    %v6342 = vadd.f32 %v6092, %v6292
    %v6343 = vadd.f32 %v6093, %v6297
    %v6344 = vadd.f32 %v6094, %v6302
    %v6345 = vadd.f32 %v6095, %v6307
    %v6346 = vadd.f32 %v6096, %v6312
    %v6347 = vadd.f32 %v6097, %v6317
    %s6348 = scalar_lea.vmem %s4, 160
    %v6349 = vld [vmem:[%s6348] sm:$0xff]
    %v6350 = vld [vmem:[%s6348 + $0x8] sm:$0xff]
    %v6351 = vld [vmem:[%s6348 + $0x10] sm:$0xff]
    %v6352 = vld [vmem:[%s6348 + $0x18] sm:$0xff]
    %v6354 = vsel %vm4947, %v4888, 0
    %v6357 = vsel %vm4947, %v4889, 0
    %v6360 = vsel %vm4947, %v4936, 0
    %v6363 = vsel %vm4947, %v4937, 0
    %6365 = vmatprep.subr.mxu0 0.0
    %6366 = vmatpush1.msra.mxu0 %v6349
    %6367 = vmatprep.subr.mxu0 0.0
    %6368 = vmatpush1.msra.mxu0 %v6350
    %6369 = vmatprep.subr.mxu0 0.0
    %6370 = vmatpush1.msra.mxu0 %v6351
    %6371 = vmatprep.subr.mxu0 0.0
    %6372 = vmatpush1.msra.mxu0 %v6352
    %6373 = vmatprep.subr.mxu0 0.0
    %6374 = vmatpush1.msra.mxu0 0.0
    %6375 = vmatprep.subr.mxu0 0.0
    %6376 = vmatpush1.msra.mxu0 0.0
    %6377 = vmatprep.subr.mxu0 0.0
    %6378 = vmatpush1.msra.mxu0 0.0
    %6379 = vmatprep.subr.mxu0 0.0
    %6380 = vmatpush1.msra.mxu0 0.0
    %6381 = vmatprep.subr.mxu0 0.0
    %6382 = vmatpush1.msra.mxu0 0.0
    %6383 = vmatprep.subr.mxu0 0.0
    %6384 = vmatpush1.msra.mxu0 0.0
    %6385 = vmatprep.subr.mxu0 0.0
    %6386 = vmatpush1.msra.mxu0 0.0
    %6387 = vmatprep.subr.mxu0 0.0
    %6388 = vmatpush1.msra.mxu0 0.0
    %6389 = vmatprep.subr.mxu0 0.0
    %6390 = vmatpush1.msra.mxu0 0.0
    %6391 = vmatprep.subr.mxu0 0.0
    %6392 = vmatpush1.msra.mxu0 0.0
    %6393 = vmatprep.subr.mxu0 0.0
    %6394 = vmatpush1.msra.mxu0 0.0
    %6395 = vmatprep.subr.mxu0 0.0
    %6396 = vmatpush1.msra.mxu0 0.0
    %6397 = vmatprep.subr.mxu0 0.0
    %6398 = vmatpush1.msra.mxu0 0.0
    %6399 = vmatprep.subr.mxu0 0.0
    %6400 = vmatpush1.msra.mxu0 0.0
    %6401 = vmatprep.subr.mxu0 0.0
    %6402 = vmatpush1.msra.mxu0 0.0
    %6403 = vmatprep.subr.mxu0 0.0
    %6404 = vmatpush1.msra.mxu0 0.0
    %6405 = vmatprep.subr.mxu0 0.0
    %6406 = vmatpush1.msra.mxu0 0.0
    %6407 = vmatprep.subr.mxu0 0.0
    %6408 = vmatpush1.msra.mxu0 0.0
    %6409 = vmatprep.subr.mxu0 0.0
    %6410 = vmatpush1.msra.mxu0 0.0
    %6411 = vmatprep.subr.mxu0 0.0
    %6412 = vmatpush1.msra.mxu0 0.0
    %6413 = vmatprep.subr.mxu0 0.0
    %6414 = vmatpush1.msra.mxu0 0.0
    %6415 = vmatprep.subr.mxu0 0.0
    %6416 = vmatpush1.msra.mxu0 0.0
    %6417 = vmatprep.subr.mxu0 0.0
    %6418 = vmatpush1.msra.mxu0 0.0
    %6419 = vmatprep.subr.mxu0 0.0
    %6420 = vmatpush1.msra.mxu0 0.0
    %6421 = vmatprep.subr.mxu0 0.0
    %6422 = vmatpush1.msra.mxu0 0.0
    %6423 = vmatprep.subr.mxu0 0.0
    %6424 = vmatpush1.msra.mxu0 0.0
    %6425 = vmatprep.subr.mxu0 0.0
    %6426 = vmatpush1.msra.mxu0 0.0
    %6427 = vmatprep.subr.mxu0 0.0
    %6428 = vmatpush1.msra.mxu0 0.0
    %6429 = vmatprep.mubr.f32.mxu0 0.0
    %6430 = vmatmul.mubr.f32.gmra.mrb[0].mxu0 %v5538
    %v6431 = vpop.f32.mrb[0].mxu0
    %v6432 = vadd.f32 0.0, %v6431
    %v6433 = vpop.f32.mrb[0].mxu0
    %6434 = vmatprep.mubr.f32.mxu0 0.0
    %6435 = vmatmul.mubr.f32.gmra.mrb[0].mxu0 %v5541
    %v6436 = vpop.f32.mrb[0].mxu0
    %v6437 = vadd.f32 0.0, %v6436
    %v6438 = vpop.f32.mrb[0].mxu0
    %6439 = vmatprep.mubr.f32.mxu0 0.0
    %6440 = vmatmul.mubr.f32.gmra.mrb[0].mxu0 %v5544
    %v6441 = vpop.f32.mrb[0].mxu0
    %v6442 = vadd.f32 0.0, %v6441
    %v6443 = vpop.f32.mrb[0].mxu0
    %6444 = vmatprep.mubr.f32.mxu0 0.0
    %6445 = vmatmul.mubr.f32.gmra.mrb[0].mxu0 %v5547
    %v6446 = vpop.f32.mrb[0].mxu0
    %v6447 = vadd.f32 0.0, %v6446
    %v6448 = vpop.f32.mrb[0].mxu0
    %6449 = vmatprep.mubr.f32.mxu0 0.0
    %6450 = vmatmul.mubr.f32.gmra.mrb[0].mxu0 %v5550
    %v6451 = vpop.f32.mrb[0].mxu0
    %v6452 = vadd.f32 0.0, %v6451
    %v6453 = vpop.f32.mrb[0].mxu0
    %6454 = vmatprep.mubr.f32.mxu0 0.0
    %6455 = vmatmul.mubr.f32.gmra.mrb[0].mxu0 %v5553
    %v6456 = vpop.f32.mrb[0].mxu0
    %v6457 = vadd.f32 0.0, %v6456
    %v6458 = vpop.f32.mrb[0].mxu0
    %6459 = vmatprep.mubr.f32.mxu0 0.0
    %6460 = vmatmul.mubr.f32.gmra.mrb[0].mxu0 %v5556
    %v6461 = vpop.f32.mrb[0].mxu0
    %v6462 = vadd.f32 0.0, %v6461
    %v6463 = vpop.f32.mrb[0].mxu0
    %6464 = vmatprep.mubr.f32.mxu0 0.0
    %6465 = vmatmul.mubr.f32.gmra.mrb[0].mxu0 %v5559
    %v6466 = vpop.f32.mrb[0].mxu0
    %v6467 = vadd.f32 0.0, %v6466
    %v6468 = vpop.f32.mrb[0].mxu0
    %6469 = vmatprep.mubr.f32.mxu0 0.0
    %6470 = vmatmul.mubr.f32.gmra.mrb[0].mxu0 %v5562
    %v6471 = vpop.f32.mrb[0].mxu0
    %v6472 = vadd.f32 0.0, %v6471
    %v6473 = vpop.f32.mrb[0].mxu0
    %6474 = vmatprep.mubr.f32.mxu0 0.0
    %6475 = vmatmul.mubr.f32.gmra.mrb[0].mxu0 %v5565
    %v6476 = vpop.f32.mrb[0].mxu0
    %v6477 = vadd.f32 0.0, %v6476
    %v6478 = vpop.f32.mrb[0].mxu0
    %6479 = vmatprep.mubr.f32.mxu0 0.0
    %6480 = vmatmul.mubr.f32.gmra.mrb[0].mxu0 %v5568
    %v6481 = vpop.f32.mrb[0].mxu0
    %v6482 = vadd.f32 0.0, %v6481
    %v6483 = vpop.f32.mrb[0].mxu0
    %6484 = vmatprep.mubr.f32.mxu0 0.0
    %6485 = vmatmul.mubr.f32.gmra.mrb[0].mxu0 %v5571
    %v6486 = vpop.f32.mrb[0].mxu0
    %v6487 = vadd.f32 0.0, %v6486
    %v6488 = vpop.f32.mrb[0].mxu0
    %6489 = vmatprep.mubr.f32.mxu0 0.0
    %6490 = vmatmul.mubr.f32.gmra.mrb[0].mxu0 %v6354
    %v6491 = vpop.f32.mrb[0].mxu0
    %v6492 = vadd.f32 0.0, %v6491
    %v6493 = vpop.f32.mrb[0].mxu0
    %6494 = vmatprep.mubr.f32.mxu0 0.0
    %6495 = vmatmul.mubr.f32.gmra.mrb[0].mxu0 %v6357
    %v6496 = vpop.f32.mrb[0].mxu0
    %v6497 = vadd.f32 0.0, %v6496
    %v6498 = vpop.f32.mrb[0].mxu0
    %6499 = vmatprep.mubr.f32.mxu0 0.0
    %6500 = vmatmul.mubr.f32.gmra.mrb[0].mxu0 %v5580
    %v6501 = vpop.f32.mrb[0].mxu0
    %v6502 = vadd.f32 0.0, %v6501
    %v6503 = vpop.f32.mrb[0].mxu0
    %6504 = vmatprep.mubr.f32.mxu0 0.0
    %6505 = vmatmul.mubr.f32.gmra.mrb[0].mxu0 %v5583
    %v6506 = vpop.f32.mrb[0].mxu0
    %v6507 = vadd.f32 0.0, %v6506
    %v6508 = vpop.f32.mrb[0].mxu0
    %6509 = vmatprep.mubr.f32.mxu0 0.0
    %6510 = vmatmul.mubr.f32.gmra.mrb[0].mxu0 %v5586
    %v6511 = vpop.f32.mrb[0].mxu0
    %v6512 = vadd.f32 0.0, %v6511
    %v6513 = vpop.f32.mrb[0].mxu0
    %6514 = vmatprep.mubr.f32.mxu0 0.0
    %6515 = vmatmul.mubr.f32.gmra.mrb[0].mxu0 %v5589
    %v6516 = vpop.f32.mrb[0].mxu0
    %v6517 = vadd.f32 0.0, %v6516
    %v6518 = vpop.f32.mrb[0].mxu0
    %6519 = vmatprep.mubr.f32.mxu0 0.0
    %6520 = vmatmul.mubr.f32.gmra.mrb[0].mxu0 %v5592
    %v6521 = vpop.f32.mrb[0].mxu0
    %v6522 = vadd.f32 0.0, %v6521
    %v6523 = vpop.f32.mrb[0].mxu0
    %6524 = vmatprep.mubr.f32.mxu0 0.0
    %6525 = vmatmul.mubr.f32.gmra.mrb[0].mxu0 %v5595
    %v6526 = vpop.f32.mrb[0].mxu0
    %v6527 = vadd.f32 0.0, %v6526
    %v6528 = vpop.f32.mrb[0].mxu0
    %6529 = vmatprep.mubr.f32.mxu0 0.0
    %6530 = vmatmul.mubr.f32.gmra.mrb[0].mxu0 %v5598
    %v6531 = vpop.f32.mrb[0].mxu0
    %v6532 = vadd.f32 0.0, %v6531
    %v6533 = vpop.f32.mrb[0].mxu0
    %6534 = vmatprep.mubr.f32.mxu0 0.0
    %6535 = vmatmul.mubr.f32.gmra.mrb[0].mxu0 %v5601
    %v6536 = vpop.f32.mrb[0].mxu0
    %v6537 = vadd.f32 0.0, %v6536
    %v6538 = vpop.f32.mrb[0].mxu0
    %6539 = vmatprep.mubr.f32.mxu0 0.0
    %6540 = vmatmul.mubr.f32.gmra.mrb[0].mxu0 %v5604
    %v6541 = vpop.f32.mrb[0].mxu0
    %v6542 = vadd.f32 0.0, %v6541
    %v6543 = vpop.f32.mrb[0].mxu0
    %6544 = vmatprep.mubr.f32.mxu0 0.0
    %6545 = vmatmul.mubr.f32.gmra.mrb[0].mxu0 %v5607
    %v6546 = vpop.f32.mrb[0].mxu0
    %v6547 = vadd.f32 0.0, %v6546
    %v6548 = vpop.f32.mrb[0].mxu0
    %6549 = vmatprep.mubr.f32.mxu0 0.0
    %6550 = vmatmul.mubr.f32.gmra.mrb[0].mxu0 %v5610
    %v6551 = vpop.f32.mrb[0].mxu0
    %v6552 = vadd.f32 0.0, %v6551
    %v6553 = vpop.f32.mrb[0].mxu0
    %6554 = vmatprep.mubr.f32.mxu0 0.0
    %6555 = vmatmul.mubr.f32.gmra.mrb[0].mxu0 %v5613
    %v6556 = vpop.f32.mrb[0].mxu0
    %v6557 = vadd.f32 0.0, %v6556
    %v6558 = vpop.f32.mrb[0].mxu0
    %6559 = vmatprep.mubr.f32.mxu0 0.0
    %6560 = vmatmul.mubr.f32.gmra.mrb[0].mxu0 %v6360
    %v6561 = vpop.f32.mrb[0].mxu0
    %v6562 = vadd.f32 0.0, %v6561
    %v6563 = vpop.f32.mrb[0].mxu0
    %6564 = vmatprep.mubr.f32.mxu0 0.0
    %6565 = vmatmul.mubr.f32.gmra.mrb[0].mxu0 %v6363
    %v6566 = vpop.f32.mrb[0].mxu0
    %v6567 = vadd.f32 0.0, %v6566
    %v6568 = vpop.f32.mrb[0].mxu0
    %6569 = vdwg.mxu0
    %v6570 = vadd.f32 %v6320, %v6432
    %v6571 = vadd.f32 %v6321, %v6437
    %v6572 = vadd.f32 %v6322, %v6442
    %v6573 = vadd.f32 %v6323, %v6447
    %v6574 = vadd.f32 %v6324, %v6452
    %v6575 = vadd.f32 %v6325, %v6457
    %v6576 = vadd.f32 %v6326, %v6462
    %v6577 = vadd.f32 %v6327, %v6467
    %v6578 = vadd.f32 %v6328, %v6472
    %v6579 = vadd.f32 %v6329, %v6477
    %v6580 = vadd.f32 %v6330, %v6482
    %v6581 = vadd.f32 %v6331, %v6487
    %v6582 = vadd.f32 %v6332, %v6492
    %v6583 = vadd.f32 %v6333, %v6497
    %v6584 = vadd.f32 %v6334, %v6502
    %v6585 = vadd.f32 %v6335, %v6507
    %v6586 = vadd.f32 %v6336, %v6512
    %v6587 = vadd.f32 %v6337, %v6517
    %v6588 = vadd.f32 %v6338, %v6522
    %v6589 = vadd.f32 %v6339, %v6527
    %v6590 = vadd.f32 %v6340, %v6532
    %v6591 = vadd.f32 %v6341, %v6537
    %v6592 = vadd.f32 %v6342, %v6542
    %v6593 = vadd.f32 %v6343, %v6547
    %v6594 = vadd.f32 %v6344, %v6552
    %v6595 = vadd.f32 %v6345, %v6557
    %v6596 = vadd.f32 %v6346, %v6562
    %v6597 = vadd.f32 %v6347, %v6567
    %v6598 = vld [vmem:[%s5] sm:$0x1]
    %v6600 = vlaneseq
    %v6601 = vshrl.u32 %v6600, 7
    %v6602 = vsub.s32 0, %v6601
    %v6603 = vrot.slane %v6598, %v6602
    %v6605 = vadd.f32 %v6570, %v6603
    %v6606 = vadd.f32 %v6571, %v6603
    %v6607 = vadd.f32 %v6572, %v6603
    %v6608 = vadd.f32 %v6573, %v6603
    %v6609 = vadd.f32 %v6574, %v6603
    %v6610 = vadd.f32 %v6575, %v6603
    %v6611 = vadd.f32 %v6576, %v6603
    %v6612 = vadd.f32 %v6577, %v6603
    %v6613 = vadd.f32 %v6578, %v6603
    %v6614 = vadd.f32 %v6579, %v6603
    %v6615 = vadd.f32 %v6580, %v6603
    %v6616 = vadd.f32 %v6581, %v6603
    %v6617 = vadd.f32 %v6582, %v6603
    %v6618 = vadd.f32 %v6583, %v6603
    %v6619 = vadd.f32 %v6584, %v6603
    %v6620 = vadd.f32 %v6585, %v6603
    %v6621 = vadd.f32 %v6586, %v6603
    %v6622 = vadd.f32 %v6587, %v6603
    %v6623 = vadd.f32 %v6588, %v6603
    %v6624 = vadd.f32 %v6589, %v6603
    %v6625 = vadd.f32 %v6590, %v6603
    %v6626 = vadd.f32 %v6591, %v6603
    %v6627 = vadd.f32 %v6592, %v6603
    %v6628 = vadd.f32 %v6593, %v6603
    %v6629 = vadd.f32 %v6594, %v6603
    %v6630 = vadd.f32 %v6595, %v6603
    %v6631 = vadd.f32 %v6596, %v6603
    %v6632 = vadd.f32 %v6597, %v6603
    %v6633 = vmax.f32 %v6605, 0.0
    %v6634 = vmax.f32 %v6606, 0.0
    %v6635 = vmax.f32 %v6607, 0.0
    %v6636 = vmax.f32 %v6608, 0.0
    %v6637 = vmax.f32 %v6609, 0.0
    %v6638 = vmax.f32 %v6610, 0.0
    %v6639 = vmax.f32 %v6611, 0.0
    %v6640 = vmax.f32 %v6612, 0.0
    %v6641 = vmax.f32 %v6613, 0.0
    %v6642 = vmax.f32 %v6614, 0.0
    %v6643 = vmax.f32 %v6615, 0.0
    %v6644 = vmax.f32 %v6616, 0.0
    %v6645 = vmax.f32 %v6617, 0.0
    %v6646 = vmax.f32 %v6618, 0.0
    %v6647 = vmax.f32 %v6619, 0.0
    %v6648 = vmax.f32 %v6620, 0.0
    %v6649 = vmax.f32 %v6621, 0.0
    %v6650 = vmax.f32 %v6622, 0.0
    %v6651 = vmax.f32 %v6623, 0.0
    %v6652 = vmax.f32 %v6624, 0.0
    %v6653 = vmax.f32 %v6625, 0.0
    %v6654 = vmax.f32 %v6626, 0.0
    %v6655 = vmax.f32 %v6627, 0.0
    %v6656 = vmax.f32 %v6628, 0.0
    %v6657 = vmax.f32 %v6629, 0.0
    %v6658 = vmax.f32 %v6630, 0.0
    %v6659 = vmax.f32 %v6631, 0.0
    %v6660 = vmax.f32 %v6632, 0.0
    %6661 = vst.msk [vmem:[#allocation3] sm:$0xff] %vm4947, 0.0
    %6662 = vst.msk [vmem:[#allocation3 + $0x8] sm:$0xff] %vm4947, 0.0
    %6663 = vst.msk [vmem:[#allocation3 + $0x10] sm:$0xff] %vm4947, 0.0
    %6664 = vst.msk [vmem:[#allocation3 + $0x18] sm:$0xff] %vm4947, 0.0
    %6665 = vst.msk [vmem:[#allocation3 + $0x20] sm:$0xff] %vm4947, 0.0
    %6666 = vst.msk [vmem:[#allocation3 + $0x28] sm:$0xff] %vm4947, 0.0
    %6667 = vst.msk [vmem:[#allocation3 + $0x30] sm:$0xff] %vm4947, 0.0
    %6668 = vst.msk [vmem:[#allocation3 + $0x38] sm:$0xff] %vm4947, 0.0
    %6669 = vst.msk [vmem:[#allocation3 + $0x40] sm:$0xff] %vm4947, 0.0
    %6670 = vst.msk [vmem:[#allocation3 + $0x48] sm:$0xff] %vm4947, 0.0
    %6671 = vst.msk [vmem:[#allocation3 + $0x50] sm:$0xff] %vm4947, 0.0
    %6672 = vst.msk [vmem:[#allocation3 + $0x58] sm:$0xff] %vm4947, 0.0
    %6673 = vst.msk [vmem:[#allocation3 + $0x60] sm:$0xff] %vm4947, 0.0
    %6674 = vst.msk [vmem:[#allocation3 + $0x68] sm:$0xff] %vm4947, 0.0
    %6675 = vst.msk [vmem:[#allocation3 + $0x70] sm:$0xff] %vm4947, 0.0
    %6676 = vst.msk [vmem:[#allocation3 + $0x78] sm:$0xff] %vm4947, 0.0
    %6677 = vst.msk [vmem:[#allocation3 + $0x80] sm:$0xff] %vm4947, 0.0
    %6678 = vst.msk [vmem:[#allocation3 + $0x88] sm:$0xff] %vm4947, 0.0
    %6679 = vst.msk [vmem:[#allocation3 + $0x90] sm:$0xff] %vm4947, 0.0
    %6680 = vst.msk [vmem:[#allocation3 + $0x98] sm:$0xff] %vm4947, 0.0
    %6681 = vst.msk [vmem:[#allocation3 + $0xa0] sm:$0xff] %vm4947, 0.0
    %6682 = vst.msk [vmem:[#allocation3 + $0xa8] sm:$0xff] %vm4947, 0.0
    %6683 = vst.msk [vmem:[#allocation3 + $0xb0] sm:$0xff] %vm4947, 0.0
    %6684 = vst.msk [vmem:[#allocation3 + $0xb8] sm:$0xff] %vm4947, 0.0
    %6685 = vst.msk [vmem:[#allocation3 + $0xc0] sm:$0xff] %vm4947, 0.0
    %6686 = vst.msk [vmem:[#allocation3 + $0xc8] sm:$0xff] %vm4947, 0.0
    %6687 = vst.msk [vmem:[#allocation3 + $0xd0] sm:$0xff] %vm4947, 0.0
    %6688 = vst.msk [vmem:[#allocation3 + $0xd8] sm:$0xff] %vm4947, 0.0
    %6689 = vst.msk [vmem:[#allocation3 + $0xe0] sm:$0xff] %vm4947, 0.0
    %6690 = vst.msk [vmem:[#allocation3 + $0xe8] sm:$0xff] %vm4947, 0.0
    %6691 = vst.msk [vmem:[#allocation3 + $0xf0] sm:$0xff] %vm4947, 0.0
    %6692 = vst.msk [vmem:[#allocation3 + $0xf8] sm:$0xff] %vm4947, 0.0
    %6693 = vst.msk [vmem:[#allocation3 + $0x100] sm:$0xff] %vm4947, 0.0
    %6694 = vst.msk [vmem:[#allocation3 + $0x108] sm:$0xff] %vm4947, 0.0
    %6695 = vst.msk [vmem:[#allocation3 + $0x110] sm:$0xff] %vm4947, 0.0
    %6696 = vst.msk [vmem:[#allocation3 + $0x118] sm:$0xff] %vm4947, 0.0
    %6697 = vst.msk [vmem:[#allocation3 + $0x10] sm:$0xff] %vm4947, %v6633
    %6698 = vst.msk [vmem:[#allocation3 + $0x18] sm:$0xff] %vm4947, %v6634
    %6699 = vst.msk [vmem:[#allocation3 + $0x20] sm:$0xff] %vm4947, %v6635
    %6700 = vst.msk [vmem:[#allocation3 + $0x28] sm:$0xff] %vm4947, %v6636
    %6701 = vst.msk [vmem:[#allocation3 + $0x30] sm:$0xff] %vm4947, %v6637
    %6702 = vst.msk [vmem:[#allocation3 + $0x38] sm:$0xff] %vm4947, %v6638
    %6703 = vst.msk [vmem:[#allocation3 + $0x40] sm:$0xff] %vm4947, %v6639
    %6704 = vst.msk [vmem:[#allocation3 + $0x48] sm:$0xff] %vm4947, %v6640
    %6705 = vst.msk [vmem:[#allocation3 + $0x50] sm:$0xff] %vm4947, %v6641
    %6706 = vst.msk [vmem:[#allocation3 + $0x58] sm:$0xff] %vm4947, %v6642
    %6707 = vst.msk [vmem:[#allocation3 + $0x60] sm:$0xff] %vm4947, %v6643
    %6708 = vst.msk [vmem:[#allocation3 + $0x68] sm:$0xff] %vm4947, %v6644
    %6709 = vst.msk [vmem:[#allocation3 + $0x70] sm:$0xff] %vm4947, %v6645
    %6710 = vst.msk [vmem:[#allocation3 + $0x78] sm:$0xff] %vm4947, %v6646
    %6711 = vst.msk [vmem:[#allocation3 + $0xa0] sm:$0xff] %vm4947, %v6647
    %6712 = vst.msk [vmem:[#allocation3 + $0xa8] sm:$0xff] %vm4947, %v6648
    %6713 = vst.msk [vmem:[#allocation3 + $0xb0] sm:$0xff] %vm4947, %v6649
    %6714 = vst.msk [vmem:[#allocation3 + $0xb8] sm:$0xff] %vm4947, %v6650
    %6715 = vst.msk [vmem:[#allocation3 + $0xc0] sm:$0xff] %vm4947, %v6651
    %6716 = vst.msk [vmem:[#allocation3 + $0xc8] sm:$0xff] %vm4947, %v6652
    %6717 = vst.msk [vmem:[#allocation3 + $0xd0] sm:$0xff] %vm4947, %v6653
    %6718 = vst.msk [vmem:[#allocation3 + $0xd8] sm:$0xff] %vm4947, %v6654
    %6719 = vst.msk [vmem:[#allocation3 + $0xe0] sm:$0xff] %vm4947, %v6655
    %6720 = vst.msk [vmem:[#allocation3 + $0xe8] sm:$0xff] %vm4947, %v6656
    %6721 = vst.msk [vmem:[#allocation3 + $0xf0] sm:$0xff] %vm4947, %v6657
    %6722 = vst.msk [vmem:[#allocation3 + $0xf8] sm:$0xff] %vm4947, %v6658
    %6723 = vst.msk [vmem:[#allocation3 + $0x100] sm:$0xff] %vm4947, %v6659
    %6724 = vst.msk [vmem:[#allocation3 + $0x108] sm:$0xff] %vm4947, %v6660
    %v6725 = vld [vmem:[#allocation3] ss:$2 sm:$0xff]
    %s6726 = scalar_lea.vmem [#allocation3], 16
    %v6727 = vld [vmem:[%s6726] ss:$2 sm:$0xff]
    %s6728 = scalar_lea.vmem [#allocation3], 32
    %v6729 = vld [vmem:[%s6728] ss:$2 sm:$0xff]
    %s6730 = scalar_lea.vmem [#allocation3], 48
    %v6731 = vld [vmem:[%s6730] ss:$2 sm:$0xff]
    %s6732 = scalar_lea.vmem [#allocation3], 64
    %v6733 = vld [vmem:[%s6732] ss:$2 sm:$0xff]
    %s6734 = scalar_lea.vmem [#allocation3], 80
    %v6735 = vld [vmem:[%s6734] ss:$2 sm:$0xff]
    %s6736 = scalar_lea.vmem [#allocation3], 96
    %v6737 = vld [vmem:[%s6736] ss:$2 sm:$0xff]
    %s6738 = scalar_lea.vmem [#allocation3], 112
    %v6739 = vld [vmem:[%s6738] ss:$2 sm:$0xff]
    %s6740 = scalar_lea.vmem [#allocation3], 128
    %v6741 = vld [vmem:[%s6740] ss:$2 sm:$0xff]
    %s6742 = scalar_lea.vmem [#allocation3], 144
    %v6743 = vld [vmem:[%s6742] ss:$2 sm:$0xff]
    %s6744 = scalar_lea.vmem [#allocation3], 160
    %v6745 = vld [vmem:[%s6744] ss:$2 sm:$0xff]
    %s6746 = scalar_lea.vmem [#allocation3], 176
    %v6747 = vld [vmem:[%s6746] ss:$2 sm:$0xff]
    %s6748 = scalar_lea.vmem [#allocation3], 192
    %v6749 = vld [vmem:[%s6748] ss:$2 sm:$0xff]
    %s6750 = scalar_lea.vmem [#allocation3], 208
    %v6751 = vld [vmem:[%s6750] ss:$2 sm:$0xff]
    %s6752 = scalar_lea.vmem [#allocation3], 224
    %v6753 = vld [vmem:[%s6752] ss:$2 sm:$0xff]
    %s6754 = scalar_lea.vmem [#allocation3], 240
    %v6755 = vld [vmem:[%s6754] ss:$2 sm:$0xff]
    %s6756 = scalar_lea.vmem [#allocation3], 256
    %v6757 = vld [vmem:[%s6756] ss:$2 sm:$0xff]
    %s6758 = scalar_lea.vmem [#allocation3], 272
    %v6759 = vld [vmem:[%s6758] ss:$2 sm:$0xff]
    %s6760 = scalar_lea.vmem [#allocation3], 1
    %v6761 = vld [vmem:[%s6760] ss:$2 sm:$0xff]
    %s6762 = scalar_lea.vmem [#allocation3], 17
    %v6763 = vld [vmem:[%s6762] ss:$2 sm:$0xff]
    %s6764 = scalar_lea.vmem [#allocation3], 33
    %v6765 = vld [vmem:[%s6764] ss:$2 sm:$0xff]
    %s6766 = scalar_lea.vmem [#allocation3], 49
    %v6767 = vld [vmem:[%s6766] ss:$2 sm:$0xff]
    %s6768 = scalar_lea.vmem [#allocation3], 65
    %v6769 = vld [vmem:[%s6768] ss:$2 sm:$0xff]
    %s6770 = scalar_lea.vmem [#allocation3], 81
    %v6771 = vld [vmem:[%s6770] ss:$2 sm:$0xff]
    %s6772 = scalar_lea.vmem [#allocation3], 97
    %v6773 = vld [vmem:[%s6772] ss:$2 sm:$0xff]
    %s6774 = scalar_lea.vmem [#allocation3], 113
    %v6775 = vld [vmem:[%s6774] ss:$2 sm:$0xff]
    %s6776 = scalar_lea.vmem [#allocation3], 129
    %v6777 = vld [vmem:[%s6776] ss:$2 sm:$0xff]
    %s6778 = scalar_lea.vmem [#allocation3], 145
    %v6779 = vld [vmem:[%s6778] ss:$2 sm:$0xff]
    %s6780 = scalar_lea.vmem [#allocation3], 161
    %v6781 = vld [vmem:[%s6780] ss:$2 sm:$0xff]
    %s6782 = scalar_lea.vmem [#allocation3], 177
    %v6783 = vld [vmem:[%s6782] ss:$2 sm:$0xff]
    %s6784 = scalar_lea.vmem [#allocation3], 193
    %v6785 = vld [vmem:[%s6784] ss:$2 sm:$0xff]
    %s6786 = scalar_lea.vmem [#allocation3], 209
    %v6787 = vld [vmem:[%s6786] ss:$2 sm:$0xff]
    %s6788 = scalar_lea.vmem [#allocation3], 225
    %v6789 = vld [vmem:[%s6788] ss:$2 sm:$0xff]
    %s6790 = scalar_lea.vmem [#allocation3], 241
    %v6791 = vld [vmem:[%s6790] ss:$2 sm:$0xff]
    %s6792 = scalar_lea.vmem [#allocation3], 257
    %v6793 = vld [vmem:[%s6792] ss:$2 sm:$0xff]
    %s6794 = scalar_lea.vmem [#allocation3], 273
    %v6795 = vld [vmem:[%s6794] ss:$2 sm:$0xff]
    %6814 = vrot.lane.b32.xlu0 %v6761, 32
    %v6815 = vpop.permute.xlu0 %6814
    %6816 = vrot.lane.b32.xlu0 %v6763, 32
    %v6817 = vpop.permute.xlu0 %6816
    %6818 = vrot.lane.b32.xlu0 %v6765, 32
    %v6819 = vpop.permute.xlu0 %6818
    %6820 = vrot.lane.b32.xlu0 %v6767, 32
    %v6821 = vpop.permute.xlu0 %6820
    %6822 = vrot.lane.b32.xlu0 %v6769, 32
    %v6823 = vpop.permute.xlu0 %6822
    %6824 = vrot.lane.b32.xlu0 %v6771, 32
    %v6825 = vpop.permute.xlu0 %6824
    %6826 = vrot.lane.b32.xlu0 %v6773, 32
    %v6827 = vpop.permute.xlu0 %6826
    %6828 = vrot.lane.b32.xlu0 %v6775, 32
    %v6829 = vpop.permute.xlu0 %6828
    %6830 = vrot.lane.b32.xlu0 %v6777, 32
    %v6831 = vpop.permute.xlu0 %6830
    %6832 = vrot.lane.b32.xlu0 %v6779, 32
    %v6833 = vpop.permute.xlu0 %6832
    %6834 = vrot.lane.b32.xlu0 %v6781, 32
    %v6835 = vpop.permute.xlu0 %6834
    %6836 = vrot.lane.b32.xlu0 %v6783, 32
    %v6837 = vpop.permute.xlu0 %6836
    %6838 = vrot.lane.b32.xlu0 %v6785, 32
    %v6839 = vpop.permute.xlu0 %6838
    %6840 = vrot.lane.b32.xlu0 %v6787, 32
    %v6841 = vpop.permute.xlu0 %6840
    %6842 = vrot.lane.b32.xlu0 %v6789, 32
    %v6843 = vpop.permute.xlu0 %6842
    %6844 = vrot.lane.b32.xlu0 %v6791, 32
    %v6845 = vpop.permute.xlu0 %6844
    %6846 = vrot.lane.b32.xlu0 %v6793, 32
    %v6847 = vpop.permute.xlu0 %6846
    %6848 = vrot.lane.b32.xlu0 %v6795, 32
    %v6849 = vpop.permute.xlu0 %6848
    %v6868 = vsel %vm4947, %v6725, %v6815
    %v6869 = vsel %vm4947, %v6727, %v6817
    %v6870 = vsel %vm4947, %v6729, %v6819
    %v6871 = vsel %vm4947, %v6731, %v6821
    %v6872 = vsel %vm4947, %v6733, %v6823
    %v6873 = vsel %vm4947, %v6735, %v6825
    %v6874 = vsel %vm4947, %v6737, %v6827
    %v6875 = vsel %vm4947, %v6739, %v6829
    %v6876 = vsel %vm4947, %v6741, %v6831
    %v6877 = vsel %vm4947, %v6743, %v6833
    %v6878 = vsel %vm4947, %v6745, %v6835
    %v6879 = vsel %vm4947, %v6747, %v6837
    %v6880 = vsel %vm4947, %v6749, %v6839
    %v6881 = vsel %vm4947, %v6751, %v6841
    %v6882 = vsel %vm4947, %v6753, %v6843
    %v6883 = vsel %vm4947, %v6755, %v6845
    %v6884 = vsel %vm4947, %v6757, %v6847
    %v6885 = vsel %vm4947, %v6759, %v6849
    %v6886 = vld [vmem:[%s6] sm:$0xff]
    %v6887 = vld [vmem:[%s6 + $0x8] sm:$0xff]
    %v6888 = vld [vmem:[%s6 + $0x10] sm:$0xff]
    %v6889 = vld [vmem:[%s6 + $0x18] sm:$0xff]
    %v6890 = vld [vmem:[%s6 + $0x20] sm:$0xff]
    %v6891 = vld [vmem:[%s6 + $0x28] sm:$0xff]
    %v6892 = vld [vmem:[%s6 + $0x30] sm:$0xff]
    %v6893 = vld [vmem:[%s6 + $0x38] sm:$0xff]
    %s6894 = scalar_lea.vmem %s6, 64
    %v6895 = vld [vmem:[%s6894] sm:$0xff]
    %v6896 = vld [vmem:[%s6894 + $0x8] sm:$0xff]
    %v6897 = vld [vmem:[%s6894 + $0x10] sm:$0xff]
    %v6898 = vld [vmem:[%s6894 + $0x18] sm:$0xff]
    %v6899 = vld [vmem:[%s6894 + $0x20] sm:$0xff]
    %v6900 = vld [vmem:[%s6894 + $0x28] sm:$0xff]
    %v6901 = vld [vmem:[%s6894 + $0x30] sm:$0xff]
    %v6902 = vld [vmem:[%s6894 + $0x38] sm:$0xff]
    %vm6903 = vcmask 523264
    %v6905 = vsel %vm6903, %v6869, 0
    %v6908 = vsel %vm6903, %v6872, 0
    %v6911 = vsel %vm6903, %v6878, 0
    %v6914 = vsel %vm6903, %v6881, 0
    %6916 = vmatprep.subr.mxu0 0.0
    %6917 = vmatpush1.msra.mxu0 %v6895
    %6918 = vmatprep.subr.mxu0 0.0
    %6919 = vmatpush1.msra.mxu0 %v6896
    %6920 = vmatprep.subr.mxu0 0.0
    %6921 = vmatpush1.msra.mxu0 %v6897
    %6922 = vmatprep.subr.mxu0 0.0
    %6923 = vmatpush1.msra.mxu0 %v6898
    %6924 = vmatprep.subr.mxu0 0.0
    %6925 = vmatpush1.msra.mxu0 %v6899
    %6926 = vmatprep.subr.mxu0 0.0
    %6927 = vmatpush1.msra.mxu0 %v6900
    %6928 = vmatprep.subr.mxu0 0.0
    %6929 = vmatpush1.msra.mxu0 %v6901
    %6930 = vmatprep.subr.mxu0 0.0
    %6931 = vmatpush1.msra.mxu0 %v6902
    %6932 = vmatprep.subr.mxu0 0.0
    %6933 = vmatpush1.msra.mxu0 0.0
    %6934 = vmatprep.subr.mxu0 0.0
    %6935 = vmatpush1.msra.mxu0 0.0
    %6936 = vmatprep.subr.mxu0 0.0
    %6937 = vmatpush1.msra.mxu0 0.0
    %6938 = vmatprep.subr.mxu0 0.0
    %6939 = vmatpush1.msra.mxu0 0.0
    %6940 = vmatprep.subr.mxu0 0.0
    %6941 = vmatpush1.msra.mxu0 0.0
    %6942 = vmatprep.subr.mxu0 0.0
    %6943 = vmatpush1.msra.mxu0 0.0
    %6944 = vmatprep.subr.mxu0 0.0
    %6945 = vmatpush1.msra.mxu0 0.0
    %6946 = vmatprep.subr.mxu0 0.0
    %6947 = vmatpush1.msra.mxu0 0.0
    %6948 = vmatprep.subr.mxu0 0.0
    %6949 = vmatpush1.msra.mxu0 0.0
    %6950 = vmatprep.subr.mxu0 0.0
    %6951 = vmatpush1.msra.mxu0 0.0
    %6952 = vmatprep.subr.mxu0 0.0
    %6953 = vmatpush1.msra.mxu0 0.0
    %6954 = vmatprep.subr.mxu0 0.0
    %6955 = vmatpush1.msra.mxu0 0.0
    %6956 = vmatprep.subr.mxu0 0.0
    %6957 = vmatpush1.msra.mxu0 0.0
    %6958 = vmatprep.subr.mxu0 0.0
    %6959 = vmatpush1.msra.mxu0 0.0
    %6960 = vmatprep.subr.mxu0 0.0
    %6961 = vmatpush1.msra.mxu0 0.0
    %6962 = vmatprep.subr.mxu0 0.0
    %6963 = vmatpush1.msra.mxu0 0.0
    %6964 = vmatprep.subr.mxu0 0.0
    %6965 = vmatpush1.msra.mxu0 0.0
    %6966 = vmatprep.subr.mxu0 0.0
    %6967 = vmatpush1.msra.mxu0 0.0
    %6968 = vmatprep.subr.mxu0 0.0
    %6969 = vmatpush1.msra.mxu0 0.0
    %6970 = vmatprep.subr.mxu0 0.0
    %6971 = vmatpush1.msra.mxu0 0.0
    %6972 = vmatprep.subr.mxu0 0.0
    %6973 = vmatpush1.msra.mxu0 0.0
    %6974 = vmatprep.subr.mxu0 0.0
    %6975 = vmatpush1.msra.mxu0 0.0
    %6976 = vmatprep.subr.mxu0 0.0
    %6977 = vmatpush1.msra.mxu0 0.0
    %6978 = vmatprep.subr.mxu0 0.0
    %6979 = vmatpush1.msra.mxu0 0.0
    %6980 = vmatprep.mubr.f32.mxu0 0.0
    %6981 = vmatmul.mubr.f32.gmra.mrb[0].mxu0 %v6905
    %v6982 = vpop.f32.mrb[0].mxu0
    %v6983 = vadd.f32 0.0, %v6982
    %v6984 = vpop.f32.mrb[0].mxu0
    %6985 = vmatprep.mubr.f32.mxu0 0.0
    %6986 = vmatmul.mubr.f32.gmra.mrb[0].mxu0 %v6908
    %v6987 = vpop.f32.mrb[0].mxu0
    %v6988 = vadd.f32 0.0, %v6987
    %v6989 = vpop.f32.mrb[0].mxu0
    %6990 = vmatprep.mubr.f32.mxu0 0.0
    %6991 = vmatmul.mubr.f32.gmra.mrb[0].mxu0 %v6911
    %v6992 = vpop.f32.mrb[0].mxu0
    %v6993 = vadd.f32 0.0, %v6992
    %v6994 = vpop.f32.mrb[0].mxu0
    %6995 = vmatprep.mubr.f32.mxu0 0.0
    %6996 = vmatmul.mubr.f32.gmra.mrb[0].mxu0 %v6914
    %v6997 = vpop.f32.mrb[0].mxu0
    %v6998 = vadd.f32 0.0, %v6997
    %v6999 = vpop.f32.mrb[0].mxu0
    %7000 = vdwg.mxu0
    %v7002 = vsel %vm6903, %v6868, 0
    %v7005 = vsel %vm6903, %v6871, 0
    %v7008 = vsel %vm6903, %v6877, 0
    %v7011 = vsel %vm6903, %v6880, 0
    %7013 = vmatprep.subr.mxu0 0.0
    %7014 = vmatpush1.msra.mxu0 %v6886
    %7015 = vmatprep.subr.mxu0 0.0
    %7016 = vmatpush1.msra.mxu0 %v6887
    %7017 = vmatprep.subr.mxu0 0.0
    %7018 = vmatpush1.msra.mxu0 %v6888
    %7019 = vmatprep.subr.mxu0 0.0
    %7020 = vmatpush1.msra.mxu0 %v6889
    %7021 = vmatprep.subr.mxu0 0.0
    %7022 = vmatpush1.msra.mxu0 %v6890
    %7023 = vmatprep.subr.mxu0 0.0
    %7024 = vmatpush1.msra.mxu0 %v6891
    %7025 = vmatprep.subr.mxu0 0.0
    %7026 = vmatpush1.msra.mxu0 %v6892
    %7027 = vmatprep.subr.mxu0 0.0
    %7028 = vmatpush1.msra.mxu0 %v6893
    %7029 = vmatprep.subr.mxu0 0.0
    %7030 = vmatpush1.msra.mxu0 0.0
    %7031 = vmatprep.subr.mxu0 0.0
    %7032 = vmatpush1.msra.mxu0 0.0
    %7033 = vmatprep.subr.mxu0 0.0
    %7034 = vmatpush1.msra.mxu0 0.0
    %7035 = vmatprep.subr.mxu0 0.0
    %7036 = vmatpush1.msra.mxu0 0.0
    %7037 = vmatprep.subr.mxu0 0.0
    %7038 = vmatpush1.msra.mxu0 0.0
    %7039 = vmatprep.subr.mxu0 0.0
    %7040 = vmatpush1.msra.mxu0 0.0
    %7041 = vmatprep.subr.mxu0 0.0
    %7042 = vmatpush1.msra.mxu0 0.0
    %7043 = vmatprep.subr.mxu0 0.0
    %7044 = vmatpush1.msra.mxu0 0.0
    %7045 = vmatprep.subr.mxu0 0.0
    %7046 = vmatpush1.msra.mxu0 0.0
    %7047 = vmatprep.subr.mxu0 0.0
    %7048 = vmatpush1.msra.mxu0 0.0
    %7049 = vmatprep.subr.mxu0 0.0
    %7050 = vmatpush1.msra.mxu0 0.0
    %7051 = vmatprep.subr.mxu0 0.0
    %7052 = vmatpush1.msra.mxu0 0.0
    %7053 = vmatprep.subr.mxu0 0.0
    %7054 = vmatpush1.msra.mxu0 0.0
    %7055 = vmatprep.subr.mxu0 0.0
    %7056 = vmatpush1.msra.mxu0 0.0
    %7057 = vmatprep.subr.mxu0 0.0
    %7058 = vmatpush1.msra.mxu0 0.0
    %7059 = vmatprep.subr.mxu0 0.0
    %7060 = vmatpush1.msra.mxu0 0.0
    %7061 = vmatprep.subr.mxu0 0.0
    %7062 = vmatpush1.msra.mxu0 0.0
    %7063 = vmatprep.subr.mxu0 0.0
    %7064 = vmatpush1.msra.mxu0 0.0
    %7065 = vmatprep.subr.mxu0 0.0
    %7066 = vmatpush1.msra.mxu0 0.0
    %7067 = vmatprep.subr.mxu0 0.0
    %7068 = vmatpush1.msra.mxu0 0.0
    %7069 = vmatprep.subr.mxu0 0.0
    %7070 = vmatpush1.msra.mxu0 0.0
    %7071 = vmatprep.subr.mxu0 0.0
    %7072 = vmatpush1.msra.mxu0 0.0
    %7073 = vmatprep.subr.mxu0 0.0
    %7074 = vmatpush1.msra.mxu0 0.0
    %7075 = vmatprep.subr.mxu0 0.0
    %7076 = vmatpush1.msra.mxu0 0.0
    %7077 = vmatprep.mubr.f32.mxu0 0.0
    %7078 = vmatmul.mubr.f32.gmra.mrb[0].mxu0 %v7002
    %v7079 = vpop.f32.mrb[0].mxu0
    %v7080 = vadd.f32 %v6983, %v7079
    %v7081 = vpop.f32.mrb[0].mxu0
    %7082 = vmatprep.mubr.f32.mxu0 0.0
    %7083 = vmatmul.mubr.f32.gmra.mrb[0].mxu0 %v7005
    %v7084 = vpop.f32.mrb[0].mxu0
    %v7085 = vadd.f32 %v6988, %v7084
    %v7086 = vpop.f32.mrb[0].mxu0
    %7087 = vmatprep.mubr.f32.mxu0 0.0
    %7088 = vmatmul.mubr.f32.gmra.mrb[0].mxu0 %v7008
    %v7089 = vpop.f32.mrb[0].mxu0
    %v7090 = vadd.f32 %v6993, %v7089
    %v7091 = vpop.f32.mrb[0].mxu0
    %7092 = vmatprep.mubr.f32.mxu0 0.0
    %7093 = vmatmul.mubr.f32.gmra.mrb[0].mxu0 %v7011
    %v7094 = vpop.f32.mrb[0].mxu0
    %v7095 = vadd.f32 %v6998, %v7094
    %v7096 = vpop.f32.mrb[0].mxu0
    %7097 = vdwg.mxu0
    %s7098 = scalar_lea.vmem %s6, 128
    %v7099 = vld [vmem:[%s7098] sm:$0xff]
    %v7100 = vld [vmem:[%s7098 + $0x8] sm:$0xff]
    %v7101 = vld [vmem:[%s7098 + $0x10] sm:$0xff]
    %v7102 = vld [vmem:[%s7098 + $0x18] sm:$0xff]
    %v7103 = vld [vmem:[%s7098 + $0x20] sm:$0xff]
    %v7104 = vld [vmem:[%s7098 + $0x28] sm:$0xff]
    %v7105 = vld [vmem:[%s7098 + $0x30] sm:$0xff]
    %v7106 = vld [vmem:[%s7098 + $0x38] sm:$0xff]
    %v7108 = vsel %vm6903, %v6870, 0
    %v7111 = vsel %vm6903, %v6873, 0
    %v7114 = vsel %vm6903, %v6879, 0
    %v7117 = vsel %vm6903, %v6882, 0
    %7119 = vmatprep.subr.mxu0 0.0
    %7120 = vmatpush1.msra.mxu0 %v7099
    %7121 = vmatprep.subr.mxu0 0.0
    %7122 = vmatpush1.msra.mxu0 %v7100
    %7123 = vmatprep.subr.mxu0 0.0
    %7124 = vmatpush1.msra.mxu0 %v7101
    %7125 = vmatprep.subr.mxu0 0.0
    %7126 = vmatpush1.msra.mxu0 %v7102
    %7127 = vmatprep.subr.mxu0 0.0
    %7128 = vmatpush1.msra.mxu0 %v7103
    %7129 = vmatprep.subr.mxu0 0.0
    %7130 = vmatpush1.msra.mxu0 %v7104
    %7131 = vmatprep.subr.mxu0 0.0
    %7132 = vmatpush1.msra.mxu0 %v7105
    %7133 = vmatprep.subr.mxu0 0.0
    %7134 = vmatpush1.msra.mxu0 %v7106
    %7135 = vmatprep.subr.mxu0 0.0
    %7136 = vmatpush1.msra.mxu0 0.0
    %7137 = vmatprep.subr.mxu0 0.0
    %7138 = vmatpush1.msra.mxu0 0.0
    %7139 = vmatprep.subr.mxu0 0.0
    %7140 = vmatpush1.msra.mxu0 0.0
    %7141 = vmatprep.subr.mxu0 0.0
    %7142 = vmatpush1.msra.mxu0 0.0
    %7143 = vmatprep.subr.mxu0 0.0
    %7144 = vmatpush1.msra.mxu0 0.0
    %7145 = vmatprep.subr.mxu0 0.0
    %7146 = vmatpush1.msra.mxu0 0.0
    %7147 = vmatprep.subr.mxu0 0.0
    %7148 = vmatpush1.msra.mxu0 0.0
    %7149 = vmatprep.subr.mxu0 0.0
    %7150 = vmatpush1.msra.mxu0 0.0
    %7151 = vmatprep.subr.mxu0 0.0
    %7152 = vmatpush1.msra.mxu0 0.0
    %7153 = vmatprep.subr.mxu0 0.0
    %7154 = vmatpush1.msra.mxu0 0.0
    %7155 = vmatprep.subr.mxu0 0.0
    %7156 = vmatpush1.msra.mxu0 0.0
    %7157 = vmatprep.subr.mxu0 0.0
    %7158 = vmatpush1.msra.mxu0 0.0
    %7159 = vmatprep.subr.mxu0 0.0
    %7160 = vmatpush1.msra.mxu0 0.0
    %7161 = vmatprep.subr.mxu0 0.0
    %7162 = vmatpush1.msra.mxu0 0.0
    %7163 = vmatprep.subr.mxu0 0.0
    %7164 = vmatpush1.msra.mxu0 0.0
    %7165 = vmatprep.subr.mxu0 0.0
    %7166 = vmatpush1.msra.mxu0 0.0
    %7167 = vmatprep.subr.mxu0 0.0
    %7168 = vmatpush1.msra.mxu0 0.0
    %7169 = vmatprep.subr.mxu0 0.0
    %7170 = vmatpush1.msra.mxu0 0.0
    %7171 = vmatprep.subr.mxu0 0.0
    %7172 = vmatpush1.msra.mxu0 0.0
    %7173 = vmatprep.subr.mxu0 0.0
    %7174 = vmatpush1.msra.mxu0 0.0
    %7175 = vmatprep.subr.mxu0 0.0
    %7176 = vmatpush1.msra.mxu0 0.0
    %7177 = vmatprep.subr.mxu0 0.0
    %7178 = vmatpush1.msra.mxu0 0.0
    %7179 = vmatprep.subr.mxu0 0.0
    %7180 = vmatpush1.msra.mxu0 0.0
    %7181 = vmatprep.subr.mxu0 0.0
    %7182 = vmatpush1.msra.mxu0 0.0
    %7183 = vmatprep.mubr.f32.mxu0 0.0
    %7184 = vmatmul.mubr.f32.gmra.mrb[0].mxu0 %v7108
    %v7185 = vpop.f32.mrb[0].mxu0
    %v7186 = vadd.f32 0.0, %v7185
    %v7187 = vpop.f32.mrb[0].mxu0
    %7188 = vmatprep.mubr.f32.mxu0 0.0
    %7189 = vmatmul.mubr.f32.gmra.mrb[0].mxu0 %v7111
    %v7190 = vpop.f32.mrb[0].mxu0
    %v7191 = vadd.f32 0.0, %v7190
    %v7192 = vpop.f32.mrb[0].mxu0
    %7193 = vmatprep.mubr.f32.mxu0 0.0
    %7194 = vmatmul.mubr.f32.gmra.mrb[0].mxu0 %v7114
    %v7195 = vpop.f32.mrb[0].mxu0
    %v7196 = vadd.f32 0.0, %v7195
    %v7197 = vpop.f32.mrb[0].mxu0
    %7198 = vmatprep.mubr.f32.mxu0 0.0
    %7199 = vmatmul.mubr.f32.gmra.mrb[0].mxu0 %v7117
    %v7200 = vpop.f32.mrb[0].mxu0
    %v7201 = vadd.f32 0.0, %v7200
    %v7202 = vpop.f32.mrb[0].mxu0
    %7203 = vdwg.mxu0
    %v7204 = vadd.f32 %v7080, %v7186
    %v7205 = vadd.f32 %v7085, %v7191
    %v7206 = vadd.f32 %v7090, %v7196
    %v7207 = vadd.f32 %v7095, %v7201
    %s7208 = scalar_lea.vmem %s6, 192
    %v7209 = vld [vmem:[%s7208] sm:$0xff]
    %v7210 = vld [vmem:[%s7208 + $0x8] sm:$0xff]
    %v7211 = vld [vmem:[%s7208 + $0x10] sm:$0xff]
    %v7212 = vld [vmem:[%s7208 + $0x18] sm:$0xff]
    %v7213 = vld [vmem:[%s7208 + $0x20] sm:$0xff]
    %v7214 = vld [vmem:[%s7208 + $0x28] sm:$0xff]
    %v7215 = vld [vmem:[%s7208 + $0x30] sm:$0xff]
    %v7216 = vld [vmem:[%s7208 + $0x38] sm:$0xff]
    %v7218 = vsel %vm6903, %v6874, 0
    %v7221 = vsel %vm6903, %v6883, 0
    %7223 = vmatprep.subr.mxu0 0.0
    %7224 = vmatpush1.msra.mxu0 %v7209
    %7225 = vmatprep.subr.mxu0 0.0
    %7226 = vmatpush1.msra.mxu0 %v7210
    %7227 = vmatprep.subr.mxu0 0.0
    %7228 = vmatpush1.msra.mxu0 %v7211
    %7229 = vmatprep.subr.mxu0 0.0
    %7230 = vmatpush1.msra.mxu0 %v7212
    %7231 = vmatprep.subr.mxu0 0.0
    %7232 = vmatpush1.msra.mxu0 %v7213
    %7233 = vmatprep.subr.mxu0 0.0
    %7234 = vmatpush1.msra.mxu0 %v7214
    %7235 = vmatprep.subr.mxu0 0.0
    %7236 = vmatpush1.msra.mxu0 %v7215
    %7237 = vmatprep.subr.mxu0 0.0
    %7238 = vmatpush1.msra.mxu0 %v7216
    %7239 = vmatprep.subr.mxu0 0.0
    %7240 = vmatpush1.msra.mxu0 0.0
    %7241 = vmatprep.subr.mxu0 0.0
    %7242 = vmatpush1.msra.mxu0 0.0
    %7243 = vmatprep.subr.mxu0 0.0
    %7244 = vmatpush1.msra.mxu0 0.0
    %7245 = vmatprep.subr.mxu0 0.0
    %7246 = vmatpush1.msra.mxu0 0.0
    %7247 = vmatprep.subr.mxu0 0.0
    %7248 = vmatpush1.msra.mxu0 0.0
    %7249 = vmatprep.subr.mxu0 0.0
    %7250 = vmatpush1.msra.mxu0 0.0
    %7251 = vmatprep.subr.mxu0 0.0
    %7252 = vmatpush1.msra.mxu0 0.0
    %7253 = vmatprep.subr.mxu0 0.0
    %7254 = vmatpush1.msra.mxu0 0.0
    %7255 = vmatprep.subr.mxu0 0.0
    %7256 = vmatpush1.msra.mxu0 0.0
    %7257 = vmatprep.subr.mxu0 0.0
    %7258 = vmatpush1.msra.mxu0 0.0
    %7259 = vmatprep.subr.mxu0 0.0
    %7260 = vmatpush1.msra.mxu0 0.0
    %7261 = vmatprep.subr.mxu0 0.0
    %7262 = vmatpush1.msra.mxu0 0.0
    %7263 = vmatprep.subr.mxu0 0.0
    %7264 = vmatpush1.msra.mxu0 0.0
    %7265 = vmatprep.subr.mxu0 0.0
    %7266 = vmatpush1.msra.mxu0 0.0
    %7267 = vmatprep.subr.mxu0 0.0
    %7268 = vmatpush1.msra.mxu0 0.0
    %7269 = vmatprep.subr.mxu0 0.0
    %7270 = vmatpush1.msra.mxu0 0.0
    %7271 = vmatprep.subr.mxu0 0.0
    %7272 = vmatpush1.msra.mxu0 0.0
    %7273 = vmatprep.subr.mxu0 0.0
    %7274 = vmatpush1.msra.mxu0 0.0
    %7275 = vmatprep.subr.mxu0 0.0
    %7276 = vmatpush1.msra.mxu0 0.0
    %7277 = vmatprep.subr.mxu0 0.0
    %7278 = vmatpush1.msra.mxu0 0.0
    %7279 = vmatprep.subr.mxu0 0.0
    %7280 = vmatpush1.msra.mxu0 0.0
    %7281 = vmatprep.subr.mxu0 0.0
    %7282 = vmatpush1.msra.mxu0 0.0
    %7283 = vmatprep.subr.mxu0 0.0
    %7284 = vmatpush1.msra.mxu0 0.0
    %7285 = vmatprep.subr.mxu0 0.0
    %7286 = vmatpush1.msra.mxu0 0.0
    %7287 = vmatprep.mubr.f32.mxu0 0.0
    %7288 = vmatmul.mubr.f32.gmra.mrb[0].mxu0 %v7005
    %v7289 = vpop.f32.mrb[0].mxu0
    %v7290 = vadd.f32 0.0, %v7289
    %v7291 = vpop.f32.mrb[0].mxu0
    %7292 = vmatprep.mubr.f32.mxu0 0.0
    %7293 = vmatmul.mubr.f32.gmra.mrb[0].mxu0 %v7218
    %v7294 = vpop.f32.mrb[0].mxu0
    %v7295 = vadd.f32 0.0, %v7294
    %v7296 = vpop.f32.mrb[0].mxu0
    %7297 = vmatprep.mubr.f32.mxu0 0.0
    %7298 = vmatmul.mubr.f32.gmra.mrb[0].mxu0 %v7011
    %v7299 = vpop.f32.mrb[0].mxu0
    %v7300 = vadd.f32 0.0, %v7299
    %v7301 = vpop.f32.mrb[0].mxu0
    %7302 = vmatprep.mubr.f32.mxu0 0.0
    %7303 = vmatmul.mubr.f32.gmra.mrb[0].mxu0 %v7221
    %v7304 = vpop.f32.mrb[0].mxu0
    %v7305 = vadd.f32 0.0, %v7304
    %v7306 = vpop.f32.mrb[0].mxu0
    %7307 = vdwg.mxu0
    %v7308 = vadd.f32 %v7204, %v7290
    %v7309 = vadd.f32 %v7205, %v7295
    %v7310 = vadd.f32 %v7206, %v7300
    %v7311 = vadd.f32 %v7207, %v7305
    %s7312 = scalar_lea.vmem %s6, 256
    %v7313 = vld [vmem:[%s7312] sm:$0xff]
    %v7314 = vld [vmem:[%s7312 + $0x8] sm:$0xff]
    %v7315 = vld [vmem:[%s7312 + $0x10] sm:$0xff]
    %v7316 = vld [vmem:[%s7312 + $0x18] sm:$0xff]
    %v7317 = vld [vmem:[%s7312 + $0x20] sm:$0xff]
    %v7318 = vld [vmem:[%s7312 + $0x28] sm:$0xff]
    %v7319 = vld [vmem:[%s7312 + $0x30] sm:$0xff]
    %v7320 = vld [vmem:[%s7312 + $0x38] sm:$0xff]
    %v7322 = vsel %vm6903, %v6875, 0
    %v7325 = vsel %vm6903, %v6884, 0
    %7327 = vmatprep.subr.mxu0 0.0
    %7328 = vmatpush1.msra.mxu0 %v7313
    %7329 = vmatprep.subr.mxu0 0.0
    %7330 = vmatpush1.msra.mxu0 %v7314
    %7331 = vmatprep.subr.mxu0 0.0
    %7332 = vmatpush1.msra.mxu0 %v7315
    %7333 = vmatprep.subr.mxu0 0.0
    %7334 = vmatpush1.msra.mxu0 %v7316
    %7335 = vmatprep.subr.mxu0 0.0
    %7336 = vmatpush1.msra.mxu0 %v7317
    %7337 = vmatprep.subr.mxu0 0.0
    %7338 = vmatpush1.msra.mxu0 %v7318
    %7339 = vmatprep.subr.mxu0 0.0
    %7340 = vmatpush1.msra.mxu0 %v7319
    %7341 = vmatprep.subr.mxu0 0.0
    %7342 = vmatpush1.msra.mxu0 %v7320
    %7343 = vmatprep.subr.mxu0 0.0
    %7344 = vmatpush1.msra.mxu0 0.0
    %7345 = vmatprep.subr.mxu0 0.0
    %7346 = vmatpush1.msra.mxu0 0.0
    %7347 = vmatprep.subr.mxu0 0.0
    %7348 = vmatpush1.msra.mxu0 0.0
    %7349 = vmatprep.subr.mxu0 0.0
    %7350 = vmatpush1.msra.mxu0 0.0
    %7351 = vmatprep.subr.mxu0 0.0
    %7352 = vmatpush1.msra.mxu0 0.0
    %7353 = vmatprep.subr.mxu0 0.0
    %7354 = vmatpush1.msra.mxu0 0.0
    %7355 = vmatprep.subr.mxu0 0.0
    %7356 = vmatpush1.msra.mxu0 0.0
    %7357 = vmatprep.subr.mxu0 0.0
    %7358 = vmatpush1.msra.mxu0 0.0
    %7359 = vmatprep.subr.mxu0 0.0
    %7360 = vmatpush1.msra.mxu0 0.0
    %7361 = vmatprep.subr.mxu0 0.0
    %7362 = vmatpush1.msra.mxu0 0.0
    %7363 = vmatprep.subr.mxu0 0.0
    %7364 = vmatpush1.msra.mxu0 0.0
    %7365 = vmatprep.subr.mxu0 0.0
    %7366 = vmatpush1.msra.mxu0 0.0
    %7367 = vmatprep.subr.mxu0 0.0
    %7368 = vmatpush1.msra.mxu0 0.0
    %7369 = vmatprep.subr.mxu0 0.0
    %7370 = vmatpush1.msra.mxu0 0.0
    %7371 = vmatprep.subr.mxu0 0.0
    %7372 = vmatpush1.msra.mxu0 0.0
    %7373 = vmatprep.subr.mxu0 0.0
    %7374 = vmatpush1.msra.mxu0 0.0
    %7375 = vmatprep.subr.mxu0 0.0
    %7376 = vmatpush1.msra.mxu0 0.0
    %7377 = vmatprep.subr.mxu0 0.0
    %7378 = vmatpush1.msra.mxu0 0.0
    %7379 = vmatprep.subr.mxu0 0.0
    %7380 = vmatpush1.msra.mxu0 0.0
    %7381 = vmatprep.subr.mxu0 0.0
    %7382 = vmatpush1.msra.mxu0 0.0
    %7383 = vmatprep.subr.mxu0 0.0
    %7384 = vmatpush1.msra.mxu0 0.0
    %7385 = vmatprep.subr.mxu0 0.0
    %7386 = vmatpush1.msra.mxu0 0.0
    %7387 = vmatprep.subr.mxu0 0.0
    %7388 = vmatpush1.msra.mxu0 0.0
    %7389 = vmatprep.subr.mxu0 0.0
    %7390 = vmatpush1.msra.mxu0 0.0
    %7391 = vmatprep.mubr.f32.mxu0 0.0
    %7392 = vmatmul.mubr.f32.gmra.mrb[0].mxu0 %v6908
    %v7393 = vpop.f32.mrb[0].mxu0
    %v7394 = vadd.f32 0.0, %v7393
    %v7395 = vpop.f32.mrb[0].mxu0
    %7396 = vmatprep.mubr.f32.mxu0 0.0
    %7397 = vmatmul.mubr.f32.gmra.mrb[0].mxu0 %v7322
    %v7398 = vpop.f32.mrb[0].mxu0
    %v7399 = vadd.f32 0.0, %v7398
    %v7400 = vpop.f32.mrb[0].mxu0
    %7401 = vmatprep.mubr.f32.mxu0 0.0
    %7402 = vmatmul.mubr.f32.gmra.mrb[0].mxu0 %v6914
    %v7403 = vpop.f32.mrb[0].mxu0
    %v7404 = vadd.f32 0.0, %v7403
    %v7405 = vpop.f32.mrb[0].mxu0
    %7406 = vmatprep.mubr.f32.mxu0 0.0
    %7407 = vmatmul.mubr.f32.gmra.mrb[0].mxu0 %v7325
    %v7408 = vpop.f32.mrb[0].mxu0
    %v7409 = vadd.f32 0.0, %v7408
    %v7410 = vpop.f32.mrb[0].mxu0
    %7411 = vdwg.mxu0
    %v7412 = vadd.f32 %v7308, %v7394
    %v7413 = vadd.f32 %v7309, %v7399
    %v7414 = vadd.f32 %v7310, %v7404
    %v7415 = vadd.f32 %v7311, %v7409
    %s7416 = scalar_lea.vmem %s6, 320
    %v7417 = vld [vmem:[%s7416] sm:$0xff]
    %v7418 = vld [vmem:[%s7416 + $0x8] sm:$0xff]
    %v7419 = vld [vmem:[%s7416 + $0x10] sm:$0xff]
    %v7420 = vld [vmem:[%s7416 + $0x18] sm:$0xff]
    %v7421 = vld [vmem:[%s7416 + $0x20] sm:$0xff]
    %v7422 = vld [vmem:[%s7416 + $0x28] sm:$0xff]
    %v7423 = vld [vmem:[%s7416 + $0x30] sm:$0xff]
    %v7424 = vld [vmem:[%s7416 + $0x38] sm:$0xff]
    %v7426 = vsel %vm6903, %v6876, 0
    %v7429 = vsel %vm6903, %v6885, 0
    %7431 = vmatprep.subr.mxu0 0.0
    %7432 = vmatpush1.msra.mxu0 %v7417
    %7433 = vmatprep.subr.mxu0 0.0
    %7434 = vmatpush1.msra.mxu0 %v7418
    %7435 = vmatprep.subr.mxu0 0.0
    %7436 = vmatpush1.msra.mxu0 %v7419
    %7437 = vmatprep.subr.mxu0 0.0
    %7438 = vmatpush1.msra.mxu0 %v7420
    %7439 = vmatprep.subr.mxu0 0.0
    %7440 = vmatpush1.msra.mxu0 %v7421
    %7441 = vmatprep.subr.mxu0 0.0
    %7442 = vmatpush1.msra.mxu0 %v7422
    %7443 = vmatprep.subr.mxu0 0.0
    %7444 = vmatpush1.msra.mxu0 %v7423
    %7445 = vmatprep.subr.mxu0 0.0
    %7446 = vmatpush1.msra.mxu0 %v7424
    %7447 = vmatprep.subr.mxu0 0.0
    %7448 = vmatpush1.msra.mxu0 0.0
    %7449 = vmatprep.subr.mxu0 0.0
    %7450 = vmatpush1.msra.mxu0 0.0
    %7451 = vmatprep.subr.mxu0 0.0
    %7452 = vmatpush1.msra.mxu0 0.0
    %7453 = vmatprep.subr.mxu0 0.0
    %7454 = vmatpush1.msra.mxu0 0.0
    %7455 = vmatprep.subr.mxu0 0.0
    %7456 = vmatpush1.msra.mxu0 0.0
    %7457 = vmatprep.subr.mxu0 0.0
    %7458 = vmatpush1.msra.mxu0 0.0
    %7459 = vmatprep.subr.mxu0 0.0
    %7460 = vmatpush1.msra.mxu0 0.0
    %7461 = vmatprep.subr.mxu0 0.0
    %7462 = vmatpush1.msra.mxu0 0.0
    %7463 = vmatprep.subr.mxu0 0.0
    %7464 = vmatpush1.msra.mxu0 0.0
    %7465 = vmatprep.subr.mxu0 0.0
    %7466 = vmatpush1.msra.mxu0 0.0
    %7467 = vmatprep.subr.mxu0 0.0
    %7468 = vmatpush1.msra.mxu0 0.0
    %7469 = vmatprep.subr.mxu0 0.0
    %7470 = vmatpush1.msra.mxu0 0.0
    %7471 = vmatprep.subr.mxu0 0.0
    %7472 = vmatpush1.msra.mxu0 0.0
    %7473 = vmatprep.subr.mxu0 0.0
    %7474 = vmatpush1.msra.mxu0 0.0
    %7475 = vmatprep.subr.mxu0 0.0
    %7476 = vmatpush1.msra.mxu0 0.0
    %7477 = vmatprep.subr.mxu0 0.0
    %7478 = vmatpush1.msra.mxu0 0.0
    %7479 = vmatprep.subr.mxu0 0.0
    %7480 = vmatpush1.msra.mxu0 0.0
    %7481 = vmatprep.subr.mxu0 0.0
    %7482 = vmatpush1.msra.mxu0 0.0
    %7483 = vmatprep.subr.mxu0 0.0
    %7484 = vmatpush1.msra.mxu0 0.0
    %7485 = vmatprep.subr.mxu0 0.0
    %7486 = vmatpush1.msra.mxu0 0.0
    %7487 = vmatprep.subr.mxu0 0.0
    %7488 = vmatpush1.msra.mxu0 0.0
    %7489 = vmatprep.subr.mxu0 0.0
    %7490 = vmatpush1.msra.mxu0 0.0
    %7491 = vmatprep.subr.mxu0 0.0
    %7492 = vmatpush1.msra.mxu0 0.0
    %7493 = vmatprep.subr.mxu0 0.0
    %7494 = vmatpush1.msra.mxu0 0.0
    %7495 = vmatprep.mubr.f32.mxu0 0.0
    %7496 = vmatmul.mubr.f32.gmra.mrb[0].mxu0 %v7111
    %v7497 = vpop.f32.mrb[0].mxu0
    %v7498 = vadd.f32 0.0, %v7497
    %v7499 = vpop.f32.mrb[0].mxu0
    %7500 = vmatprep.mubr.f32.mxu0 0.0
    %7501 = vmatmul.mubr.f32.gmra.mrb[0].mxu0 %v7426
    %v7502 = vpop.f32.mrb[0].mxu0
    %v7503 = vadd.f32 0.0, %v7502
    %v7504 = vpop.f32.mrb[0].mxu0
    %7505 = vmatprep.mubr.f32.mxu0 0.0
    %7506 = vmatmul.mubr.f32.gmra.mrb[0].mxu0 %v7117
    %v7507 = vpop.f32.mrb[0].mxu0
    %v7508 = vadd.f32 0.0, %v7507
    %v7509 = vpop.f32.mrb[0].mxu0
    %7510 = vmatprep.mubr.f32.mxu0 0.0
    %7511 = vmatmul.mubr.f32.gmra.mrb[0].mxu0 %v7429
    %v7512 = vpop.f32.mrb[0].mxu0
    %v7513 = vadd.f32 0.0, %v7512
    %v7514 = vpop.f32.mrb[0].mxu0
    %7515 = vdwg.mxu0
    %v7516 = vadd.f32 %v7412, %v7498
    %v7517 = vadd.f32 %v7413, %v7503
    %v7518 = vadd.f32 %v7414, %v7508
    %v7519 = vadd.f32 %v7415, %v7513
    %v7520 = vld [vmem:[%s7] sm:$0x1]
    %v7522 = vlaneseq
    %v7523 = vshrl.u32 %v7522, 7
    %v7524 = vsub.s32 0, %v7523
    %v7525 = vrot.slane %v7520, %v7524
    %v7527 = vadd.f32 %v7516, %v7525
    %v7528 = vadd.f32 %v7517, %v7525
    %v7529 = vadd.f32 %v7518, %v7525
    %v7530 = vadd.f32 %v7519, %v7525
    %v7531 = vmax.f32 %v7527, 0.0
    %v7532 = vmax.f32 %v7528, 0.0
    %v7533 = vmax.f32 %v7529, 0.0
    %v7534 = vmax.f32 %v7530, 0.0
    %7535 = vst.msk [vmem:[%s10] sm:$0xff] %vm6903, %v7531
    %7536 = vst.msk [vmem:[%s10 + $0x8] sm:$0xff] %vm6903, %v7532
    %7537 = vst.msk [vmem:[%s10 + $0x10] sm:$0xff] %vm6903, %v7533
    %7538 = vst.msk [vmem:[%s10 + $0x18] sm:$0xff] %vm6903, %v7534
    %v7539 = vld [vmem:[%s10] ss:$16 sm:$0x3]
    %v7540 = vld [vmem:[%s8] sm:$0xff]
    %v7541 = vld [vmem:[%s8 + $0x8] sm:$0xff]
    %v7542 = vld [vmem:[%s8 + $0x10] sm:$0xff]
    %v7543 = vld [vmem:[%s8 + $0x18] sm:$0xff]
    %v7544 = vld [vmem:[%s8 + $0x20] sm:$0xff]
    %v7545 = vld [vmem:[%s8 + $0x28] sm:$0xff]
    %v7546 = vld [vmem:[%s8 + $0x30] sm:$0xff]
    %v7547 = vld [vmem:[%s8 + $0x38] sm:$0xff]
    %s7548 = scalar_lea.vmem %s10, 1
    %v7549 = vld [vmem:[%s7548] ss:$16 sm:$0x3]
    %s7550 = scalar_lea.vmem %s8, 64
    %v7551 = vld [vmem:[%s7550] sm:$0xff]
    %v7552 = vld [vmem:[%s7550 + $0x8] sm:$0xff]
    %v7553 = vld [vmem:[%s7550 + $0x10] sm:$0xff]
    %v7554 = vld [vmem:[%s7550 + $0x18] sm:$0xff]
    %v7555 = vld [vmem:[%s7550 + $0x20] sm:$0xff]
    %v7556 = vld [vmem:[%s7550 + $0x28] sm:$0xff]
    %v7557 = vld [vmem:[%s7550 + $0x30] sm:$0xff]
    %v7558 = vld [vmem:[%s7550 + $0x38] sm:$0xff]
    %v7560 = vsel %vm6903, %v7549, 0
    %7562 = vmatprep.subr.mxu0 0.0
    %7563 = vmatpush1.msra.mxu0 %v7551
    %7564 = vmatprep.subr.mxu0 0.0
    %7565 = vmatpush1.msra.mxu0 %v7552
    %7566 = vmatprep.subr.mxu0 0.0
    %7567 = vmatpush1.msra.mxu0 %v7553
    %7568 = vmatprep.subr.mxu0 0.0
    %7569 = vmatpush1.msra.mxu0 %v7554
    %7570 = vmatprep.subr.mxu0 0.0
    %7571 = vmatpush1.msra.mxu0 %v7555
    %7572 = vmatprep.subr.mxu0 0.0
    %7573 = vmatpush1.msra.mxu0 %v7556
    %7574 = vmatprep.subr.mxu0 0.0
    %7575 = vmatpush1.msra.mxu0 %v7557
    %7576 = vmatprep.subr.mxu0 0.0
    %7577 = vmatpush1.msra.mxu0 %v7558
    %7578 = vmatprep.subr.mxu0 0.0
    %7579 = vmatpush1.msra.mxu0 0.0
    %7580 = vmatprep.subr.mxu0 0.0
    %7581 = vmatpush1.msra.mxu0 0.0
    %7582 = vmatprep.subr.mxu0 0.0
    %7583 = vmatpush1.msra.mxu0 0.0
    %7584 = vmatprep.subr.mxu0 0.0
    %7585 = vmatpush1.msra.mxu0 0.0
    %7586 = vmatprep.subr.mxu0 0.0
    %7587 = vmatpush1.msra.mxu0 0.0
    %7588 = vmatprep.subr.mxu0 0.0
    %7589 = vmatpush1.msra.mxu0 0.0
    %7590 = vmatprep.subr.mxu0 0.0
    %7591 = vmatpush1.msra.mxu0 0.0
    %7592 = vmatprep.subr.mxu0 0.0
    %7593 = vmatpush1.msra.mxu0 0.0
    %7594 = vmatprep.subr.mxu0 0.0
    %7595 = vmatpush1.msra.mxu0 0.0
    %7596 = vmatprep.subr.mxu0 0.0
    %7597 = vmatpush1.msra.mxu0 0.0
    %7598 = vmatprep.subr.mxu0 0.0
    %7599 = vmatpush1.msra.mxu0 0.0
    %7600 = vmatprep.subr.mxu0 0.0
    %7601 = vmatpush1.msra.mxu0 0.0
    %7602 = vmatprep.subr.mxu0 0.0
    %7603 = vmatpush1.msra.mxu0 0.0
    %7604 = vmatprep.subr.mxu0 0.0
    %7605 = vmatpush1.msra.mxu0 0.0
    %7606 = vmatprep.subr.mxu0 0.0
    %7607 = vmatpush1.msra.mxu0 0.0
    %7608 = vmatprep.subr.mxu0 0.0
    %7609 = vmatpush1.msra.mxu0 0.0
    %7610 = vmatprep.subr.mxu0 0.0
    %7611 = vmatpush1.msra.mxu0 0.0
    %7612 = vmatprep.subr.mxu0 0.0
    %7613 = vmatpush1.msra.mxu0 0.0
    %7614 = vmatprep.subr.mxu0 0.0
    %7615 = vmatpush1.msra.mxu0 0.0
    %7616 = vmatprep.subr.mxu0 0.0
    %7617 = vmatpush1.msra.mxu0 0.0
    %7618 = vmatprep.subr.mxu0 0.0
    %7619 = vmatpush1.msra.mxu0 0.0
    %7620 = vmatprep.subr.mxu0 0.0
    %7621 = vmatpush1.msra.mxu0 0.0
    %7622 = vmatprep.subr.mxu0 0.0
    %7623 = vmatpush1.msra.mxu0 0.0
    %7624 = vmatprep.subr.mxu0 0.0
    %7625 = vmatpush1.msra.mxu0 0.0
    %7626 = vmatprep.mubr.f32.mxu0 0.0
    %7627 = vmatmul.mubr.f32.gmra.mrb[0].mxu0 %v7560
    %v7628 = vpop.f32.mrb[0].mxu0
    %v7629 = vadd.f32 0.0, %v7628
    %v7630 = vpop.f32.mrb[0].mxu0
    %7631 = vdwg.mxu0
    %v7633 = vsel %vm6903, %v7539, 0
    %7635 = vmatprep.subr.mxu0 0.0
    %7636 = vmatpush1.msra.mxu0 %v7540
    %7637 = vmatprep.subr.mxu0 0.0
    %7638 = vmatpush1.msra.mxu0 %v7541
    %7639 = vmatprep.subr.mxu0 0.0
    %7640 = vmatpush1.msra.mxu0 %v7542
    %7641 = vmatprep.subr.mxu0 0.0
    %7642 = vmatpush1.msra.mxu0 %v7543
    %7643 = vmatprep.subr.mxu0 0.0
    %7644 = vmatpush1.msra.mxu0 %v7544
    %7645 = vmatprep.subr.mxu0 0.0
    %7646 = vmatpush1.msra.mxu0 %v7545
    %7647 = vmatprep.subr.mxu0 0.0
    %7648 = vmatpush1.msra.mxu0 %v7546
    %7649 = vmatprep.subr.mxu0 0.0
    %7650 = vmatpush1.msra.mxu0 %v7547
    %7651 = vmatprep.subr.mxu0 0.0
    %7652 = vmatpush1.msra.mxu0 0.0
    %7653 = vmatprep.subr.mxu0 0.0
    %7654 = vmatpush1.msra.mxu0 0.0
    %7655 = vmatprep.subr.mxu0 0.0
    %7656 = vmatpush1.msra.mxu0 0.0
    %7657 = vmatprep.subr.mxu0 0.0
    %7658 = vmatpush1.msra.mxu0 0.0
    %7659 = vmatprep.subr.mxu0 0.0
    %7660 = vmatpush1.msra.mxu0 0.0
    %7661 = vmatprep.subr.mxu0 0.0
    %7662 = vmatpush1.msra.mxu0 0.0
    %7663 = vmatprep.subr.mxu0 0.0
    %7664 = vmatpush1.msra.mxu0 0.0
    %7665 = vmatprep.subr.mxu0 0.0
    %7666 = vmatpush1.msra.mxu0 0.0
    %7667 = vmatprep.subr.mxu0 0.0
    %7668 = vmatpush1.msra.mxu0 0.0
    %7669 = vmatprep.subr.mxu0 0.0
    %7670 = vmatpush1.msra.mxu0 0.0
    %7671 = vmatprep.subr.mxu0 0.0
    %7672 = vmatpush1.msra.mxu0 0.0
    %7673 = vmatprep.subr.mxu0 0.0
    %7674 = vmatpush1.msra.mxu0 0.0
    %7675 = vmatprep.subr.mxu0 0.0
    %7676 = vmatpush1.msra.mxu0 0.0
    %7677 = vmatprep.subr.mxu0 0.0
    %7678 = vmatpush1.msra.mxu0 0.0
    %7679 = vmatprep.subr.mxu0 0.0
    %7680 = vmatpush1.msra.mxu0 0.0
    %7681 = vmatprep.subr.mxu0 0.0
    %7682 = vmatpush1.msra.mxu0 0.0
    %7683 = vmatprep.subr.mxu0 0.0
    %7684 = vmatpush1.msra.mxu0 0.0
    %7685 = vmatprep.subr.mxu0 0.0
    %7686 = vmatpush1.msra.mxu0 0.0
    %7687 = vmatprep.subr.mxu0 0.0
    %7688 = vmatpush1.msra.mxu0 0.0
    %7689 = vmatprep.subr.mxu0 0.0
    %7690 = vmatpush1.msra.mxu0 0.0
    %7691 = vmatprep.subr.mxu0 0.0
    %7692 = vmatpush1.msra.mxu0 0.0
    %7693 = vmatprep.subr.mxu0 0.0
    %7694 = vmatpush1.msra.mxu0 0.0
    %7695 = vmatprep.subr.mxu0 0.0
    %7696 = vmatpush1.msra.mxu0 0.0
    %7697 = vmatprep.subr.mxu0 0.0
    %7698 = vmatpush1.msra.mxu0 0.0
    %7699 = vmatprep.mubr.f32.mxu0 0.0
    %7700 = vmatmul.mubr.f32.gmra.mrb[0].mxu0 %v7633
    %v7701 = vpop.f32.mrb[0].mxu0
    %v7702 = vadd.f32 %v7629, %v7701
    %v7703 = vpop.f32.mrb[0].mxu0
    %7704 = vdwg.mxu0
    %s7705 = scalar_lea.vmem %s10, 2
    %v7706 = vld [vmem:[%s7705] ss:$16 sm:$0x3]
    %s7707 = scalar_lea.vmem %s8, 128
    %v7708 = vld [vmem:[%s7707] sm:$0xff]
    %v7709 = vld [vmem:[%s7707 + $0x8] sm:$0xff]
    %v7710 = vld [vmem:[%s7707 + $0x10] sm:$0xff]
    %v7711 = vld [vmem:[%s7707 + $0x18] sm:$0xff]
    %v7712 = vld [vmem:[%s7707 + $0x20] sm:$0xff]
    %v7713 = vld [vmem:[%s7707 + $0x28] sm:$0xff]
    %v7714 = vld [vmem:[%s7707 + $0x30] sm:$0xff]
    %v7715 = vld [vmem:[%s7707 + $0x38] sm:$0xff]
    %v7717 = vsel %vm6903, %v7706, 0
    %7719 = vmatprep.subr.mxu0 0.0
    %7720 = vmatpush1.msra.mxu0 %v7708
    %7721 = vmatprep.subr.mxu0 0.0
    %7722 = vmatpush1.msra.mxu0 %v7709
    %7723 = vmatprep.subr.mxu0 0.0
    %7724 = vmatpush1.msra.mxu0 %v7710
    %7725 = vmatprep.subr.mxu0 0.0
    %7726 = vmatpush1.msra.mxu0 %v7711
    %7727 = vmatprep.subr.mxu0 0.0
    %7728 = vmatpush1.msra.mxu0 %v7712
    %7729 = vmatprep.subr.mxu0 0.0
    %7730 = vmatpush1.msra.mxu0 %v7713
    %7731 = vmatprep.subr.mxu0 0.0
    %7732 = vmatpush1.msra.mxu0 %v7714
    %7733 = vmatprep.subr.mxu0 0.0
    %7734 = vmatpush1.msra.mxu0 %v7715
    %7735 = vmatprep.subr.mxu0 0.0
    %7736 = vmatpush1.msra.mxu0 0.0
    %7737 = vmatprep.subr.mxu0 0.0
    %7738 = vmatpush1.msra.mxu0 0.0
    %7739 = vmatprep.subr.mxu0 0.0
    %7740 = vmatpush1.msra.mxu0 0.0
    %7741 = vmatprep.subr.mxu0 0.0
    %7742 = vmatpush1.msra.mxu0 0.0
    %7743 = vmatprep.subr.mxu0 0.0
    %7744 = vmatpush1.msra.mxu0 0.0
    %7745 = vmatprep.subr.mxu0 0.0
    %7746 = vmatpush1.msra.mxu0 0.0
    %7747 = vmatprep.subr.mxu0 0.0
    %7748 = vmatpush1.msra.mxu0 0.0
    %7749 = vmatprep.subr.mxu0 0.0
    %7750 = vmatpush1.msra.mxu0 0.0
    %7751 = vmatprep.subr.mxu0 0.0
    %7752 = vmatpush1.msra.mxu0 0.0
    %7753 = vmatprep.subr.mxu0 0.0
    %7754 = vmatpush1.msra.mxu0 0.0
    %7755 = vmatprep.subr.mxu0 0.0
    %7756 = vmatpush1.msra.mxu0 0.0
    %7757 = vmatprep.subr.mxu0 0.0
    %7758 = vmatpush1.msra.mxu0 0.0
    %7759 = vmatprep.subr.mxu0 0.0
    %7760 = vmatpush1.msra.mxu0 0.0
    %7761 = vmatprep.subr.mxu0 0.0
    %7762 = vmatpush1.msra.mxu0 0.0
    %7763 = vmatprep.subr.mxu0 0.0
    %7764 = vmatpush1.msra.mxu0 0.0
    %7765 = vmatprep.subr.mxu0 0.0
    %7766 = vmatpush1.msra.mxu0 0.0
    %7767 = vmatprep.subr.mxu0 0.0
    %7768 = vmatpush1.msra.mxu0 0.0
    %7769 = vmatprep.subr.mxu0 0.0
    %7770 = vmatpush1.msra.mxu0 0.0
    %7771 = vmatprep.subr.mxu0 0.0
    %7772 = vmatpush1.msra.mxu0 0.0
    %7773 = vmatprep.subr.mxu0 0.0
    %7774 = vmatpush1.msra.mxu0 0.0
    %7775 = vmatprep.subr.mxu0 0.0
    %7776 = vmatpush1.msra.mxu0 0.0
    %7777 = vmatprep.subr.mxu0 0.0
    %7778 = vmatpush1.msra.mxu0 0.0
    %7779 = vmatprep.subr.mxu0 0.0
    %7780 = vmatpush1.msra.mxu0 0.0
    %7781 = vmatprep.subr.mxu0 0.0
    %7782 = vmatpush1.msra.mxu0 0.0
    %7783 = vmatprep.mubr.f32.mxu0 0.0
    %7784 = vmatmul.mubr.f32.gmra.mrb[0].mxu0 %v7717
    %v7785 = vpop.f32.mrb[0].mxu0
    %v7786 = vadd.f32 0.0, %v7785
    %v7787 = vpop.f32.mrb[0].mxu0
    %7788 = vdwg.mxu0
    %v7789 = vadd.f32 %v7702, %v7786
    %s7790 = scalar_lea.vmem %s10, 3
    %v7791 = vld [vmem:[%s7790] ss:$16 sm:$0x3]
    %s7792 = scalar_lea.vmem %s8, 192
    %v7793 = vld [vmem:[%s7792] sm:$0xff]
    %v7794 = vld [vmem:[%s7792 + $0x8] sm:$0xff]
    %v7795 = vld [vmem:[%s7792 + $0x10] sm:$0xff]
    %v7796 = vld [vmem:[%s7792 + $0x18] sm:$0xff]
    %v7797 = vld [vmem:[%s7792 + $0x20] sm:$0xff]
    %v7798 = vld [vmem:[%s7792 + $0x28] sm:$0xff]
    %v7799 = vld [vmem:[%s7792 + $0x30] sm:$0xff]
    %v7800 = vld [vmem:[%s7792 + $0x38] sm:$0xff]
    %v7802 = vsel %vm6903, %v7791, 0
    %7804 = vmatprep.subr.mxu0 0.0
    %7805 = vmatpush1.msra.mxu0 %v7793
    %7806 = vmatprep.subr.mxu0 0.0
    %7807 = vmatpush1.msra.mxu0 %v7794
    %7808 = vmatprep.subr.mxu0 0.0
    %7809 = vmatpush1.msra.mxu0 %v7795
    %7810 = vmatprep.subr.mxu0 0.0
    %7811 = vmatpush1.msra.mxu0 %v7796
    %7812 = vmatprep.subr.mxu0 0.0
    %7813 = vmatpush1.msra.mxu0 %v7797
    %7814 = vmatprep.subr.mxu0 0.0
    %7815 = vmatpush1.msra.mxu0 %v7798
    %7816 = vmatprep.subr.mxu0 0.0
    %7817 = vmatpush1.msra.mxu0 %v7799
    %7818 = vmatprep.subr.mxu0 0.0
    %7819 = vmatpush1.msra.mxu0 %v7800
    %7820 = vmatprep.subr.mxu0 0.0
    %7821 = vmatpush1.msra.mxu0 0.0
    %7822 = vmatprep.subr.mxu0 0.0
    %7823 = vmatpush1.msra.mxu0 0.0
    %7824 = vmatprep.subr.mxu0 0.0
    %7825 = vmatpush1.msra.mxu0 0.0
    %7826 = vmatprep.subr.mxu0 0.0
    %7827 = vmatpush1.msra.mxu0 0.0
    %7828 = vmatprep.subr.mxu0 0.0
    %7829 = vmatpush1.msra.mxu0 0.0
    %7830 = vmatprep.subr.mxu0 0.0
    %7831 = vmatpush1.msra.mxu0 0.0
    %7832 = vmatprep.subr.mxu0 0.0
    %7833 = vmatpush1.msra.mxu0 0.0
    %7834 = vmatprep.subr.mxu0 0.0
    %7835 = vmatpush1.msra.mxu0 0.0
    %7836 = vmatprep.subr.mxu0 0.0
    %7837 = vmatpush1.msra.mxu0 0.0
    %7838 = vmatprep.subr.mxu0 0.0
    %7839 = vmatpush1.msra.mxu0 0.0
    %7840 = vmatprep.subr.mxu0 0.0
    %7841 = vmatpush1.msra.mxu0 0.0
    %7842 = vmatprep.subr.mxu0 0.0
    %7843 = vmatpush1.msra.mxu0 0.0
    %7844 = vmatprep.subr.mxu0 0.0
    %7845 = vmatpush1.msra.mxu0 0.0
    %7846 = vmatprep.subr.mxu0 0.0
    %7847 = vmatpush1.msra.mxu0 0.0
    %7848 = vmatprep.subr.mxu0 0.0
    %7849 = vmatpush1.msra.mxu0 0.0
    %7850 = vmatprep.subr.mxu0 0.0
    %7851 = vmatpush1.msra.mxu0 0.0
    %7852 = vmatprep.subr.mxu0 0.0
    %7853 = vmatpush1.msra.mxu0 0.0
    %7854 = vmatprep.subr.mxu0 0.0
    %7855 = vmatpush1.msra.mxu0 0.0
    %7856 = vmatprep.subr.mxu0 0.0
    %7857 = vmatpush1.msra.mxu0 0.0
    %7858 = vmatprep.subr.mxu0 0.0
    %7859 = vmatpush1.msra.mxu0 0.0
    %7860 = vmatprep.subr.mxu0 0.0
    %7861 = vmatpush1.msra.mxu0 0.0
    %7862 = vmatprep.subr.mxu0 0.0
    %7863 = vmatpush1.msra.mxu0 0.0
    %7864 = vmatprep.subr.mxu0 0.0
    %7865 = vmatpush1.msra.mxu0 0.0
    %7866 = vmatprep.subr.mxu0 0.0
    %7867 = vmatpush1.msra.mxu0 0.0
    %7868 = vmatprep.mubr.f32.mxu0 0.0
    %7869 = vmatmul.mubr.f32.gmra.mrb[0].mxu0 %v7802
    %v7870 = vpop.f32.mrb[0].mxu0
    %v7871 = vadd.f32 0.0, %v7870
    %v7872 = vpop.f32.mrb[0].mxu0
    %7873 = vdwg.mxu0
    %v7874 = vadd.f32 %v7789, %v7871
    %s7875 = scalar_lea.vmem %s10, 4
    %v7876 = vld [vmem:[%s7875] ss:$16 sm:$0x3]
    %s7877 = scalar_lea.vmem %s8, 256
    %v7878 = vld [vmem:[%s7877] sm:$0xff]
    %v7879 = vld [vmem:[%s7877 + $0x8] sm:$0xff]
    %v7880 = vld [vmem:[%s7877 + $0x10] sm:$0xff]
    %v7881 = vld [vmem:[%s7877 + $0x18] sm:$0xff]
    %v7882 = vld [vmem:[%s7877 + $0x20] sm:$0xff]
    %v7883 = vld [vmem:[%s7877 + $0x28] sm:$0xff]
    %v7884 = vld [vmem:[%s7877 + $0x30] sm:$0xff]
    %v7885 = vld [vmem:[%s7877 + $0x38] sm:$0xff]
    %v7887 = vsel %vm6903, %v7876, 0
    %7889 = vmatprep.subr.mxu0 0.0
    %7890 = vmatpush1.msra.mxu0 %v7878
    %7891 = vmatprep.subr.mxu0 0.0
    %7892 = vmatpush1.msra.mxu0 %v7879
    %7893 = vmatprep.subr.mxu0 0.0
    %7894 = vmatpush1.msra.mxu0 %v7880
    %7895 = vmatprep.subr.mxu0 0.0
    %7896 = vmatpush1.msra.mxu0 %v7881
    %7897 = vmatprep.subr.mxu0 0.0
    %7898 = vmatpush1.msra.mxu0 %v7882
    %7899 = vmatprep.subr.mxu0 0.0
    %7900 = vmatpush1.msra.mxu0 %v7883
    %7901 = vmatprep.subr.mxu0 0.0
    %7902 = vmatpush1.msra.mxu0 %v7884
    %7903 = vmatprep.subr.mxu0 0.0
    %7904 = vmatpush1.msra.mxu0 %v7885
    %7905 = vmatprep.subr.mxu0 0.0
    %7906 = vmatpush1.msra.mxu0 0.0
    %7907 = vmatprep.subr.mxu0 0.0
    %7908 = vmatpush1.msra.mxu0 0.0
    %7909 = vmatprep.subr.mxu0 0.0
    %7910 = vmatpush1.msra.mxu0 0.0
    %7911 = vmatprep.subr.mxu0 0.0
    %7912 = vmatpush1.msra.mxu0 0.0
    %7913 = vmatprep.subr.mxu0 0.0
    %7914 = vmatpush1.msra.mxu0 0.0
    %7915 = vmatprep.subr.mxu0 0.0
    %7916 = vmatpush1.msra.mxu0 0.0
    %7917 = vmatprep.subr.mxu0 0.0
    %7918 = vmatpush1.msra.mxu0 0.0
    %7919 = vmatprep.subr.mxu0 0.0
    %7920 = vmatpush1.msra.mxu0 0.0
    %7921 = vmatprep.subr.mxu0 0.0
    %7922 = vmatpush1.msra.mxu0 0.0
    %7923 = vmatprep.subr.mxu0 0.0
    %7924 = vmatpush1.msra.mxu0 0.0
    %7925 = vmatprep.subr.mxu0 0.0
    %7926 = vmatpush1.msra.mxu0 0.0
    %7927 = vmatprep.subr.mxu0 0.0
    %7928 = vmatpush1.msra.mxu0 0.0
    %7929 = vmatprep.subr.mxu0 0.0
    %7930 = vmatpush1.msra.mxu0 0.0
    %7931 = vmatprep.subr.mxu0 0.0
    %7932 = vmatpush1.msra.mxu0 0.0
    %7933 = vmatprep.subr.mxu0 0.0
    %7934 = vmatpush1.msra.mxu0 0.0
    %7935 = vmatprep.subr.mxu0 0.0
    %7936 = vmatpush1.msra.mxu0 0.0
    %7937 = vmatprep.subr.mxu0 0.0
    %7938 = vmatpush1.msra.mxu0 0.0
    %7939 = vmatprep.subr.mxu0 0.0
    %7940 = vmatpush1.msra.mxu0 0.0
    %7941 = vmatprep.subr.mxu0 0.0
    %7942 = vmatpush1.msra.mxu0 0.0
    %7943 = vmatprep.subr.mxu0 0.0
    %7944 = vmatpush1.msra.mxu0 0.0
    %7945 = vmatprep.subr.mxu0 0.0
    %7946 = vmatpush1.msra.mxu0 0.0
    %7947 = vmatprep.subr.mxu0 0.0
    %7948 = vmatpush1.msra.mxu0 0.0
    %7949 = vmatprep.subr.mxu0 0.0
    %7950 = vmatpush1.msra.mxu0 0.0
    %7951 = vmatprep.subr.mxu0 0.0
    %7952 = vmatpush1.msra.mxu0 0.0
    %7953 = vmatprep.mubr.f32.mxu0 0.0
    %7954 = vmatmul.mubr.f32.gmra.mrb[0].mxu0 %v7887
    %v7955 = vpop.f32.mrb[0].mxu0
    %v7956 = vadd.f32 0.0, %v7955
    %v7957 = vpop.f32.mrb[0].mxu0
    %7958 = vdwg.mxu0
    %v7959 = vadd.f32 %v7874, %v7956
    %s7960 = scalar_lea.vmem %s10, 5
    %v7961 = vld [vmem:[%s7960] ss:$16 sm:$0x3]
    %s7962 = scalar_lea.vmem %s8, 320
    %v7963 = vld [vmem:[%s7962] sm:$0xff]
    %v7964 = vld [vmem:[%s7962 + $0x8] sm:$0xff]
    %v7965 = vld [vmem:[%s7962 + $0x10] sm:$0xff]
    %v7966 = vld [vmem:[%s7962 + $0x18] sm:$0xff]
    %v7967 = vld [vmem:[%s7962 + $0x20] sm:$0xff]
    %v7968 = vld [vmem:[%s7962 + $0x28] sm:$0xff]
    %v7969 = vld [vmem:[%s7962 + $0x30] sm:$0xff]
    %v7970 = vld [vmem:[%s7962 + $0x38] sm:$0xff]
    %v7972 = vsel %vm6903, %v7961, 0
    %7974 = vmatprep.subr.mxu0 0.0
    %7975 = vmatpush1.msra.mxu0 %v7963
    %7976 = vmatprep.subr.mxu0 0.0
    %7977 = vmatpush1.msra.mxu0 %v7964
    %7978 = vmatprep.subr.mxu0 0.0
    %7979 = vmatpush1.msra.mxu0 %v7965
    %7980 = vmatprep.subr.mxu0 0.0
    %7981 = vmatpush1.msra.mxu0 %v7966
    %7982 = vmatprep.subr.mxu0 0.0
    %7983 = vmatpush1.msra.mxu0 %v7967
    %7984 = vmatprep.subr.mxu0 0.0
    %7985 = vmatpush1.msra.mxu0 %v7968
    %7986 = vmatprep.subr.mxu0 0.0
    %7987 = vmatpush1.msra.mxu0 %v7969
    %7988 = vmatprep.subr.mxu0 0.0
    %7989 = vmatpush1.msra.mxu0 %v7970
    %7990 = vmatprep.subr.mxu0 0.0
    %7991 = vmatpush1.msra.mxu0 0.0
    %7992 = vmatprep.subr.mxu0 0.0
    %7993 = vmatpush1.msra.mxu0 0.0
    %7994 = vmatprep.subr.mxu0 0.0
    %7995 = vmatpush1.msra.mxu0 0.0
    %7996 = vmatprep.subr.mxu0 0.0
    %7997 = vmatpush1.msra.mxu0 0.0
    %7998 = vmatprep.subr.mxu0 0.0
    %7999 = vmatpush1.msra.mxu0 0.0
    %8000 = vmatprep.subr.mxu0 0.0
    %8001 = vmatpush1.msra.mxu0 0.0
    %8002 = vmatprep.subr.mxu0 0.0
    %8003 = vmatpush1.msra.mxu0 0.0
    %8004 = vmatprep.subr.mxu0 0.0
    %8005 = vmatpush1.msra.mxu0 0.0
    %8006 = vmatprep.subr.mxu0 0.0
    %8007 = vmatpush1.msra.mxu0 0.0
    %8008 = vmatprep.subr.mxu0 0.0
    %8009 = vmatpush1.msra.mxu0 0.0
    %8010 = vmatprep.subr.mxu0 0.0
    %8011 = vmatpush1.msra.mxu0 0.0
    %8012 = vmatprep.subr.mxu0 0.0
    %8013 = vmatpush1.msra.mxu0 0.0
    %8014 = vmatprep.subr.mxu0 0.0
    %8015 = vmatpush1.msra.mxu0 0.0
    %8016 = vmatprep.subr.mxu0 0.0
    %8017 = vmatpush1.msra.mxu0 0.0
    %8018 = vmatprep.subr.mxu0 0.0
    %8019 = vmatpush1.msra.mxu0 0.0
    %8020 = vmatprep.subr.mxu0 0.0
    %8021 = vmatpush1.msra.mxu0 0.0
    %8022 = vmatprep.subr.mxu0 0.0
    %8023 = vmatpush1.msra.mxu0 0.0
    %8024 = vmatprep.subr.mxu0 0.0
    %8025 = vmatpush1.msra.mxu0 0.0
    %8026 = vmatprep.subr.mxu0 0.0
    %8027 = vmatpush1.msra.mxu0 0.0
    %8028 = vmatprep.subr.mxu0 0.0
    %8029 = vmatpush1.msra.mxu0 0.0
    %8030 = vmatprep.subr.mxu0 0.0
    %8031 = vmatpush1.msra.mxu0 0.0
    %8032 = vmatprep.subr.mxu0 0.0
    %8033 = vmatpush1.msra.mxu0 0.0
    %8034 = vmatprep.subr.mxu0 0.0
    %8035 = vmatpush1.msra.mxu0 0.0
    %8036 = vmatprep.subr.mxu0 0.0
    %8037 = vmatpush1.msra.mxu0 0.0
    %8038 = vmatprep.mubr.f32.mxu0 0.0
    %8039 = vmatmul.mubr.f32.gmra.mrb[0].mxu0 %v7972
    %v8040 = vpop.f32.mrb[0].mxu0
    %v8041 = vadd.f32 0.0, %v8040
    %v8042 = vpop.f32.mrb[0].mxu0
    %8043 = vdwg.mxu0
    %v8044 = vadd.f32 %v7959, %v8041
    %s8045 = scalar_lea.vmem %s10, 6
    %v8046 = vld [vmem:[%s8045] ss:$16 sm:$0x3]
    %s8047 = scalar_lea.vmem %s8, 384
    %v8048 = vld [vmem:[%s8047] sm:$0xff]
    %v8049 = vld [vmem:[%s8047 + $0x8] sm:$0xff]
    %v8050 = vld [vmem:[%s8047 + $0x10] sm:$0xff]
    %v8051 = vld [vmem:[%s8047 + $0x18] sm:$0xff]
    %v8052 = vld [vmem:[%s8047 + $0x20] sm:$0xff]
    %v8053 = vld [vmem:[%s8047 + $0x28] sm:$0xff]
    %v8054 = vld [vmem:[%s8047 + $0x30] sm:$0xff]
    %v8055 = vld [vmem:[%s8047 + $0x38] sm:$0xff]
    %v8057 = vsel %vm6903, %v8046, 0
    %8059 = vmatprep.subr.mxu0 0.0
    %8060 = vmatpush1.msra.mxu0 %v8048
    %8061 = vmatprep.subr.mxu0 0.0
    %8062 = vmatpush1.msra.mxu0 %v8049
    %8063 = vmatprep.subr.mxu0 0.0
    %8064 = vmatpush1.msra.mxu0 %v8050
    %8065 = vmatprep.subr.mxu0 0.0
    %8066 = vmatpush1.msra.mxu0 %v8051
    %8067 = vmatprep.subr.mxu0 0.0
    %8068 = vmatpush1.msra.mxu0 %v8052
    %8069 = vmatprep.subr.mxu0 0.0
    %8070 = vmatpush1.msra.mxu0 %v8053
    %8071 = vmatprep.subr.mxu0 0.0
    %8072 = vmatpush1.msra.mxu0 %v8054
    %8073 = vmatprep.subr.mxu0 0.0
    %8074 = vmatpush1.msra.mxu0 %v8055
    %8075 = vmatprep.subr.mxu0 0.0
    %8076 = vmatpush1.msra.mxu0 0.0
    %8077 = vmatprep.subr.mxu0 0.0
    %8078 = vmatpush1.msra.mxu0 0.0
    %8079 = vmatprep.subr.mxu0 0.0
    %8080 = vmatpush1.msra.mxu0 0.0
    %8081 = vmatprep.subr.mxu0 0.0
    %8082 = vmatpush1.msra.mxu0 0.0
    %8083 = vmatprep.subr.mxu0 0.0
    %8084 = vmatpush1.msra.mxu0 0.0
    %8085 = vmatprep.subr.mxu0 0.0
    %8086 = vmatpush1.msra.mxu0 0.0
    %8087 = vmatprep.subr.mxu0 0.0
    %8088 = vmatpush1.msra.mxu0 0.0
    %8089 = vmatprep.subr.mxu0 0.0
    %8090 = vmatpush1.msra.mxu0 0.0
    %8091 = vmatprep.subr.mxu0 0.0
    %8092 = vmatpush1.msra.mxu0 0.0
    %8093 = vmatprep.subr.mxu0 0.0
    %8094 = vmatpush1.msra.mxu0 0.0
    %8095 = vmatprep.subr.mxu0 0.0
    %8096 = vmatpush1.msra.mxu0 0.0
    %8097 = vmatprep.subr.mxu0 0.0
    %8098 = vmatpush1.msra.mxu0 0.0
    %8099 = vmatprep.subr.mxu0 0.0
    %8100 = vmatpush1.msra.mxu0 0.0
    %8101 = vmatprep.subr.mxu0 0.0
    %8102 = vmatpush1.msra.mxu0 0.0
    %8103 = vmatprep.subr.mxu0 0.0
    %8104 = vmatpush1.msra.mxu0 0.0
    %8105 = vmatprep.subr.mxu0 0.0
    %8106 = vmatpush1.msra.mxu0 0.0
    %8107 = vmatprep.subr.mxu0 0.0
    %8108 = vmatpush1.msra.mxu0 0.0
    %8109 = vmatprep.subr.mxu0 0.0
    %8110 = vmatpush1.msra.mxu0 0.0
    %8111 = vmatprep.subr.mxu0 0.0
    %8112 = vmatpush1.msra.mxu0 0.0
    %8113 = vmatprep.subr.mxu0 0.0
    %8114 = vmatpush1.msra.mxu0 0.0
    %8115 = vmatprep.subr.mxu0 0.0
    %8116 = vmatpush1.msra.mxu0 0.0
    %8117 = vmatprep.subr.mxu0 0.0
    %8118 = vmatpush1.msra.mxu0 0.0
    %8119 = vmatprep.subr.mxu0 0.0
    %8120 = vmatpush1.msra.mxu0 0.0
    %8121 = vmatprep.subr.mxu0 0.0
    %8122 = vmatpush1.msra.mxu0 0.0
    %8123 = vmatprep.mubr.f32.mxu0 0.0
    %8124 = vmatmul.mubr.f32.gmra.mrb[0].mxu0 %v8057
    %v8125 = vpop.f32.mrb[0].mxu0
    %v8126 = vadd.f32 0.0, %v8125
    %v8127 = vpop.f32.mrb[0].mxu0
    %8128 = vdwg.mxu0
    %v8129 = vadd.f32 %v8044, %v8126
    %s8130 = scalar_lea.vmem %s10, 7
    %v8131 = vld [vmem:[%s8130] ss:$16 sm:$0x3]
    %s8132 = scalar_lea.vmem %s8, 448
    %v8133 = vld [vmem:[%s8132] sm:$0xff]
    %v8134 = vld [vmem:[%s8132 + $0x8] sm:$0xff]
    %v8135 = vld [vmem:[%s8132 + $0x10] sm:$0xff]
    %v8136 = vld [vmem:[%s8132 + $0x18] sm:$0xff]
    %v8137 = vld [vmem:[%s8132 + $0x20] sm:$0xff]
    %v8138 = vld [vmem:[%s8132 + $0x28] sm:$0xff]
    %v8139 = vld [vmem:[%s8132 + $0x30] sm:$0xff]
    %v8140 = vld [vmem:[%s8132 + $0x38] sm:$0xff]
    %v8142 = vsel %vm6903, %v8131, 0
    %8144 = vmatprep.subr.mxu0 0.0
    %8145 = vmatpush1.msra.mxu0 %v8133
    %8146 = vmatprep.subr.mxu0 0.0
    %8147 = vmatpush1.msra.mxu0 %v8134
    %8148 = vmatprep.subr.mxu0 0.0
    %8149 = vmatpush1.msra.mxu0 %v8135
    %8150 = vmatprep.subr.mxu0 0.0
    %8151 = vmatpush1.msra.mxu0 %v8136
    %8152 = vmatprep.subr.mxu0 0.0
    %8153 = vmatpush1.msra.mxu0 %v8137
    %8154 = vmatprep.subr.mxu0 0.0
    %8155 = vmatpush1.msra.mxu0 %v8138
    %8156 = vmatprep.subr.mxu0 0.0
    %8157 = vmatpush1.msra.mxu0 %v8139
    %8158 = vmatprep.subr.mxu0 0.0
    %8159 = vmatpush1.msra.mxu0 %v8140
    %8160 = vmatprep.subr.mxu0 0.0
    %8161 = vmatpush1.msra.mxu0 0.0
    %8162 = vmatprep.subr.mxu0 0.0
    %8163 = vmatpush1.msra.mxu0 0.0
    %8164 = vmatprep.subr.mxu0 0.0
    %8165 = vmatpush1.msra.mxu0 0.0
    %8166 = vmatprep.subr.mxu0 0.0
    %8167 = vmatpush1.msra.mxu0 0.0
    %8168 = vmatprep.subr.mxu0 0.0
    %8169 = vmatpush1.msra.mxu0 0.0
    %8170 = vmatprep.subr.mxu0 0.0
    %8171 = vmatpush1.msra.mxu0 0.0
    %8172 = vmatprep.subr.mxu0 0.0
    %8173 = vmatpush1.msra.mxu0 0.0
    %8174 = vmatprep.subr.mxu0 0.0
    %8175 = vmatpush1.msra.mxu0 0.0
    %8176 = vmatprep.subr.mxu0 0.0
    %8177 = vmatpush1.msra.mxu0 0.0
    %8178 = vmatprep.subr.mxu0 0.0
    %8179 = vmatpush1.msra.mxu0 0.0
    %8180 = vmatprep.subr.mxu0 0.0
    %8181 = vmatpush1.msra.mxu0 0.0
    %8182 = vmatprep.subr.mxu0 0.0
    %8183 = vmatpush1.msra.mxu0 0.0
    %8184 = vmatprep.subr.mxu0 0.0
    %8185 = vmatpush1.msra.mxu0 0.0
    %8186 = vmatprep.subr.mxu0 0.0
    %8187 = vmatpush1.msra.mxu0 0.0
    %8188 = vmatprep.subr.mxu0 0.0
    %8189 = vmatpush1.msra.mxu0 0.0
    %8190 = vmatprep.subr.mxu0 0.0
    %8191 = vmatpush1.msra.mxu0 0.0
    %8192 = vmatprep.subr.mxu0 0.0
    %8193 = vmatpush1.msra.mxu0 0.0
    %8194 = vmatprep.subr.mxu0 0.0
    %8195 = vmatpush1.msra.mxu0 0.0
    %8196 = vmatprep.subr.mxu0 0.0
    %8197 = vmatpush1.msra.mxu0 0.0
    %8198 = vmatprep.subr.mxu0 0.0
    %8199 = vmatpush1.msra.mxu0 0.0
    %8200 = vmatprep.subr.mxu0 0.0
    %8201 = vmatpush1.msra.mxu0 0.0
    %8202 = vmatprep.subr.mxu0 0.0
    %8203 = vmatpush1.msra.mxu0 0.0
    %8204 = vmatprep.subr.mxu0 0.0
    %8205 = vmatpush1.msra.mxu0 0.0
    %8206 = vmatprep.subr.mxu0 0.0
    %8207 = vmatpush1.msra.mxu0 0.0
    %8208 = vmatprep.mubr.f32.mxu0 0.0
    %8209 = vmatmul.mubr.f32.gmra.mrb[0].mxu0 %v8142
    %v8210 = vpop.f32.mrb[0].mxu0
    %v8211 = vadd.f32 0.0, %v8210
    %v8212 = vpop.f32.mrb[0].mxu0
    %8213 = vdwg.mxu0
    %v8214 = vadd.f32 %v8129, %v8211
    %s8215 = scalar_lea.vmem %s10, 8
    %v8216 = vld [vmem:[%s8215] ss:$16 sm:$0x3]
    %s8217 = scalar_lea.vmem %s8, 512
    %v8218 = vld [vmem:[%s8217] sm:$0xff]
    %v8219 = vld [vmem:[%s8217 + $0x8] sm:$0xff]
    %v8220 = vld [vmem:[%s8217 + $0x10] sm:$0xff]
    %v8221 = vld [vmem:[%s8217 + $0x18] sm:$0xff]
    %v8222 = vld [vmem:[%s8217 + $0x20] sm:$0xff]
    %v8223 = vld [vmem:[%s8217 + $0x28] sm:$0xff]
    %v8224 = vld [vmem:[%s8217 + $0x30] sm:$0xff]
    %v8225 = vld [vmem:[%s8217 + $0x38] sm:$0xff]
    %v8227 = vsel %vm6903, %v8216, 0
    %8229 = vmatprep.subr.mxu0 0.0
    %8230 = vmatpush1.msra.mxu0 %v8218
    %8231 = vmatprep.subr.mxu0 0.0
    %8232 = vmatpush1.msra.mxu0 %v8219
    %8233 = vmatprep.subr.mxu0 0.0
    %8234 = vmatpush1.msra.mxu0 %v8220
    %8235 = vmatprep.subr.mxu0 0.0
    %8236 = vmatpush1.msra.mxu0 %v8221
    %8237 = vmatprep.subr.mxu0 0.0
    %8238 = vmatpush1.msra.mxu0 %v8222
    %8239 = vmatprep.subr.mxu0 0.0
    %8240 = vmatpush1.msra.mxu0 %v8223
    %8241 = vmatprep.subr.mxu0 0.0
    %8242 = vmatpush1.msra.mxu0 %v8224
    %8243 = vmatprep.subr.mxu0 0.0
    %8244 = vmatpush1.msra.mxu0 %v8225
    %8245 = vmatprep.subr.mxu0 0.0
    %8246 = vmatpush1.msra.mxu0 0.0
    %8247 = vmatprep.subr.mxu0 0.0
    %8248 = vmatpush1.msra.mxu0 0.0
    %8249 = vmatprep.subr.mxu0 0.0
    %8250 = vmatpush1.msra.mxu0 0.0
    %8251 = vmatprep.subr.mxu0 0.0
    %8252 = vmatpush1.msra.mxu0 0.0
    %8253 = vmatprep.subr.mxu0 0.0
    %8254 = vmatpush1.msra.mxu0 0.0
    %8255 = vmatprep.subr.mxu0 0.0
    %8256 = vmatpush1.msra.mxu0 0.0
    %8257 = vmatprep.subr.mxu0 0.0
    %8258 = vmatpush1.msra.mxu0 0.0
    %8259 = vmatprep.subr.mxu0 0.0
    %8260 = vmatpush1.msra.mxu0 0.0
    %8261 = vmatprep.subr.mxu0 0.0
    %8262 = vmatpush1.msra.mxu0 0.0
    %8263 = vmatprep.subr.mxu0 0.0
    %8264 = vmatpush1.msra.mxu0 0.0
    %8265 = vmatprep.subr.mxu0 0.0
    %8266 = vmatpush1.msra.mxu0 0.0
    %8267 = vmatprep.subr.mxu0 0.0
    %8268 = vmatpush1.msra.mxu0 0.0
    %8269 = vmatprep.subr.mxu0 0.0
    %8270 = vmatpush1.msra.mxu0 0.0
    %8271 = vmatprep.subr.mxu0 0.0
    %8272 = vmatpush1.msra.mxu0 0.0
    %8273 = vmatprep.subr.mxu0 0.0
    %8274 = vmatpush1.msra.mxu0 0.0
    %8275 = vmatprep.subr.mxu0 0.0
    %8276 = vmatpush1.msra.mxu0 0.0
    %8277 = vmatprep.subr.mxu0 0.0
    %8278 = vmatpush1.msra.mxu0 0.0
    %8279 = vmatprep.subr.mxu0 0.0
    %8280 = vmatpush1.msra.mxu0 0.0
    %8281 = vmatprep.subr.mxu0 0.0
    %8282 = vmatpush1.msra.mxu0 0.0
    %8283 = vmatprep.subr.mxu0 0.0
    %8284 = vmatpush1.msra.mxu0 0.0
    %8285 = vmatprep.subr.mxu0 0.0
    %8286 = vmatpush1.msra.mxu0 0.0
    %8287 = vmatprep.subr.mxu0 0.0
    %8288 = vmatpush1.msra.mxu0 0.0
    %8289 = vmatprep.subr.mxu0 0.0
    %8290 = vmatpush1.msra.mxu0 0.0
    %8291 = vmatprep.subr.mxu0 0.0
    %8292 = vmatpush1.msra.mxu0 0.0
    %8293 = vmatprep.mubr.f32.mxu0 0.0
    %8294 = vmatmul.mubr.f32.gmra.mrb[0].mxu0 %v8227
    %v8295 = vpop.f32.mrb[0].mxu0
    %v8296 = vadd.f32 0.0, %v8295
    %v8297 = vpop.f32.mrb[0].mxu0
    %8298 = vdwg.mxu0
    %v8299 = vadd.f32 %v8214, %v8296
    %s8300 = scalar_lea.vmem %s10, 9
    %v8301 = vld [vmem:[%s8300] ss:$16 sm:$0x3]
    %s8302 = scalar_lea.vmem %s8, 576
    %v8303 = vld [vmem:[%s8302] sm:$0xff]
    %v8304 = vld [vmem:[%s8302 + $0x8] sm:$0xff]
    %v8305 = vld [vmem:[%s8302 + $0x10] sm:$0xff]
    %v8306 = vld [vmem:[%s8302 + $0x18] sm:$0xff]
    %v8307 = vld [vmem:[%s8302 + $0x20] sm:$0xff]
    %v8308 = vld [vmem:[%s8302 + $0x28] sm:$0xff]
    %v8309 = vld [vmem:[%s8302 + $0x30] sm:$0xff]
    %v8310 = vld [vmem:[%s8302 + $0x38] sm:$0xff]
    %v8312 = vsel %vm6903, %v8301, 0
    %8314 = vmatprep.subr.mxu0 0.0
    %8315 = vmatpush1.msra.mxu0 %v8303
    %8316 = vmatprep.subr.mxu0 0.0
    %8317 = vmatpush1.msra.mxu0 %v8304
    %8318 = vmatprep.subr.mxu0 0.0
    %8319 = vmatpush1.msra.mxu0 %v8305
    %8320 = vmatprep.subr.mxu0 0.0
    %8321 = vmatpush1.msra.mxu0 %v8306
    %8322 = vmatprep.subr.mxu0 0.0
    %8323 = vmatpush1.msra.mxu0 %v8307
    %8324 = vmatprep.subr.mxu0 0.0
    %8325 = vmatpush1.msra.mxu0 %v8308
    %8326 = vmatprep.subr.mxu0 0.0
    %8327 = vmatpush1.msra.mxu0 %v8309
    %8328 = vmatprep.subr.mxu0 0.0
    %8329 = vmatpush1.msra.mxu0 %v8310
    %8330 = vmatprep.subr.mxu0 0.0
    %8331 = vmatpush1.msra.mxu0 0.0
    %8332 = vmatprep.subr.mxu0 0.0
    %8333 = vmatpush1.msra.mxu0 0.0
    %8334 = vmatprep.subr.mxu0 0.0
    %8335 = vmatpush1.msra.mxu0 0.0
    %8336 = vmatprep.subr.mxu0 0.0
    %8337 = vmatpush1.msra.mxu0 0.0
    %8338 = vmatprep.subr.mxu0 0.0
    %8339 = vmatpush1.msra.mxu0 0.0
    %8340 = vmatprep.subr.mxu0 0.0
    %8341 = vmatpush1.msra.mxu0 0.0
    %8342 = vmatprep.subr.mxu0 0.0
    %8343 = vmatpush1.msra.mxu0 0.0
    %8344 = vmatprep.subr.mxu0 0.0
    %8345 = vmatpush1.msra.mxu0 0.0
    %8346 = vmatprep.subr.mxu0 0.0
    %8347 = vmatpush1.msra.mxu0 0.0
    %8348 = vmatprep.subr.mxu0 0.0
    %8349 = vmatpush1.msra.mxu0 0.0
    %8350 = vmatprep.subr.mxu0 0.0
    %8351 = vmatpush1.msra.mxu0 0.0
    %8352 = vmatprep.subr.mxu0 0.0
    %8353 = vmatpush1.msra.mxu0 0.0
    %8354 = vmatprep.subr.mxu0 0.0
    %8355 = vmatpush1.msra.mxu0 0.0
    %8356 = vmatprep.subr.mxu0 0.0
    %8357 = vmatpush1.msra.mxu0 0.0
    %8358 = vmatprep.subr.mxu0 0.0
    %8359 = vmatpush1.msra.mxu0 0.0
    %8360 = vmatprep.subr.mxu0 0.0
    %8361 = vmatpush1.msra.mxu0 0.0
    %8362 = vmatprep.subr.mxu0 0.0
    %8363 = vmatpush1.msra.mxu0 0.0
    %8364 = vmatprep.subr.mxu0 0.0
    %8365 = vmatpush1.msra.mxu0 0.0
    %8366 = vmatprep.subr.mxu0 0.0
    %8367 = vmatpush1.msra.mxu0 0.0
    %8368 = vmatprep.subr.mxu0 0.0
    %8369 = vmatpush1.msra.mxu0 0.0
    %8370 = vmatprep.subr.mxu0 0.0
    %8371 = vmatpush1.msra.mxu0 0.0
    %8372 = vmatprep.subr.mxu0 0.0
    %8373 = vmatpush1.msra.mxu0 0.0
    %8374 = vmatprep.subr.mxu0 0.0
    %8375 = vmatpush1.msra.mxu0 0.0
    %8376 = vmatprep.subr.mxu0 0.0
    %8377 = vmatpush1.msra.mxu0 0.0
    %8378 = vmatprep.mubr.f32.mxu0 0.0
    %8379 = vmatmul.mubr.f32.gmra.mrb[0].mxu0 %v8312
    %v8380 = vpop.f32.mrb[0].mxu0
    %v8381 = vadd.f32 0.0, %v8380
    %v8382 = vpop.f32.mrb[0].mxu0
    %8383 = vdwg.mxu0
    %v8384 = vadd.f32 %v8299, %v8381
    %s8385 = scalar_lea.vmem %s10, 10
    %v8386 = vld [vmem:[%s8385] ss:$16 sm:$0x3]
    %s8387 = scalar_lea.vmem %s8, 640
    %v8388 = vld [vmem:[%s8387] sm:$0xff]
    %v8389 = vld [vmem:[%s8387 + $0x8] sm:$0xff]
    %v8390 = vld [vmem:[%s8387 + $0x10] sm:$0xff]
    %v8391 = vld [vmem:[%s8387 + $0x18] sm:$0xff]
    %v8392 = vld [vmem:[%s8387 + $0x20] sm:$0xff]
    %v8393 = vld [vmem:[%s8387 + $0x28] sm:$0xff]
    %v8394 = vld [vmem:[%s8387 + $0x30] sm:$0xff]
    %v8395 = vld [vmem:[%s8387 + $0x38] sm:$0xff]
    %v8397 = vsel %vm6903, %v8386, 0
    %8399 = vmatprep.subr.mxu0 0.0
    %8400 = vmatpush1.msra.mxu0 %v8388
    %8401 = vmatprep.subr.mxu0 0.0
    %8402 = vmatpush1.msra.mxu0 %v8389
    %8403 = vmatprep.subr.mxu0 0.0
    %8404 = vmatpush1.msra.mxu0 %v8390
    %8405 = vmatprep.subr.mxu0 0.0
    %8406 = vmatpush1.msra.mxu0 %v8391
    %8407 = vmatprep.subr.mxu0 0.0
    %8408 = vmatpush1.msra.mxu0 %v8392
    %8409 = vmatprep.subr.mxu0 0.0
    %8410 = vmatpush1.msra.mxu0 %v8393
    %8411 = vmatprep.subr.mxu0 0.0
    %8412 = vmatpush1.msra.mxu0 %v8394
    %8413 = vmatprep.subr.mxu0 0.0
    %8414 = vmatpush1.msra.mxu0 %v8395
    %8415 = vmatprep.subr.mxu0 0.0
    %8416 = vmatpush1.msra.mxu0 0.0
    %8417 = vmatprep.subr.mxu0 0.0
    %8418 = vmatpush1.msra.mxu0 0.0
    %8419 = vmatprep.subr.mxu0 0.0
    %8420 = vmatpush1.msra.mxu0 0.0
    %8421 = vmatprep.subr.mxu0 0.0
    %8422 = vmatpush1.msra.mxu0 0.0
    %8423 = vmatprep.subr.mxu0 0.0
    %8424 = vmatpush1.msra.mxu0 0.0
    %8425 = vmatprep.subr.mxu0 0.0
    %8426 = vmatpush1.msra.mxu0 0.0
    %8427 = vmatprep.subr.mxu0 0.0
    %8428 = vmatpush1.msra.mxu0 0.0
    %8429 = vmatprep.subr.mxu0 0.0
    %8430 = vmatpush1.msra.mxu0 0.0
    %8431 = vmatprep.subr.mxu0 0.0
    %8432 = vmatpush1.msra.mxu0 0.0
    %8433 = vmatprep.subr.mxu0 0.0
    %8434 = vmatpush1.msra.mxu0 0.0
    %8435 = vmatprep.subr.mxu0 0.0
    %8436 = vmatpush1.msra.mxu0 0.0
    %8437 = vmatprep.subr.mxu0 0.0
    %8438 = vmatpush1.msra.mxu0 0.0
    %8439 = vmatprep.subr.mxu0 0.0
    %8440 = vmatpush1.msra.mxu0 0.0
    %8441 = vmatprep.subr.mxu0 0.0
    %8442 = vmatpush1.msra.mxu0 0.0
    %8443 = vmatprep.subr.mxu0 0.0
    %8444 = vmatpush1.msra.mxu0 0.0
    %8445 = vmatprep.subr.mxu0 0.0
    %8446 = vmatpush1.msra.mxu0 0.0
    %8447 = vmatprep.subr.mxu0 0.0
    %8448 = vmatpush1.msra.mxu0 0.0
    %8449 = vmatprep.subr.mxu0 0.0
    %8450 = vmatpush1.msra.mxu0 0.0
    %8451 = vmatprep.subr.mxu0 0.0
    %8452 = vmatpush1.msra.mxu0 0.0
    %8453 = vmatprep.subr.mxu0 0.0
    %8454 = vmatpush1.msra.mxu0 0.0
    %8455 = vmatprep.subr.mxu0 0.0
    %8456 = vmatpush1.msra.mxu0 0.0
    %8457 = vmatprep.subr.mxu0 0.0
    %8458 = vmatpush1.msra.mxu0 0.0
    %8459 = vmatprep.subr.mxu0 0.0
    %8460 = vmatpush1.msra.mxu0 0.0
    %8461 = vmatprep.subr.mxu0 0.0
    %8462 = vmatpush1.msra.mxu0 0.0
    %8463 = vmatprep.mubr.f32.mxu0 0.0
    %8464 = vmatmul.mubr.f32.gmra.mrb[0].mxu0 %v8397
    %v8465 = vpop.f32.mrb[0].mxu0
    %v8466 = vadd.f32 0.0, %v8465
    %v8467 = vpop.f32.mrb[0].mxu0
    %8468 = vdwg.mxu0
    %v8469 = vadd.f32 %v8384, %v8466
    %s8470 = scalar_lea.vmem %s10, 11
    %v8471 = vld [vmem:[%s8470] ss:$16 sm:$0x3]
    %s8472 = scalar_lea.vmem %s8, 704
    %v8473 = vld [vmem:[%s8472] sm:$0xff]
    %v8474 = vld [vmem:[%s8472 + $0x8] sm:$0xff]
    %v8475 = vld [vmem:[%s8472 + $0x10] sm:$0xff]
    %v8476 = vld [vmem:[%s8472 + $0x18] sm:$0xff]
    %v8477 = vld [vmem:[%s8472 + $0x20] sm:$0xff]
    %v8478 = vld [vmem:[%s8472 + $0x28] sm:$0xff]
    %v8479 = vld [vmem:[%s8472 + $0x30] sm:$0xff]
    %v8480 = vld [vmem:[%s8472 + $0x38] sm:$0xff]
    %v8482 = vsel %vm6903, %v8471, 0
    %8484 = vmatprep.subr.mxu0 0.0
    %8485 = vmatpush1.msra.mxu0 %v8473
    %8486 = vmatprep.subr.mxu0 0.0
    %8487 = vmatpush1.msra.mxu0 %v8474
    %8488 = vmatprep.subr.mxu0 0.0
    %8489 = vmatpush1.msra.mxu0 %v8475
    %8490 = vmatprep.subr.mxu0 0.0
    %8491 = vmatpush1.msra.mxu0 %v8476
    %8492 = vmatprep.subr.mxu0 0.0
    %8493 = vmatpush1.msra.mxu0 %v8477
    %8494 = vmatprep.subr.mxu0 0.0
    %8495 = vmatpush1.msra.mxu0 %v8478
    %8496 = vmatprep.subr.mxu0 0.0
    %8497 = vmatpush1.msra.mxu0 %v8479
    %8498 = vmatprep.subr.mxu0 0.0
    %8499 = vmatpush1.msra.mxu0 %v8480
    %8500 = vmatprep.subr.mxu0 0.0
    %8501 = vmatpush1.msra.mxu0 0.0
    %8502 = vmatprep.subr.mxu0 0.0
    %8503 = vmatpush1.msra.mxu0 0.0
    %8504 = vmatprep.subr.mxu0 0.0
    %8505 = vmatpush1.msra.mxu0 0.0
    %8506 = vmatprep.subr.mxu0 0.0
    %8507 = vmatpush1.msra.mxu0 0.0
    %8508 = vmatprep.subr.mxu0 0.0
    %8509 = vmatpush1.msra.mxu0 0.0
    %8510 = vmatprep.subr.mxu0 0.0
    %8511 = vmatpush1.msra.mxu0 0.0
    %8512 = vmatprep.subr.mxu0 0.0
    %8513 = vmatpush1.msra.mxu0 0.0
    %8514 = vmatprep.subr.mxu0 0.0
    %8515 = vmatpush1.msra.mxu0 0.0
    %8516 = vmatprep.subr.mxu0 0.0
    %8517 = vmatpush1.msra.mxu0 0.0
    %8518 = vmatprep.subr.mxu0 0.0
    %8519 = vmatpush1.msra.mxu0 0.0
    %8520 = vmatprep.subr.mxu0 0.0
    %8521 = vmatpush1.msra.mxu0 0.0
    %8522 = vmatprep.subr.mxu0 0.0
    %8523 = vmatpush1.msra.mxu0 0.0
    %8524 = vmatprep.subr.mxu0 0.0
    %8525 = vmatpush1.msra.mxu0 0.0
    %8526 = vmatprep.subr.mxu0 0.0
    %8527 = vmatpush1.msra.mxu0 0.0
    %8528 = vmatprep.subr.mxu0 0.0
    %8529 = vmatpush1.msra.mxu0 0.0
    %8530 = vmatprep.subr.mxu0 0.0
    %8531 = vmatpush1.msra.mxu0 0.0
    %8532 = vmatprep.subr.mxu0 0.0
    %8533 = vmatpush1.msra.mxu0 0.0
    %8534 = vmatprep.subr.mxu0 0.0
    %8535 = vmatpush1.msra.mxu0 0.0
    %8536 = vmatprep.subr.mxu0 0.0
    %8537 = vmatpush1.msra.mxu0 0.0
    %8538 = vmatprep.subr.mxu0 0.0
    %8539 = vmatpush1.msra.mxu0 0.0
    %8540 = vmatprep.subr.mxu0 0.0
    %8541 = vmatpush1.msra.mxu0 0.0
    %8542 = vmatprep.subr.mxu0 0.0
    %8543 = vmatpush1.msra.mxu0 0.0
    %8544 = vmatprep.subr.mxu0 0.0
    %8545 = vmatpush1.msra.mxu0 0.0
    %8546 = vmatprep.subr.mxu0 0.0
    %8547 = vmatpush1.msra.mxu0 0.0
    %8548 = vmatprep.mubr.f32.mxu0 0.0
    %8549 = vmatmul.mubr.f32.gmra.mrb[0].mxu0 %v8482
    %v8550 = vpop.f32.mrb[0].mxu0
    %v8551 = vadd.f32 0.0, %v8550
    %v8552 = vpop.f32.mrb[0].mxu0
    %8553 = vdwg.mxu0
    %v8554 = vadd.f32 %v8469, %v8551
    %s8555 = scalar_lea.vmem %s10, 12
    %v8556 = vld [vmem:[%s8555] ss:$16 sm:$0x3]
    %s8557 = scalar_lea.vmem %s8, 768
    %v8558 = vld [vmem:[%s8557] sm:$0xff]
    %v8559 = vld [vmem:[%s8557 + $0x8] sm:$0xff]
    %v8560 = vld [vmem:[%s8557 + $0x10] sm:$0xff]
    %v8561 = vld [vmem:[%s8557 + $0x18] sm:$0xff]
    %v8562 = vld [vmem:[%s8557 + $0x20] sm:$0xff]
    %v8563 = vld [vmem:[%s8557 + $0x28] sm:$0xff]
    %v8564 = vld [vmem:[%s8557 + $0x30] sm:$0xff]
    %v8565 = vld [vmem:[%s8557 + $0x38] sm:$0xff]
    %v8567 = vsel %vm6903, %v8556, 0
    %8569 = vmatprep.subr.mxu0 0.0
    %8570 = vmatpush1.msra.mxu0 %v8558
    %8571 = vmatprep.subr.mxu0 0.0
    %8572 = vmatpush1.msra.mxu0 %v8559
    %8573 = vmatprep.subr.mxu0 0.0
    %8574 = vmatpush1.msra.mxu0 %v8560
    %8575 = vmatprep.subr.mxu0 0.0
    %8576 = vmatpush1.msra.mxu0 %v8561
    %8577 = vmatprep.subr.mxu0 0.0
    %8578 = vmatpush1.msra.mxu0 %v8562
    %8579 = vmatprep.subr.mxu0 0.0
    %8580 = vmatpush1.msra.mxu0 %v8563
    %8581 = vmatprep.subr.mxu0 0.0
    %8582 = vmatpush1.msra.mxu0 %v8564
    %8583 = vmatprep.subr.mxu0 0.0
    %8584 = vmatpush1.msra.mxu0 %v8565
    %8585 = vmatprep.subr.mxu0 0.0
    %8586 = vmatpush1.msra.mxu0 0.0
    %8587 = vmatprep.subr.mxu0 0.0
    %8588 = vmatpush1.msra.mxu0 0.0
    %8589 = vmatprep.subr.mxu0 0.0
    %8590 = vmatpush1.msra.mxu0 0.0
    %8591 = vmatprep.subr.mxu0 0.0
    %8592 = vmatpush1.msra.mxu0 0.0
    %8593 = vmatprep.subr.mxu0 0.0
    %8594 = vmatpush1.msra.mxu0 0.0
    %8595 = vmatprep.subr.mxu0 0.0
    %8596 = vmatpush1.msra.mxu0 0.0
    %8597 = vmatprep.subr.mxu0 0.0
    %8598 = vmatpush1.msra.mxu0 0.0
    %8599 = vmatprep.subr.mxu0 0.0
    %8600 = vmatpush1.msra.mxu0 0.0
    %8601 = vmatprep.subr.mxu0 0.0
    %8602 = vmatpush1.msra.mxu0 0.0
    %8603 = vmatprep.subr.mxu0 0.0
    %8604 = vmatpush1.msra.mxu0 0.0
    %8605 = vmatprep.subr.mxu0 0.0
    %8606 = vmatpush1.msra.mxu0 0.0
    %8607 = vmatprep.subr.mxu0 0.0
    %8608 = vmatpush1.msra.mxu0 0.0
    %8609 = vmatprep.subr.mxu0 0.0
    %8610 = vmatpush1.msra.mxu0 0.0
    %8611 = vmatprep.subr.mxu0 0.0
    %8612 = vmatpush1.msra.mxu0 0.0
    %8613 = vmatprep.subr.mxu0 0.0
    %8614 = vmatpush1.msra.mxu0 0.0
    %8615 = vmatprep.subr.mxu0 0.0
    %8616 = vmatpush1.msra.mxu0 0.0
    %8617 = vmatprep.subr.mxu0 0.0
    %8618 = vmatpush1.msra.mxu0 0.0
    %8619 = vmatprep.subr.mxu0 0.0
    %8620 = vmatpush1.msra.mxu0 0.0
    %8621 = vmatprep.subr.mxu0 0.0
    %8622 = vmatpush1.msra.mxu0 0.0
    %8623 = vmatprep.subr.mxu0 0.0
    %8624 = vmatpush1.msra.mxu0 0.0
    %8625 = vmatprep.subr.mxu0 0.0
    %8626 = vmatpush1.msra.mxu0 0.0
    %8627 = vmatprep.subr.mxu0 0.0
    %8628 = vmatpush1.msra.mxu0 0.0
    %8629 = vmatprep.subr.mxu0 0.0
    %8630 = vmatpush1.msra.mxu0 0.0
    %8631 = vmatprep.subr.mxu0 0.0
    %8632 = vmatpush1.msra.mxu0 0.0
    %8633 = vmatprep.mubr.f32.mxu0 0.0
    %8634 = vmatmul.mubr.f32.gmra.mrb[0].mxu0 %v8567
    %v8635 = vpop.f32.mrb[0].mxu0
    %v8636 = vadd.f32 0.0, %v8635
    %v8637 = vpop.f32.mrb[0].mxu0
    %8638 = vdwg.mxu0
    %v8639 = vadd.f32 %v8554, %v8636
    %s8640 = scalar_lea.vmem %s10, 13
    %v8641 = vld [vmem:[%s8640] ss:$16 sm:$0x3]
    %s8642 = scalar_lea.vmem %s8, 832
    %v8643 = vld [vmem:[%s8642] sm:$0xff]
    %v8644 = vld [vmem:[%s8642 + $0x8] sm:$0xff]
    %v8645 = vld [vmem:[%s8642 + $0x10] sm:$0xff]
    %v8646 = vld [vmem:[%s8642 + $0x18] sm:$0xff]
    %v8647 = vld [vmem:[%s8642 + $0x20] sm:$0xff]
    %v8648 = vld [vmem:[%s8642 + $0x28] sm:$0xff]
    %v8649 = vld [vmem:[%s8642 + $0x30] sm:$0xff]
    %v8650 = vld [vmem:[%s8642 + $0x38] sm:$0xff]
    %v8652 = vsel %vm6903, %v8641, 0
    %8654 = vmatprep.subr.mxu0 0.0
    %8655 = vmatpush1.msra.mxu0 %v8643
    %8656 = vmatprep.subr.mxu0 0.0
    %8657 = vmatpush1.msra.mxu0 %v8644
    %8658 = vmatprep.subr.mxu0 0.0
    %8659 = vmatpush1.msra.mxu0 %v8645
    %8660 = vmatprep.subr.mxu0 0.0
    %8661 = vmatpush1.msra.mxu0 %v8646
    %8662 = vmatprep.subr.mxu0 0.0
    %8663 = vmatpush1.msra.mxu0 %v8647
    %8664 = vmatprep.subr.mxu0 0.0
    %8665 = vmatpush1.msra.mxu0 %v8648
    %8666 = vmatprep.subr.mxu0 0.0
    %8667 = vmatpush1.msra.mxu0 %v8649
    %8668 = vmatprep.subr.mxu0 0.0
    %8669 = vmatpush1.msra.mxu0 %v8650
    %8670 = vmatprep.subr.mxu0 0.0
    %8671 = vmatpush1.msra.mxu0 0.0
    %8672 = vmatprep.subr.mxu0 0.0
    %8673 = vmatpush1.msra.mxu0 0.0
    %8674 = vmatprep.subr.mxu0 0.0
    %8675 = vmatpush1.msra.mxu0 0.0
    %8676 = vmatprep.subr.mxu0 0.0
    %8677 = vmatpush1.msra.mxu0 0.0
    %8678 = vmatprep.subr.mxu0 0.0
    %8679 = vmatpush1.msra.mxu0 0.0
    %8680 = vmatprep.subr.mxu0 0.0
    %8681 = vmatpush1.msra.mxu0 0.0
    %8682 = vmatprep.subr.mxu0 0.0
    %8683 = vmatpush1.msra.mxu0 0.0
    %8684 = vmatprep.subr.mxu0 0.0
    %8685 = vmatpush1.msra.mxu0 0.0
    %8686 = vmatprep.subr.mxu0 0.0
    %8687 = vmatpush1.msra.mxu0 0.0
    %8688 = vmatprep.subr.mxu0 0.0
    %8689 = vmatpush1.msra.mxu0 0.0
    %8690 = vmatprep.subr.mxu0 0.0
    %8691 = vmatpush1.msra.mxu0 0.0
    %8692 = vmatprep.subr.mxu0 0.0
    %8693 = vmatpush1.msra.mxu0 0.0
    %8694 = vmatprep.subr.mxu0 0.0
    %8695 = vmatpush1.msra.mxu0 0.0
    %8696 = vmatprep.subr.mxu0 0.0
    %8697 = vmatpush1.msra.mxu0 0.0
    %8698 = vmatprep.subr.mxu0 0.0
    %8699 = vmatpush1.msra.mxu0 0.0
    %8700 = vmatprep.subr.mxu0 0.0
    %8701 = vmatpush1.msra.mxu0 0.0
    %8702 = vmatprep.subr.mxu0 0.0
    %8703 = vmatpush1.msra.mxu0 0.0
    %8704 = vmatprep.subr.mxu0 0.0
    %8705 = vmatpush1.msra.mxu0 0.0
    %8706 = vmatprep.subr.mxu0 0.0
    %8707 = vmatpush1.msra.mxu0 0.0
    %8708 = vmatprep.subr.mxu0 0.0
    %8709 = vmatpush1.msra.mxu0 0.0
    %8710 = vmatprep.subr.mxu0 0.0
    %8711 = vmatpush1.msra.mxu0 0.0
    %8712 = vmatprep.subr.mxu0 0.0
    %8713 = vmatpush1.msra.mxu0 0.0
    %8714 = vmatprep.subr.mxu0 0.0
    %8715 = vmatpush1.msra.mxu0 0.0
    %8716 = vmatprep.subr.mxu0 0.0
    %8717 = vmatpush1.msra.mxu0 0.0
    %8718 = vmatprep.mubr.f32.mxu0 0.0
    %8719 = vmatmul.mubr.f32.gmra.mrb[0].mxu0 %v8652
    %v8720 = vpop.f32.mrb[0].mxu0
    %v8721 = vadd.f32 0.0, %v8720
    %v8722 = vpop.f32.mrb[0].mxu0
    %8723 = vdwg.mxu0
    %v8724 = vadd.f32 %v8639, %v8721
    %s8725 = scalar_lea.vmem %s10, 14
    %v8726 = vld [vmem:[%s8725] ss:$16 sm:$0x3]
    %s8727 = scalar_lea.vmem %s8, 896
    %v8728 = vld [vmem:[%s8727] sm:$0xff]
    %v8729 = vld [vmem:[%s8727 + $0x8] sm:$0xff]
    %v8730 = vld [vmem:[%s8727 + $0x10] sm:$0xff]
    %v8731 = vld [vmem:[%s8727 + $0x18] sm:$0xff]
    %v8732 = vld [vmem:[%s8727 + $0x20] sm:$0xff]
    %v8733 = vld [vmem:[%s8727 + $0x28] sm:$0xff]
    %v8734 = vld [vmem:[%s8727 + $0x30] sm:$0xff]
    %v8735 = vld [vmem:[%s8727 + $0x38] sm:$0xff]
    %v8737 = vsel %vm6903, %v8726, 0
    %8739 = vmatprep.subr.mxu0 0.0
    %8740 = vmatpush1.msra.mxu0 %v8728
    %8741 = vmatprep.subr.mxu0 0.0
    %8742 = vmatpush1.msra.mxu0 %v8729
    %8743 = vmatprep.subr.mxu0 0.0
    %8744 = vmatpush1.msra.mxu0 %v8730
    %8745 = vmatprep.subr.mxu0 0.0
    %8746 = vmatpush1.msra.mxu0 %v8731
    %8747 = vmatprep.subr.mxu0 0.0
    %8748 = vmatpush1.msra.mxu0 %v8732
    %8749 = vmatprep.subr.mxu0 0.0
    %8750 = vmatpush1.msra.mxu0 %v8733
    %8751 = vmatprep.subr.mxu0 0.0
    %8752 = vmatpush1.msra.mxu0 %v8734
    %8753 = vmatprep.subr.mxu0 0.0
    %8754 = vmatpush1.msra.mxu0 %v8735
    %8755 = vmatprep.subr.mxu0 0.0
    %8756 = vmatpush1.msra.mxu0 0.0
    %8757 = vmatprep.subr.mxu0 0.0
    %8758 = vmatpush1.msra.mxu0 0.0
    %8759 = vmatprep.subr.mxu0 0.0
    %8760 = vmatpush1.msra.mxu0 0.0
    %8761 = vmatprep.subr.mxu0 0.0
    %8762 = vmatpush1.msra.mxu0 0.0
    %8763 = vmatprep.subr.mxu0 0.0
    %8764 = vmatpush1.msra.mxu0 0.0
    %8765 = vmatprep.subr.mxu0 0.0
    %8766 = vmatpush1.msra.mxu0 0.0
    %8767 = vmatprep.subr.mxu0 0.0
    %8768 = vmatpush1.msra.mxu0 0.0
    %8769 = vmatprep.subr.mxu0 0.0
    %8770 = vmatpush1.msra.mxu0 0.0
    %8771 = vmatprep.subr.mxu0 0.0
    %8772 = vmatpush1.msra.mxu0 0.0
    %8773 = vmatprep.subr.mxu0 0.0
    %8774 = vmatpush1.msra.mxu0 0.0
    %8775 = vmatprep.subr.mxu0 0.0
    %8776 = vmatpush1.msra.mxu0 0.0
    %8777 = vmatprep.subr.mxu0 0.0
    %8778 = vmatpush1.msra.mxu0 0.0
    %8779 = vmatprep.subr.mxu0 0.0
    %8780 = vmatpush1.msra.mxu0 0.0
    %8781 = vmatprep.subr.mxu0 0.0
    %8782 = vmatpush1.msra.mxu0 0.0
    %8783 = vmatprep.subr.mxu0 0.0
    %8784 = vmatpush1.msra.mxu0 0.0
    %8785 = vmatprep.subr.mxu0 0.0
    %8786 = vmatpush1.msra.mxu0 0.0
    %8787 = vmatprep.subr.mxu0 0.0
    %8788 = vmatpush1.msra.mxu0 0.0
    %8789 = vmatprep.subr.mxu0 0.0
    %8790 = vmatpush1.msra.mxu0 0.0
    %8791 = vmatprep.subr.mxu0 0.0
    %8792 = vmatpush1.msra.mxu0 0.0
    %8793 = vmatprep.subr.mxu0 0.0
    %8794 = vmatpush1.msra.mxu0 0.0
    %8795 = vmatprep.subr.mxu0 0.0
    %8796 = vmatpush1.msra.mxu0 0.0
    %8797 = vmatprep.subr.mxu0 0.0
    %8798 = vmatpush1.msra.mxu0 0.0
    %8799 = vmatprep.subr.mxu0 0.0
    %8800 = vmatpush1.msra.mxu0 0.0
    %8801 = vmatprep.subr.mxu0 0.0
    %8802 = vmatpush1.msra.mxu0 0.0
    %8803 = vmatprep.mubr.f32.mxu0 0.0
    %8804 = vmatmul.mubr.f32.gmra.mrb[0].mxu0 %v8737
    %v8805 = vpop.f32.mrb[0].mxu0
    %v8806 = vadd.f32 0.0, %v8805
    %v8807 = vpop.f32.mrb[0].mxu0
    %8808 = vdwg.mxu0
    %v8809 = vadd.f32 %v8724, %v8806
    %s8810 = scalar_lea.vmem %s10, 15
    %v8811 = vld [vmem:[%s8810] ss:$16 sm:$0x3]
    %s8812 = scalar_lea.vmem %s8, 960
    %v8813 = vld [vmem:[%s8812] sm:$0xff]
    %v8814 = vld [vmem:[%s8812 + $0x8] sm:$0xff]
    %v8815 = vld [vmem:[%s8812 + $0x10] sm:$0xff]
    %v8816 = vld [vmem:[%s8812 + $0x18] sm:$0xff]
    %v8817 = vld [vmem:[%s8812 + $0x20] sm:$0xff]
    %v8818 = vld [vmem:[%s8812 + $0x28] sm:$0xff]
    %v8819 = vld [vmem:[%s8812 + $0x30] sm:$0xff]
    %v8820 = vld [vmem:[%s8812 + $0x38] sm:$0xff]
    %v8822 = vsel %vm6903, %v8811, 0
    %8824 = vmatprep.subr.mxu0 0.0
    %8825 = vmatpush1.msra.mxu0 %v8813
    %8826 = vmatprep.subr.mxu0 0.0
    %8827 = vmatpush1.msra.mxu0 %v8814
    %8828 = vmatprep.subr.mxu0 0.0
    %8829 = vmatpush1.msra.mxu0 %v8815
    %8830 = vmatprep.subr.mxu0 0.0
    %8831 = vmatpush1.msra.mxu0 %v8816
    %8832 = vmatprep.subr.mxu0 0.0
    %8833 = vmatpush1.msra.mxu0 %v8817
    %8834 = vmatprep.subr.mxu0 0.0
    %8835 = vmatpush1.msra.mxu0 %v8818
    %8836 = vmatprep.subr.mxu0 0.0
    %8837 = vmatpush1.msra.mxu0 %v8819
    %8838 = vmatprep.subr.mxu0 0.0
    %8839 = vmatpush1.msra.mxu0 %v8820
    %8840 = vmatprep.subr.mxu0 0.0
    %8841 = vmatpush1.msra.mxu0 0.0
    %8842 = vmatprep.subr.mxu0 0.0
    %8843 = vmatpush1.msra.mxu0 0.0
    %8844 = vmatprep.subr.mxu0 0.0
    %8845 = vmatpush1.msra.mxu0 0.0
    %8846 = vmatprep.subr.mxu0 0.0
    %8847 = vmatpush1.msra.mxu0 0.0
    %8848 = vmatprep.subr.mxu0 0.0
    %8849 = vmatpush1.msra.mxu0 0.0
    %8850 = vmatprep.subr.mxu0 0.0
    %8851 = vmatpush1.msra.mxu0 0.0
    %8852 = vmatprep.subr.mxu0 0.0
    %8853 = vmatpush1.msra.mxu0 0.0
    %8854 = vmatprep.subr.mxu0 0.0
    %8855 = vmatpush1.msra.mxu0 0.0
    %8856 = vmatprep.subr.mxu0 0.0
    %8857 = vmatpush1.msra.mxu0 0.0
    %8858 = vmatprep.subr.mxu0 0.0
    %8859 = vmatpush1.msra.mxu0 0.0
    %8860 = vmatprep.subr.mxu0 0.0
    %8861 = vmatpush1.msra.mxu0 0.0
    %8862 = vmatprep.subr.mxu0 0.0
    %8863 = vmatpush1.msra.mxu0 0.0
    %8864 = vmatprep.subr.mxu0 0.0
    %8865 = vmatpush1.msra.mxu0 0.0
    %8866 = vmatprep.subr.mxu0 0.0
    %8867 = vmatpush1.msra.mxu0 0.0
    %8868 = vmatprep.subr.mxu0 0.0
    %8869 = vmatpush1.msra.mxu0 0.0
    %8870 = vmatprep.subr.mxu0 0.0
    %8871 = vmatpush1.msra.mxu0 0.0
    %8872 = vmatprep.subr.mxu0 0.0
    %8873 = vmatpush1.msra.mxu0 0.0
    %8874 = vmatprep.subr.mxu0 0.0
    %8875 = vmatpush1.msra.mxu0 0.0
    %8876 = vmatprep.subr.mxu0 0.0
    %8877 = vmatpush1.msra.mxu0 0.0
    %8878 = vmatprep.subr.mxu0 0.0
    %8879 = vmatpush1.msra.mxu0 0.0
    %8880 = vmatprep.subr.mxu0 0.0
    %8881 = vmatpush1.msra.mxu0 0.0
    %8882 = vmatprep.subr.mxu0 0.0
    %8883 = vmatpush1.msra.mxu0 0.0
    %8884 = vmatprep.subr.mxu0 0.0
    %8885 = vmatpush1.msra.mxu0 0.0
    %8886 = vmatprep.subr.mxu0 0.0
    %8887 = vmatpush1.msra.mxu0 0.0
    %8888 = vmatprep.mubr.f32.mxu0 0.0
    %8889 = vmatmul.mubr.f32.gmra.mrb[0].mxu0 %v8822
    %v8890 = vpop.f32.mrb[0].mxu0
    %v8891 = vadd.f32 0.0, %v8890
    %v8892 = vpop.f32.mrb[0].mxu0
    %8893 = vdwg.mxu0
    %v8894 = vadd.f32 %v8809, %v8891
    %v8895 = vld [vmem:[%s9] sm:$0x1]
    %v8897 = vlaneseq
    %v8898 = vshrl.u32 %v8897, 7
    %v8899 = vsub.s32 0, %v8898
    %v8900 = vrot.slane %v8895, %v8899
    %v8902 = vadd.f32 %v8894, %v8900
    %vm8903 = vcmask 91136
    %8904 = vst.msk [vmem:[#allocation4] sm:$0x3] %vm8903, %v8902
    // Predicated region
    $region42: #{cnn_tiny_forward.1} parent=1 // pred_check
      _
    $region43: #{cnn_tiny_forward.1} parent=1 // pred_check_branch
      %8906 = sbr.rel (0) target = $region45
    $region44: #{cnn_tiny_forward.1} parent=1 // pred_region
      _
    $region45: #{cnn_tiny_forward.1} parent=1 // pred_fallthru
      _
    // Predicated region
    $region46: #{cnn_tiny_forward.1} parent=1 // pred_check
      _
    $region47: #{cnn_tiny_forward.1} parent=1 // pred_check_branch
      %8908 = sbr.rel (0) target = $region49
    $region48: #{cnn_tiny_forward.1} parent=1 // pred_region
      %s8910 = ssub.s32 32, 32
      %8911 = vsyncadd [#allocation5], %s8910
      %s8913 = sshll.u32 [#allocation4], 4
      %s8914 = int_to_ptr.vmem [resolvable:$true] %s8913
      %8916 = dma.vmem_to_hbm [thread:$0]  %s8914, 32, %s11, [#allocation5]
    $region49: #{cnn_tiny_forward.1} parent=1 // pred_fallthru
      _
    // Predicated region
    $region50: #{cnn_tiny_forward.1} parent=1 // pred_check
      _
    $region51: #{cnn_tiny_forward.1} parent=1 // pred_check_branch
      %8918 = sbr.rel (0) target = $region53
    $region52: #{cnn_tiny_forward.1} parent=1 // pred_region
      _
    $region53: #{cnn_tiny_forward.1} parent=1 // pred_fallthru
      _
    // Predicated region
    $region54: #{cnn_tiny_forward.1} parent=1 // pred_check
      _
    $region55: #{cnn_tiny_forward.1} parent=1 // pred_check_branch
      %8920 = sbr.rel (0) target = $region57
    $region56: #{cnn_tiny_forward.1} parent=1 // pred_region
      %8921 = dma.done [#allocation5], 32
    $region57: #{cnn_tiny_forward.1} parent=1 // pred_fallthru
      _
    %8922 = vsyncpa [#allocation5], 1

</llo_original>
